<compile_context>
chip_gen: v6e
topology: v6e:2x2x1
jax: 0.10.0
libtpu: 0.0.40
codegen_flags: <defaults>
</compile_context>

<pallas_src>
import functools

import jax
import jax.numpy as jnp
from jax.experimental import pallas as pl
from jax.experimental.pallas import tpu as pltpu


N_FEATURES = 100
N_H0 = 256
N_H1 = 512
N_H2 = 1024
N_OUT = 784

# Lane-aligned (multiple-of-128) padded sizes.
N_FEATURES_PAD = 128
N_OUT_PAD = 896  # 7 * 128


def _round_up(x, m):
    return ((x + m - 1) // m) * m


def _device_kind():
    try:
        return jax.devices()[0].device_kind.lower()
    except Exception:
        return ""


def generator_kernel(x_ref,
                     w0_ref, b0_ref,
                     w1_ref, b1_ref,
                     w2_ref, b2_ref,
                     w3_ref, b3_ref,
                     out_ref,
                     *, bf16_elementwise):
    act_dt = jnp.bfloat16 if bf16_elementwise else jnp.float32

    def hidden(h_in, w_ref, b_ref):
        # bf16 MXU matmul, f32 accumulation.
        h = jnp.dot(h_in.astype(jnp.bfloat16), w_ref[...],
                    preferred_element_type=jnp.float32)
        h = h.astype(act_dt) + b_ref[...].astype(act_dt)
        # LeakyReLU(0.2) == max(h, 0.2*h): one VALU op instead of cmp+select.
        return jnp.maximum(h, 0.2 * h)

    h = hidden(x_ref[...], w0_ref, b0_ref)   # 100(->128) -> 256
    h = hidden(h, w1_ref, b1_ref)            # 256 -> 512
    h = hidden(h, w2_ref, b2_ref)            # 512 -> 1024

    # out: Linear(1024 -> 784, padded 896) + Tanh, stored in bf16.
    h = jnp.dot(h.astype(jnp.bfloat16), w3_ref[...],
                preferred_element_type=jnp.float32)
    h = h.astype(act_dt) + b3_ref[...].astype(act_dt)
    out_ref[...] = jnp.tanh(h).astype(out_ref.dtype)


def generator_forward(x, kparams, *, block_m=512, bf16_elementwise=None,
                      min_grid_steps=None, out_dtype=jnp.bfloat16):
    """x: (batch, 100) float. kparams: padded params from prepare_params().
    Returns (batch, 784) in `out_dtype` (bf16 by default)."""
    batch = x.shape[0]
    kind = _device_kind()
    if bf16_elementwise is None:
        # v5e has no bf16 VPU/EUP -> keep the elementwise chain in f32 there.
        bf16_elementwise = "v5" not in kind
    if min_grid_steps is None:
        # v7x has 2 TensorCores: ensure the (parallel) batch grid has >= 2
        # steps so both cores get work.
        min_grid_steps = 2 if "v7" in kind else 1

    # Batch tile: <= block_m, multiple of 8 (sublane-aligned).
    tm = min(block_m, _round_up(batch, 8))
    if min_grid_steps > 1:
        tm = min(tm, max(8, _round_up(pl.cdiv(batch, min_grid_steps), 8)))
    padded_batch = _round_up(batch, tm)

    # Zero-pad input directly in bf16: rows -> padded_batch, cols 100 -> 128.
    x_p = jnp.zeros((padded_batch, N_FEATURES_PAD), jnp.bfloat16)
    x_p = x_p.at[:batch, :N_FEATURES].set(x.astype(jnp.bfloat16))

    grid = (padded_batch // tm,)
    io_map = lambda i: (i, 0)     # x / out: tile over batch
    res_map = lambda i: (0, 0)    # weights / biases: VMEM-resident

    kernel = functools.partial(generator_kernel,
                               bf16_elementwise=bf16_elementwise)

    def run(single_buffer_weights):
        if single_buffer_weights and hasattr(pl, "Buffered"):
            # Constant index_map -> never re-DMA'd; no need to double-buffer.
            def w_spec(shape):
                return pl.BlockSpec(shape, res_map,
                                    pipeline_mode=pl.Buffered(1))
        else:
            def w_spec(shape):
                return pl.BlockSpec(shape, res_map)

        in_specs = [
            pl.BlockSpec((tm, N_FEATURES_PAD), io_map),
            w_spec((N_FEATURES_PAD, N_H0)), w_spec((1, N_H0)),
            w_spec((N_H0, N_H1)), w_spec((1, N_H1)),
            w_spec((N_H1, N_H2)), w_spec((1, N_H2)),
            w_spec((N_H2, N_OUT_PAD)), w_spec((1, N_OUT_PAD)),
        ]
        out_spec = pl.BlockSpec((tm, N_OUT_PAD), io_map)

        return pl.pallas_call(
            kernel,
            out_shape=jax.ShapeDtypeStruct((padded_batch, N_OUT_PAD),
                                           jnp.bfloat16),
            grid=grid,
            in_specs=in_specs,
            out_specs=out_spec,
            compiler_params=pltpu.CompilerParams(
                dimension_semantics=("parallel",),
                vmem_limit_bytes=32 << 20,
            ),
        )(
            x_p,
            kparams["w0"], kparams["b0"],
            kparams["w1"], kparams["b1"],
            kparams["w2"], kparams["b2"],
            kparams["w3"], kparams["b3"],
        )

    try:
        out = run(True)
    except Exception:
        # Fallback for environments without pipeline_mode / Buffered(1) support.
        out = run(False)

    out = out[:batch, :N_OUT]
    if out_dtype != jnp.bfloat16:
        out = out.astype(out_dtype)
    return out


def init_params(key):
    """f32 master params matching PyTorch nn.Linear default init
    U(-1/sqrt(fan_in), 1/sqrt(fan_in)). Weights stored (in_features, out_features)."""
    dims = [(N_FEATURES, N_H0), (N_H0, N_H1), (N_H1, N_H2), (N_H2, N_OUT)]
    params = {}
    for i, (fan_in, fan_out) in enumerate(dims):
        key, kw, kb = jax.random.split(key, 3)
        bound = 1.0 / (fan_in ** 0.5)
        params[f"w{i}"] = jax.random.uniform(
            kw, (fan_in, fan_out), jnp.float32, minval=-bound, maxval=bound)
        params[f"b{i}"] = jax.random.uniform(
            kb, (1, fan_out), jnp.float32, minval=-bound, maxval=bound)
    return params


def prepare_params(params):
    """Pad to lane-aligned shapes and cast weights to bf16 for the kernel.
    w0: (100,256)->(128,256) with zero rows; w3: (1024,784)->(1024,896) and
    b3: (1,784)->(1,896) with zero columns. Zero padding leaves results unchanged."""
    w0 = jnp.zeros((N_FEATURES_PAD, N_H0), jnp.float32).at[:N_FEATURES].set(params["w0"])
    w3 = jnp.zeros((N_H2, N_OUT_PAD), jnp.float32).at[:, :N_OUT].set(params["w3"])
    b3 = jnp.zeros((1, N_OUT_PAD), jnp.float32).at[:, :N_OUT].set(params["b3"])
    return {
        "w0": w0.astype(jnp.bfloat16),
        "b0": params["b0"],
        "w1": params["w1"].astype(jnp.bfloat16),
        "b1": params["b1"],
        "w2": params["w2"].astype(jnp.bfloat16),
        "b2": params["b2"],
        "w3": w3.astype(jnp.bfloat16),
        "b3": b3,
    }


def _reference_forward(x, params):
    """Pure-JAX f32 reference (PyTorch semantics)."""
    h = x @ params["w0"] + params["b0"]
    h = jnp.where(h > 0, h, 0.2 * h)
    h = h @ params["w1"] + params["b1"]
    h = jnp.where(h > 0, h, 0.2 * h)
    h = h @ params["w2"] + params["b2"]
    h = jnp.where(h > 0, h, 0.2 * h)
    h = h @ params["w3"] + params["b3"]
    return jnp.tanh(h)


if __name__ == "__main__":
    key = jax.random.PRNGKey(0)
    key, kx = jax.random.split(key)

    batch = 8
    x = jax.random.normal(kx, (batch, N_FEATURES), dtype=jnp.float32)
    params = init_params(key)
    kparams = prepare_params(params)

    out = generator_forward(x, kparams)
    out = jax.block_until_ready(out)

    assert out.shape == (batch, N_OUT), out.shape
    assert out.dtype == jnp.bfloat16, out.dtype

    # bf16 weight/activation/output streaming vs f32 reference -> loosened tol.
    ref = _reference_forward(x, params)
    err = jnp.max(jnp.abs(out.astype(jnp.float32) - ref))
    assert err < 3e-2, f"mismatch vs JAX reference (max abs err {err})"

    print("KERNEL_OK")
</pallas_src>

<mosaic_0001>
module attributes {stable_mosaic.version = 11 : i64} {
  func.func @generator_kernel(%arg0: i32, %arg1: memref<8x128xbf16, #tpu.memory_space<vmem>>, %arg2: memref<128x256xbf16, #tpu.memory_space<vmem>>, %arg3: memref<1x256xf32, #tpu.memory_space<vmem>>, %arg4: memref<256x512xbf16, #tpu.memory_space<vmem>>, %arg5: memref<1x512xf32, #tpu.memory_space<vmem>>, %arg6: memref<512x1024xbf16, #tpu.memory_space<vmem>>, %arg7: memref<1x1024xf32, #tpu.memory_space<vmem>>, %arg8: memref<1024x896xbf16, #tpu.memory_space<vmem>>, %arg9: memref<1x896xf32, #tpu.memory_space<vmem>>, %arg10: memref<8x896xbf16, #tpu.memory_space<vmem>>) attributes {dimension_semantics = [#tpu.dimension_semantics<parallel>], iteration_bounds = array<i64: 1>, scalar_prefetch = 0 : i64, scratch_operands = 0 : i64, tpu.core_type = #tpu.core_type<tc>, window_params = [{transform_indices = @transform_0, window_bounds = array<i64: 8, 128>}, {pipeline_mode = #tpu.pipeline_mode<synchronous>, transform_indices = @transform_1, window_bounds = array<i64: 128, 256>}, {pipeline_mode = #tpu.pipeline_mode<synchronous>, transform_indices = @transform_2, window_bounds = array<i64: 1, 256>}, {pipeline_mode = #tpu.pipeline_mode<synchronous>, transform_indices = @transform_3, window_bounds = array<i64: 256, 512>}, {pipeline_mode = #tpu.pipeline_mode<synchronous>, transform_indices = @transform_4, window_bounds = array<i64: 1, 512>}, {pipeline_mode = #tpu.pipeline_mode<synchronous>, transform_indices = @transform_5, window_bounds = array<i64: 512, 1024>}, {pipeline_mode = #tpu.pipeline_mode<synchronous>, transform_indices = @transform_6, window_bounds = array<i64: 1, 1024>}, {pipeline_mode = #tpu.pipeline_mode<synchronous>, transform_indices = @transform_7, window_bounds = array<i64: 1024, 896>}, {pipeline_mode = #tpu.pipeline_mode<synchronous>, transform_indices = @transform_8, window_bounds = array<i64: 1, 896>}, {transform_indices = @transform_9, window_bounds = array<i64: 8, 896>}]} {
    %c0 = arith.constant 0 : index
    %c0_0 = arith.constant 0 : index
    %0 = vector.load %arg1[%c0, %c0_0] : memref<8x128xbf16, #tpu.memory_space<vmem>>, vector<8x128xbf16>
    %c0_1 = arith.constant 0 : index
    %c0_2 = arith.constant 0 : index
    %1 = vector.load %arg2[%c0_1, %c0_2] : memref<128x256xbf16, #tpu.memory_space<vmem>>, vector<128x256xbf16>
    %cst = arith.constant dense<0.000000e+00> : vector<8x256xf32>
    %2 = tpu.matmul %0, %1, %cst {dimension_numbers = #tpu.dot_dimension_numbers<[1], [0], [0], [1], [0, 0, 1, 1], [], []>} : vector<8x128xbf16>, vector<128x256xbf16>, vector<8x256xf32> -> vector<8x256xf32>
    %3 = arith.truncf %2 : vector<8x256xf32> to vector<8x256xbf16>
    %c0_3 = arith.constant 0 : index
    %c0_4 = arith.constant 0 : index
    %4 = vector.load %arg3[%c0_3, %c0_4] : memref<1x256xf32, #tpu.memory_space<vmem>>, vector<1x256xf32>
    %5 = arith.truncf %4 : vector<1x256xf32> to vector<1x256xbf16>
    %6 = vector.broadcast %5 : vector<1x256xbf16> to vector<8x256xbf16>
    %7 = arith.addf %3, %6 : vector<8x256xbf16>
    %cst_5 = arith.constant 2.001950e-01 : bf16
    %8 = vector.broadcast %cst_5 : bf16 to vector<8x256xbf16>
    %9 = arith.mulf %8, %7 : vector<8x256xbf16>
    %10 = arith.maximumf %7, %9 : vector<8x256xbf16>
    %c0_6 = arith.constant 0 : index
    %c0_7 = arith.constant 0 : index
    %11 = vector.load %arg4[%c0_6, %c0_7] : memref<256x512xbf16, #tpu.memory_space<vmem>>, vector<256x512xbf16>
    %cst_8 = arith.constant dense<0.000000e+00> : vector<8x512xf32>
    %12 = tpu.matmul %10, %11, %cst_8 {dimension_numbers = #tpu.dot_dimension_numbers<[1], [0], [0], [1], [0, 0, 1, 1], [], []>} : vector<8x256xbf16>, vector<256x512xbf16>, vector<8x512xf32> -> vector<8x512xf32>
    %13 = arith.truncf %12 : vector<8x512xf32> to vector<8x512xbf16>
    %c0_9 = arith.constant 0 : index
    %c0_10 = arith.constant 0 : index
    %14 = vector.load %arg5[%c0_9, %c0_10] : memref<1x512xf32, #tpu.memory_space<vmem>>, vector<1x512xf32>
    %15 = arith.truncf %14 : vector<1x512xf32> to vector<1x512xbf16>
    %16 = vector.broadcast %15 : vector<1x512xbf16> to vector<8x512xbf16>
    %17 = arith.addf %13, %16 : vector<8x512xbf16>
    %cst_11 = arith.constant 2.001950e-01 : bf16
    %18 = vector.broadcast %cst_11 : bf16 to vector<8x512xbf16>
    %19 = arith.mulf %18, %17 : vector<8x512xbf16>
    %20 = arith.maximumf %17, %19 : vector<8x512xbf16>
    %c0_12 = arith.constant 0 : index
    %c0_13 = arith.constant 0 : index
    %21 = vector.load %arg6[%c0_12, %c0_13] : memref<512x1024xbf16, #tpu.memory_space<vmem>>, vector<512x1024xbf16>
    %cst_14 = arith.constant dense<0.000000e+00> : vector<8x1024xf32>
    %22 = tpu.matmul %20, %21, %cst_14 {dimension_numbers = #tpu.dot_dimension_numbers<[1], [0], [0], [1], [0, 0, 1, 1], [], []>} : vector<8x512xbf16>, vector<512x1024xbf16>, vector<8x1024xf32> -> vector<8x1024xf32>
    %23 = arith.truncf %22 : vector<8x1024xf32> to vector<8x1024xbf16>
    %c0_15 = arith.constant 0 : index
    %c0_16 = arith.constant 0 : index
    %24 = vector.load %arg7[%c0_15, %c0_16] : memref<1x1024xf32, #tpu.memory_space<vmem>>, vector<1x1024xf32>
    %25 = arith.truncf %24 : vector<1x1024xf32> to vector<1x1024xbf16>
    %26 = vector.broadcast %25 : vector<1x1024xbf16> to vector<8x1024xbf16>
    %27 = arith.addf %23, %26 : vector<8x1024xbf16>
    %cst_17 = arith.constant 2.001950e-01 : bf16
    %28 = vector.broadcast %cst_17 : bf16 to vector<8x1024xbf16>
    %29 = arith.mulf %28, %27 : vector<8x1024xbf16>
    %30 = arith.maximumf %27, %29 : vector<8x1024xbf16>
    %c0_18 = arith.constant 0 : index
    %c0_19 = arith.constant 0 : index
    %31 = vector.load %arg8[%c0_18, %c0_19] : memref<1024x896xbf16, #tpu.memory_space<vmem>>, vector<1024x896xbf16>
    %cst_20 = arith.constant dense<0.000000e+00> : vector<8x896xf32>
    %32 = tpu.matmul %30, %31, %cst_20 {dimension_numbers = #tpu.dot_dimension_numbers<[1], [0], [0], [1], [0, 0, 1, 1], [], []>} : vector<8x1024xbf16>, vector<1024x896xbf16>, vector<8x896xf32> -> vector<8x896xf32>
    %33 = arith.truncf %32 : vector<8x896xf32> to vector<8x896xbf16>
    %c0_21 = arith.constant 0 : index
    %c0_22 = arith.constant 0 : index
    %34 = vector.load %arg9[%c0_21, %c0_22] : memref<1x896xf32, #tpu.memory_space<vmem>>, vector<1x896xf32>
    %35 = arith.truncf %34 : vector<1x896xf32> to vector<1x896xbf16>
    %36 = vector.broadcast %35 : vector<1x896xbf16> to vector<8x896xbf16>
    %37 = arith.addf %33, %36 : vector<8x896xbf16>
    %38 = math.tanh %37 : vector<8x896xbf16>
    %c0_23 = arith.constant 0 : index
    %c0_24 = arith.constant 0 : index
    %39 = vector.load %arg10[%c0_23, %c0_24] : memref<8x896xbf16, #tpu.memory_space<vmem>>, vector<8x896xbf16>
    tpu.vector_store %arg10[%c0_23, %c0_24], %38 {strides = array<i32>} : memref<8x896xbf16, #tpu.memory_space<vmem>>, vector<8x896xbf16>,
    return
  }
  func.func @transform_0(%arg0: i32) -> (i32, i32) {
    %c0_i32 = arith.constant 0 : i32
    %c0_i32_0 = arith.constant 0 : i32
    return %arg0, %c0_i32 : i32, i32
  }
  func.func @transform_1(%arg0: i32) -> (i32, i32) {
    %c0_i32 = arith.constant 0 : i32
    %c0_i32_0 = arith.constant 0 : i32
    %c0_i32_1 = arith.constant 0 : i32
    return %c0_i32, %c0_i32_0 : i32, i32
  }
  func.func @transform_2(%arg0: i32) -> (i32, i32) {
    %c0_i32 = arith.constant 0 : i32
    %c0_i32_0 = arith.constant 0 : i32
    %c0_i32_1 = arith.constant 0 : i32
    return %c0_i32, %c0_i32_0 : i32, i32
  }
  func.func @transform_3(%arg0: i32) -> (i32, i32) {
    %c0_i32 = arith.constant 0 : i32
    %c0_i32_0 = arith.constant 0 : i32
    %c0_i32_1 = arith.constant 0 : i32
    return %c0_i32, %c0_i32_0 : i32, i32
  }
  func.func @transform_4(%arg0: i32) -> (i32, i32) {
    %c0_i32 = arith.constant 0 : i32
    %c0_i32_0 = arith.constant 0 : i32
    %c0_i32_1 = arith.constant 0 : i32
    return %c0_i32, %c0_i32_0 : i32, i32
  }
  func.func @transform_5(%arg0: i32) -> (i32, i32) {
    %c0_i32 = arith.constant 0 : i32
    %c0_i32_0 = arith.constant 0 : i32
    %c0_i32_1 = arith.constant 0 : i32
    return %c0_i32, %c0_i32_0 : i32, i32
  }
  func.func @transform_6(%arg0: i32) -> (i32, i32) {
    %c0_i32 = arith.constant 0 : i32
    %c0_i32_0 = arith.constant 0 : i32
    %c0_i32_1 = arith.constant 0 : i32
    return %c0_i32, %c0_i32_0 : i32, i32
  }
  func.func @transform_7(%arg0: i32) -> (i32, i32) {
    %c0_i32 = arith.constant 0 : i32
    %c0_i32_0 = arith.constant 0 : i32
    %c0_i32_1 = arith.constant 0 : i32
    return %c0_i32, %c0_i32_0 : i32, i32
  }
  func.func @transform_8(%arg0: i32) -> (i32, i32) {
    %c0_i32 = arith.constant 0 : i32
    %c0_i32_0 = arith.constant 0 : i32
    %c0_i32_1 = arith.constant 0 : i32
    return %c0_i32, %c0_i32_0 : i32, i32
  }
  func.func @transform_9(%arg0: i32) -> (i32, i32) {
    %c0_i32 = arith.constant 0 : i32
    %c0_i32_0 = arith.constant 0 : i32
    return %arg0, %c0_i32 : i32, i32
  }
}

module attributes {stable_mosaic.version = 11 : i64} {
  func.func @generator_kernel(%arg0: i32, %arg1: memref<8x128xbf16, #tpu.memory_space<vmem>>, %arg2: memref<128x256xbf16, #tpu.memory_space<vmem>>, %arg3: memref<1x256xf32, #tpu.memory_space<vmem>>, %arg4: memref<256x512xbf16, #tpu.memory_space<vmem>>, %arg5: memref<1x512xf32, #tpu.memory_space<vmem>>, %arg6: memref<512x1024xbf16, #tpu.memory_space<vmem>>, %arg7: memref<1x1024xf32, #tpu.memory_space<vmem>>, %arg8: memref<1024x896xbf16, #tpu.memory_space<vmem>>, %arg9: memref<1x896xf32, #tpu.memory_space<vmem>>, %arg10: memref<8x896xbf16, #tpu.memory_space<vmem>>) attributes {dimension_semantics = [#tpu.dimension_semantics<parallel>], iteration_bounds = array<i64: 1>, scalar_prefetch = 0 : i64, scratch_operands = 0 : i64, tpu.core_type = #tpu.core_type<tc>, window_params = [{transform_indices = @transform_0, window_bounds = array<i64: 8, 128>}, {pipeline_mode = #tpu.pipeline_mode<synchronous>, transform_indices = @transform_1, window_bounds = array<i64: 128, 256>}, {pipeline_mode = #tpu.pipeline_mode<synchronous>, transform_indices = @transform_2, window_bounds = array<i64: 1, 256>}, {pipeline_mode = #tpu.pipeline_mode<synchronous>, transform_indices = @transform_3, window_bounds = array<i64: 256, 512>}, {pipeline_mode = #tpu.pipeline_mode<synchronous>, transform_indices = @transform_4, window_bounds = array<i64: 1, 512>}, {pipeline_mode = #tpu.pipeline_mode<synchronous>, transform_indices = @transform_5, window_bounds = array<i64: 512, 1024>}, {pipeline_mode = #tpu.pipeline_mode<synchronous>, transform_indices = @transform_6, window_bounds = array<i64: 1, 1024>}, {pipeline_mode = #tpu.pipeline_mode<synchronous>, transform_indices = @transform_7, window_bounds = array<i64: 1024, 896>}, {pipeline_mode = #tpu.pipeline_mode<synchronous>, transform_indices = @transform_8, window_bounds = array<i64: 1, 896>}, {transform_indices = @transform_9, window_bounds = array<i64: 8, 896>}]} {
    %c0 = arith.constant 0 : index
    %c0_0 = arith.constant 0 : index
    %0 = vector.load %arg1[%c0, %c0_0] : memref<8x128xbf16, #tpu.memory_space<vmem>>, vector<8x128xbf16>
    %c0_1 = arith.constant 0 : index
    %c0_2 = arith.constant 0 : index
    %1 = vector.load %arg2[%c0_1, %c0_2] : memref<128x256xbf16, #tpu.memory_space<vmem>>, vector<128x256xbf16>
    %cst = arith.constant dense<0.000000e+00> : vector<8x256xf32>
    %2 = tpu.matmul %0, %1, %cst {dimension_numbers = #tpu.dot_dimension_numbers<[1], [0], [0], [1], [0, 0, 1, 1], [], []>} : vector<8x128xbf16>, vector<128x256xbf16>, vector<8x256xf32> -> vector<8x256xf32>
    %3 = arith.truncf %2 : vector<8x256xf32> to vector<8x256xbf16>
    %c0_3 = arith.constant 0 : index
    %c0_4 = arith.constant 0 : index
    %4 = vector.load %arg3[%c0_3, %c0_4] : memref<1x256xf32, #tpu.memory_space<vmem>>, vector<1x256xf32>
    %5 = arith.truncf %4 : vector<1x256xf32> to vector<1x256xbf16>
    %6 = vector.broadcast %5 : vector<1x256xbf16> to vector<8x256xbf16>
    %7 = arith.addf %3, %6 : vector<8x256xbf16>
    %cst_5 = arith.constant 2.001950e-01 : bf16
    %8 = vector.broadcast %cst_5 : bf16 to vector<8x256xbf16>
    %9 = arith.mulf %8, %7 : vector<8x256xbf16>
    %10 = arith.maximumf %7, %9 : vector<8x256xbf16>
    %c0_6 = arith.constant 0 : index
    %c0_7 = arith.constant 0 : index
    %11 = vector.load %arg4[%c0_6, %c0_7] : memref<256x512xbf16, #tpu.memory_space<vmem>>, vector<256x512xbf16>
    %cst_8 = arith.constant dense<0.000000e+00> : vector<8x512xf32>
    %12 = tpu.matmul %10, %11, %cst_8 {dimension_numbers = #tpu.dot_dimension_numbers<[1], [0], [0], [1], [0, 0, 1, 1], [], []>} : vector<8x256xbf16>, vector<256x512xbf16>, vector<8x512xf32> -> vector<8x512xf32>
    %13 = arith.truncf %12 : vector<8x512xf32> to vector<8x512xbf16>
    %c0_9 = arith.constant 0 : index
    %c0_10 = arith.constant 0 : index
    %14 = vector.load %arg5[%c0_9, %c0_10] : memref<1x512xf32, #tpu.memory_space<vmem>>, vector<1x512xf32>
    %15 = arith.truncf %14 : vector<1x512xf32> to vector<1x512xbf16>
    %16 = vector.broadcast %15 : vector<1x512xbf16> to vector<8x512xbf16>
    %17 = arith.addf %13, %16 : vector<8x512xbf16>
    %cst_11 = arith.constant 2.001950e-01 : bf16
    %18 = vector.broadcast %cst_11 : bf16 to vector<8x512xbf16>
    %19 = arith.mulf %18, %17 : vector<8x512xbf16>
    %20 = arith.maximumf %17, %19 : vector<8x512xbf16>
    %c0_12 = arith.constant 0 : index
    %c0_13 = arith.constant 0 : index
    %21 = vector.load %arg6[%c0_12, %c0_13] : memref<512x1024xbf16, #tpu.memory_space<vmem>>, vector<512x1024xbf16>
    %cst_14 = arith.constant dense<0.000000e+00> : vector<8x1024xf32>
    %22 = tpu.matmul %20, %21, %cst_14 {dimension_numbers = #tpu.dot_dimension_numbers<[1], [0], [0], [1], [0, 0, 1, 1], [], []>} : vector<8x512xbf16>, vector<512x1024xbf16>, vector<8x1024xf32> -> vector<8x1024xf32>
    %23 = arith.truncf %22 : vector<8x1024xf32> to vector<8x1024xbf16>
    %c0_15 = arith.constant 0 : index
    %c0_16 = arith.constant 0 : index
    %24 = vector.load %arg7[%c0_15, %c0_16] : memref<1x1024xf32, #tpu.memory_space<vmem>>, vector<1x1024xf32>
    %25 = arith.truncf %24 : vector<1x1024xf32> to vector<1x1024xbf16>
    %26 = vector.broadcast %25 : vector<1x1024xbf16> to vector<8x1024xbf16>
    %27 = arith.addf %23, %26 : vector<8x1024xbf16>
    %cst_17 = arith.constant 2.001950e-01 : bf16
    %28 = vector.broadcast %cst_17 : bf16 to vector<8x1024xbf16>
    %29 = arith.mulf %28, %27 : vector<8x1024xbf16>
    %30 = arith.maximumf %27, %29 : vector<8x1024xbf16>
    %c0_18 = arith.constant 0 : index
    %c0_19 = arith.constant 0 : index
    %31 = vector.load %arg8[%c0_18, %c0_19] : memref<1024x896xbf16, #tpu.memory_space<vmem>>, vector<1024x896xbf16>
    %cst_20 = arith.constant dense<0.000000e+00> : vector<8x896xf32>
    %32 = tpu.matmul %30, %31, %cst_20 {dimension_numbers = #tpu.dot_dimension_numbers<[1], [0], [0], [1], [0, 0, 1, 1], [], []>} : vector<8x1024xbf16>, vector<1024x896xbf16>, vector<8x896xf32> -> vector<8x896xf32>
    %33 = arith.truncf %32 : vector<8x896xf32> to vector<8x896xbf16>
    %c0_21 = arith.constant 0 : index
    %c0_22 = arith.constant 0 : index
    %34 = vector.load %arg9[%c0_21, %c0_22] : memref<1x896xf32, #tpu.memory_space<vmem>>, vector<1x896xf32>
    %35 = arith.truncf %34 : vector<1x896xf32> to vector<1x896xbf16>
    %36 = vector.broadcast %35 : vector<1x896xbf16> to vector<8x896xbf16>
    %37 = arith.addf %33, %36 : vector<8x896xbf16>
    %38 = math.tanh %37 : vector<8x896xbf16>
    %c0_23 = arith.constant 0 : index
    %c0_24 = arith.constant 0 : index
    %39 = vector.load %arg10[%c0_23, %c0_24] : memref<8x896xbf16, #tpu.memory_space<vmem>>, vector<8x896xbf16>
    tpu.vector_store %arg10[%c0_23, %c0_24], %38 {strides = array<i32>} : memref<8x896xbf16, #tpu.memory_space<vmem>>, vector<8x896xbf16>,
    return
  }
  func.func @transform_0(%arg0: i32) -> (i32, i32) {
    %c0_i32 = arith.constant 0 : i32
    %c0_i32_0 = arith.constant 0 : i32
    return %arg0, %c0_i32 : i32, i32
  }
  func.func @transform_1(%arg0: i32) -> (i32, i32) {
    %c0_i32 = arith.constant 0 : i32
    %c0_i32_0 = arith.constant 0 : i32
    %c0_i32_1 = arith.constant 0 : i32
    return %c0_i32, %c0_i32_0 : i32, i32
  }
  func.func @transform_2(%arg0: i32) -> (i32, i32) {
    %c0_i32 = arith.constant 0 : i32
    %c0_i32_0 = arith.constant 0 : i32
    %c0_i32_1 = arith.constant 0 : i32
    return %c0_i32, %c0_i32_0 : i32, i32
  }
  func.func @transform_3(%arg0: i32) -> (i32, i32) {
    %c0_i32 = arith.constant 0 : i32
    %c0_i32_0 = arith.constant 0 : i32
    %c0_i32_1 = arith.constant 0 : i32
    return %c0_i32, %c0_i32_0 : i32, i32
  }
  func.func @transform_4(%arg0: i32) -> (i32, i32) {
    %c0_i32 = arith.constant 0 : i32
    %c0_i32_0 = arith.constant 0 : i32
    %c0_i32_1 = arith.constant 0 : i32
    return %c0_i32, %c0_i32_0 : i32, i32
  }
  func.func @transform_5(%arg0: i32) -> (i32, i32) {
    %c0_i32 = arith.constant 0 : i32
    %c0_i32_0 = arith.constant 0 : i32
    %c0_i32_1 = arith.constant 0 : i32
    return %c0_i32, %c0_i32_0 : i32, i32
  }
  func.func @transform_6(%arg0: i32) -> (i32, i32) {
    %c0_i32 = arith.constant 0 : i32
    %c0_i32_0 = arith.constant 0 : i32
    %c0_i32_1 = arith.constant 0 : i32
    return %c0_i32, %c0_i32_0 : i32, i32
  }
  func.func @transform_7(%arg0: i32) -> (i32, i32) {
    %c0_i32 = arith.constant 0 : i32
    %c0_i32_0 = arith.constant 0 : i32
    %c0_i32_1 = arith.constant 0 : i32
    return %c0_i32, %c0_i32_0 : i32, i32
  }
  func.func @transform_8(%arg0: i32) -> (i32, i32) {
    %c0_i32 = arith.constant 0 : i32
    %c0_i32_0 = arith.constant 0 : i32
    %c0_i32_1 = arith.constant 0 : i32
    return %c0_i32, %c0_i32_0 : i32, i32
  }
  func.func @transform_9(%arg0: i32) -> (i32, i32) {
    %c0_i32 = arith.constant 0 : i32
    %c0_i32_0 = arith.constant 0 : i32
    return %arg0, %c0_i32 : i32, i32
  }
}

</mosaic_0001>

<llo_original>
// kernel: tpu_custom_call.1
$region0: #{tpu_custom_call.1}
  #allocation0 [shape = 'u32[]', space=smem, size = 0x4, offset = 0x4, fixed_abs, tag = 'smem constant byte address 0x4 - core index']
  #allocation1 [shape = 'u32[144,128]{1,0:T(1,128)}', space=vmem, size = 0x12000, scoped, tag = 'internal scratch']
  %s0 = inlined_call_operand.hbm [shape: bf16[8,128], index: 0, kind: input, shape index: {}]
  %s1 = inlined_call_operand.hbm [shape: bf16[128,256], index: 1, kind: input, shape index: {}]
  %s2 = inlined_call_operand.hbm [shape: f32[1,256], index: 2, kind: input, shape index: {}]
  %s3 = inlined_call_operand.hbm [shape: bf16[256,512], index: 3, kind: input, shape index: {}]
  %s4 = inlined_call_operand.hbm [shape: f32[1,512], index: 4, kind: input, shape index: {}]
  %s5 = inlined_call_operand.hbm [shape: bf16[512,1024], index: 5, kind: input, shape index: {}]
  %s6 = inlined_call_operand.hbm [shape: f32[1,1024], index: 6, kind: input, shape index: {}]
  %s7 = inlined_call_operand.hbm [shape: bf16[1024,896], index: 7, kind: input, shape index: {}]
  %s8 = inlined_call_operand.hbm [shape: f32[1,896], index: 8, kind: input, shape index: {}]
  %s9 = inlined_call_operand.hbm [shape: bf16[8,896], index: 9, kind: output, shape index: {}]
  %s10 = sld [smem:[#allocation0]]
  $region82: #{tpu_custom_call.1} parent=0
    _
  %s12 = ssub.s32 1, %s10
  %s13 = scalar_select 0, %s12, %s10
  $region1: #{tpu_custom_call.1} parent=0
    #allocation2 [shape = 'u8[2048]{0}', space=vmem, size = 0x800, scoped, tag = 'input window, operand 0, single buffered']
    #allocation3 [shape = 's32[1]{0}', space=sflag, size = 0x4, scoped, tag = 'scoped memory for tpu_custom_call.1']
    #allocation4 [shape = 's32[1]{0}', space=sflag, size = 0x4, scoped, tag = 'scoped memory for tpu_custom_call.1']
    #allocation5 [shape = 'u8[65536]{0}', space=vmem, size = 0x10000, scoped, tag = 'input window, operand 1, single buffered']
    #allocation6 [shape = 's32[1]{0}', space=sflag, size = 0x4, scoped, tag = 'scoped memory for tpu_custom_call.1']
    #allocation7 [shape = 'u8[1024]{0}', space=vmem, size = 0x400, scoped, tag = 'input window, operand 2, single buffered']
    #allocation8 [shape = 'u8[262144]{0}', space=vmem, size = 0x40000, scoped, tag = 'input window, operand 3, single buffered']
    #allocation9 [shape = 's32[1]{0}', space=sflag, size = 0x4, scoped, tag = 'scoped memory for tpu_custom_call.1']
    #allocation10 [shape = 'u8[2048]{0}', space=vmem, size = 0x800, scoped, tag = 'input window, operand 4, single buffered']
    #allocation11 [shape = 'u8[1048576]{0}', space=vmem, size = 0x100000, scoped, tag = 'input window, operand 5, single buffered']
    #allocation12 [shape = 's32[1]{0}', space=sflag, size = 0x4, scoped, tag = 'scoped memory for tpu_custom_call.1']
    #allocation13 [shape = 'u8[4096]{0}', space=vmem, size = 0x1000, scoped, tag = 'input window, operand 6, single buffered']
    #allocation14 [shape = 'u8[1835008]{0}', space=vmem, size = 0x1c0000, scoped, tag = 'input window, operand 7, single buffered']
    #allocation15 [shape = 's32[1]{0}', space=sflag, size = 0x4, scoped, tag = 'scoped memory for tpu_custom_call.1']
    #allocation16 [shape = 'u8[3584]{0}', space=vmem, size = 0x1000, scoped, tag = 'input window, operand 8, single buffered']
    #allocation17 [shape = 'u8[14336]{0}', space=vmem, size = 0x3800, scoped, tag = 'output window, operand 0, single buffered']
    %14 = vsyncpa [#allocation3], 0
    %15 = vsyncpa [#allocation6], 0
    %16 = vsyncpa [#allocation9], 0
    %17 = vsyncpa [#allocation12], 0
    %18 = vsyncpa [#allocation15], 0
    %19 = vsyncpa [#allocation4], 0
    // Predicated region
    $region2: #{tpu_custom_call.1} parent=1 // pred_check
      _
    $region3: #{tpu_custom_call.1} parent=1 // pred_check_branch
      %21 = sbr.rel (0) target = $region5
    $region4: #{tpu_custom_call.1} parent=1 // pred_region
      %s23 = ssub.s32 64, 64
      %24 = vsyncadd [#allocation3], %s23
      %s26 = sshll.u32 [#allocation2], 4
      %s27 = int_to_ptr.vmem [resolvable:$true] %s26
      %29 = dma.hbm_to_vmem [thread:$0]  %s0, 64, %s27, [#allocation3]
    $region5: #{tpu_custom_call.1} parent=1 // pred_fallthru
      _
    // Predicated region
    $region6: #{tpu_custom_call.1} parent=1 // pred_check
      _
    $region7: #{tpu_custom_call.1} parent=1 // pred_check_branch
      %31 = sbr.rel (0) target = $region9
    $region8: #{tpu_custom_call.1} parent=1 // pred_region
      %s33 = ssub.s32 2048, 2048
      %34 = vsyncadd [#allocation6], %s33
      %s35 = sshll.u32 [#allocation5], 4
      %s36 = int_to_ptr.vmem [resolvable:$true] %s35
      %41 = dma.hbm_to_vmem [thread:$0]  %s1, 2048, %s36, [#allocation6], 128, 128, 8
    $region9: #{tpu_custom_call.1} parent=1 // pred_fallthru
      _
    // Predicated region
    $region10: #{tpu_custom_call.1} parent=1 // pred_check
      _
    $region11: #{tpu_custom_call.1} parent=1 // pred_check_branch
      %43 = sbr.rel (0) target = $region13
    $region12: #{tpu_custom_call.1} parent=1 // pred_region
      %s45 = ssub.s32 32, 32
      %46 = vsyncadd [#allocation6], %s45
      %s48 = sshll.u32 [#allocation7], 4
      %s49 = int_to_ptr.vmem [resolvable:$true] %s48
      %51 = dma.hbm_to_vmem [thread:$0]  %s2, 32, %s49, [#allocation6]
    $region13: #{tpu_custom_call.1} parent=1 // pred_fallthru
      _
    // Predicated region
    $region14: #{tpu_custom_call.1} parent=1 // pred_check
      _
    $region15: #{tpu_custom_call.1} parent=1 // pred_check_branch
      %53 = sbr.rel (0) target = $region17
    $region16: #{tpu_custom_call.1} parent=1 // pred_region
      %s55 = ssub.s32 8192, 8192
      %56 = vsyncadd [#allocation9], %s55
      %s57 = sshll.u32 [#allocation8], 4
      %s58 = int_to_ptr.vmem [resolvable:$true] %s57
      %63 = dma.hbm_to_vmem [thread:$0]  %s3, 8192, %s58, [#allocation9], 256, 256, 16
    $region17: #{tpu_custom_call.1} parent=1 // pred_fallthru
      _
    // Predicated region
    $region18: #{tpu_custom_call.1} parent=1 // pred_check
      _
    $region19: #{tpu_custom_call.1} parent=1 // pred_check_branch
      %65 = sbr.rel (0) target = $region21
    $region20: #{tpu_custom_call.1} parent=1 // pred_region
      %s67 = ssub.s32 64, 64
      %68 = vsyncadd [#allocation9], %s67
      %s70 = sshll.u32 [#allocation10], 4
      %s71 = int_to_ptr.vmem [resolvable:$true] %s70
      %73 = dma.hbm_to_vmem [thread:$0]  %s4, 64, %s71, [#allocation9]
    $region21: #{tpu_custom_call.1} parent=1 // pred_fallthru
      _
    // Predicated region
    $region22: #{tpu_custom_call.1} parent=1 // pred_check
      _
    $region23: #{tpu_custom_call.1} parent=1 // pred_check_branch
      %75 = sbr.rel (0) target = $region25
    $region24: #{tpu_custom_call.1} parent=1 // pred_region
      %s77 = ssub.s32 32768, 32768
      %78 = vsyncadd [#allocation12], %s77
      %s79 = sshll.u32 [#allocation11], 4
      %s80 = int_to_ptr.vmem [resolvable:$true] %s79
      %85 = dma.hbm_to_vmem [thread:$0]  %s5, 32768, %s80, [#allocation12], 512, 512, 32
    $region25: #{tpu_custom_call.1} parent=1 // pred_fallthru
      _
    // Predicated region
    $region26: #{tpu_custom_call.1} parent=1 // pred_check
      _
    $region27: #{tpu_custom_call.1} parent=1 // pred_check_branch
      %87 = sbr.rel (0) target = $region29
    $region28: #{tpu_custom_call.1} parent=1 // pred_region
      %s89 = ssub.s32 128, 128
      %90 = vsyncadd [#allocation12], %s89
      %s92 = sshll.u32 [#allocation13], 4
      %s93 = int_to_ptr.vmem [resolvable:$true] %s92
      %95 = dma.hbm_to_vmem [thread:$0]  %s6, 128, %s93, [#allocation12]
    $region29: #{tpu_custom_call.1} parent=1 // pred_fallthru
      _
    // Predicated region
    $region30: #{tpu_custom_call.1} parent=1 // pred_check
      _
    $region31: #{tpu_custom_call.1} parent=1 // pred_check_branch
      %97 = sbr.rel (0) target = $region33
    $region32: #{tpu_custom_call.1} parent=1 // pred_region
      %s99 = ssub.s32 57344, 57344
      %100 = vsyncadd [#allocation15], %s99
      %s101 = sshll.u32 [#allocation14], 4
      %s102 = int_to_ptr.vmem [resolvable:$true] %s101
      %107 = dma.hbm_to_vmem [thread:$0]  %s7, 57344, %s102, [#allocation15], 448, 448, 28
    $region33: #{tpu_custom_call.1} parent=1 // pred_fallthru
      _
    // Predicated region
    $region34: #{tpu_custom_call.1} parent=1 // pred_check
      _
    $region35: #{tpu_custom_call.1} parent=1 // pred_check_branch
      %109 = sbr.rel (0) target = $region37
    $region36: #{tpu_custom_call.1} parent=1 // pred_region
      %s111 = ssub.s32 112, 112
      %112 = vsyncadd [#allocation15], %s111
      %s114 = sshll.u32 [#allocation16], 4
      %s115 = int_to_ptr.vmem [resolvable:$true] %s114
      %117 = dma.hbm_to_vmem [thread:$0]  %s8, 112, %s115, [#allocation15]
    $region37: #{tpu_custom_call.1} parent=1 // pred_fallthru
      _
    // Predicated region
    $region38: #{tpu_custom_call.1} parent=1 // pred_check
      _
    $region39: #{tpu_custom_call.1} parent=1 // pred_check_branch
      %119 = sbr.rel (0) target = $region41
    $region40: #{tpu_custom_call.1} parent=1 // pred_region
      %120 = dma.done [#allocation3], 64
    $region41: #{tpu_custom_call.1} parent=1 // pred_fallthru
      _
    // Predicated region
    $region42: #{tpu_custom_call.1} parent=1 // pred_check
      _
    $region43: #{tpu_custom_call.1} parent=1 // pred_check_branch
      %122 = sbr.rel (0) target = $region45
    $region44: #{tpu_custom_call.1} parent=1 // pred_region
      %123 = dma.done [#allocation6], 2048
    $region45: #{tpu_custom_call.1} parent=1 // pred_fallthru
      _
    // Predicated region
    $region46: #{tpu_custom_call.1} parent=1 // pred_check
      _
    $region47: #{tpu_custom_call.1} parent=1 // pred_check_branch
      %125 = sbr.rel (0) target = $region49
    $region48: #{tpu_custom_call.1} parent=1 // pred_region
      %126 = dma.done [#allocation6], 32
    $region49: #{tpu_custom_call.1} parent=1 // pred_fallthru
      _
    // Predicated region
    $region50: #{tpu_custom_call.1} parent=1 // pred_check
      _
    $region51: #{tpu_custom_call.1} parent=1 // pred_check_branch
      %128 = sbr.rel (0) target = $region53
    $region52: #{tpu_custom_call.1} parent=1 // pred_region
      %129 = dma.done [#allocation9], 8192
    $region53: #{tpu_custom_call.1} parent=1 // pred_fallthru
      _
    // Predicated region
    $region54: #{tpu_custom_call.1} parent=1 // pred_check
      _
    $region55: #{tpu_custom_call.1} parent=1 // pred_check_branch
      %131 = sbr.rel (0) target = $region57
    $region56: #{tpu_custom_call.1} parent=1 // pred_region
      %132 = dma.done [#allocation9], 64
    $region57: #{tpu_custom_call.1} parent=1 // pred_fallthru
      _
    // Predicated region
    $region58: #{tpu_custom_call.1} parent=1 // pred_check
      _
    $region59: #{tpu_custom_call.1} parent=1 // pred_check_branch
      %134 = sbr.rel (0) target = $region61
    $region60: #{tpu_custom_call.1} parent=1 // pred_region
      %135 = dma.done [#allocation12], 32768
    $region61: #{tpu_custom_call.1} parent=1 // pred_fallthru
      _
    // Predicated region
    $region62: #{tpu_custom_call.1} parent=1 // pred_check
      _
    $region63: #{tpu_custom_call.1} parent=1 // pred_check_branch
      %137 = sbr.rel (0) target = $region65
    $region64: #{tpu_custom_call.1} parent=1 // pred_region
      %138 = dma.done [#allocation12], 128
    $region65: #{tpu_custom_call.1} parent=1 // pred_fallthru
      _
    // Predicated region
    $region66: #{tpu_custom_call.1} parent=1 // pred_check
      _
    $region67: #{tpu_custom_call.1} parent=1 // pred_check_branch
      %140 = sbr.rel (0) target = $region69
    $region68: #{tpu_custom_call.1} parent=1 // pred_region
      %141 = dma.done [#allocation15], 57344
    $region69: #{tpu_custom_call.1} parent=1 // pred_fallthru
      _
    // Predicated region
    $region70: #{tpu_custom_call.1} parent=1 // pred_check
      _
    $region71: #{tpu_custom_call.1} parent=1 // pred_check_branch
      %143 = sbr.rel (0) target = $region73
    $region72: #{tpu_custom_call.1} parent=1 // pred_region
      %144 = dma.done [#allocation15], 112
    $region73: #{tpu_custom_call.1} parent=1 // pred_fallthru
      _
    %v147 = vld [vmem:[#allocation2] sm:$0xf]
    %v148 = vld [vmem:[#allocation5] sm:$0xff]
    %v149 = vld [vmem:[#allocation5 + $0x8] sm:$0xff]
    %v150 = vld [vmem:[#allocation5 + $0x10] sm:$0xff]
    %v151 = vld [vmem:[#allocation5 + $0x18] sm:$0xff]
    %v152 = vld [vmem:[#allocation5 + $0x20] sm:$0xff]
    %v153 = vld [vmem:[#allocation5 + $0x28] sm:$0xff]
    %v154 = vld [vmem:[#allocation5 + $0x30] sm:$0xff]
    %v155 = vld [vmem:[#allocation5 + $0x38] sm:$0xff]
    %v156 = vld [vmem:[#allocation5 + $0x40] sm:$0xff]
    %v157 = vld [vmem:[#allocation5 + $0x48] sm:$0xff]
    %v158 = vld [vmem:[#allocation5 + $0x50] sm:$0xff]
    %v159 = vld [vmem:[#allocation5 + $0x58] sm:$0xff]
    %v160 = vld [vmem:[#allocation5 + $0x60] sm:$0xff]
    %v161 = vld [vmem:[#allocation5 + $0x68] sm:$0xff]
    %v162 = vld [vmem:[#allocation5 + $0x70] sm:$0xff]
    %v163 = vld [vmem:[#allocation5 + $0x78] sm:$0xff]
    %v180 = vunpack.c.l.b16 %v148
    %v181 = vunpack.c.h.b16 %v148
    %v182 = vunpack.c.l.b16 %v149
    %v183 = vunpack.c.h.b16 %v149
    %v184 = vunpack.c.l.b16 %v150
    %v185 = vunpack.c.h.b16 %v150
    %v186 = vunpack.c.l.b16 %v151
    %v187 = vunpack.c.h.b16 %v151
    %v188 = vunpack.c.l.b16 %v152
    %v189 = vunpack.c.h.b16 %v152
    %v190 = vunpack.c.l.b16 %v153
    %v191 = vunpack.c.h.b16 %v153
    %v192 = vunpack.c.l.b16 %v154
    %v193 = vunpack.c.h.b16 %v154
    %v194 = vunpack.c.l.b16 %v155
    %v195 = vunpack.c.h.b16 %v155
    %v196 = vunpack.c.l.b16 %v156
    %v197 = vunpack.c.h.b16 %v156
    %v198 = vunpack.c.l.b16 %v157
    %v199 = vunpack.c.h.b16 %v157
    %v200 = vunpack.c.l.b16 %v158
    %v201 = vunpack.c.h.b16 %v158
    %v202 = vunpack.c.l.b16 %v159
    %v203 = vunpack.c.h.b16 %v159
    %v204 = vunpack.c.l.b16 %v160
    %v205 = vunpack.c.h.b16 %v160
    %v206 = vunpack.c.l.b16 %v161
    %v207 = vunpack.c.h.b16 %v161
    %v208 = vunpack.c.l.b16 %v162
    %v209 = vunpack.c.h.b16 %v162
    %v210 = vunpack.c.l.b16 %v163
    %v211 = vunpack.c.h.b16 %v163
    %v212 = vpack.c.b16 %v182, %v180
    %v213 = vpack.c.b16 %v183, %v181
    %v214 = vpack.c.b16 %v186, %v184
    %v215 = vpack.c.b16 %v187, %v185
    %v216 = vpack.c.b16 %v190, %v188
    %v217 = vpack.c.b16 %v191, %v189
    %v218 = vpack.c.b16 %v194, %v192
    %v219 = vpack.c.b16 %v195, %v193
    %v220 = vpack.c.b16 %v198, %v196
    %v221 = vpack.c.b16 %v199, %v197
    %v222 = vpack.c.b16 %v202, %v200
    %v223 = vpack.c.b16 %v203, %v201
    %v224 = vpack.c.b16 %v206, %v204
    %v225 = vpack.c.b16 %v207, %v205
    %v226 = vpack.c.b16 %v210, %v208
    %v227 = vpack.c.b16 %v211, %v209
    %244 = vmatprep.subr.bf16.mxu0 %v227
    %245 = vmatpush1.bf16.msra.mxu0 %v226
    %246 = vmatprep.subr.bf16.mxu0 %v225
    %247 = vmatpush1.bf16.msra.mxu0 %v224
    %248 = vmatprep.subr.bf16.mxu0 %v223
    %249 = vmatpush1.bf16.msra.mxu0 %v222
    %250 = vmatprep.subr.bf16.mxu0 %v221
    %251 = vmatpush1.bf16.msra.mxu0 %v220
    %252 = vmatprep.subr.bf16.mxu0 %v219
    %253 = vmatpush1.bf16.msra.mxu0 %v218
    %254 = vmatprep.subr.bf16.mxu0 %v217
    %255 = vmatpush1.bf16.msra.mxu0 %v216
    %256 = vmatprep.subr.bf16.mxu0 %v215
    %257 = vmatpush1.bf16.msra.mxu0 %v214
    %258 = vmatprep.subr.bf16.mxu0 %v213
    %259 = vmatpush1.bf16.msra.mxu0 %v212
    %260 = vmatprep.subr.bf16.mxu0 0
    %261 = vmatpush2.bf16.msra.mxu0 0
    %262 = vmatprep.subr.bf16.mxu0 0
    %263 = vmatpush2.bf16.msra.mxu0 0
    %264 = vmatprep.subr.bf16.mxu0 0
    %265 = vmatpush2.bf16.msra.mxu0 0
    %266 = vmatprep.subr.bf16.mxu0 0
    %267 = vmatpush2.bf16.msra.mxu0 0
    %268 = vmatprep.subr.bf16.mxu0 0
    %269 = vmatpush2.bf16.msra.mxu0 0
    %270 = vmatprep.subr.bf16.mxu0 0
    %271 = vmatpush2.bf16.msra.mxu0 0
    %272 = vmatprep.subr.bf16.mxu0 0
    %273 = vmatpush2.bf16.msra.mxu0 0
    %274 = vmatprep.subr.bf16.mxu0 0
    %275 = vmatpush2.bf16.msra.mxu0 0
    %276 = vmatprep.mubr.bf16.mxu0 0
    %277 = vmatmul.mubr.bf16.gmra.mxu0 %v147
    %v278 = vpop.f32.mrf.mxu0
    %v279 = vadd.f32 0.0, %v278
    %v280 = vpop.f32.mrf.mxu0
    %v281 = vadd.f32 0.0, %v280
    %v282 = vpop.f32.mrf.mxu0
    %v283 = vpop.f32.mrf.mxu0
    %284 = vdwg.mxu0
    %v285 = vpack.c.bf16 %v279, %v279
    %v286 = vpack.c.bf16 %v281, %v281
    %v287 = vld [vmem:[#allocation7] sm:$0x3]
    %v289 = vlaneseq
    %v290 = vshrl.u32 %v289, 7
    %v291 = vsub.s32 0, %v290
    %v292 = vrot.slane %v287, %v291
    %v293 = vlaneseq
    %v294 = vshrl.u32 %v293, 7
    %v295 = vsub.s32 1, %v294
    %v296 = vrot.slane %v287, %v295
    %v299 = vpack.c.bf16 %v292, %v292
    %v300 = vpack.c.bf16 %v296, %v296
    %v302 = vpack.i.b16 %v299, %v299
    %v304 = vlaneseq
    %v305 = vshrl.u32 %v304, 7
    %v306 = vsub.s32 0, %v305
    %v307 = vrot.slane %v302, %v306
    %v309 = vpack.i.b16 %v300, %v300
    %v311 = vlaneseq
    %v312 = vshrl.u32 %v311, 7
    %v313 = vsub.s32 0, %v312
    %v314 = vrot.slane %v309, %v313
    %v315 = vadd.bf16 %v285, %v307
    %v316 = vadd.bf16 %v286, %v314
    %v317 = vmul.bf16 %v315, 1045249613
    %v318 = vmul.bf16 %v316, 1045249613
    %v319 = vmax.bf16 %v315, %v317
    %v320 = vmax.bf16 %v316, %v318
    %v321 = vld [vmem:[#allocation8] sm:$0xff]
    %v322 = vld [vmem:[#allocation8 + $0x8] sm:$0xff]
    %v323 = vld [vmem:[#allocation8 + $0x10] sm:$0xff]
    %v324 = vld [vmem:[#allocation8 + $0x18] sm:$0xff]
    %v325 = vld [vmem:[#allocation8 + $0x20] sm:$0xff]
    %v326 = vld [vmem:[#allocation8 + $0x28] sm:$0xff]
    %v327 = vld [vmem:[#allocation8 + $0x30] sm:$0xff]
    %v328 = vld [vmem:[#allocation8 + $0x38] sm:$0xff]
    %v329 = vld [vmem:[#allocation8 + $0x40] sm:$0xff]
    %v330 = vld [vmem:[#allocation8 + $0x48] sm:$0xff]
    %v331 = vld [vmem:[#allocation8 + $0x50] sm:$0xff]
    %v332 = vld [vmem:[#allocation8 + $0x58] sm:$0xff]
    %v333 = vld [vmem:[#allocation8 + $0x60] sm:$0xff]
    %v334 = vld [vmem:[#allocation8 + $0x68] sm:$0xff]
    %v335 = vld [vmem:[#allocation8 + $0x70] sm:$0xff]
    %v336 = vld [vmem:[#allocation8 + $0x78] sm:$0xff]
    %v337 = vld [vmem:[#allocation8 + $0x80] sm:$0xff]
    %v338 = vld [vmem:[#allocation8 + $0x88] sm:$0xff]
    %v339 = vld [vmem:[#allocation8 + $0x90] sm:$0xff]
    %v340 = vld [vmem:[#allocation8 + $0x98] sm:$0xff]
    %v341 = vld [vmem:[#allocation8 + $0xa0] sm:$0xff]
    %v342 = vld [vmem:[#allocation8 + $0xa8] sm:$0xff]
    %v343 = vld [vmem:[#allocation8 + $0xb0] sm:$0xff]
    %v344 = vld [vmem:[#allocation8 + $0xb8] sm:$0xff]
    %v345 = vld [vmem:[#allocation8 + $0xc0] sm:$0xff]
    %v346 = vld [vmem:[#allocation8 + $0xc8] sm:$0xff]
    %v347 = vld [vmem:[#allocation8 + $0xd0] sm:$0xff]
    %v348 = vld [vmem:[#allocation8 + $0xd8] sm:$0xff]
    %v349 = vld [vmem:[#allocation8 + $0xe0] sm:$0xff]
    %v350 = vld [vmem:[#allocation8 + $0xe8] sm:$0xff]
    %v351 = vld [vmem:[#allocation8 + $0xf0] sm:$0xff]
    %v352 = vld [vmem:[#allocation8 + $0xf8] sm:$0xff]
    %v353 = vld [vmem:[#allocation8 + $0x100] sm:$0xff]
    %v354 = vld [vmem:[#allocation8 + $0x108] sm:$0xff]
    %v355 = vld [vmem:[#allocation8 + $0x110] sm:$0xff]
    %v356 = vld [vmem:[#allocation8 + $0x118] sm:$0xff]
    %v357 = vld [vmem:[#allocation8 + $0x120] sm:$0xff]
    %v358 = vld [vmem:[#allocation8 + $0x128] sm:$0xff]
    %v359 = vld [vmem:[#allocation8 + $0x130] sm:$0xff]
    %v360 = vld [vmem:[#allocation8 + $0x138] sm:$0xff]
    %v361 = vld [vmem:[#allocation8 + $0x140] sm:$0xff]
    %v362 = vld [vmem:[#allocation8 + $0x148] sm:$0xff]
    %v363 = vld [vmem:[#allocation8 + $0x150] sm:$0xff]
    %v364 = vld [vmem:[#allocation8 + $0x158] sm:$0xff]
    %v365 = vld [vmem:[#allocation8 + $0x160] sm:$0xff]
    %v366 = vld [vmem:[#allocation8 + $0x168] sm:$0xff]
    %v367 = vld [vmem:[#allocation8 + $0x170] sm:$0xff]
    %v368 = vld [vmem:[#allocation8 + $0x178] sm:$0xff]
    %v369 = vld [vmem:[#allocation8 + $0x180] sm:$0xff]
    %v370 = vld [vmem:[#allocation8 + $0x188] sm:$0xff]
    %v371 = vld [vmem:[#allocation8 + $0x190] sm:$0xff]
    %v372 = vld [vmem:[#allocation8 + $0x198] sm:$0xff]
    %v373 = vld [vmem:[#allocation8 + $0x1a0] sm:$0xff]
    %v374 = vld [vmem:[#allocation8 + $0x1a8] sm:$0xff]
    %v375 = vld [vmem:[#allocation8 + $0x1b0] sm:$0xff]
    %v376 = vld [vmem:[#allocation8 + $0x1b8] sm:$0xff]
    %v377 = vld [vmem:[#allocation8 + $0x1c0] sm:$0xff]
    %v378 = vld [vmem:[#allocation8 + $0x1c8] sm:$0xff]
    %v379 = vld [vmem:[#allocation8 + $0x1d0] sm:$0xff]
    %v380 = vld [vmem:[#allocation8 + $0x1d8] sm:$0xff]
    %v381 = vld [vmem:[#allocation8 + $0x1e0] sm:$0xff]
    %v382 = vld [vmem:[#allocation8 + $0x1e8] sm:$0xff]
    %v383 = vld [vmem:[#allocation8 + $0x1f0] sm:$0xff]
    %v384 = vld [vmem:[#allocation8 + $0x1f8] sm:$0xff]
    %v449 = vunpack.c.l.b16 %v321
    %v450 = vunpack.c.h.b16 %v321
    %v451 = vunpack.c.l.b16 %v322
    %v452 = vunpack.c.h.b16 %v322
    %v453 = vunpack.c.l.b16 %v323
    %v454 = vunpack.c.h.b16 %v323
    %v455 = vunpack.c.l.b16 %v324
    %v456 = vunpack.c.h.b16 %v324
    %v457 = vunpack.c.l.b16 %v325
    %v458 = vunpack.c.h.b16 %v325
    %v459 = vunpack.c.l.b16 %v326
    %v460 = vunpack.c.h.b16 %v326
    %v461 = vunpack.c.l.b16 %v327
    %v462 = vunpack.c.h.b16 %v327
    %v463 = vunpack.c.l.b16 %v328
    %v464 = vunpack.c.h.b16 %v328
    %v465 = vunpack.c.l.b16 %v329
    %v466 = vunpack.c.h.b16 %v329
    %v467 = vunpack.c.l.b16 %v330
    %v468 = vunpack.c.h.b16 %v330
    %v469 = vunpack.c.l.b16 %v331
    %v470 = vunpack.c.h.b16 %v331
    %v471 = vunpack.c.l.b16 %v332
    %v472 = vunpack.c.h.b16 %v332
    %v473 = vunpack.c.l.b16 %v333
    %v474 = vunpack.c.h.b16 %v333
    %v475 = vunpack.c.l.b16 %v334
    %v476 = vunpack.c.h.b16 %v334
    %v477 = vunpack.c.l.b16 %v335
    %v478 = vunpack.c.h.b16 %v335
    %v479 = vunpack.c.l.b16 %v336
    %v480 = vunpack.c.h.b16 %v336
    %v481 = vunpack.c.l.b16 %v337
    %v482 = vunpack.c.h.b16 %v337
    %v483 = vunpack.c.l.b16 %v338
    %v484 = vunpack.c.h.b16 %v338
    %v485 = vunpack.c.l.b16 %v339
    %v486 = vunpack.c.h.b16 %v339
    %v487 = vunpack.c.l.b16 %v340
    %v488 = vunpack.c.h.b16 %v340
    %v489 = vunpack.c.l.b16 %v341
    %v490 = vunpack.c.h.b16 %v341
    %v491 = vunpack.c.l.b16 %v342
    %v492 = vunpack.c.h.b16 %v342
    %v493 = vunpack.c.l.b16 %v343
    %v494 = vunpack.c.h.b16 %v343
    %v495 = vunpack.c.l.b16 %v344
    %v496 = vunpack.c.h.b16 %v344
    %v497 = vunpack.c.l.b16 %v345
    %v498 = vunpack.c.h.b16 %v345
    %v499 = vunpack.c.l.b16 %v346
    %v500 = vunpack.c.h.b16 %v346
    %v501 = vunpack.c.l.b16 %v347
    %v502 = vunpack.c.h.b16 %v347
    %v503 = vunpack.c.l.b16 %v348
    %v504 = vunpack.c.h.b16 %v348
    %v505 = vunpack.c.l.b16 %v349
    %v506 = vunpack.c.h.b16 %v349
    %v507 = vunpack.c.l.b16 %v350
    %v508 = vunpack.c.h.b16 %v350
    %v509 = vunpack.c.l.b16 %v351
    %v510 = vunpack.c.h.b16 %v351
    %v511 = vunpack.c.l.b16 %v352
    %v512 = vunpack.c.h.b16 %v352
    %v513 = vunpack.c.l.b16 %v353
    %v514 = vunpack.c.h.b16 %v353
    %v515 = vunpack.c.l.b16 %v354
    %v516 = vunpack.c.h.b16 %v354
    %v517 = vunpack.c.l.b16 %v355
    %v518 = vunpack.c.h.b16 %v355
    %v519 = vunpack.c.l.b16 %v356
    %v520 = vunpack.c.h.b16 %v356
    %v521 = vunpack.c.l.b16 %v357
    %v522 = vunpack.c.h.b16 %v357
    %v523 = vunpack.c.l.b16 %v358
    %v524 = vunpack.c.h.b16 %v358
    %v525 = vunpack.c.l.b16 %v359
    %v526 = vunpack.c.h.b16 %v359
    %v527 = vunpack.c.l.b16 %v360
    %v528 = vunpack.c.h.b16 %v360
    %v529 = vunpack.c.l.b16 %v361
    %v530 = vunpack.c.h.b16 %v361
    %v531 = vunpack.c.l.b16 %v362
    %v532 = vunpack.c.h.b16 %v362
    %v533 = vunpack.c.l.b16 %v363
    %v534 = vunpack.c.h.b16 %v363
    %v535 = vunpack.c.l.b16 %v364
    %v536 = vunpack.c.h.b16 %v364
    %v537 = vunpack.c.l.b16 %v365
    %v538 = vunpack.c.h.b16 %v365
    %v539 = vunpack.c.l.b16 %v366
    %v540 = vunpack.c.h.b16 %v366
    %v541 = vunpack.c.l.b16 %v367
    %v542 = vunpack.c.h.b16 %v367
    %v543 = vunpack.c.l.b16 %v368
    %v544 = vunpack.c.h.b16 %v368
    %v545 = vunpack.c.l.b16 %v369
    %v546 = vunpack.c.h.b16 %v369
    %v547 = vunpack.c.l.b16 %v370
    %v548 = vunpack.c.h.b16 %v370
    %v549 = vunpack.c.l.b16 %v371
    %v550 = vunpack.c.h.b16 %v371
    %v551 = vunpack.c.l.b16 %v372
    %v552 = vunpack.c.h.b16 %v372
    %v553 = vunpack.c.l.b16 %v373
    %v554 = vunpack.c.h.b16 %v373
    %v555 = vunpack.c.l.b16 %v374
    %v556 = vunpack.c.h.b16 %v374
    %v557 = vunpack.c.l.b16 %v375
    %v558 = vunpack.c.h.b16 %v375
    %v559 = vunpack.c.l.b16 %v376
    %v560 = vunpack.c.h.b16 %v376
    %v561 = vunpack.c.l.b16 %v377
    %v562 = vunpack.c.h.b16 %v377
    %v563 = vunpack.c.l.b16 %v378
    %v564 = vunpack.c.h.b16 %v378
    %v565 = vunpack.c.l.b16 %v379
    %v566 = vunpack.c.h.b16 %v379
    %v567 = vunpack.c.l.b16 %v380
    %v568 = vunpack.c.h.b16 %v380
    %v569 = vunpack.c.l.b16 %v381
    %v570 = vunpack.c.h.b16 %v381
    %v571 = vunpack.c.l.b16 %v382
    %v572 = vunpack.c.h.b16 %v382
    %v573 = vunpack.c.l.b16 %v383
    %v574 = vunpack.c.h.b16 %v383
    %v575 = vunpack.c.l.b16 %v384
    %v576 = vunpack.c.h.b16 %v384
    %v577 = vpack.c.b16 %v453, %v449
    %v578 = vpack.c.b16 %v454, %v450
    %v579 = vpack.c.b16 %v455, %v451
    %v580 = vpack.c.b16 %v456, %v452
    %v581 = vpack.c.b16 %v461, %v457
    %v582 = vpack.c.b16 %v462, %v458
    %v583 = vpack.c.b16 %v463, %v459
    %v584 = vpack.c.b16 %v464, %v460
    %v585 = vpack.c.b16 %v469, %v465
    %v586 = vpack.c.b16 %v470, %v466
    %v587 = vpack.c.b16 %v471, %v467
    %v588 = vpack.c.b16 %v472, %v468
    %v589 = vpack.c.b16 %v477, %v473
    %v590 = vpack.c.b16 %v478, %v474
    %v591 = vpack.c.b16 %v479, %v475
    %v592 = vpack.c.b16 %v480, %v476
    %v593 = vpack.c.b16 %v485, %v481
    %v594 = vpack.c.b16 %v486, %v482
    %v595 = vpack.c.b16 %v487, %v483
    %v596 = vpack.c.b16 %v488, %v484
    %v597 = vpack.c.b16 %v493, %v489
    %v598 = vpack.c.b16 %v494, %v490
    %v599 = vpack.c.b16 %v495, %v491
    %v600 = vpack.c.b16 %v496, %v492
    %v601 = vpack.c.b16 %v501, %v497
    %v602 = vpack.c.b16 %v502, %v498
    %v603 = vpack.c.b16 %v503, %v499
    %v604 = vpack.c.b16 %v504, %v500
    %v605 = vpack.c.b16 %v509, %v505
    %v606 = vpack.c.b16 %v510, %v506
    %v607 = vpack.c.b16 %v511, %v507
    %v608 = vpack.c.b16 %v512, %v508
    %v609 = vpack.c.b16 %v517, %v513
    %v610 = vpack.c.b16 %v518, %v514
    %v611 = vpack.c.b16 %v519, %v515
    %v612 = vpack.c.b16 %v520, %v516
    %v613 = vpack.c.b16 %v525, %v521
    %v614 = vpack.c.b16 %v526, %v522
    %v615 = vpack.c.b16 %v527, %v523
    %v616 = vpack.c.b16 %v528, %v524
    %v617 = vpack.c.b16 %v533, %v529
    %v618 = vpack.c.b16 %v534, %v530
    %v619 = vpack.c.b16 %v535, %v531
    %v620 = vpack.c.b16 %v536, %v532
    %v621 = vpack.c.b16 %v541, %v537
    %v622 = vpack.c.b16 %v542, %v538
    %v623 = vpack.c.b16 %v543, %v539
    %v624 = vpack.c.b16 %v544, %v540
    %v625 = vpack.c.b16 %v549, %v545
    %v626 = vpack.c.b16 %v550, %v546
    %v627 = vpack.c.b16 %v551, %v547
    %v628 = vpack.c.b16 %v552, %v548
    %v629 = vpack.c.b16 %v557, %v553
    %v630 = vpack.c.b16 %v558, %v554
    %v631 = vpack.c.b16 %v559, %v555
    %v632 = vpack.c.b16 %v560, %v556
    %v633 = vpack.c.b16 %v565, %v561
    %v634 = vpack.c.b16 %v566, %v562
    %v635 = vpack.c.b16 %v567, %v563
    %v636 = vpack.c.b16 %v568, %v564
    %v637 = vpack.c.b16 %v573, %v569
    %v638 = vpack.c.b16 %v574, %v570
    %v639 = vpack.c.b16 %v575, %v571
    %v640 = vpack.c.b16 %v576, %v572
    %705 = vmatprep.subr.bf16.mxu0 %v606
    %706 = vmatpush1.bf16.msra.mxu0 %v605
    %707 = vmatprep.subr.bf16.mxu0 %v602
    %708 = vmatpush1.bf16.msra.mxu0 %v601
    %709 = vmatprep.subr.bf16.mxu0 %v598
    %710 = vmatpush1.bf16.msra.mxu0 %v597
    %711 = vmatprep.subr.bf16.mxu0 %v594
    %712 = vmatpush1.bf16.msra.mxu0 %v593
    %713 = vmatprep.subr.bf16.mxu0 %v590
    %714 = vmatpush1.bf16.msra.mxu0 %v589
    %715 = vmatprep.subr.bf16.mxu0 %v586
    %716 = vmatpush1.bf16.msra.mxu0 %v585
    %717 = vmatprep.subr.bf16.mxu0 %v582
    %718 = vmatpush1.bf16.msra.mxu0 %v581
    %719 = vmatprep.subr.bf16.mxu0 %v578
    %720 = vmatpush1.bf16.msra.mxu0 %v577
    %721 = vmatprep.subr.bf16.mxu0 %v638
    %722 = vmatpush2.bf16.msra.mxu0 %v637
    %723 = vmatprep.subr.bf16.mxu0 %v634
    %724 = vmatpush2.bf16.msra.mxu0 %v633
    %725 = vmatprep.subr.bf16.mxu0 %v630
    %726 = vmatpush2.bf16.msra.mxu0 %v629
    %727 = vmatprep.subr.bf16.mxu0 %v626
    %728 = vmatpush2.bf16.msra.mxu0 %v625
    %729 = vmatprep.subr.bf16.mxu0 %v622
    %730 = vmatpush2.bf16.msra.mxu0 %v621
    %731 = vmatprep.subr.bf16.mxu0 %v618
    %732 = vmatpush2.bf16.msra.mxu0 %v617
    %733 = vmatprep.subr.bf16.mxu0 %v614
    %734 = vmatpush2.bf16.msra.mxu0 %v613
    %735 = vmatprep.subr.bf16.mxu0 %v610
    %736 = vmatpush2.bf16.msra.mxu0 %v609
    %737 = vmatprep.mubr.bf16.mxu0 %v320
    %738 = vmatmul.mubr.bf16.gmra.mxu0 %v319
    %v739 = vpop.f32.mrf.mxu0
    %v740 = vadd.f32 0.0, %v739
    %v741 = vpop.f32.mrf.mxu0
    %v742 = vadd.f32 0.0, %v741
    %v743 = vpop.f32.mrf.mxu0
    %v744 = vpop.f32.mrf.mxu0
    %745 = vdwg.mxu0
    %746 = vmatprep.subr.bf16.mxu0 %v608
    %747 = vmatpush1.bf16.msra.mxu0 %v607
    %748 = vmatprep.subr.bf16.mxu0 %v604
    %749 = vmatpush1.bf16.msra.mxu0 %v603
    %750 = vmatprep.subr.bf16.mxu0 %v600
    %751 = vmatpush1.bf16.msra.mxu0 %v599
    %752 = vmatprep.subr.bf16.mxu0 %v596
    %753 = vmatpush1.bf16.msra.mxu0 %v595
    %754 = vmatprep.subr.bf16.mxu0 %v592
    %755 = vmatpush1.bf16.msra.mxu0 %v591
    %756 = vmatprep.subr.bf16.mxu0 %v588
    %757 = vmatpush1.bf16.msra.mxu0 %v587
    %758 = vmatprep.subr.bf16.mxu0 %v584
    %759 = vmatpush1.bf16.msra.mxu0 %v583
    %760 = vmatprep.subr.bf16.mxu0 %v580
    %761 = vmatpush1.bf16.msra.mxu0 %v579
    %762 = vmatprep.subr.bf16.mxu0 %v640
    %763 = vmatpush2.bf16.msra.mxu0 %v639
    %764 = vmatprep.subr.bf16.mxu0 %v636
    %765 = vmatpush2.bf16.msra.mxu0 %v635
    %766 = vmatprep.subr.bf16.mxu0 %v632
    %767 = vmatpush2.bf16.msra.mxu0 %v631
    %768 = vmatprep.subr.bf16.mxu0 %v628
    %769 = vmatpush2.bf16.msra.mxu0 %v627
    %770 = vmatprep.subr.bf16.mxu0 %v624
    %771 = vmatpush2.bf16.msra.mxu0 %v623
    %772 = vmatprep.subr.bf16.mxu0 %v620
    %773 = vmatpush2.bf16.msra.mxu0 %v619
    %774 = vmatprep.subr.bf16.mxu0 %v616
    %775 = vmatpush2.bf16.msra.mxu0 %v615
    %776 = vmatprep.subr.bf16.mxu0 %v612
    %777 = vmatpush2.bf16.msra.mxu0 %v611
    %778 = vmatprep.mubr.bf16.mxu0 %v320
    %779 = vmatmul.mubr.bf16.gmra.mxu0 %v319
    %v780 = vpop.f32.mrf.mxu0
    %v781 = vadd.f32 0.0, %v780
    %v782 = vpop.f32.mrf.mxu0
    %v783 = vadd.f32 0.0, %v782
    %v784 = vpop.f32.mrf.mxu0
    %v785 = vpop.f32.mrf.mxu0
    %786 = vdwg.mxu0
    %v787 = vpack.c.bf16 %v740, %v740
    %v788 = vpack.c.bf16 %v742, %v742
    %v789 = vpack.c.bf16 %v781, %v781
    %v790 = vpack.c.bf16 %v783, %v783
    %v791 = vld [vmem:[#allocation10] sm:$0xf]
    %v793 = vlaneseq
    %v794 = vshrl.u32 %v793, 7
    %v795 = vsub.s32 0, %v794
    %v796 = vrot.slane %v791, %v795
    %v797 = vlaneseq
    %v798 = vshrl.u32 %v797, 7
    %v799 = vsub.s32 1, %v798
    %v800 = vrot.slane %v791, %v799
    %v801 = vlaneseq
    %v802 = vshrl.u32 %v801, 7
    %v803 = vsub.s32 2, %v802
    %v804 = vrot.slane %v791, %v803
    %v805 = vlaneseq
    %v806 = vshrl.u32 %v805, 7
    %v807 = vsub.s32 3, %v806
    %v808 = vrot.slane %v791, %v807
    %v813 = vpack.c.bf16 %v796, %v796
    %v814 = vpack.c.bf16 %v800, %v800
    %v815 = vpack.c.bf16 %v804, %v804
    %v816 = vpack.c.bf16 %v808, %v808
    %v818 = vpack.i.b16 %v813, %v813
    %v820 = vlaneseq
    %v821 = vshrl.u32 %v820, 7
    %v822 = vsub.s32 0, %v821
    %v823 = vrot.slane %v818, %v822
    %v825 = vpack.i.b16 %v814, %v814
    %v827 = vlaneseq
    %v828 = vshrl.u32 %v827, 7
    %v829 = vsub.s32 0, %v828
    %v830 = vrot.slane %v825, %v829
    %v832 = vpack.i.b16 %v815, %v815
    %v834 = vlaneseq
    %v835 = vshrl.u32 %v834, 7
    %v836 = vsub.s32 0, %v835
    %v837 = vrot.slane %v832, %v836
    %v839 = vpack.i.b16 %v816, %v816
    %v841 = vlaneseq
    %v842 = vshrl.u32 %v841, 7
    %v843 = vsub.s32 0, %v842
    %v844 = vrot.slane %v839, %v843
    %v845 = vadd.bf16 %v787, %v823
    %v846 = vadd.bf16 %v788, %v830
    %v847 = vadd.bf16 %v789, %v837
    %v848 = vadd.bf16 %v790, %v844
    %v849 = vmul.bf16 %v845, 1045249613
    %v850 = vmul.bf16 %v846, 1045249613
    %v851 = vmul.bf16 %v847, 1045249613
    %v852 = vmul.bf16 %v848, 1045249613
    %v853 = vmax.bf16 %v845, %v849
    %v854 = vmax.bf16 %v846, %v850
    %v855 = vmax.bf16 %v847, %v851
    %v856 = vmax.bf16 %v848, %v852
    %v857 = vld [vmem:[#allocation11] sm:$0xff]
    %v858 = vld [vmem:[#allocation11 + $0x8] sm:$0xff]
    %v859 = vld [vmem:[#allocation11 + $0x10] sm:$0xff]
    %v860 = vld [vmem:[#allocation11 + $0x18] sm:$0xff]
    %v861 = vld [vmem:[#allocation11 + $0x20] sm:$0xff]
    %v862 = vld [vmem:[#allocation11 + $0x28] sm:$0xff]
    %v863 = vld [vmem:[#allocation11 + $0x30] sm:$0xff]
    %v864 = vld [vmem:[#allocation11 + $0x38] sm:$0xff]
    %v865 = vld [vmem:[#allocation11 + $0x40] sm:$0xff]
    %v866 = vld [vmem:[#allocation11 + $0x48] sm:$0xff]
    %v867 = vld [vmem:[#allocation11 + $0x50] sm:$0xff]
    %v868 = vld [vmem:[#allocation11 + $0x58] sm:$0xff]
    %v869 = vld [vmem:[#allocation11 + $0x60] sm:$0xff]
    %v870 = vld [vmem:[#allocation11 + $0x68] sm:$0xff]
    %v871 = vld [vmem:[#allocation11 + $0x70] sm:$0xff]
    %v872 = vld [vmem:[#allocation11 + $0x78] sm:$0xff]
    %v873 = vld [vmem:[#allocation11 + $0x80] sm:$0xff]
    %v874 = vld [vmem:[#allocation11 + $0x88] sm:$0xff]
    %v875 = vld [vmem:[#allocation11 + $0x90] sm:$0xff]
    %v876 = vld [vmem:[#allocation11 + $0x98] sm:$0xff]
    %v877 = vld [vmem:[#allocation11 + $0xa0] sm:$0xff]
    %v878 = vld [vmem:[#allocation11 + $0xa8] sm:$0xff]
    %v879 = vld [vmem:[#allocation11 + $0xb0] sm:$0xff]
    %v880 = vld [vmem:[#allocation11 + $0xb8] sm:$0xff]
    %v881 = vld [vmem:[#allocation11 + $0xc0] sm:$0xff]
    %v882 = vld [vmem:[#allocation11 + $0xc8] sm:$0xff]
    %v883 = vld [vmem:[#allocation11 + $0xd0] sm:$0xff]
    %v884 = vld [vmem:[#allocation11 + $0xd8] sm:$0xff]
    %v885 = vld [vmem:[#allocation11 + $0xe0] sm:$0xff]
    %v886 = vld [vmem:[#allocation11 + $0xe8] sm:$0xff]
    %v887 = vld [vmem:[#allocation11 + $0xf0] sm:$0xff]
    %v888 = vld [vmem:[#allocation11 + $0xf8] sm:$0xff]
    %v889 = vld [vmem:[#allocation11 + $0x100] sm:$0xff]
    %v890 = vld [vmem:[#allocation11 + $0x108] sm:$0xff]
    %v891 = vld [vmem:[#allocation11 + $0x110] sm:$0xff]
    %v892 = vld [vmem:[#allocation11 + $0x118] sm:$0xff]
    %v893 = vld [vmem:[#allocation11 + $0x120] sm:$0xff]
    %v894 = vld [vmem:[#allocation11 + $0x128] sm:$0xff]
    %v895 = vld [vmem:[#allocation11 + $0x130] sm:$0xff]
    %v896 = vld [vmem:[#allocation11 + $0x138] sm:$0xff]
    %v897 = vld [vmem:[#allocation11 + $0x140] sm:$0xff]
    %v898 = vld [vmem:[#allocation11 + $0x148] sm:$0xff]
    %v899 = vld [vmem:[#allocation11 + $0x150] sm:$0xff]
    %v900 = vld [vmem:[#allocation11 + $0x158] sm:$0xff]
    %v901 = vld [vmem:[#allocation11 + $0x160] sm:$0xff]
    %v902 = vld [vmem:[#allocation11 + $0x168] sm:$0xff]
    %v903 = vld [vmem:[#allocation11 + $0x170] sm:$0xff]
    %v904 = vld [vmem:[#allocation11 + $0x178] sm:$0xff]
    %v905 = vld [vmem:[#allocation11 + $0x180] sm:$0xff]
    %v906 = vld [vmem:[#allocation11 + $0x188] sm:$0xff]
    %v907 = vld [vmem:[#allocation11 + $0x190] sm:$0xff]
    %v908 = vld [vmem:[#allocation11 + $0x198] sm:$0xff]
    %v909 = vld [vmem:[#allocation11 + $0x1a0] sm:$0xff]
    %v910 = vld [vmem:[#allocation11 + $0x1a8] sm:$0xff]
    %v911 = vld [vmem:[#allocation11 + $0x1b0] sm:$0xff]
    %v912 = vld [vmem:[#allocation11 + $0x1b8] sm:$0xff]
    %v913 = vld [vmem:[#allocation11 + $0x1c0] sm:$0xff]
    %v914 = vld [vmem:[#allocation11 + $0x1c8] sm:$0xff]
    %v915 = vld [vmem:[#allocation11 + $0x1d0] sm:$0xff]
    %v916 = vld [vmem:[#allocation11 + $0x1d8] sm:$0xff]
    %v917 = vld [vmem:[#allocation11 + $0x1e0] sm:$0xff]
    %v918 = vld [vmem:[#allocation11 + $0x1e8] sm:$0xff]
    %v919 = vld [vmem:[#allocation11 + $0x1f0] sm:$0xff]
    %v920 = vld [vmem:[#allocation11 + $0x1f8] sm:$0xff]
    %v921 = vld [vmem:[#allocation11 + $0x200] sm:$0xff]
    %v922 = vld [vmem:[#allocation11 + $0x208] sm:$0xff]
    %v923 = vld [vmem:[#allocation11 + $0x210] sm:$0xff]
    %v924 = vld [vmem:[#allocation11 + $0x218] sm:$0xff]
    %v925 = vld [vmem:[#allocation11 + $0x220] sm:$0xff]
    %v926 = vld [vmem:[#allocation11 + $0x228] sm:$0xff]
    %v927 = vld [vmem:[#allocation11 + $0x230] sm:$0xff]
    %v928 = vld [vmem:[#allocation11 + $0x238] sm:$0xff]
    %v929 = vld [vmem:[#allocation11 + $0x240] sm:$0xff]
    %v930 = vld [vmem:[#allocation11 + $0x248] sm:$0xff]
    %v931 = vld [vmem:[#allocation11 + $0x250] sm:$0xff]
    %v932 = vld [vmem:[#allocation11 + $0x258] sm:$0xff]
    %v933 = vld [vmem:[#allocation11 + $0x260] sm:$0xff]
    %v934 = vld [vmem:[#allocation11 + $0x268] sm:$0xff]
    %v935 = vld [vmem:[#allocation11 + $0x270] sm:$0xff]
    %v936 = vld [vmem:[#allocation11 + $0x278] sm:$0xff]
    %v937 = vld [vmem:[#allocation11 + $0x280] sm:$0xff]
    %v938 = vld [vmem:[#allocation11 + $0x288] sm:$0xff]
    %v939 = vld [vmem:[#allocation11 + $0x290] sm:$0xff]
    %v940 = vld [vmem:[#allocation11 + $0x298] sm:$0xff]
    %v941 = vld [vmem:[#allocation11 + $0x2a0] sm:$0xff]
    %v942 = vld [vmem:[#allocation11 + $0x2a8] sm:$0xff]
    %v943 = vld [vmem:[#allocation11 + $0x2b0] sm:$0xff]
    %v944 = vld [vmem:[#allocation11 + $0x2b8] sm:$0xff]
    %v945 = vld [vmem:[#allocation11 + $0x2c0] sm:$0xff]
    %v946 = vld [vmem:[#allocation11 + $0x2c8] sm:$0xff]
    %v947 = vld [vmem:[#allocation11 + $0x2d0] sm:$0xff]
    %v948 = vld [vmem:[#allocation11 + $0x2d8] sm:$0xff]
    %v949 = vld [vmem:[#allocation11 + $0x2e0] sm:$0xff]
    %v950 = vld [vmem:[#allocation11 + $0x2e8] sm:$0xff]
    %v951 = vld [vmem:[#allocation11 + $0x2f0] sm:$0xff]
    %v952 = vld [vmem:[#allocation11 + $0x2f8] sm:$0xff]
    %v953 = vld [vmem:[#allocation11 + $0x300] sm:$0xff]
    %v954 = vld [vmem:[#allocation11 + $0x308] sm:$0xff]
    %v955 = vld [vmem:[#allocation11 + $0x310] sm:$0xff]
    %v956 = vld [vmem:[#allocation11 + $0x318] sm:$0xff]
    %v957 = vld [vmem:[#allocation11 + $0x320] sm:$0xff]
    %v958 = vld [vmem:[#allocation11 + $0x328] sm:$0xff]
    %v959 = vld [vmem:[#allocation11 + $0x330] sm:$0xff]
    %v960 = vld [vmem:[#allocation11 + $0x338] sm:$0xff]
    %v961 = vld [vmem:[#allocation11 + $0x340] sm:$0xff]
    %v962 = vld [vmem:[#allocation11 + $0x348] sm:$0xff]
    %v963 = vld [vmem:[#allocation11 + $0x350] sm:$0xff]
    %v964 = vld [vmem:[#allocation11 + $0x358] sm:$0xff]
    %v965 = vld [vmem:[#allocation11 + $0x360] sm:$0xff]
    %v966 = vld [vmem:[#allocation11 + $0x368] sm:$0xff]
    %v967 = vld [vmem:[#allocation11 + $0x370] sm:$0xff]
    %v968 = vld [vmem:[#allocation11 + $0x378] sm:$0xff]
    %v969 = vld [vmem:[#allocation11 + $0x380] sm:$0xff]
    %v970 = vld [vmem:[#allocation11 + $0x388] sm:$0xff]
    %v971 = vld [vmem:[#allocation11 + $0x390] sm:$0xff]
    %v972 = vld [vmem:[#allocation11 + $0x398] sm:$0xff]
    %v973 = vld [vmem:[#allocation11 + $0x3a0] sm:$0xff]
    %v974 = vld [vmem:[#allocation11 + $0x3a8] sm:$0xff]
    %v975 = vld [vmem:[#allocation11 + $0x3b0] sm:$0xff]
    %v976 = vld [vmem:[#allocation11 + $0x3b8] sm:$0xff]
    %v977 = vld [vmem:[#allocation11 + $0x3c0] sm:$0xff]
    %v978 = vld [vmem:[#allocation11 + $0x3c8] sm:$0xff]
    %v979 = vld [vmem:[#allocation11 + $0x3d0] sm:$0xff]
    %v980 = vld [vmem:[#allocation11 + $0x3d8] sm:$0xff]
    %v981 = vld [vmem:[#allocation11 + $0x3e0] sm:$0xff]
    %v982 = vld [vmem:[#allocation11 + $0x3e8] sm:$0xff]
    %v983 = vld [vmem:[#allocation11 + $0x3f0] sm:$0xff]
    %v984 = vld [vmem:[#allocation11 + $0x3f8] sm:$0xff]
    %v985 = vld [vmem:[#allocation11 + $0x400] sm:$0xff]
    %v986 = vld [vmem:[#allocation11 + $0x408] sm:$0xff]
    %v987 = vld [vmem:[#allocation11 + $0x410] sm:$0xff]
    %v988 = vld [vmem:[#allocation11 + $0x418] sm:$0xff]
    %v989 = vld [vmem:[#allocation11 + $0x420] sm:$0xff]
    %v990 = vld [vmem:[#allocation11 + $0x428] sm:$0xff]
    %v991 = vld [vmem:[#allocation11 + $0x430] sm:$0xff]
    %v992 = vld [vmem:[#allocation11 + $0x438] sm:$0xff]
    %v993 = vld [vmem:[#allocation11 + $0x440] sm:$0xff]
    %v994 = vld [vmem:[#allocation11 + $0x448] sm:$0xff]
    %v995 = vld [vmem:[#allocation11 + $0x450] sm:$0xff]
    %v996 = vld [vmem:[#allocation11 + $0x458] sm:$0xff]
    %v997 = vld [vmem:[#allocation11 + $0x460] sm:$0xff]
    %v998 = vld [vmem:[#allocation11 + $0x468] sm:$0xff]
    %v999 = vld [vmem:[#allocation11 + $0x470] sm:$0xff]
    %v1000 = vld [vmem:[#allocation11 + $0x478] sm:$0xff]
    %v1001 = vld [vmem:[#allocation11 + $0x480] sm:$0xff]
    %v1002 = vld [vmem:[#allocation11 + $0x488] sm:$0xff]
    %v1003 = vld [vmem:[#allocation11 + $0x490] sm:$0xff]
    %v1004 = vld [vmem:[#allocation11 + $0x498] sm:$0xff]
    %v1005 = vld [vmem:[#allocation11 + $0x4a0] sm:$0xff]
    %v1006 = vld [vmem:[#allocation11 + $0x4a8] sm:$0xff]
    %v1007 = vld [vmem:[#allocation11 + $0x4b0] sm:$0xff]
    %v1008 = vld [vmem:[#allocation11 + $0x4b8] sm:$0xff]
    %v1009 = vld [vmem:[#allocation11 + $0x4c0] sm:$0xff]
    %v1010 = vld [vmem:[#allocation11 + $0x4c8] sm:$0xff]
    %v1011 = vld [vmem:[#allocation11 + $0x4d0] sm:$0xff]
    %v1012 = vld [vmem:[#allocation11 + $0x4d8] sm:$0xff]
    %v1013 = vld [vmem:[#allocation11 + $0x4e0] sm:$0xff]
    %v1014 = vld [vmem:[#allocation11 + $0x4e8] sm:$0xff]
    %v1015 = vld [vmem:[#allocation11 + $0x4f0] sm:$0xff]
    %v1016 = vld [vmem:[#allocation11 + $0x4f8] sm:$0xff]
    %v1017 = vld [vmem:[#allocation11 + $0x500] sm:$0xff]
    %v1018 = vld [vmem:[#allocation11 + $0x508] sm:$0xff]
    %v1019 = vld [vmem:[#allocation11 + $0x510] sm:$0xff]
    %v1020 = vld [vmem:[#allocation11 + $0x518] sm:$0xff]
    %v1021 = vld [vmem:[#allocation11 + $0x520] sm:$0xff]
    %v1022 = vld [vmem:[#allocation11 + $0x528] sm:$0xff]
    %v1023 = vld [vmem:[#allocation11 + $0x530] sm:$0xff]
    %v1024 = vld [vmem:[#allocation11 + $0x538] sm:$0xff]
    %v1025 = vld [vmem:[#allocation11 + $0x540] sm:$0xff]
    %v1026 = vld [vmem:[#allocation11 + $0x548] sm:$0xff]
    %v1027 = vld [vmem:[#allocation11 + $0x550] sm:$0xff]
    %v1028 = vld [vmem:[#allocation11 + $0x558] sm:$0xff]
    %v1029 = vld [vmem:[#allocation11 + $0x560] sm:$0xff]
    %v1030 = vld [vmem:[#allocation11 + $0x568] sm:$0xff]
    %v1031 = vld [vmem:[#allocation11 + $0x570] sm:$0xff]
    %v1032 = vld [vmem:[#allocation11 + $0x578] sm:$0xff]
    %v1033 = vld [vmem:[#allocation11 + $0x580] sm:$0xff]
    %v1034 = vld [vmem:[#allocation11 + $0x588] sm:$0xff]
    %v1035 = vld [vmem:[#allocation11 + $0x590] sm:$0xff]
    %v1036 = vld [vmem:[#allocation11 + $0x598] sm:$0xff]
    %v1037 = vld [vmem:[#allocation11 + $0x5a0] sm:$0xff]
    %v1038 = vld [vmem:[#allocation11 + $0x5a8] sm:$0xff]
    %v1039 = vld [vmem:[#allocation11 + $0x5b0] sm:$0xff]
    %v1040 = vld [vmem:[#allocation11 + $0x5b8] sm:$0xff]
    %v1041 = vld [vmem:[#allocation11 + $0x5c0] sm:$0xff]
    %v1042 = vld [vmem:[#allocation11 + $0x5c8] sm:$0xff]
    %v1043 = vld [vmem:[#allocation11 + $0x5d0] sm:$0xff]
    %v1044 = vld [vmem:[#allocation11 + $0x5d8] sm:$0xff]
    %v1045 = vld [vmem:[#allocation11 + $0x5e0] sm:$0xff]
    %v1046 = vld [vmem:[#allocation11 + $0x5e8] sm:$0xff]
    %v1047 = vld [vmem:[#allocation11 + $0x5f0] sm:$0xff]
    %v1048 = vld [vmem:[#allocation11 + $0x5f8] sm:$0xff]
    %v1049 = vld [vmem:[#allocation11 + $0x600] sm:$0xff]
    %v1050 = vld [vmem:[#allocation11 + $0x608] sm:$0xff]
    %v1051 = vld [vmem:[#allocation11 + $0x610] sm:$0xff]
    %v1052 = vld [vmem:[#allocation11 + $0x618] sm:$0xff]
    %v1053 = vld [vmem:[#allocation11 + $0x620] sm:$0xff]
    %v1054 = vld [vmem:[#allocation11 + $0x628] sm:$0xff]
    %v1055 = vld [vmem:[#allocation11 + $0x630] sm:$0xff]
    %v1056 = vld [vmem:[#allocation11 + $0x638] sm:$0xff]
    %v1057 = vld [vmem:[#allocation11 + $0x640] sm:$0xff]
    %v1058 = vld [vmem:[#allocation11 + $0x648] sm:$0xff]
    %v1059 = vld [vmem:[#allocation11 + $0x650] sm:$0xff]
    %v1060 = vld [vmem:[#allocation11 + $0x658] sm:$0xff]
    %v1061 = vld [vmem:[#allocation11 + $0x660] sm:$0xff]
    %v1062 = vld [vmem:[#allocation11 + $0x668] sm:$0xff]
    %v1063 = vld [vmem:[#allocation11 + $0x670] sm:$0xff]
    %v1064 = vld [vmem:[#allocation11 + $0x678] sm:$0xff]
    %v1065 = vld [vmem:[#allocation11 + $0x680] sm:$0xff]
    %v1066 = vld [vmem:[#allocation11 + $0x688] sm:$0xff]
    %v1067 = vld [vmem:[#allocation11 + $0x690] sm:$0xff]
    %v1068 = vld [vmem:[#allocation11 + $0x698] sm:$0xff]
    %v1069 = vld [vmem:[#allocation11 + $0x6a0] sm:$0xff]
    %v1070 = vld [vmem:[#allocation11 + $0x6a8] sm:$0xff]
    %v1071 = vld [vmem:[#allocation11 + $0x6b0] sm:$0xff]
    %v1072 = vld [vmem:[#allocation11 + $0x6b8] sm:$0xff]
    %v1073 = vld [vmem:[#allocation11 + $0x6c0] sm:$0xff]
    %v1074 = vld [vmem:[#allocation11 + $0x6c8] sm:$0xff]
    %v1075 = vld [vmem:[#allocation11 + $0x6d0] sm:$0xff]
    %v1076 = vld [vmem:[#allocation11 + $0x6d8] sm:$0xff]
    %v1077 = vld [vmem:[#allocation11 + $0x6e0] sm:$0xff]
    %v1078 = vld [vmem:[#allocation11 + $0x6e8] sm:$0xff]
    %v1079 = vld [vmem:[#allocation11 + $0x6f0] sm:$0xff]
    %v1080 = vld [vmem:[#allocation11 + $0x6f8] sm:$0xff]
    %v1081 = vld [vmem:[#allocation11 + $0x700] sm:$0xff]
    %v1082 = vld [vmem:[#allocation11 + $0x708] sm:$0xff]
    %v1083 = vld [vmem:[#allocation11 + $0x710] sm:$0xff]
    %v1084 = vld [vmem:[#allocation11 + $0x718] sm:$0xff]
    %v1085 = vld [vmem:[#allocation11 + $0x720] sm:$0xff]
    %v1086 = vld [vmem:[#allocation11 + $0x728] sm:$0xff]
    %v1087 = vld [vmem:[#allocation11 + $0x730] sm:$0xff]
    %v1088 = vld [vmem:[#allocation11 + $0x738] sm:$0xff]
    %v1089 = vld [vmem:[#allocation11 + $0x740] sm:$0xff]
    %v1090 = vld [vmem:[#allocation11 + $0x748] sm:$0xff]
    %v1091 = vld [vmem:[#allocation11 + $0x750] sm:$0xff]
    %v1092 = vld [vmem:[#allocation11 + $0x758] sm:$0xff]
    %v1093 = vld [vmem:[#allocation11 + $0x760] sm:$0xff]
    %v1094 = vld [vmem:[#allocation11 + $0x768] sm:$0xff]
    %v1095 = vld [vmem:[#allocation11 + $0x770] sm:$0xff]
    %v1096 = vld [vmem:[#allocation11 + $0x778] sm:$0xff]
    %v1097 = vld [vmem:[#allocation11 + $0x780] sm:$0xff]
    %v1098 = vld [vmem:[#allocation11 + $0x788] sm:$0xff]
    %v1099 = vld [vmem:[#allocation11 + $0x790] sm:$0xff]
    %v1100 = vld [vmem:[#allocation11 + $0x798] sm:$0xff]
    %v1101 = vld [vmem:[#allocation11 + $0x7a0] sm:$0xff]
    %v1102 = vld [vmem:[#allocation11 + $0x7a8] sm:$0xff]
    %v1103 = vld [vmem:[#allocation11 + $0x7b0] sm:$0xff]
    %v1104 = vld [vmem:[#allocation11 + $0x7b8] sm:$0xff]
    %v1105 = vld [vmem:[#allocation11 + $0x7c0] sm:$0xff]
    %v1106 = vld [vmem:[#allocation11 + $0x7c8] sm:$0xff]
    %v1107 = vld [vmem:[#allocation11 + $0x7d0] sm:$0xff]
    %v1108 = vld [vmem:[#allocation11 + $0x7d8] sm:$0xff]
    %v1109 = vld [vmem:[#allocation11 + $0x7e0] sm:$0xff]
    %v1110 = vld [vmem:[#allocation11 + $0x7e8] sm:$0xff]
    %v1111 = vld [vmem:[#allocation11 + $0x7f0] sm:$0xff]
    %v1112 = vld [vmem:[#allocation11 + $0x7f8] sm:$0xff]
    %v1369 = vunpack.c.l.b16 %v857
    %v1370 = vunpack.c.h.b16 %v857
    %v1371 = vunpack.c.l.b16 %v858
    %v1372 = vunpack.c.h.b16 %v858
    %v1373 = vunpack.c.l.b16 %v859
    %v1374 = vunpack.c.h.b16 %v859
    %v1375 = vunpack.c.l.b16 %v860
    %v1376 = vunpack.c.h.b16 %v860
    %v1377 = vunpack.c.l.b16 %v861
    %v1378 = vunpack.c.h.b16 %v861
    %v1379 = vunpack.c.l.b16 %v862
    %v1380 = vunpack.c.h.b16 %v862
    %v1381 = vunpack.c.l.b16 %v863
    %v1382 = vunpack.c.h.b16 %v863
    %v1383 = vunpack.c.l.b16 %v864
    %v1384 = vunpack.c.h.b16 %v864
    %v1385 = vunpack.c.l.b16 %v865
    %v1386 = vunpack.c.h.b16 %v865
    %v1387 = vunpack.c.l.b16 %v866
    %v1388 = vunpack.c.h.b16 %v866
    %v1389 = vunpack.c.l.b16 %v867
    %v1390 = vunpack.c.h.b16 %v867
    %v1391 = vunpack.c.l.b16 %v868
    %v1392 = vunpack.c.h.b16 %v868
    %v1393 = vunpack.c.l.b16 %v869
    %v1394 = vunpack.c.h.b16 %v869
    %v1395 = vunpack.c.l.b16 %v870
    %v1396 = vunpack.c.h.b16 %v870
    %v1397 = vunpack.c.l.b16 %v871
    %v1398 = vunpack.c.h.b16 %v871
    %v1399 = vunpack.c.l.b16 %v872
    %v1400 = vunpack.c.h.b16 %v872
    %v1401 = vunpack.c.l.b16 %v873
    %v1402 = vunpack.c.h.b16 %v873
    %v1403 = vunpack.c.l.b16 %v874
    %v1404 = vunpack.c.h.b16 %v874
    %v1405 = vunpack.c.l.b16 %v875
    %v1406 = vunpack.c.h.b16 %v875
    %v1407 = vunpack.c.l.b16 %v876
    %v1408 = vunpack.c.h.b16 %v876
    %v1409 = vunpack.c.l.b16 %v877
    %v1410 = vunpack.c.h.b16 %v877
    %v1411 = vunpack.c.l.b16 %v878
    %v1412 = vunpack.c.h.b16 %v878
    %v1413 = vunpack.c.l.b16 %v879
    %v1414 = vunpack.c.h.b16 %v879
    %v1415 = vunpack.c.l.b16 %v880
    %v1416 = vunpack.c.h.b16 %v880
    %v1417 = vunpack.c.l.b16 %v881
    %v1418 = vunpack.c.h.b16 %v881
    %v1419 = vunpack.c.l.b16 %v882
    %v1420 = vunpack.c.h.b16 %v882
    %v1421 = vunpack.c.l.b16 %v883
    %v1422 = vunpack.c.h.b16 %v883
    %v1423 = vunpack.c.l.b16 %v884
    %v1424 = vunpack.c.h.b16 %v884
    %v1425 = vunpack.c.l.b16 %v885
    %v1426 = vunpack.c.h.b16 %v885
    %v1427 = vunpack.c.l.b16 %v886
    %v1428 = vunpack.c.h.b16 %v886
    %v1429 = vunpack.c.l.b16 %v887
    %v1430 = vunpack.c.h.b16 %v887
    %v1431 = vunpack.c.l.b16 %v888
    %v1432 = vunpack.c.h.b16 %v888
    %v1433 = vunpack.c.l.b16 %v889
    %v1434 = vunpack.c.h.b16 %v889
    %v1435 = vunpack.c.l.b16 %v890
    %v1436 = vunpack.c.h.b16 %v890
    %v1437 = vunpack.c.l.b16 %v891
    %v1438 = vunpack.c.h.b16 %v891
    %v1439 = vunpack.c.l.b16 %v892
    %v1440 = vunpack.c.h.b16 %v892
    %v1441 = vunpack.c.l.b16 %v893
    %v1442 = vunpack.c.h.b16 %v893
    %v1443 = vunpack.c.l.b16 %v894
    %v1444 = vunpack.c.h.b16 %v894
    %v1445 = vunpack.c.l.b16 %v895
    %v1446 = vunpack.c.h.b16 %v895
    %v1447 = vunpack.c.l.b16 %v896
    %v1448 = vunpack.c.h.b16 %v896
    %v1449 = vunpack.c.l.b16 %v897
    %v1450 = vunpack.c.h.b16 %v897
    %v1451 = vunpack.c.l.b16 %v898
    %v1452 = vunpack.c.h.b16 %v898
    %v1453 = vunpack.c.l.b16 %v899
    %v1454 = vunpack.c.h.b16 %v899
    %v1455 = vunpack.c.l.b16 %v900
    %v1456 = vunpack.c.h.b16 %v900
    %v1457 = vunpack.c.l.b16 %v901
    %v1458 = vunpack.c.h.b16 %v901
    %v1459 = vunpack.c.l.b16 %v902
    %v1460 = vunpack.c.h.b16 %v902
    %v1461 = vunpack.c.l.b16 %v903
    %v1462 = vunpack.c.h.b16 %v903
    %v1463 = vunpack.c.l.b16 %v904
    %v1464 = vunpack.c.h.b16 %v904
    %v1465 = vunpack.c.l.b16 %v905
    %v1466 = vunpack.c.h.b16 %v905
    %v1467 = vunpack.c.l.b16 %v906
    %v1468 = vunpack.c.h.b16 %v906
    %v1469 = vunpack.c.l.b16 %v907
    %v1470 = vunpack.c.h.b16 %v907
    %v1471 = vunpack.c.l.b16 %v908
    %v1472 = vunpack.c.h.b16 %v908
    %v1473 = vunpack.c.l.b16 %v909
    %v1474 = vunpack.c.h.b16 %v909
    %v1475 = vunpack.c.l.b16 %v910
    %v1476 = vunpack.c.h.b16 %v910
    %v1477 = vunpack.c.l.b16 %v911
    %v1478 = vunpack.c.h.b16 %v911
    %v1479 = vunpack.c.l.b16 %v912
    %v1480 = vunpack.c.h.b16 %v912
    %v1481 = vunpack.c.l.b16 %v913
    %v1482 = vunpack.c.h.b16 %v913
    %v1483 = vunpack.c.l.b16 %v914
    %v1484 = vunpack.c.h.b16 %v914
    %v1485 = vunpack.c.l.b16 %v915
    %v1486 = vunpack.c.h.b16 %v915
    %v1487 = vunpack.c.l.b16 %v916
    %v1488 = vunpack.c.h.b16 %v916
    %v1489 = vunpack.c.l.b16 %v917
    %v1490 = vunpack.c.h.b16 %v917
    %v1491 = vunpack.c.l.b16 %v918
    %v1492 = vunpack.c.h.b16 %v918
    %v1493 = vunpack.c.l.b16 %v919
    %v1494 = vunpack.c.h.b16 %v919
    %v1495 = vunpack.c.l.b16 %v920
    %v1496 = vunpack.c.h.b16 %v920
    %v1497 = vunpack.c.l.b16 %v921
    %v1498 = vunpack.c.h.b16 %v921
    %v1499 = vunpack.c.l.b16 %v922
    %v1500 = vunpack.c.h.b16 %v922
    %v1501 = vunpack.c.l.b16 %v923
    %v1502 = vunpack.c.h.b16 %v923
    %v1503 = vunpack.c.l.b16 %v924
    %v1504 = vunpack.c.h.b16 %v924
    %v1505 = vunpack.c.l.b16 %v925
    %v1506 = vunpack.c.h.b16 %v925
    %v1507 = vunpack.c.l.b16 %v926
    %v1508 = vunpack.c.h.b16 %v926
    %v1509 = vunpack.c.l.b16 %v927
    %v1510 = vunpack.c.h.b16 %v927
    %v1511 = vunpack.c.l.b16 %v928
    %v1512 = vunpack.c.h.b16 %v928
    %v1513 = vunpack.c.l.b16 %v929
    %v1514 = vunpack.c.h.b16 %v929
    %v1515 = vunpack.c.l.b16 %v930
    %v1516 = vunpack.c.h.b16 %v930
    %v1517 = vunpack.c.l.b16 %v931
    %v1518 = vunpack.c.h.b16 %v931
    %v1519 = vunpack.c.l.b16 %v932
    %v1520 = vunpack.c.h.b16 %v932
    %v1521 = vunpack.c.l.b16 %v933
    %v1522 = vunpack.c.h.b16 %v933
    %v1523 = vunpack.c.l.b16 %v934
    %v1524 = vunpack.c.h.b16 %v934
    %v1525 = vunpack.c.l.b16 %v935
    %v1526 = vunpack.c.h.b16 %v935
    %v1527 = vunpack.c.l.b16 %v936
    %v1528 = vunpack.c.h.b16 %v936
    %v1529 = vunpack.c.l.b16 %v937
    %v1530 = vunpack.c.h.b16 %v937
    %v1531 = vunpack.c.l.b16 %v938
    %v1532 = vunpack.c.h.b16 %v938
    %v1533 = vunpack.c.l.b16 %v939
    %v1534 = vunpack.c.h.b16 %v939
    %v1535 = vunpack.c.l.b16 %v940
    %v1536 = vunpack.c.h.b16 %v940
    %v1537 = vunpack.c.l.b16 %v941
    %v1538 = vunpack.c.h.b16 %v941
    %v1539 = vunpack.c.l.b16 %v942
    %v1540 = vunpack.c.h.b16 %v942
    %v1541 = vunpack.c.l.b16 %v943
    %v1542 = vunpack.c.h.b16 %v943
    %v1543 = vunpack.c.l.b16 %v944
    %v1544 = vunpack.c.h.b16 %v944
    %v1545 = vunpack.c.l.b16 %v945
    %v1546 = vunpack.c.h.b16 %v945
    %v1547 = vunpack.c.l.b16 %v946
    %v1548 = vunpack.c.h.b16 %v946
    %v1549 = vunpack.c.l.b16 %v947
    %v1550 = vunpack.c.h.b16 %v947
    %v1551 = vunpack.c.l.b16 %v948
    %v1552 = vunpack.c.h.b16 %v948
    %v1553 = vunpack.c.l.b16 %v949
    %v1554 = vunpack.c.h.b16 %v949
    %v1555 = vunpack.c.l.b16 %v950
    %v1556 = vunpack.c.h.b16 %v950
    %v1557 = vunpack.c.l.b16 %v951
    %v1558 = vunpack.c.h.b16 %v951
    %v1559 = vunpack.c.l.b16 %v952
    %v1560 = vunpack.c.h.b16 %v952
    %v1561 = vunpack.c.l.b16 %v953
    %v1562 = vunpack.c.h.b16 %v953
    %v1563 = vunpack.c.l.b16 %v954
    %v1564 = vunpack.c.h.b16 %v954
    %v1565 = vunpack.c.l.b16 %v955
    %v1566 = vunpack.c.h.b16 %v955
    %v1567 = vunpack.c.l.b16 %v956
    %v1568 = vunpack.c.h.b16 %v956
    %v1569 = vunpack.c.l.b16 %v957
    %v1570 = vunpack.c.h.b16 %v957
    %v1571 = vunpack.c.l.b16 %v958
    %v1572 = vunpack.c.h.b16 %v958
    %v1573 = vunpack.c.l.b16 %v959
    %v1574 = vunpack.c.h.b16 %v959
    %v1575 = vunpack.c.l.b16 %v960
    %v1576 = vunpack.c.h.b16 %v960
    %v1577 = vunpack.c.l.b16 %v961
    %v1578 = vunpack.c.h.b16 %v961
    %v1579 = vunpack.c.l.b16 %v962
    %v1580 = vunpack.c.h.b16 %v962
    %v1581 = vunpack.c.l.b16 %v963
    %v1582 = vunpack.c.h.b16 %v963
    %v1583 = vunpack.c.l.b16 %v964
    %v1584 = vunpack.c.h.b16 %v964
    %v1585 = vunpack.c.l.b16 %v965
    %v1586 = vunpack.c.h.b16 %v965
    %v1587 = vunpack.c.l.b16 %v966
    %v1588 = vunpack.c.h.b16 %v966
    %v1589 = vunpack.c.l.b16 %v967
    %v1590 = vunpack.c.h.b16 %v967
    %v1591 = vunpack.c.l.b16 %v968
    %v1592 = vunpack.c.h.b16 %v968
    %v1593 = vunpack.c.l.b16 %v969
    %v1594 = vunpack.c.h.b16 %v969
    %v1595 = vunpack.c.l.b16 %v970
    %v1596 = vunpack.c.h.b16 %v970
    %v1597 = vunpack.c.l.b16 %v971
    %v1598 = vunpack.c.h.b16 %v971
    %v1599 = vunpack.c.l.b16 %v972
    %v1600 = vunpack.c.h.b16 %v972
    %v1601 = vunpack.c.l.b16 %v973
    %v1602 = vunpack.c.h.b16 %v973
    %v1603 = vunpack.c.l.b16 %v974
    %v1604 = vunpack.c.h.b16 %v974
    %v1605 = vunpack.c.l.b16 %v975
    %v1606 = vunpack.c.h.b16 %v975
    %v1607 = vunpack.c.l.b16 %v976
    %v1608 = vunpack.c.h.b16 %v976
    %v1609 = vunpack.c.l.b16 %v977
    %v1610 = vunpack.c.h.b16 %v977
    %v1611 = vunpack.c.l.b16 %v978
    %v1612 = vunpack.c.h.b16 %v978
    %v1613 = vunpack.c.l.b16 %v979
    %v1614 = vunpack.c.h.b16 %v979
    %v1615 = vunpack.c.l.b16 %v980
    %v1616 = vunpack.c.h.b16 %v980
    %v1617 = vunpack.c.l.b16 %v981
    %v1618 = vunpack.c.h.b16 %v981
    %v1619 = vunpack.c.l.b16 %v982
    %v1620 = vunpack.c.h.b16 %v982
    %v1621 = vunpack.c.l.b16 %v983
    %v1622 = vunpack.c.h.b16 %v983
    %v1623 = vunpack.c.l.b16 %v984
    %v1624 = vunpack.c.h.b16 %v984
    %v1625 = vunpack.c.l.b16 %v985
    %v1626 = vunpack.c.h.b16 %v985
    %v1627 = vunpack.c.l.b16 %v986
    %v1628 = vunpack.c.h.b16 %v986
    %v1629 = vunpack.c.l.b16 %v987
    %v1630 = vunpack.c.h.b16 %v987
    %v1631 = vunpack.c.l.b16 %v988
    %v1632 = vunpack.c.h.b16 %v988
    %v1633 = vunpack.c.l.b16 %v989
    %v1634 = vunpack.c.h.b16 %v989
    %v1635 = vunpack.c.l.b16 %v990
    %v1636 = vunpack.c.h.b16 %v990
    %v1637 = vunpack.c.l.b16 %v991
    %v1638 = vunpack.c.h.b16 %v991
    %v1639 = vunpack.c.l.b16 %v992
    %v1640 = vunpack.c.h.b16 %v992
    %v1641 = vunpack.c.l.b16 %v993
    %v1642 = vunpack.c.h.b16 %v993
    %v1643 = vunpack.c.l.b16 %v994
    %v1644 = vunpack.c.h.b16 %v994
    %v1645 = vunpack.c.l.b16 %v995
    %v1646 = vunpack.c.h.b16 %v995
    %v1647 = vunpack.c.l.b16 %v996
    %v1648 = vunpack.c.h.b16 %v996
    %v1649 = vunpack.c.l.b16 %v997
    %v1650 = vunpack.c.h.b16 %v997
    %v1651 = vunpack.c.l.b16 %v998
    %v1652 = vunpack.c.h.b16 %v998
    %v1653 = vunpack.c.l.b16 %v999
    %v1654 = vunpack.c.h.b16 %v999
    %v1655 = vunpack.c.l.b16 %v1000
    %v1656 = vunpack.c.h.b16 %v1000
    %v1657 = vunpack.c.l.b16 %v1001
    %v1658 = vunpack.c.h.b16 %v1001
    %v1659 = vunpack.c.l.b16 %v1002
    %v1660 = vunpack.c.h.b16 %v1002
    %v1661 = vunpack.c.l.b16 %v1003
    %v1662 = vunpack.c.h.b16 %v1003
    %v1663 = vunpack.c.l.b16 %v1004
    %v1664 = vunpack.c.h.b16 %v1004
    %v1665 = vunpack.c.l.b16 %v1005
    %v1666 = vunpack.c.h.b16 %v1005
    %v1667 = vunpack.c.l.b16 %v1006
    %v1668 = vunpack.c.h.b16 %v1006
    %v1669 = vunpack.c.l.b16 %v1007
    %v1670 = vunpack.c.h.b16 %v1007
    %v1671 = vunpack.c.l.b16 %v1008
    %v1672 = vunpack.c.h.b16 %v1008
    %v1673 = vunpack.c.l.b16 %v1009
    %v1674 = vunpack.c.h.b16 %v1009
    %v1675 = vunpack.c.l.b16 %v1010
    %v1676 = vunpack.c.h.b16 %v1010
    %v1677 = vunpack.c.l.b16 %v1011
    %v1678 = vunpack.c.h.b16 %v1011
    %v1679 = vunpack.c.l.b16 %v1012
    %v1680 = vunpack.c.h.b16 %v1012
    %v1681 = vunpack.c.l.b16 %v1013
    %v1682 = vunpack.c.h.b16 %v1013
    %v1683 = vunpack.c.l.b16 %v1014
    %v1684 = vunpack.c.h.b16 %v1014
    %v1685 = vunpack.c.l.b16 %v1015
    %v1686 = vunpack.c.h.b16 %v1015
    %v1687 = vunpack.c.l.b16 %v1016
    %v1688 = vunpack.c.h.b16 %v1016
    %v1689 = vunpack.c.l.b16 %v1017
    %v1690 = vunpack.c.h.b16 %v1017
    %v1691 = vunpack.c.l.b16 %v1018
    %v1692 = vunpack.c.h.b16 %v1018
    %v1693 = vunpack.c.l.b16 %v1019
    %v1694 = vunpack.c.h.b16 %v1019
    %v1695 = vunpack.c.l.b16 %v1020
    %v1696 = vunpack.c.h.b16 %v1020
    %v1697 = vunpack.c.l.b16 %v1021
    %v1698 = vunpack.c.h.b16 %v1021
    %v1699 = vunpack.c.l.b16 %v1022
    %v1700 = vunpack.c.h.b16 %v1022
    %v1701 = vunpack.c.l.b16 %v1023
    %v1702 = vunpack.c.h.b16 %v1023
    %v1703 = vunpack.c.l.b16 %v1024
    %v1704 = vunpack.c.h.b16 %v1024
    %v1705 = vunpack.c.l.b16 %v1025
    %v1706 = vunpack.c.h.b16 %v1025
    %v1707 = vunpack.c.l.b16 %v1026
    %v1708 = vunpack.c.h.b16 %v1026
    %v1709 = vunpack.c.l.b16 %v1027
    %v1710 = vunpack.c.h.b16 %v1027
    %v1711 = vunpack.c.l.b16 %v1028
    %v1712 = vunpack.c.h.b16 %v1028
    %v1713 = vunpack.c.l.b16 %v1029
    %v1714 = vunpack.c.h.b16 %v1029
    %v1715 = vunpack.c.l.b16 %v1030
    %v1716 = vunpack.c.h.b16 %v1030
    %v1717 = vunpack.c.l.b16 %v1031
    %v1718 = vunpack.c.h.b16 %v1031
    %v1719 = vunpack.c.l.b16 %v1032
    %v1720 = vunpack.c.h.b16 %v1032
    %v1721 = vunpack.c.l.b16 %v1033
    %v1722 = vunpack.c.h.b16 %v1033
    %v1723 = vunpack.c.l.b16 %v1034
    %v1724 = vunpack.c.h.b16 %v1034
    %v1725 = vunpack.c.l.b16 %v1035
    %v1726 = vunpack.c.h.b16 %v1035
    %v1727 = vunpack.c.l.b16 %v1036
    %v1728 = vunpack.c.h.b16 %v1036
    %v1729 = vunpack.c.l.b16 %v1037
    %v1730 = vunpack.c.h.b16 %v1037
    %v1731 = vunpack.c.l.b16 %v1038
    %v1732 = vunpack.c.h.b16 %v1038
    %v1733 = vunpack.c.l.b16 %v1039
    %v1734 = vunpack.c.h.b16 %v1039
    %v1735 = vunpack.c.l.b16 %v1040
    %v1736 = vunpack.c.h.b16 %v1040
    %v1737 = vunpack.c.l.b16 %v1041
    %v1738 = vunpack.c.h.b16 %v1041
    %v1739 = vunpack.c.l.b16 %v1042
    %v1740 = vunpack.c.h.b16 %v1042
    %v1741 = vunpack.c.l.b16 %v1043
    %v1742 = vunpack.c.h.b16 %v1043
    %v1743 = vunpack.c.l.b16 %v1044
    %v1744 = vunpack.c.h.b16 %v1044
    %v1745 = vunpack.c.l.b16 %v1045
    %v1746 = vunpack.c.h.b16 %v1045
    %v1747 = vunpack.c.l.b16 %v1046
    %v1748 = vunpack.c.h.b16 %v1046
    %v1749 = vunpack.c.l.b16 %v1047
    %v1750 = vunpack.c.h.b16 %v1047
    %v1751 = vunpack.c.l.b16 %v1048
    %v1752 = vunpack.c.h.b16 %v1048
    %v1753 = vunpack.c.l.b16 %v1049
    %v1754 = vunpack.c.h.b16 %v1049
    %v1755 = vunpack.c.l.b16 %v1050
    %v1756 = vunpack.c.h.b16 %v1050
    %v1757 = vunpack.c.l.b16 %v1051
    %v1758 = vunpack.c.h.b16 %v1051
    %v1759 = vunpack.c.l.b16 %v1052
    %v1760 = vunpack.c.h.b16 %v1052
    %v1761 = vunpack.c.l.b16 %v1053
    %v1762 = vunpack.c.h.b16 %v1053
    %v1763 = vunpack.c.l.b16 %v1054
    %v1764 = vunpack.c.h.b16 %v1054
    %v1765 = vunpack.c.l.b16 %v1055
    %v1766 = vunpack.c.h.b16 %v1055
    %v1767 = vunpack.c.l.b16 %v1056
    %v1768 = vunpack.c.h.b16 %v1056
    %v1769 = vunpack.c.l.b16 %v1057
    %v1770 = vunpack.c.h.b16 %v1057
    %v1771 = vunpack.c.l.b16 %v1058
    %v1772 = vunpack.c.h.b16 %v1058
    %v1773 = vunpack.c.l.b16 %v1059
    %v1774 = vunpack.c.h.b16 %v1059
    %v1775 = vunpack.c.l.b16 %v1060
    %v1776 = vunpack.c.h.b16 %v1060
    %v1777 = vunpack.c.l.b16 %v1061
    %v1778 = vunpack.c.h.b16 %v1061
    %v1779 = vunpack.c.l.b16 %v1062
    %v1780 = vunpack.c.h.b16 %v1062
    %v1781 = vunpack.c.l.b16 %v1063
    %v1782 = vunpack.c.h.b16 %v1063
    %v1783 = vunpack.c.l.b16 %v1064
    %v1784 = vunpack.c.h.b16 %v1064
    %v1785 = vunpack.c.l.b16 %v1065
    %v1786 = vunpack.c.h.b16 %v1065
    %v1787 = vunpack.c.l.b16 %v1066
    %v1788 = vunpack.c.h.b16 %v1066
    %v1789 = vunpack.c.l.b16 %v1067
    %v1790 = vunpack.c.h.b16 %v1067
    %v1791 = vunpack.c.l.b16 %v1068
    %v1792 = vunpack.c.h.b16 %v1068
    %v1793 = vunpack.c.l.b16 %v1069
    %v1794 = vunpack.c.h.b16 %v1069
    %v1795 = vunpack.c.l.b16 %v1070
    %v1796 = vunpack.c.h.b16 %v1070
    %v1797 = vunpack.c.l.b16 %v1071
    %v1798 = vunpack.c.h.b16 %v1071
    %v1799 = vunpack.c.l.b16 %v1072
    %v1800 = vunpack.c.h.b16 %v1072
    %v1801 = vunpack.c.l.b16 %v1073
    %v1802 = vunpack.c.h.b16 %v1073
    %v1803 = vunpack.c.l.b16 %v1074
    %v1804 = vunpack.c.h.b16 %v1074
    %v1805 = vunpack.c.l.b16 %v1075
    %v1806 = vunpack.c.h.b16 %v1075
    %v1807 = vunpack.c.l.b16 %v1076
    %v1808 = vunpack.c.h.b16 %v1076
    %v1809 = vunpack.c.l.b16 %v1077
    %v1810 = vunpack.c.h.b16 %v1077
    %v1811 = vunpack.c.l.b16 %v1078
    %v1812 = vunpack.c.h.b16 %v1078
    %v1813 = vunpack.c.l.b16 %v1079
    %v1814 = vunpack.c.h.b16 %v1079
    %v1815 = vunpack.c.l.b16 %v1080
    %v1816 = vunpack.c.h.b16 %v1080
    %v1817 = vunpack.c.l.b16 %v1081
    %v1818 = vunpack.c.h.b16 %v1081
    %v1819 = vunpack.c.l.b16 %v1082
    %v1820 = vunpack.c.h.b16 %v1082
    %v1821 = vunpack.c.l.b16 %v1083
    %v1822 = vunpack.c.h.b16 %v1083
    %v1823 = vunpack.c.l.b16 %v1084
    %v1824 = vunpack.c.h.b16 %v1084
    %v1825 = vunpack.c.l.b16 %v1085
    %v1826 = vunpack.c.h.b16 %v1085
    %v1827 = vunpack.c.l.b16 %v1086
    %v1828 = vunpack.c.h.b16 %v1086
    %v1829 = vunpack.c.l.b16 %v1087
    %v1830 = vunpack.c.h.b16 %v1087
    %v1831 = vunpack.c.l.b16 %v1088
    %v1832 = vunpack.c.h.b16 %v1088
    %v1833 = vunpack.c.l.b16 %v1089
    %v1834 = vunpack.c.h.b16 %v1089
    %v1835 = vunpack.c.l.b16 %v1090
    %v1836 = vunpack.c.h.b16 %v1090
    %v1837 = vunpack.c.l.b16 %v1091
    %v1838 = vunpack.c.h.b16 %v1091
    %v1839 = vunpack.c.l.b16 %v1092
    %v1840 = vunpack.c.h.b16 %v1092
    %v1841 = vunpack.c.l.b16 %v1093
    %v1842 = vunpack.c.h.b16 %v1093
    %v1843 = vunpack.c.l.b16 %v1094
    %v1844 = vunpack.c.h.b16 %v1094
    %v1845 = vunpack.c.l.b16 %v1095
    %v1846 = vunpack.c.h.b16 %v1095
    %v1847 = vunpack.c.l.b16 %v1096
    %v1848 = vunpack.c.h.b16 %v1096
    %v1849 = vunpack.c.l.b16 %v1097
    %v1850 = vunpack.c.h.b16 %v1097
    %v1851 = vunpack.c.l.b16 %v1098
    %v1852 = vunpack.c.h.b16 %v1098
    %v1853 = vunpack.c.l.b16 %v1099
    %v1854 = vunpack.c.h.b16 %v1099
    %v1855 = vunpack.c.l.b16 %v1100
    %v1856 = vunpack.c.h.b16 %v1100
    %v1857 = vunpack.c.l.b16 %v1101
    %v1858 = vunpack.c.h.b16 %v1101
    %v1859 = vunpack.c.l.b16 %v1102
    %v1860 = vunpack.c.h.b16 %v1102
    %v1861 = vunpack.c.l.b16 %v1103
    %v1862 = vunpack.c.h.b16 %v1103
    %v1863 = vunpack.c.l.b16 %v1104
    %v1864 = vunpack.c.h.b16 %v1104
    %v1865 = vunpack.c.l.b16 %v1105
    %v1866 = vunpack.c.h.b16 %v1105
    %v1867 = vunpack.c.l.b16 %v1106
    %v1868 = vunpack.c.h.b16 %v1106
    %v1869 = vunpack.c.l.b16 %v1107
    %v1870 = vunpack.c.h.b16 %v1107
    %v1871 = vunpack.c.l.b16 %v1108
    %v1872 = vunpack.c.h.b16 %v1108
    %v1873 = vunpack.c.l.b16 %v1109
    %v1874 = vunpack.c.h.b16 %v1109
    %v1875 = vunpack.c.l.b16 %v1110
    %v1876 = vunpack.c.h.b16 %v1110
    %v1877 = vunpack.c.l.b16 %v1111
    %v1878 = vunpack.c.h.b16 %v1111
    %v1879 = vunpack.c.l.b16 %v1112
    %v1880 = vunpack.c.h.b16 %v1112
    %v1881 = vpack.c.b16 %v1377, %v1369
    %v1882 = vpack.c.b16 %v1378, %v1370
    %v1883 = vpack.c.b16 %v1379, %v1371
    %v1884 = vpack.c.b16 %v1380, %v1372
    %v1885 = vpack.c.b16 %v1381, %v1373
    %v1886 = vpack.c.b16 %v1382, %v1374
    %v1887 = vpack.c.b16 %v1383, %v1375
    %v1888 = vpack.c.b16 %v1384, %v1376
    %v1889 = vpack.c.b16 %v1393, %v1385
    %v1890 = vpack.c.b16 %v1394, %v1386
    %v1891 = vpack.c.b16 %v1395, %v1387
    %v1892 = vpack.c.b16 %v1396, %v1388
    %v1893 = vpack.c.b16 %v1397, %v1389
    %v1894 = vpack.c.b16 %v1398, %v1390
    %v1895 = vpack.c.b16 %v1399, %v1391
    %v1896 = vpack.c.b16 %v1400, %v1392
    %v1897 = vpack.c.b16 %v1409, %v1401
    %v1898 = vpack.c.b16 %v1410, %v1402
    %v1899 = vpack.c.b16 %v1411, %v1403
    %v1900 = vpack.c.b16 %v1412, %v1404
    %v1901 = vpack.c.b16 %v1413, %v1405
    %v1902 = vpack.c.b16 %v1414, %v1406
    %v1903 = vpack.c.b16 %v1415, %v1407
    %v1904 = vpack.c.b16 %v1416, %v1408
    %v1905 = vpack.c.b16 %v1425, %v1417
    %v1906 = vpack.c.b16 %v1426, %v1418
    %v1907 = vpack.c.b16 %v1427, %v1419
    %v1908 = vpack.c.b16 %v1428, %v1420
    %v1909 = vpack.c.b16 %v1429, %v1421
    %v1910 = vpack.c.b16 %v1430, %v1422
    %v1911 = vpack.c.b16 %v1431, %v1423
    %v1912 = vpack.c.b16 %v1432, %v1424
    %v1913 = vpack.c.b16 %v1441, %v1433
    %v1914 = vpack.c.b16 %v1442, %v1434
    %v1915 = vpack.c.b16 %v1443, %v1435
    %v1916 = vpack.c.b16 %v1444, %v1436
    %v1917 = vpack.c.b16 %v1445, %v1437
    %v1918 = vpack.c.b16 %v1446, %v1438
    %v1919 = vpack.c.b16 %v1447, %v1439
    %v1920 = vpack.c.b16 %v1448, %v1440
    %v1921 = vpack.c.b16 %v1457, %v1449
    %v1922 = vpack.c.b16 %v1458, %v1450
    %v1923 = vpack.c.b16 %v1459, %v1451
    %v1924 = vpack.c.b16 %v1460, %v1452
    %v1925 = vpack.c.b16 %v1461, %v1453
    %v1926 = vpack.c.b16 %v1462, %v1454
    %v1927 = vpack.c.b16 %v1463, %v1455
    %v1928 = vpack.c.b16 %v1464, %v1456
    %v1929 = vpack.c.b16 %v1473, %v1465
    %v1930 = vpack.c.b16 %v1474, %v1466
    %v1931 = vpack.c.b16 %v1475, %v1467
    %v1932 = vpack.c.b16 %v1476, %v1468
    %v1933 = vpack.c.b16 %v1477, %v1469
    %v1934 = vpack.c.b16 %v1478, %v1470
    %v1935 = vpack.c.b16 %v1479, %v1471
    %v1936 = vpack.c.b16 %v1480, %v1472
    %v1937 = vpack.c.b16 %v1489, %v1481
    %v1938 = vpack.c.b16 %v1490, %v1482
    %v1939 = vpack.c.b16 %v1491, %v1483
    %v1940 = vpack.c.b16 %v1492, %v1484
    %v1941 = vpack.c.b16 %v1493, %v1485
    %v1942 = vpack.c.b16 %v1494, %v1486
    %v1943 = vpack.c.b16 %v1495, %v1487
    %v1944 = vpack.c.b16 %v1496, %v1488
    %v1945 = vpack.c.b16 %v1505, %v1497
    %v1946 = vpack.c.b16 %v1506, %v1498
    %v1947 = vpack.c.b16 %v1507, %v1499
    %v1948 = vpack.c.b16 %v1508, %v1500
    %v1949 = vpack.c.b16 %v1509, %v1501
    %v1950 = vpack.c.b16 %v1510, %v1502
    %v1951 = vpack.c.b16 %v1511, %v1503
    %v1952 = vpack.c.b16 %v1512, %v1504
    %v1953 = vpack.c.b16 %v1521, %v1513
    %v1954 = vpack.c.b16 %v1522, %v1514
    %v1955 = vpack.c.b16 %v1523, %v1515
    %v1956 = vpack.c.b16 %v1524, %v1516
    %v1957 = vpack.c.b16 %v1525, %v1517
    %v1958 = vpack.c.b16 %v1526, %v1518
    %v1959 = vpack.c.b16 %v1527, %v1519
    %v1960 = vpack.c.b16 %v1528, %v1520
    %v1961 = vpack.c.b16 %v1537, %v1529
    %v1962 = vpack.c.b16 %v1538, %v1530
    %v1963 = vpack.c.b16 %v1539, %v1531
    %v1964 = vpack.c.b16 %v1540, %v1532
    %v1965 = vpack.c.b16 %v1541, %v1533
    %v1966 = vpack.c.b16 %v1542, %v1534
    %v1967 = vpack.c.b16 %v1543, %v1535
    %v1968 = vpack.c.b16 %v1544, %v1536
    %v1969 = vpack.c.b16 %v1553, %v1545
    %v1970 = vpack.c.b16 %v1554, %v1546
    %v1971 = vpack.c.b16 %v1555, %v1547
    %v1972 = vpack.c.b16 %v1556, %v1548
    %v1973 = vpack.c.b16 %v1557, %v1549
    %v1974 = vpack.c.b16 %v1558, %v1550
    %v1975 = vpack.c.b16 %v1559, %v1551
    %v1976 = vpack.c.b16 %v1560, %v1552
    %v1977 = vpack.c.b16 %v1569, %v1561
    %v1978 = vpack.c.b16 %v1570, %v1562
    %v1979 = vpack.c.b16 %v1571, %v1563
    %v1980 = vpack.c.b16 %v1572, %v1564
    %v1981 = vpack.c.b16 %v1573, %v1565
    %v1982 = vpack.c.b16 %v1574, %v1566
    %v1983 = vpack.c.b16 %v1575, %v1567
    %v1984 = vpack.c.b16 %v1576, %v1568
    %v1985 = vpack.c.b16 %v1585, %v1577
    %v1986 = vpack.c.b16 %v1586, %v1578
    %v1987 = vpack.c.b16 %v1587, %v1579
    %v1988 = vpack.c.b16 %v1588, %v1580
    %v1989 = vpack.c.b16 %v1589, %v1581
    %v1990 = vpack.c.b16 %v1590, %v1582
    %v1991 = vpack.c.b16 %v1591, %v1583
    %v1992 = vpack.c.b16 %v1592, %v1584
    %v1993 = vpack.c.b16 %v1601, %v1593
    %v1994 = vpack.c.b16 %v1602, %v1594
    %v1995 = vpack.c.b16 %v1603, %v1595
    %v1996 = vpack.c.b16 %v1604, %v1596
    %v1997 = vpack.c.b16 %v1605, %v1597
    %v1998 = vpack.c.b16 %v1606, %v1598
    %v1999 = vpack.c.b16 %v1607, %v1599
    %v2000 = vpack.c.b16 %v1608, %v1600
    %v2001 = vpack.c.b16 %v1617, %v1609
    %v2002 = vpack.c.b16 %v1618, %v1610
    %v2003 = vpack.c.b16 %v1619, %v1611
    %v2004 = vpack.c.b16 %v1620, %v1612
    %v2005 = vpack.c.b16 %v1621, %v1613
    %v2006 = vpack.c.b16 %v1622, %v1614
    %v2007 = vpack.c.b16 %v1623, %v1615
    %v2008 = vpack.c.b16 %v1624, %v1616
    %v2009 = vpack.c.b16 %v1633, %v1625
    %v2010 = vpack.c.b16 %v1634, %v1626
    %v2011 = vpack.c.b16 %v1635, %v1627
    %v2012 = vpack.c.b16 %v1636, %v1628
    %v2013 = vpack.c.b16 %v1637, %v1629
    %v2014 = vpack.c.b16 %v1638, %v1630
    %v2015 = vpack.c.b16 %v1639, %v1631
    %v2016 = vpack.c.b16 %v1640, %v1632
    %v2017 = vpack.c.b16 %v1649, %v1641
    %v2018 = vpack.c.b16 %v1650, %v1642
    %v2019 = vpack.c.b16 %v1651, %v1643
    %v2020 = vpack.c.b16 %v1652, %v1644
    %v2021 = vpack.c.b16 %v1653, %v1645
    %v2022 = vpack.c.b16 %v1654, %v1646
    %v2023 = vpack.c.b16 %v1655, %v1647
    %v2024 = vpack.c.b16 %v1656, %v1648
    %v2025 = vpack.c.b16 %v1665, %v1657
    %v2026 = vpack.c.b16 %v1666, %v1658
    %v2027 = vpack.c.b16 %v1667, %v1659
    %v2028 = vpack.c.b16 %v1668, %v1660
    %v2029 = vpack.c.b16 %v1669, %v1661
    %v2030 = vpack.c.b16 %v1670, %v1662
    %v2031 = vpack.c.b16 %v1671, %v1663
    %v2032 = vpack.c.b16 %v1672, %v1664
    %v2033 = vpack.c.b16 %v1681, %v1673
    %v2034 = vpack.c.b16 %v1682, %v1674
    %v2035 = vpack.c.b16 %v1683, %v1675
    %v2036 = vpack.c.b16 %v1684, %v1676
    %v2037 = vpack.c.b16 %v1685, %v1677
    %v2038 = vpack.c.b16 %v1686, %v1678
    %v2039 = vpack.c.b16 %v1687, %v1679
    %v2040 = vpack.c.b16 %v1688, %v1680
    %v2041 = vpack.c.b16 %v1697, %v1689
    %v2042 = vpack.c.b16 %v1698, %v1690
    %v2043 = vpack.c.b16 %v1699, %v1691
    %v2044 = vpack.c.b16 %v1700, %v1692
    %v2045 = vpack.c.b16 %v1701, %v1693
    %v2046 = vpack.c.b16 %v1702, %v1694
    %v2047 = vpack.c.b16 %v1703, %v1695
    %v2048 = vpack.c.b16 %v1704, %v1696
    %v2049 = vpack.c.b16 %v1713, %v1705
    %v2050 = vpack.c.b16 %v1714, %v1706
    %v2051 = vpack.c.b16 %v1715, %v1707
    %v2052 = vpack.c.b16 %v1716, %v1708
    %v2053 = vpack.c.b16 %v1717, %v1709
    %v2054 = vpack.c.b16 %v1718, %v1710
    %v2055 = vpack.c.b16 %v1719, %v1711
    %v2056 = vpack.c.b16 %v1720, %v1712
    %v2057 = vpack.c.b16 %v1729, %v1721
    %v2058 = vpack.c.b16 %v1730, %v1722
    %v2059 = vpack.c.b16 %v1731, %v1723
    %v2060 = vpack.c.b16 %v1732, %v1724
    %v2061 = vpack.c.b16 %v1733, %v1725
    %v2062 = vpack.c.b16 %v1734, %v1726
    %v2063 = vpack.c.b16 %v1735, %v1727
    %v2064 = vpack.c.b16 %v1736, %v1728
    %v2065 = vpack.c.b16 %v1745, %v1737
    %v2066 = vpack.c.b16 %v1746, %v1738
    %v2067 = vpack.c.b16 %v1747, %v1739
    %v2068 = vpack.c.b16 %v1748, %v1740
    %v2069 = vpack.c.b16 %v1749, %v1741
    %v2070 = vpack.c.b16 %v1750, %v1742
    %v2071 = vpack.c.b16 %v1751, %v1743
    %v2072 = vpack.c.b16 %v1752, %v1744
    %v2073 = vpack.c.b16 %v1761, %v1753
    %v2074 = vpack.c.b16 %v1762, %v1754
    %v2075 = vpack.c.b16 %v1763, %v1755
    %v2076 = vpack.c.b16 %v1764, %v1756
    %v2077 = vpack.c.b16 %v1765, %v1757
    %v2078 = vpack.c.b16 %v1766, %v1758
    %v2079 = vpack.c.b16 %v1767, %v1759
    %v2080 = vpack.c.b16 %v1768, %v1760
    %v2081 = vpack.c.b16 %v1777, %v1769
    %v2082 = vpack.c.b16 %v1778, %v1770
    %v2083 = vpack.c.b16 %v1779, %v1771
    %v2084 = vpack.c.b16 %v1780, %v1772
    %v2085 = vpack.c.b16 %v1781, %v1773
    %v2086 = vpack.c.b16 %v1782, %v1774
    %v2087 = vpack.c.b16 %v1783, %v1775
    %v2088 = vpack.c.b16 %v1784, %v1776
    %v2089 = vpack.c.b16 %v1793, %v1785
    %v2090 = vpack.c.b16 %v1794, %v1786
    %v2091 = vpack.c.b16 %v1795, %v1787
    %v2092 = vpack.c.b16 %v1796, %v1788
    %v2093 = vpack.c.b16 %v1797, %v1789
    %v2094 = vpack.c.b16 %v1798, %v1790
    %v2095 = vpack.c.b16 %v1799, %v1791
    %v2096 = vpack.c.b16 %v1800, %v1792
    %v2097 = vpack.c.b16 %v1809, %v1801
    %v2098 = vpack.c.b16 %v1810, %v1802
    %v2099 = vpack.c.b16 %v1811, %v1803
    %v2100 = vpack.c.b16 %v1812, %v1804
    %v2101 = vpack.c.b16 %v1813, %v1805
    %v2102 = vpack.c.b16 %v1814, %v1806
    %v2103 = vpack.c.b16 %v1815, %v1807
    %v2104 = vpack.c.b16 %v1816, %v1808
    %v2105 = vpack.c.b16 %v1825, %v1817
    %v2106 = vpack.c.b16 %v1826, %v1818
    %v2107 = vpack.c.b16 %v1827, %v1819
    %v2108 = vpack.c.b16 %v1828, %v1820
    %v2109 = vpack.c.b16 %v1829, %v1821
    %v2110 = vpack.c.b16 %v1830, %v1822
    %v2111 = vpack.c.b16 %v1831, %v1823
    %v2112 = vpack.c.b16 %v1832, %v1824
    %v2113 = vpack.c.b16 %v1841, %v1833
    %v2114 = vpack.c.b16 %v1842, %v1834
    %v2115 = vpack.c.b16 %v1843, %v1835
    %v2116 = vpack.c.b16 %v1844, %v1836
    %v2117 = vpack.c.b16 %v1845, %v1837
    %v2118 = vpack.c.b16 %v1846, %v1838
    %v2119 = vpack.c.b16 %v1847, %v1839
    %v2120 = vpack.c.b16 %v1848, %v1840
    %v2121 = vpack.c.b16 %v1857, %v1849
    %v2122 = vpack.c.b16 %v1858, %v1850
    %v2123 = vpack.c.b16 %v1859, %v1851
    %v2124 = vpack.c.b16 %v1860, %v1852
    %v2125 = vpack.c.b16 %v1861, %v1853
    %v2126 = vpack.c.b16 %v1862, %v1854
    %v2127 = vpack.c.b16 %v1863, %v1855
    %v2128 = vpack.c.b16 %v1864, %v1856
    %v2129 = vpack.c.b16 %v1873, %v1865
    %v2130 = vpack.c.b16 %v1874, %v1866
    %v2131 = vpack.c.b16 %v1875, %v1867
    %v2132 = vpack.c.b16 %v1876, %v1868
    %v2133 = vpack.c.b16 %v1877, %v1869
    %v2134 = vpack.c.b16 %v1878, %v1870
    %v2135 = vpack.c.b16 %v1879, %v1871
    %v2136 = vpack.c.b16 %v1880, %v1872
    %2393 = vmatprep.subr.bf16.mxu0 %v1938
    %2394 = vmatpush1.bf16.msra.mxu0 %v1937
    %2395 = vmatprep.subr.bf16.mxu0 %v1930
    %2396 = vmatpush1.bf16.msra.mxu0 %v1929
    %2397 = vmatprep.subr.bf16.mxu0 %v1922
    %2398 = vmatpush1.bf16.msra.mxu0 %v1921
    %2399 = vmatprep.subr.bf16.mxu0 %v1914
    %2400 = vmatpush1.bf16.msra.mxu0 %v1913
    %2401 = vmatprep.subr.bf16.mxu0 %v1906
    %2402 = vmatpush1.bf16.msra.mxu0 %v1905
    %2403 = vmatprep.subr.bf16.mxu0 %v1898
    %2404 = vmatpush1.bf16.msra.mxu0 %v1897
    %2405 = vmatprep.subr.bf16.mxu0 %v1890
    %2406 = vmatpush1.bf16.msra.mxu0 %v1889
    %2407 = vmatprep.subr.bf16.mxu0 %v1882
    %2408 = vmatpush1.bf16.msra.mxu0 %v1881
    %2409 = vmatprep.subr.bf16.mxu0 %v2002
    %2410 = vmatpush2.bf16.msra.mxu0 %v2001
    %2411 = vmatprep.subr.bf16.mxu0 %v1994
    %2412 = vmatpush2.bf16.msra.mxu0 %v1993
    %2413 = vmatprep.subr.bf16.mxu0 %v1986
    %2414 = vmatpush2.bf16.msra.mxu0 %v1985
    %2415 = vmatprep.subr.bf16.mxu0 %v1978
    %2416 = vmatpush2.bf16.msra.mxu0 %v1977
    %2417 = vmatprep.subr.bf16.mxu0 %v1970
    %2418 = vmatpush2.bf16.msra.mxu0 %v1969
    %2419 = vmatprep.subr.bf16.mxu0 %v1962
    %2420 = vmatpush2.bf16.msra.mxu0 %v1961
    %2421 = vmatprep.subr.bf16.mxu0 %v1954
    %2422 = vmatpush2.bf16.msra.mxu0 %v1953
    %2423 = vmatprep.subr.bf16.mxu0 %v1946
    %2424 = vmatpush2.bf16.msra.mxu0 %v1945
    %2425 = vmatprep.mubr.bf16.mxu0 %v854
    %2426 = vmatmul.mubr.bf16.gmra.mxu0 %v853
    %v2427 = vpop.f32.mrf.mxu0
    %v2428 = vadd.f32 0.0, %v2427
    %v2429 = vpop.f32.mrf.mxu0
    %v2430 = vadd.f32 0.0, %v2429
    %v2431 = vpop.f32.mrf.mxu0
    %v2432 = vpop.f32.mrf.mxu0
    %2433 = vdwg.mxu0
    %2434 = vmatprep.subr.bf16.mxu0 %v2066
    %2435 = vmatpush1.bf16.msra.mxu0 %v2065
    %2436 = vmatprep.subr.bf16.mxu0 %v2058
    %2437 = vmatpush1.bf16.msra.mxu0 %v2057
    %2438 = vmatprep.subr.bf16.mxu0 %v2050
    %2439 = vmatpush1.bf16.msra.mxu0 %v2049
    %2440 = vmatprep.subr.bf16.mxu0 %v2042
    %2441 = vmatpush1.bf16.msra.mxu0 %v2041
    %2442 = vmatprep.subr.bf16.mxu0 %v2034
    %2443 = vmatpush1.bf16.msra.mxu0 %v2033
    %2444 = vmatprep.subr.bf16.mxu0 %v2026
    %2445 = vmatpush1.bf16.msra.mxu0 %v2025
    %2446 = vmatprep.subr.bf16.mxu0 %v2018
    %2447 = vmatpush1.bf16.msra.mxu0 %v2017
    %2448 = vmatprep.subr.bf16.mxu0 %v2010
    %2449 = vmatpush1.bf16.msra.mxu0 %v2009
    %2450 = vmatprep.subr.bf16.mxu0 %v2130
    %2451 = vmatpush2.bf16.msra.mxu0 %v2129
    %2452 = vmatprep.subr.bf16.mxu0 %v2122
    %2453 = vmatpush2.bf16.msra.mxu0 %v2121
    %2454 = vmatprep.subr.bf16.mxu0 %v2114
    %2455 = vmatpush2.bf16.msra.mxu0 %v2113
    %2456 = vmatprep.subr.bf16.mxu0 %v2106
    %2457 = vmatpush2.bf16.msra.mxu0 %v2105
    %2458 = vmatprep.subr.bf16.mxu0 %v2098
    %2459 = vmatpush2.bf16.msra.mxu0 %v2097
    %2460 = vmatprep.subr.bf16.mxu0 %v2090
    %2461 = vmatpush2.bf16.msra.mxu0 %v2089
    %2462 = vmatprep.subr.bf16.mxu0 %v2082
    %2463 = vmatpush2.bf16.msra.mxu0 %v2081
    %2464 = vmatprep.subr.bf16.mxu0 %v2074
    %2465 = vmatpush2.bf16.msra.mxu0 %v2073
    %2466 = vmatprep.mubr.bf16.mxu0 %v856
    %2467 = vmatmul.mubr.bf16.gmra.mxu0 %v855
    %v2468 = vpop.f32.mrf.mxu0
    %v2469 = vadd.f32 %v2428, %v2468
    %v2470 = vpop.f32.mrf.mxu0
    %v2471 = vadd.f32 %v2430, %v2470
    %v2472 = vpop.f32.mrf.mxu0
    %v2473 = vpop.f32.mrf.mxu0
    %2474 = vdwg.mxu0
    %2475 = vmatprep.subr.bf16.mxu0 %v1940
    %2476 = vmatpush1.bf16.msra.mxu0 %v1939
    %2477 = vmatprep.subr.bf16.mxu0 %v1932
    %2478 = vmatpush1.bf16.msra.mxu0 %v1931
    %2479 = vmatprep.subr.bf16.mxu0 %v1924
    %2480 = vmatpush1.bf16.msra.mxu0 %v1923
    %2481 = vmatprep.subr.bf16.mxu0 %v1916
    %2482 = vmatpush1.bf16.msra.mxu0 %v1915
    %2483 = vmatprep.subr.bf16.mxu0 %v1908
    %2484 = vmatpush1.bf16.msra.mxu0 %v1907
    %2485 = vmatprep.subr.bf16.mxu0 %v1900
    %2486 = vmatpush1.bf16.msra.mxu0 %v1899
    %2487 = vmatprep.subr.bf16.mxu0 %v1892
    %2488 = vmatpush1.bf16.msra.mxu0 %v1891
    %2489 = vmatprep.subr.bf16.mxu0 %v1884
    %2490 = vmatpush1.bf16.msra.mxu0 %v1883
    %2491 = vmatprep.subr.bf16.mxu0 %v2004
    %2492 = vmatpush2.bf16.msra.mxu0 %v2003
    %2493 = vmatprep.subr.bf16.mxu0 %v1996
    %2494 = vmatpush2.bf16.msra.mxu0 %v1995
    %2495 = vmatprep.subr.bf16.mxu0 %v1988
    %2496 = vmatpush2.bf16.msra.mxu0 %v1987
    %2497 = vmatprep.subr.bf16.mxu0 %v1980
    %2498 = vmatpush2.bf16.msra.mxu0 %v1979
    %2499 = vmatprep.subr.bf16.mxu0 %v1972
    %2500 = vmatpush2.bf16.msra.mxu0 %v1971
    %2501 = vmatprep.subr.bf16.mxu0 %v1964
    %2502 = vmatpush2.bf16.msra.mxu0 %v1963
    %2503 = vmatprep.subr.bf16.mxu0 %v1956
    %2504 = vmatpush2.bf16.msra.mxu0 %v1955
    %2505 = vmatprep.subr.bf16.mxu0 %v1948
    %2506 = vmatpush2.bf16.msra.mxu0 %v1947
    %2507 = vmatprep.mubr.bf16.mxu0 %v854
    %2508 = vmatmul.mubr.bf16.gmra.mxu0 %v853
    %v2509 = vpop.f32.mrf.mxu0
    %v2510 = vadd.f32 0.0, %v2509
    %v2511 = vpop.f32.mrf.mxu0
    %v2512 = vadd.f32 0.0, %v2511
    %v2513 = vpop.f32.mrf.mxu0
    %v2514 = vpop.f32.mrf.mxu0
    %2515 = vdwg.mxu0
    %2516 = vmatprep.subr.bf16.mxu0 %v2068
    %2517 = vmatpush1.bf16.msra.mxu0 %v2067
    %2518 = vmatprep.subr.bf16.mxu0 %v2060
    %2519 = vmatpush1.bf16.msra.mxu0 %v2059
    %2520 = vmatprep.subr.bf16.mxu0 %v2052
    %2521 = vmatpush1.bf16.msra.mxu0 %v2051
    %2522 = vmatprep.subr.bf16.mxu0 %v2044
    %2523 = vmatpush1.bf16.msra.mxu0 %v2043
    %2524 = vmatprep.subr.bf16.mxu0 %v2036
    %2525 = vmatpush1.bf16.msra.mxu0 %v2035
    %2526 = vmatprep.subr.bf16.mxu0 %v2028
    %2527 = vmatpush1.bf16.msra.mxu0 %v2027
    %2528 = vmatprep.subr.bf16.mxu0 %v2020
    %2529 = vmatpush1.bf16.msra.mxu0 %v2019
    %2530 = vmatprep.subr.bf16.mxu0 %v2012
    %2531 = vmatpush1.bf16.msra.mxu0 %v2011
    %2532 = vmatprep.subr.bf16.mxu0 %v2132
    %2533 = vmatpush2.bf16.msra.mxu0 %v2131
    %2534 = vmatprep.subr.bf16.mxu0 %v2124
    %2535 = vmatpush2.bf16.msra.mxu0 %v2123
    %2536 = vmatprep.subr.bf16.mxu0 %v2116
    %2537 = vmatpush2.bf16.msra.mxu0 %v2115
    %2538 = vmatprep.subr.bf16.mxu0 %v2108
    %2539 = vmatpush2.bf16.msra.mxu0 %v2107
    %2540 = vmatprep.subr.bf16.mxu0 %v2100
    %2541 = vmatpush2.bf16.msra.mxu0 %v2099
    %2542 = vmatprep.subr.bf16.mxu0 %v2092
    %2543 = vmatpush2.bf16.msra.mxu0 %v2091
    %2544 = vmatprep.subr.bf16.mxu0 %v2084
    %2545 = vmatpush2.bf16.msra.mxu0 %v2083
    %2546 = vmatprep.subr.bf16.mxu0 %v2076
    %2547 = vmatpush2.bf16.msra.mxu0 %v2075
    %2548 = vmatprep.mubr.bf16.mxu0 %v856
    %2549 = vmatmul.mubr.bf16.gmra.mxu0 %v855
    %v2550 = vpop.f32.mrf.mxu0
    %v2551 = vadd.f32 %v2510, %v2550
    %v2552 = vpop.f32.mrf.mxu0
    %v2553 = vadd.f32 %v2512, %v2552
    %v2554 = vpop.f32.mrf.mxu0
    %v2555 = vpop.f32.mrf.mxu0
    %2556 = vdwg.mxu0
    %2557 = vmatprep.subr.bf16.mxu0 %v1942
    %2558 = vmatpush1.bf16.msra.mxu0 %v1941
    %2559 = vmatprep.subr.bf16.mxu0 %v1934
    %2560 = vmatpush1.bf16.msra.mxu0 %v1933
    %2561 = vmatprep.subr.bf16.mxu0 %v1926
    %2562 = vmatpush1.bf16.msra.mxu0 %v1925
    %2563 = vmatprep.subr.bf16.mxu0 %v1918
    %2564 = vmatpush1.bf16.msra.mxu0 %v1917
    %2565 = vmatprep.subr.bf16.mxu0 %v1910
    %2566 = vmatpush1.bf16.msra.mxu0 %v1909
    %2567 = vmatprep.subr.bf16.mxu0 %v1902
    %2568 = vmatpush1.bf16.msra.mxu0 %v1901
    %2569 = vmatprep.subr.bf16.mxu0 %v1894
    %2570 = vmatpush1.bf16.msra.mxu0 %v1893
    %2571 = vmatprep.subr.bf16.mxu0 %v1886
    %2572 = vmatpush1.bf16.msra.mxu0 %v1885
    %2573 = vmatprep.subr.bf16.mxu0 %v2006
    %2574 = vmatpush2.bf16.msra.mxu0 %v2005
    %2575 = vmatprep.subr.bf16.mxu0 %v1998
    %2576 = vmatpush2.bf16.msra.mxu0 %v1997
    %2577 = vmatprep.subr.bf16.mxu0 %v1990
    %2578 = vmatpush2.bf16.msra.mxu0 %v1989
    %2579 = vmatprep.subr.bf16.mxu0 %v1982
    %2580 = vmatpush2.bf16.msra.mxu0 %v1981
    %2581 = vmatprep.subr.bf16.mxu0 %v1974
    %2582 = vmatpush2.bf16.msra.mxu0 %v1973
    %2583 = vmatprep.subr.bf16.mxu0 %v1966
    %2584 = vmatpush2.bf16.msra.mxu0 %v1965
    %2585 = vmatprep.subr.bf16.mxu0 %v1958
    %2586 = vmatpush2.bf16.msra.mxu0 %v1957
    %2587 = vmatprep.subr.bf16.mxu0 %v1950
    %2588 = vmatpush2.bf16.msra.mxu0 %v1949
    %2589 = vmatprep.mubr.bf16.mxu0 %v854
    %2590 = vmatmul.mubr.bf16.gmra.mxu0 %v853
    %v2591 = vpop.f32.mrf.mxu0
    %v2592 = vadd.f32 0.0, %v2591
    %v2593 = vpop.f32.mrf.mxu0
    %v2594 = vadd.f32 0.0, %v2593
    %v2595 = vpop.f32.mrf.mxu0
    %v2596 = vpop.f32.mrf.mxu0
    %2597 = vdwg.mxu0
    %2598 = vmatprep.subr.bf16.mxu0 %v2070
    %2599 = vmatpush1.bf16.msra.mxu0 %v2069
    %2600 = vmatprep.subr.bf16.mxu0 %v2062
    %2601 = vmatpush1.bf16.msra.mxu0 %v2061
    %2602 = vmatprep.subr.bf16.mxu0 %v2054
    %2603 = vmatpush1.bf16.msra.mxu0 %v2053
    %2604 = vmatprep.subr.bf16.mxu0 %v2046
    %2605 = vmatpush1.bf16.msra.mxu0 %v2045
    %2606 = vmatprep.subr.bf16.mxu0 %v2038
    %2607 = vmatpush1.bf16.msra.mxu0 %v2037
    %2608 = vmatprep.subr.bf16.mxu0 %v2030
    %2609 = vmatpush1.bf16.msra.mxu0 %v2029
    %2610 = vmatprep.subr.bf16.mxu0 %v2022
    %2611 = vmatpush1.bf16.msra.mxu0 %v2021
    %2612 = vmatprep.subr.bf16.mxu0 %v2014
    %2613 = vmatpush1.bf16.msra.mxu0 %v2013
    %2614 = vmatprep.subr.bf16.mxu0 %v2134
    %2615 = vmatpush2.bf16.msra.mxu0 %v2133
    %2616 = vmatprep.subr.bf16.mxu0 %v2126
    %2617 = vmatpush2.bf16.msra.mxu0 %v2125
    %2618 = vmatprep.subr.bf16.mxu0 %v2118
    %2619 = vmatpush2.bf16.msra.mxu0 %v2117
    %2620 = vmatprep.subr.bf16.mxu0 %v2110
    %2621 = vmatpush2.bf16.msra.mxu0 %v2109
    %2622 = vmatprep.subr.bf16.mxu0 %v2102
    %2623 = vmatpush2.bf16.msra.mxu0 %v2101
    %2624 = vmatprep.subr.bf16.mxu0 %v2094
    %2625 = vmatpush2.bf16.msra.mxu0 %v2093
    %2626 = vmatprep.subr.bf16.mxu0 %v2086
    %2627 = vmatpush2.bf16.msra.mxu0 %v2085
    %2628 = vmatprep.subr.bf16.mxu0 %v2078
    %2629 = vmatpush2.bf16.msra.mxu0 %v2077
    %2630 = vmatprep.mubr.bf16.mxu0 %v856
    %2631 = vmatmul.mubr.bf16.gmra.mxu0 %v855
    %v2632 = vpop.f32.mrf.mxu0
    %v2633 = vadd.f32 %v2592, %v2632
    %v2634 = vpop.f32.mrf.mxu0
    %v2635 = vadd.f32 %v2594, %v2634
    %v2636 = vpop.f32.mrf.mxu0
    %v2637 = vpop.f32.mrf.mxu0
    %2638 = vdwg.mxu0
    %2639 = vmatprep.subr.bf16.mxu0 %v1944
    %2640 = vmatpush1.bf16.msra.mxu0 %v1943
    %2641 = vmatprep.subr.bf16.mxu0 %v1936
    %2642 = vmatpush1.bf16.msra.mxu0 %v1935
    %2643 = vmatprep.subr.bf16.mxu0 %v1928
    %2644 = vmatpush1.bf16.msra.mxu0 %v1927
    %2645 = vmatprep.subr.bf16.mxu0 %v1920
    %2646 = vmatpush1.bf16.msra.mxu0 %v1919
    %2647 = vmatprep.subr.bf16.mxu0 %v1912
    %2648 = vmatpush1.bf16.msra.mxu0 %v1911
    %2649 = vmatprep.subr.bf16.mxu0 %v1904
    %2650 = vmatpush1.bf16.msra.mxu0 %v1903
    %2651 = vmatprep.subr.bf16.mxu0 %v1896
    %2652 = vmatpush1.bf16.msra.mxu0 %v1895
    %2653 = vmatprep.subr.bf16.mxu0 %v1888
    %2654 = vmatpush1.bf16.msra.mxu0 %v1887
    %2655 = vmatprep.subr.bf16.mxu0 %v2008
    %2656 = vmatpush2.bf16.msra.mxu0 %v2007
    %2657 = vmatprep.subr.bf16.mxu0 %v2000
    %2658 = vmatpush2.bf16.msra.mxu0 %v1999
    %2659 = vmatprep.subr.bf16.mxu0 %v1992
    %2660 = vmatpush2.bf16.msra.mxu0 %v1991
    %2661 = vmatprep.subr.bf16.mxu0 %v1984
    %2662 = vmatpush2.bf16.msra.mxu0 %v1983
    %2663 = vmatprep.subr.bf16.mxu0 %v1976
    %2664 = vmatpush2.bf16.msra.mxu0 %v1975
    %2665 = vmatprep.subr.bf16.mxu0 %v1968
    %2666 = vmatpush2.bf16.msra.mxu0 %v1967
    %2667 = vmatprep.subr.bf16.mxu0 %v1960
    %2668 = vmatpush2.bf16.msra.mxu0 %v1959
    %2669 = vmatprep.subr.bf16.mxu0 %v1952
    %2670 = vmatpush2.bf16.msra.mxu0 %v1951
    %2671 = vmatprep.mubr.bf16.mxu0 %v854
    %2672 = vmatmul.mubr.bf16.gmra.mxu0 %v853
    %v2673 = vpop.f32.mrf.mxu0
    %v2674 = vadd.f32 0.0, %v2673
    %v2675 = vpop.f32.mrf.mxu0
    %v2676 = vadd.f32 0.0, %v2675
    %v2677 = vpop.f32.mrf.mxu0
    %v2678 = vpop.f32.mrf.mxu0
    %2679 = vdwg.mxu0
    %2680 = vmatprep.subr.bf16.mxu0 %v2072
    %2681 = vmatpush1.bf16.msra.mxu0 %v2071
    %2682 = vmatprep.subr.bf16.mxu0 %v2064
    %2683 = vmatpush1.bf16.msra.mxu0 %v2063
    %2684 = vmatprep.subr.bf16.mxu0 %v2056
    %2685 = vmatpush1.bf16.msra.mxu0 %v2055
    %2686 = vmatprep.subr.bf16.mxu0 %v2048
    %2687 = vmatpush1.bf16.msra.mxu0 %v2047
    %2688 = vmatprep.subr.bf16.mxu0 %v2040
    %2689 = vmatpush1.bf16.msra.mxu0 %v2039
    %2690 = vmatprep.subr.bf16.mxu0 %v2032
    %2691 = vmatpush1.bf16.msra.mxu0 %v2031
    %2692 = vmatprep.subr.bf16.mxu0 %v2024
    %2693 = vmatpush1.bf16.msra.mxu0 %v2023
    %2694 = vmatprep.subr.bf16.mxu0 %v2016
    %2695 = vmatpush1.bf16.msra.mxu0 %v2015
    %2696 = vmatprep.subr.bf16.mxu0 %v2136
    %2697 = vmatpush2.bf16.msra.mxu0 %v2135
    %2698 = vmatprep.subr.bf16.mxu0 %v2128
    %2699 = vmatpush2.bf16.msra.mxu0 %v2127
    %2700 = vmatprep.subr.bf16.mxu0 %v2120
    %2701 = vmatpush2.bf16.msra.mxu0 %v2119
    %2702 = vmatprep.subr.bf16.mxu0 %v2112
    %2703 = vmatpush2.bf16.msra.mxu0 %v2111
    %2704 = vmatprep.subr.bf16.mxu0 %v2104
    %2705 = vmatpush2.bf16.msra.mxu0 %v2103
    %2706 = vmatprep.subr.bf16.mxu0 %v2096
    %2707 = vmatpush2.bf16.msra.mxu0 %v2095
    %2708 = vmatprep.subr.bf16.mxu0 %v2088
    %2709 = vmatpush2.bf16.msra.mxu0 %v2087
    %2710 = vmatprep.subr.bf16.mxu0 %v2080
    %2711 = vmatpush2.bf16.msra.mxu0 %v2079
    %2712 = vmatprep.mubr.bf16.mxu0 %v856
    %2713 = vmatmul.mubr.bf16.gmra.mxu0 %v855
    %v2714 = vpop.f32.mrf.mxu0
    %v2715 = vadd.f32 %v2674, %v2714
    %v2716 = vpop.f32.mrf.mxu0
    %v2717 = vadd.f32 %v2676, %v2716
    %v2718 = vpop.f32.mrf.mxu0
    %v2719 = vpop.f32.mrf.mxu0
    %2720 = vdwg.mxu0
    %v2721 = vpack.c.bf16 %v2469, %v2469
    %v2722 = vpack.c.bf16 %v2471, %v2471
    %v2723 = vpack.c.bf16 %v2551, %v2551
    %v2724 = vpack.c.bf16 %v2553, %v2553
    %v2725 = vpack.c.bf16 %v2633, %v2633
    %v2726 = vpack.c.bf16 %v2635, %v2635
    %v2727 = vpack.c.bf16 %v2715, %v2715
    %v2728 = vpack.c.bf16 %v2717, %v2717
    %v2729 = vld [vmem:[#allocation13] sm:$0xff]
    %v2731 = vlaneseq
    %v2732 = vshrl.u32 %v2731, 7
    %v2733 = vsub.s32 0, %v2732
    %v2734 = vrot.slane %v2729, %v2733
    %v2735 = vlaneseq
    %v2736 = vshrl.u32 %v2735, 7
    %v2737 = vsub.s32 1, %v2736
    %v2738 = vrot.slane %v2729, %v2737
    %v2739 = vlaneseq
    %v2740 = vshrl.u32 %v2739, 7
    %v2741 = vsub.s32 2, %v2740
    %v2742 = vrot.slane %v2729, %v2741
    %v2743 = vlaneseq
    %v2744 = vshrl.u32 %v2743, 7
    %v2745 = vsub.s32 3, %v2744
    %v2746 = vrot.slane %v2729, %v2745
    %v2747 = vlaneseq
    %v2748 = vshrl.u32 %v2747, 7
    %v2749 = vsub.s32 4, %v2748
    %v2750 = vrot.slane %v2729, %v2749
    %v2751 = vlaneseq
    %v2752 = vshrl.u32 %v2751, 7
    %v2753 = vsub.s32 5, %v2752
    %v2754 = vrot.slane %v2729, %v2753
    %v2755 = vlaneseq
    %v2756 = vshrl.u32 %v2755, 7
    %v2757 = vsub.s32 6, %v2756
    %v2758 = vrot.slane %v2729, %v2757
    %v2759 = vlaneseq
    %v2760 = vshrl.u32 %v2759, 7
    %v2761 = vsub.s32 7, %v2760
    %v2762 = vrot.slane %v2729, %v2761
    %v2771 = vpack.c.bf16 %v2734, %v2734
    %v2772 = vpack.c.bf16 %v2738, %v2738
    %v2773 = vpack.c.bf16 %v2742, %v2742
    %v2774 = vpack.c.bf16 %v2746, %v2746
    %v2775 = vpack.c.bf16 %v2750, %v2750
    %v2776 = vpack.c.bf16 %v2754, %v2754
    %v2777 = vpack.c.bf16 %v2758, %v2758
    %v2778 = vpack.c.bf16 %v2762, %v2762
    %v2780 = vpack.i.b16 %v2771, %v2771
    %v2782 = vlaneseq
    %v2783 = vshrl.u32 %v2782, 7
    %v2784 = vsub.s32 0, %v2783
    %v2785 = vrot.slane %v2780, %v2784
    %v2787 = vpack.i.b16 %v2772, %v2772
    %v2789 = vlaneseq
    %v2790 = vshrl.u32 %v2789, 7
    %v2791 = vsub.s32 0, %v2790
    %v2792 = vrot.slane %v2787, %v2791
    %v2794 = vpack.i.b16 %v2773, %v2773
    %v2796 = vlaneseq
    %v2797 = vshrl.u32 %v2796, 7
    %v2798 = vsub.s32 0, %v2797
    %v2799 = vrot.slane %v2794, %v2798
    %v2801 = vpack.i.b16 %v2774, %v2774
    %v2803 = vlaneseq
    %v2804 = vshrl.u32 %v2803, 7
    %v2805 = vsub.s32 0, %v2804
    %v2806 = vrot.slane %v2801, %v2805
    %v2808 = vpack.i.b16 %v2775, %v2775
    %v2810 = vlaneseq
    %v2811 = vshrl.u32 %v2810, 7
    %v2812 = vsub.s32 0, %v2811
    %v2813 = vrot.slane %v2808, %v2812
    %v2815 = vpack.i.b16 %v2776, %v2776
    %v2817 = vlaneseq
    %v2818 = vshrl.u32 %v2817, 7
    %v2819 = vsub.s32 0, %v2818
    %v2820 = vrot.slane %v2815, %v2819
    %v2822 = vpack.i.b16 %v2777, %v2777
    %v2824 = vlaneseq
    %v2825 = vshrl.u32 %v2824, 7
    %v2826 = vsub.s32 0, %v2825
    %v2827 = vrot.slane %v2822, %v2826
    %v2829 = vpack.i.b16 %v2778, %v2778
    %v2831 = vlaneseq
    %v2832 = vshrl.u32 %v2831, 7
    %v2833 = vsub.s32 0, %v2832
    %v2834 = vrot.slane %v2829, %v2833
    %v2835 = vadd.bf16 %v2721, %v2785
    %v2836 = vadd.bf16 %v2722, %v2792
    %v2837 = vadd.bf16 %v2723, %v2799
    %v2838 = vadd.bf16 %v2724, %v2806
    %v2839 = vadd.bf16 %v2725, %v2813
    %v2840 = vadd.bf16 %v2726, %v2820
    %v2841 = vadd.bf16 %v2727, %v2827
    %v2842 = vadd.bf16 %v2728, %v2834
    %v2843 = vmul.bf16 %v2835, 1045249613
    %v2844 = vmul.bf16 %v2836, 1045249613
    %v2845 = vmul.bf16 %v2837, 1045249613
    %v2846 = vmul.bf16 %v2838, 1045249613
    %v2847 = vmul.bf16 %v2839, 1045249613
    %v2848 = vmul.bf16 %v2840, 1045249613
    %v2849 = vmul.bf16 %v2841, 1045249613
    %v2850 = vmul.bf16 %v2842, 1045249613
    %v2851 = vmax.bf16 %v2835, %v2843
    %v2852 = vmax.bf16 %v2836, %v2844
    %v2853 = vmax.bf16 %v2837, %v2845
    %v2854 = vmax.bf16 %v2838, %v2846
    %v2855 = vmax.bf16 %v2839, %v2847
    %v2856 = vmax.bf16 %v2840, %v2848
    %v2857 = vmax.bf16 %v2841, %v2849
    %v2858 = vmax.bf16 %v2842, %v2850
    %v2859 = vld [vmem:[#allocation14] sm:$0xff]
    %v2860 = vld [vmem:[#allocation14 + $0x8] sm:$0xff]
    %v2861 = vld [vmem:[#allocation14 + $0x10] sm:$0xff]
    %v2862 = vld [vmem:[#allocation14 + $0x18] sm:$0xf]
    %v2863 = vld [vmem:[#allocation14 + $0x1c] sm:$0xff]
    %v2864 = vld [vmem:[#allocation14 + $0x24] sm:$0xff]
    %v2865 = vld [vmem:[#allocation14 + $0x2c] sm:$0xff]
    %v2866 = vld [vmem:[#allocation14 + $0x34] sm:$0xf]
    %v2867 = vld [vmem:[#allocation14 + $0x38] sm:$0xff]
    %v2868 = vld [vmem:[#allocation14 + $0x40] sm:$0xff]
    %v2869 = vld [vmem:[#allocation14 + $0x48] sm:$0xff]
    %v2870 = vld [vmem:[#allocation14 + $0x50] sm:$0xf]
    %v2871 = vld [vmem:[#allocation14 + $0x54] sm:$0xff]
    %v2872 = vld [vmem:[#allocation14 + $0x5c] sm:$0xff]
    %v2873 = vld [vmem:[#allocation14 + $0x64] sm:$0xff]
    %v2874 = vld [vmem:[#allocation14 + $0x6c] sm:$0xf]
    %v2875 = vld [vmem:[#allocation14 + $0x70] sm:$0xff]
    %v2876 = vld [vmem:[#allocation14 + $0x78] sm:$0xff]
    %v2877 = vld [vmem:[#allocation14 + $0x80] sm:$0xff]
    %v2878 = vld [vmem:[#allocation14 + $0x88] sm:$0xf]
    %v2879 = vld [vmem:[#allocation14 + $0x8c] sm:$0xff]
    %v2880 = vld [vmem:[#allocation14 + $0x94] sm:$0xff]
    %v2881 = vld [vmem:[#allocation14 + $0x9c] sm:$0xff]
    %v2882 = vld [vmem:[#allocation14 + $0xa4] sm:$0xf]
    %v2883 = vld [vmem:[#allocation14 + $0xa8] sm:$0xff]
    %v2884 = vld [vmem:[#allocation14 + $0xb0] sm:$0xff]
    %v2885 = vld [vmem:[#allocation14 + $0xb8] sm:$0xff]
    %v2886 = vld [vmem:[#allocation14 + $0xc0] sm:$0xf]
    %v2887 = vld [vmem:[#allocation14 + $0xc4] sm:$0xff]
    %v2888 = vld [vmem:[#allocation14 + $0xcc] sm:$0xff]
    %v2889 = vld [vmem:[#allocation14 + $0xd4] sm:$0xff]
    %v2890 = vld [vmem:[#allocation14 + $0xdc] sm:$0xf]
    %v2891 = vld [vmem:[#allocation14 + $0xe0] sm:$0xff]
    %v2892 = vld [vmem:[#allocation14 + $0xe8] sm:$0xff]
    %v2893 = vld [vmem:[#allocation14 + $0xf0] sm:$0xff]
    %v2894 = vld [vmem:[#allocation14 + $0xf8] sm:$0xf]
    %v2895 = vld [vmem:[#allocation14 + $0xfc] sm:$0xff]
    %v2896 = vld [vmem:[#allocation14 + $0x104] sm:$0xff]
    %v2897 = vld [vmem:[#allocation14 + $0x10c] sm:$0xff]
    %v2898 = vld [vmem:[#allocation14 + $0x114] sm:$0xf]
    %v2899 = vld [vmem:[#allocation14 + $0x118] sm:$0xff]
    %v2900 = vld [vmem:[#allocation14 + $0x120] sm:$0xff]
    %v2901 = vld [vmem:[#allocation14 + $0x128] sm:$0xff]
    %v2902 = vld [vmem:[#allocation14 + $0x130] sm:$0xf]
    %v2903 = vld [vmem:[#allocation14 + $0x134] sm:$0xff]
    %v2904 = vld [vmem:[#allocation14 + $0x13c] sm:$0xff]
    %v2905 = vld [vmem:[#allocation14 + $0x144] sm:$0xff]
    %v2906 = vld [vmem:[#allocation14 + $0x14c] sm:$0xf]
    %v2907 = vld [vmem:[#allocation14 + $0x150] sm:$0xff]
    %v2908 = vld [vmem:[#allocation14 + $0x158] sm:$0xff]
    %v2909 = vld [vmem:[#allocation14 + $0x160] sm:$0xff]
    %v2910 = vld [vmem:[#allocation14 + $0x168] sm:$0xf]
    %v2911 = vld [vmem:[#allocation14 + $0x16c] sm:$0xff]
    %v2912 = vld [vmem:[#allocation14 + $0x174] sm:$0xff]
    %v2913 = vld [vmem:[#allocation14 + $0x17c] sm:$0xff]
    %v2914 = vld [vmem:[#allocation14 + $0x184] sm:$0xf]
    %v2915 = vld [vmem:[#allocation14 + $0x188] sm:$0xff]
    %v2916 = vld [vmem:[#allocation14 + $0x190] sm:$0xff]
    %v2917 = vld [vmem:[#allocation14 + $0x198] sm:$0xff]
    %v2918 = vld [vmem:[#allocation14 + $0x1a0] sm:$0xf]
    %v2919 = vld [vmem:[#allocation14 + $0x1a4] sm:$0xff]
    %v2920 = vld [vmem:[#allocation14 + $0x1ac] sm:$0xff]
    %v2921 = vld [vmem:[#allocation14 + $0x1b4] sm:$0xff]
    %v2922 = vld [vmem:[#allocation14 + $0x1bc] sm:$0xf]
    %v2923 = vld [vmem:[#allocation14 + $0x1c0] sm:$0xff]
    %v2924 = vld [vmem:[#allocation14 + $0x1c8] sm:$0xff]
    %v2925 = vld [vmem:[#allocation14 + $0x1d0] sm:$0xff]
    %v2926 = vld [vmem:[#allocation14 + $0x1d8] sm:$0xf]
    %v2927 = vld [vmem:[#allocation14 + $0x1dc] sm:$0xff]
    %v2928 = vld [vmem:[#allocation14 + $0x1e4] sm:$0xff]
    %v2929 = vld [vmem:[#allocation14 + $0x1ec] sm:$0xff]
    %v2930 = vld [vmem:[#allocation14 + $0x1f4] sm:$0xf]
    %v2931 = vld [vmem:[#allocation14 + $0x1f8] sm:$0xff]
    %v2932 = vld [vmem:[#allocation14 + $0x200] sm:$0xff]
    %v2933 = vld [vmem:[#allocation14 + $0x208] sm:$0xff]
    %v2934 = vld [vmem:[#allocation14 + $0x210] sm:$0xf]
    %v2935 = vld [vmem:[#allocation14 + $0x214] sm:$0xff]
    %v2936 = vld [vmem:[#allocation14 + $0x21c] sm:$0xff]
    %v2937 = vld [vmem:[#allocation14 + $0x224] sm:$0xff]
    %v2938 = vld [vmem:[#allocation14 + $0x22c] sm:$0xf]
    %v2939 = vld [vmem:[#allocation14 + $0x230] sm:$0xff]
    %v2940 = vld [vmem:[#allocation14 + $0x238] sm:$0xff]
    %v2941 = vld [vmem:[#allocation14 + $0x240] sm:$0xff]
    %v2942 = vld [vmem:[#allocation14 + $0x248] sm:$0xf]
    %v2943 = vld [vmem:[#allocation14 + $0x24c] sm:$0xff]
    %v2944 = vld [vmem:[#allocation14 + $0x254] sm:$0xff]
    %v2945 = vld [vmem:[#allocation14 + $0x25c] sm:$0xff]
    %v2946 = vld [vmem:[#allocation14 + $0x264] sm:$0xf]
    %v2947 = vld [vmem:[#allocation14 + $0x268] sm:$0xff]
    %v2948 = vld [vmem:[#allocation14 + $0x270] sm:$0xff]
    %v2949 = vld [vmem:[#allocation14 + $0x278] sm:$0xff]
    %v2950 = vld [vmem:[#allocation14 + $0x280] sm:$0xf]
    %v2951 = vld [vmem:[#allocation14 + $0x284] sm:$0xff]
    %v2952 = vld [vmem:[#allocation14 + $0x28c] sm:$0xff]
    %v2953 = vld [vmem:[#allocation14 + $0x294] sm:$0xff]
    %v2954 = vld [vmem:[#allocation14 + $0x29c] sm:$0xf]
    %v2955 = vld [vmem:[#allocation14 + $0x2a0] sm:$0xff]
    %v2956 = vld [vmem:[#allocation14 + $0x2a8] sm:$0xff]
    %v2957 = vld [vmem:[#allocation14 + $0x2b0] sm:$0xff]
    %v2958 = vld [vmem:[#allocation14 + $0x2b8] sm:$0xf]
    %v2959 = vld [vmem:[#allocation14 + $0x2bc] sm:$0xff]
    %v2960 = vld [vmem:[#allocation14 + $0x2c4] sm:$0xff]
    %v2961 = vld [vmem:[#allocation14 + $0x2cc] sm:$0xff]
    %v2962 = vld [vmem:[#allocation14 + $0x2d4] sm:$0xf]
    %v2963 = vld [vmem:[#allocation14 + $0x2d8] sm:$0xff]
    %v2964 = vld [vmem:[#allocation14 + $0x2e0] sm:$0xff]
    %v2965 = vld [vmem:[#allocation14 + $0x2e8] sm:$0xff]
    %v2966 = vld [vmem:[#allocation14 + $0x2f0] sm:$0xf]
    %v2967 = vld [vmem:[#allocation14 + $0x2f4] sm:$0xff]
    %v2968 = vld [vmem:[#allocation14 + $0x2fc] sm:$0xff]
    %v2969 = vld [vmem:[#allocation14 + $0x304] sm:$0xff]
    %v2970 = vld [vmem:[#allocation14 + $0x30c] sm:$0xf]
    %v2971 = vld [vmem:[#allocation14 + $0x310] sm:$0xff]
    %v2972 = vld [vmem:[#allocation14 + $0x318] sm:$0xff]
    %v2973 = vld [vmem:[#allocation14 + $0x320] sm:$0xff]
    %v2974 = vld [vmem:[#allocation14 + $0x328] sm:$0xf]
    %v2975 = vld [vmem:[#allocation14 + $0x32c] sm:$0xff]
    %v2976 = vld [vmem:[#allocation14 + $0x334] sm:$0xff]
    %v2977 = vld [vmem:[#allocation14 + $0x33c] sm:$0xff]
    %v2978 = vld [vmem:[#allocation14 + $0x344] sm:$0xf]
    %v2979 = vld [vmem:[#allocation14 + $0x348] sm:$0xff]
    %v2980 = vld [vmem:[#allocation14 + $0x350] sm:$0xff]
    %v2981 = vld [vmem:[#allocation14 + $0x358] sm:$0xff]
    %v2982 = vld [vmem:[#allocation14 + $0x360] sm:$0xf]
    %v2983 = vld [vmem:[#allocation14 + $0x364] sm:$0xff]
    %v2984 = vld [vmem:[#allocation14 + $0x36c] sm:$0xff]
    %v2985 = vld [vmem:[#allocation14 + $0x374] sm:$0xff]
    %v2986 = vld [vmem:[#allocation14 + $0x37c] sm:$0xf]
    %v2987 = vld [vmem:[#allocation14 + $0x380] sm:$0xff]
    %v2988 = vld [vmem:[#allocation14 + $0x388] sm:$0xff]
    %v2989 = vld [vmem:[#allocation14 + $0x390] sm:$0xff]
    %v2990 = vld [vmem:[#allocation14 + $0x398] sm:$0xf]
    %v2991 = vld [vmem:[#allocation14 + $0x39c] sm:$0xff]
    %v2992 = vld [vmem:[#allocation14 + $0x3a4] sm:$0xff]
    %v2993 = vld [vmem:[#allocation14 + $0x3ac] sm:$0xff]
    %v2994 = vld [vmem:[#allocation14 + $0x3b4] sm:$0xf]
    %v2995 = vld [vmem:[#allocation14 + $0x3b8] sm:$0xff]
    %v2996 = vld [vmem:[#allocation14 + $0x3c0] sm:$0xff]
    %v2997 = vld [vmem:[#allocation14 + $0x3c8] sm:$0xff]
    %v2998 = vld [vmem:[#allocation14 + $0x3d0] sm:$0xf]
    %v2999 = vld [vmem:[#allocation14 + $0x3d4] sm:$0xff]
    %v3000 = vld [vmem:[#allocation14 + $0x3dc] sm:$0xff]
    %v3001 = vld [vmem:[#allocation14 + $0x3e4] sm:$0xff]
    %v3002 = vld [vmem:[#allocation14 + $0x3ec] sm:$0xf]
    %v3003 = vld [vmem:[#allocation14 + $0x3f0] sm:$0xff]
    %v3004 = vld [vmem:[#allocation14 + $0x3f8] sm:$0xff]
    %v3005 = vld [vmem:[#allocation14 + $0x400] sm:$0xff]
    %v3006 = vld [vmem:[#allocation14 + $0x408] sm:$0xf]
    %v3007 = vld [vmem:[#allocation14 + $0x40c] sm:$0xff]
    %v3008 = vld [vmem:[#allocation14 + $0x414] sm:$0xff]
    %v3009 = vld [vmem:[#allocation14 + $0x41c] sm:$0xff]
    %v3010 = vld [vmem:[#allocation14 + $0x424] sm:$0xf]
    %v3011 = vld [vmem:[#allocation14 + $0x428] sm:$0xff]
    %v3012 = vld [vmem:[#allocation14 + $0x430] sm:$0xff]
    %v3013 = vld [vmem:[#allocation14 + $0x438] sm:$0xff]
    %v3014 = vld [vmem:[#allocation14 + $0x440] sm:$0xf]
    %v3015 = vld [vmem:[#allocation14 + $0x444] sm:$0xff]
    %v3016 = vld [vmem:[#allocation14 + $0x44c] sm:$0xff]
    %v3017 = vld [vmem:[#allocation14 + $0x454] sm:$0xff]
    %v3018 = vld [vmem:[#allocation14 + $0x45c] sm:$0xf]
    %v3019 = vld [vmem:[#allocation14 + $0x460] sm:$0xff]
    %v3020 = vld [vmem:[#allocation14 + $0x468] sm:$0xff]
    %v3021 = vld [vmem:[#allocation14 + $0x470] sm:$0xff]
    %v3022 = vld [vmem:[#allocation14 + $0x478] sm:$0xf]
    %v3023 = vld [vmem:[#allocation14 + $0x47c] sm:$0xff]
    %v3024 = vld [vmem:[#allocation14 + $0x484] sm:$0xff]
    %v3025 = vld [vmem:[#allocation14 + $0x48c] sm:$0xff]
    %v3026 = vld [vmem:[#allocation14 + $0x494] sm:$0xf]
    %v3027 = vld [vmem:[#allocation14 + $0x498] sm:$0xff]
    %v3028 = vld [vmem:[#allocation14 + $0x4a0] sm:$0xff]
    %v3029 = vld [vmem:[#allocation14 + $0x4a8] sm:$0xff]
    %v3030 = vld [vmem:[#allocation14 + $0x4b0] sm:$0xf]
    %v3031 = vld [vmem:[#allocation14 + $0x4b4] sm:$0xff]
    %v3032 = vld [vmem:[#allocation14 + $0x4bc] sm:$0xff]
    %v3033 = vld [vmem:[#allocation14 + $0x4c4] sm:$0xff]
    %v3034 = vld [vmem:[#allocation14 + $0x4cc] sm:$0xf]
    %v3035 = vld [vmem:[#allocation14 + $0x4d0] sm:$0xff]
    %v3036 = vld [vmem:[#allocation14 + $0x4d8] sm:$0xff]
    %v3037 = vld [vmem:[#allocation14 + $0x4e0] sm:$0xff]
    %v3038 = vld [vmem:[#allocation14 + $0x4e8] sm:$0xf]
    %v3039 = vld [vmem:[#allocation14 + $0x4ec] sm:$0xff]
    %v3040 = vld [vmem:[#allocation14 + $0x4f4] sm:$0xff]
    %v3041 = vld [vmem:[#allocation14 + $0x4fc] sm:$0xff]
    %v3042 = vld [vmem:[#allocation14 + $0x504] sm:$0xf]
    %v3043 = vld [vmem:[#allocation14 + $0x508] sm:$0xff]
    %v3044 = vld [vmem:[#allocation14 + $0x510] sm:$0xff]
    %v3045 = vld [vmem:[#allocation14 + $0x518] sm:$0xff]
    %v3046 = vld [vmem:[#allocation14 + $0x520] sm:$0xf]
    %v3047 = vld [vmem:[#allocation14 + $0x524] sm:$0xff]
    %v3048 = vld [vmem:[#allocation14 + $0x52c] sm:$0xff]
    %v3049 = vld [vmem:[#allocation14 + $0x534] sm:$0xff]
    %v3050 = vld [vmem:[#allocation14 + $0x53c] sm:$0xf]
    %v3051 = vld [vmem:[#allocation14 + $0x540] sm:$0xff]
    %v3052 = vld [vmem:[#allocation14 + $0x548] sm:$0xff]
    %v3053 = vld [vmem:[#allocation14 + $0x550] sm:$0xff]
    %v3054 = vld [vmem:[#allocation14 + $0x558] sm:$0xf]
    %v3055 = vld [vmem:[#allocation14 + $0x55c] sm:$0xff]
    %v3056 = vld [vmem:[#allocation14 + $0x564] sm:$0xff]
    %v3057 = vld [vmem:[#allocation14 + $0x56c] sm:$0xff]
    %v3058 = vld [vmem:[#allocation14 + $0x574] sm:$0xf]
    %v3059 = vld [vmem:[#allocation14 + $0x578] sm:$0xff]
    %v3060 = vld [vmem:[#allocation14 + $0x580] sm:$0xff]
    %v3061 = vld [vmem:[#allocation14 + $0x588] sm:$0xff]
    %v3062 = vld [vmem:[#allocation14 + $0x590] sm:$0xf]
    %v3063 = vld [vmem:[#allocation14 + $0x594] sm:$0xff]
    %v3064 = vld [vmem:[#allocation14 + $0x59c] sm:$0xff]
    %v3065 = vld [vmem:[#allocation14 + $0x5a4] sm:$0xff]
    %v3066 = vld [vmem:[#allocation14 + $0x5ac] sm:$0xf]
    %v3067 = vld [vmem:[#allocation14 + $0x5b0] sm:$0xff]
    %v3068 = vld [vmem:[#allocation14 + $0x5b8] sm:$0xff]
    %v3069 = vld [vmem:[#allocation14 + $0x5c0] sm:$0xff]
    %v3070 = vld [vmem:[#allocation14 + $0x5c8] sm:$0xf]
    %v3071 = vld [vmem:[#allocation14 + $0x5cc] sm:$0xff]
    %v3072 = vld [vmem:[#allocation14 + $0x5d4] sm:$0xff]
    %v3073 = vld [vmem:[#allocation14 + $0x5dc] sm:$0xff]
    %v3074 = vld [vmem:[#allocation14 + $0x5e4] sm:$0xf]
    %v3075 = vld [vmem:[#allocation14 + $0x5e8] sm:$0xff]
    %v3076 = vld [vmem:[#allocation14 + $0x5f0] sm:$0xff]
    %v3077 = vld [vmem:[#allocation14 + $0x5f8] sm:$0xff]
    %v3078 = vld [vmem:[#allocation14 + $0x600] sm:$0xf]
    %v3079 = vld [vmem:[#allocation14 + $0x604] sm:$0xff]
    %v3080 = vld [vmem:[#allocation14 + $0x60c] sm:$0xff]
    %v3081 = vld [vmem:[#allocation14 + $0x614] sm:$0xff]
    %v3082 = vld [vmem:[#allocation14 + $0x61c] sm:$0xf]
    %v3083 = vld [vmem:[#allocation14 + $0x620] sm:$0xff]
    %v3084 = vld [vmem:[#allocation14 + $0x628] sm:$0xff]
    %v3085 = vld [vmem:[#allocation14 + $0x630] sm:$0xff]
    %v3086 = vld [vmem:[#allocation14 + $0x638] sm:$0xf]
    %v3087 = vld [vmem:[#allocation14 + $0x63c] sm:$0xff]
    %v3088 = vld [vmem:[#allocation14 + $0x644] sm:$0xff]
    %v3089 = vld [vmem:[#allocation14 + $0x64c] sm:$0xff]
    %v3090 = vld [vmem:[#allocation14 + $0x654] sm:$0xf]
    %v3091 = vld [vmem:[#allocation14 + $0x658] sm:$0xff]
    %v3092 = vld [vmem:[#allocation14 + $0x660] sm:$0xff]
    %v3093 = vld [vmem:[#allocation14 + $0x668] sm:$0xff]
    %v3094 = vld [vmem:[#allocation14 + $0x670] sm:$0xf]
    %v3095 = vld [vmem:[#allocation14 + $0x674] sm:$0xff]
    %v3096 = vld [vmem:[#allocation14 + $0x67c] sm:$0xff]
    %v3097 = vld [vmem:[#allocation14 + $0x684] sm:$0xff]
    %v3098 = vld [vmem:[#allocation14 + $0x68c] sm:$0xf]
    %v3099 = vld [vmem:[#allocation14 + $0x690] sm:$0xff]
    %v3100 = vld [vmem:[#allocation14 + $0x698] sm:$0xff]
    %v3101 = vld [vmem:[#allocation14 + $0x6a0] sm:$0xff]
    %v3102 = vld [vmem:[#allocation14 + $0x6a8] sm:$0xf]
    %v3103 = vld [vmem:[#allocation14 + $0x6ac] sm:$0xff]
    %v3104 = vld [vmem:[#allocation14 + $0x6b4] sm:$0xff]
    %v3105 = vld [vmem:[#allocation14 + $0x6bc] sm:$0xff]
    %v3106 = vld [vmem:[#allocation14 + $0x6c4] sm:$0xf]
    %v3107 = vld [vmem:[#allocation14 + $0x6c8] sm:$0xff]
    %v3108 = vld [vmem:[#allocation14 + $0x6d0] sm:$0xff]
    %v3109 = vld [vmem:[#allocation14 + $0x6d8] sm:$0xff]
    %v3110 = vld [vmem:[#allocation14 + $0x6e0] sm:$0xf]
    %v3111 = vld [vmem:[#allocation14 + $0x6e4] sm:$0xff]
    %v3112 = vld [vmem:[#allocation14 + $0x6ec] sm:$0xff]
    %v3113 = vld [vmem:[#allocation14 + $0x6f4] sm:$0xff]
    %v3114 = vld [vmem:[#allocation14 + $0x6fc] sm:$0xf]
    %v3115 = vld [vmem:[#allocation14 + $0x700] sm:$0xff]
    %v3116 = vld [vmem:[#allocation14 + $0x708] sm:$0xff]
    %v3117 = vld [vmem:[#allocation14 + $0x710] sm:$0xff]
    %v3118 = vld [vmem:[#allocation14 + $0x718] sm:$0xf]
    %v3119 = vld [vmem:[#allocation14 + $0x71c] sm:$0xff]
    %v3120 = vld [vmem:[#allocation14 + $0x724] sm:$0xff]
    %v3121 = vld [vmem:[#allocation14 + $0x72c] sm:$0xff]
    %v3122 = vld [vmem:[#allocation14 + $0x734] sm:$0xf]
    %v3123 = vld [vmem:[#allocation14 + $0x738] sm:$0xff]
    %v3124 = vld [vmem:[#allocation14 + $0x740] sm:$0xff]
    %v3125 = vld [vmem:[#allocation14 + $0x748] sm:$0xff]
    %v3126 = vld [vmem:[#allocation14 + $0x750] sm:$0xf]
    %v3127 = vld [vmem:[#allocation14 + $0x754] sm:$0xff]
    %v3128 = vld [vmem:[#allocation14 + $0x75c] sm:$0xff]
    %v3129 = vld [vmem:[#allocation14 + $0x764] sm:$0xff]
    %v3130 = vld [vmem:[#allocation14 + $0x76c] sm:$0xf]
    %v3131 = vld [vmem:[#allocation14 + $0x770] sm:$0xff]
    %v3132 = vld [vmem:[#allocation14 + $0x778] sm:$0xff]
    %v3133 = vld [vmem:[#allocation14 + $0x780] sm:$0xff]
    %v3134 = vld [vmem:[#allocation14 + $0x788] sm:$0xf]
    %v3135 = vld [vmem:[#allocation14 + $0x78c] sm:$0xff]
    %v3136 = vld [vmem:[#allocation14 + $0x794] sm:$0xff]
    %v3137 = vld [vmem:[#allocation14 + $0x79c] sm:$0xff]
    %v3138 = vld [vmem:[#allocation14 + $0x7a4] sm:$0xf]
    %v3139 = vld [vmem:[#allocation14 + $0x7a8] sm:$0xff]
    %v3140 = vld [vmem:[#allocation14 + $0x7b0] sm:$0xff]
    %v3141 = vld [vmem:[#allocation14 + $0x7b8] sm:$0xff]
    %v3142 = vld [vmem:[#allocation14 + $0x7c0] sm:$0xf]
    %v3143 = vld [vmem:[#allocation14 + $0x7c4] sm:$0xff]
    %v3144 = vld [vmem:[#allocation14 + $0x7cc] sm:$0xff]
    %v3145 = vld [vmem:[#allocation14 + $0x7d4] sm:$0xff]
    %v3146 = vld [vmem:[#allocation14 + $0x7dc] sm:$0xf]
    %v3147 = vld [vmem:[#allocation14 + $0x7e0] sm:$0xff]
    %v3148 = vld [vmem:[#allocation14 + $0x7e8] sm:$0xff]
    %v3149 = vld [vmem:[#allocation14 + $0x7f0] sm:$0xff]
    %v3150 = vld [vmem:[#allocation14 + $0x7f8] sm:$0xf]
    %v3151 = vld [vmem:[#allocation14 + $0x7fc] sm:$0xff]
    %v3152 = vld [vmem:[#allocation14 + $0x804] sm:$0xff]
    %v3153 = vld [vmem:[#allocation14 + $0x80c] sm:$0xff]
    %v3154 = vld [vmem:[#allocation14 + $0x814] sm:$0xf]
    %v3155 = vld [vmem:[#allocation14 + $0x818] sm:$0xff]
    %v3156 = vld [vmem:[#allocation14 + $0x820] sm:$0xff]
    %v3157 = vld [vmem:[#allocation14 + $0x828] sm:$0xff]
    %v3158 = vld [vmem:[#allocation14 + $0x830] sm:$0xf]
    %v3159 = vld [vmem:[#allocation14 + $0x834] sm:$0xff]
    %v3160 = vld [vmem:[#allocation14 + $0x83c] sm:$0xff]
    %v3161 = vld [vmem:[#allocation14 + $0x844] sm:$0xff]
    %v3162 = vld [vmem:[#allocation14 + $0x84c] sm:$0xf]
    %v3163 = vld [vmem:[#allocation14 + $0x850] sm:$0xff]
    %v3164 = vld [vmem:[#allocation14 + $0x858] sm:$0xff]
    %v3165 = vld [vmem:[#allocation14 + $0x860] sm:$0xff]
    %v3166 = vld [vmem:[#allocation14 + $0x868] sm:$0xf]
    %v3167 = vld [vmem:[#allocation14 + $0x86c] sm:$0xff]
    %v3168 = vld [vmem:[#allocation14 + $0x874] sm:$0xff]
    %v3169 = vld [vmem:[#allocation14 + $0x87c] sm:$0xff]
    %v3170 = vld [vmem:[#allocation14 + $0x884] sm:$0xf]
    %v3171 = vld [vmem:[#allocation14 + $0x888] sm:$0xff]
    %v3172 = vld [vmem:[#allocation14 + $0x890] sm:$0xff]
    %v3173 = vld [vmem:[#allocation14 + $0x898] sm:$0xff]
    %v3174 = vld [vmem:[#allocation14 + $0x8a0] sm:$0xf]
    %v3175 = vld [vmem:[#allocation14 + $0x8a4] sm:$0xff]
    %v3176 = vld [vmem:[#allocation14 + $0x8ac] sm:$0xff]
    %v3177 = vld [vmem:[#allocation14 + $0x8b4] sm:$0xff]
    %v3178 = vld [vmem:[#allocation14 + $0x8bc] sm:$0xf]
    %v3179 = vld [vmem:[#allocation14 + $0x8c0] sm:$0xff]
    %v3180 = vld [vmem:[#allocation14 + $0x8c8] sm:$0xff]
    %v3181 = vld [vmem:[#allocation14 + $0x8d0] sm:$0xff]
    %v3182 = vld [vmem:[#allocation14 + $0x8d8] sm:$0xf]
    %v3183 = vld [vmem:[#allocation14 + $0x8dc] sm:$0xff]
    %v3184 = vld [vmem:[#allocation14 + $0x8e4] sm:$0xff]
    %v3185 = vld [vmem:[#allocation14 + $0x8ec] sm:$0xff]
    %v3186 = vld [vmem:[#allocation14 + $0x8f4] sm:$0xf]
    %v3187 = vld [vmem:[#allocation14 + $0x8f8] sm:$0xff]
    %v3188 = vld [vmem:[#allocation14 + $0x900] sm:$0xff]
    %v3189 = vld [vmem:[#allocation14 + $0x908] sm:$0xff]
    %v3190 = vld [vmem:[#allocation14 + $0x910] sm:$0xf]
    %v3191 = vld [vmem:[#allocation14 + $0x914] sm:$0xff]
    %v3192 = vld [vmem:[#allocation14 + $0x91c] sm:$0xff]
    %v3193 = vld [vmem:[#allocation14 + $0x924] sm:$0xff]
    %v3194 = vld [vmem:[#allocation14 + $0x92c] sm:$0xf]
    %v3195 = vld [vmem:[#allocation14 + $0x930] sm:$0xff]
    %v3196 = vld [vmem:[#allocation14 + $0x938] sm:$0xff]
    %v3197 = vld [vmem:[#allocation14 + $0x940] sm:$0xff]
    %v3198 = vld [vmem:[#allocation14 + $0x948] sm:$0xf]
    %v3199 = vld [vmem:[#allocation14 + $0x94c] sm:$0xff]
    %v3200 = vld [vmem:[#allocation14 + $0x954] sm:$0xff]
    %v3201 = vld [vmem:[#allocation14 + $0x95c] sm:$0xff]
    %v3202 = vld [vmem:[#allocation14 + $0x964] sm:$0xf]
    %v3203 = vld [vmem:[#allocation14 + $0x968] sm:$0xff]
    %v3204 = vld [vmem:[#allocation14 + $0x970] sm:$0xff]
    %v3205 = vld [vmem:[#allocation14 + $0x978] sm:$0xff]
    %v3206 = vld [vmem:[#allocation14 + $0x980] sm:$0xf]
    %v3207 = vld [vmem:[#allocation14 + $0x984] sm:$0xff]
    %v3208 = vld [vmem:[#allocation14 + $0x98c] sm:$0xff]
    %v3209 = vld [vmem:[#allocation14 + $0x994] sm:$0xff]
    %v3210 = vld [vmem:[#allocation14 + $0x99c] sm:$0xf]
    %v3211 = vld [vmem:[#allocation14 + $0x9a0] sm:$0xff]
    %v3212 = vld [vmem:[#allocation14 + $0x9a8] sm:$0xff]
    %v3213 = vld [vmem:[#allocation14 + $0x9b0] sm:$0xff]
    %v3214 = vld [vmem:[#allocation14 + $0x9b8] sm:$0xf]
    %v3215 = vld [vmem:[#allocation14 + $0x9bc] sm:$0xff]
    %v3216 = vld [vmem:[#allocation14 + $0x9c4] sm:$0xff]
    %v3217 = vld [vmem:[#allocation14 + $0x9cc] sm:$0xff]
    %v3218 = vld [vmem:[#allocation14 + $0x9d4] sm:$0xf]
    %v3219 = vld [vmem:[#allocation14 + $0x9d8] sm:$0xff]
    %v3220 = vld [vmem:[#allocation14 + $0x9e0] sm:$0xff]
    %v3221 = vld [vmem:[#allocation14 + $0x9e8] sm:$0xff]
    %v3222 = vld [vmem:[#allocation14 + $0x9f0] sm:$0xf]
    %v3223 = vld [vmem:[#allocation14 + $0x9f4] sm:$0xff]
    %v3224 = vld [vmem:[#allocation14 + $0x9fc] sm:$0xff]
    %v3225 = vld [vmem:[#allocation14 + $0xa04] sm:$0xff]
    %v3226 = vld [vmem:[#allocation14 + $0xa0c] sm:$0xf]
    %v3227 = vld [vmem:[#allocation14 + $0xa10] sm:$0xff]
    %v3228 = vld [vmem:[#allocation14 + $0xa18] sm:$0xff]
    %v3229 = vld [vmem:[#allocation14 + $0xa20] sm:$0xff]
    %v3230 = vld [vmem:[#allocation14 + $0xa28] sm:$0xf]
    %v3231 = vld [vmem:[#allocation14 + $0xa2c] sm:$0xff]
    %v3232 = vld [vmem:[#allocation14 + $0xa34] sm:$0xff]
    %v3233 = vld [vmem:[#allocation14 + $0xa3c] sm:$0xff]
    %v3234 = vld [vmem:[#allocation14 + $0xa44] sm:$0xf]
    %v3235 = vld [vmem:[#allocation14 + $0xa48] sm:$0xff]
    %v3236 = vld [vmem:[#allocation14 + $0xa50] sm:$0xff]
    %v3237 = vld [vmem:[#allocation14 + $0xa58] sm:$0xff]
    %v3238 = vld [vmem:[#allocation14 + $0xa60] sm:$0xf]
    %v3239 = vld [vmem:[#allocation14 + $0xa64] sm:$0xff]
    %v3240 = vld [vmem:[#allocation14 + $0xa6c] sm:$0xff]
    %v3241 = vld [vmem:[#allocation14 + $0xa74] sm:$0xff]
    %v3242 = vld [vmem:[#allocation14 + $0xa7c] sm:$0xf]
    %v3243 = vld [vmem:[#allocation14 + $0xa80] sm:$0xff]
    %v3244 = vld [vmem:[#allocation14 + $0xa88] sm:$0xff]
    %v3245 = vld [vmem:[#allocation14 + $0xa90] sm:$0xff]
    %v3246 = vld [vmem:[#allocation14 + $0xa98] sm:$0xf]
    %v3247 = vld [vmem:[#allocation14 + $0xa9c] sm:$0xff]
    %v3248 = vld [vmem:[#allocation14 + $0xaa4] sm:$0xff]
    %v3249 = vld [vmem:[#allocation14 + $0xaac] sm:$0xff]
    %v3250 = vld [vmem:[#allocation14 + $0xab4] sm:$0xf]
    %v3251 = vld [vmem:[#allocation14 + $0xab8] sm:$0xff]
    %v3252 = vld [vmem:[#allocation14 + $0xac0] sm:$0xff]
    %v3253 = vld [vmem:[#allocation14 + $0xac8] sm:$0xff]
    %v3254 = vld [vmem:[#allocation14 + $0xad0] sm:$0xf]
    %v3255 = vld [vmem:[#allocation14 + $0xad4] sm:$0xff]
    %v3256 = vld [vmem:[#allocation14 + $0xadc] sm:$0xff]
    %v3257 = vld [vmem:[#allocation14 + $0xae4] sm:$0xff]
    %v3258 = vld [vmem:[#allocation14 + $0xaec] sm:$0xf]
    %v3259 = vld [vmem:[#allocation14 + $0xaf0] sm:$0xff]
    %v3260 = vld [vmem:[#allocation14 + $0xaf8] sm:$0xff]
    %v3261 = vld [vmem:[#allocation14 + $0xb00] sm:$0xff]
    %v3262 = vld [vmem:[#allocation14 + $0xb08] sm:$0xf]
    %v3263 = vld [vmem:[#allocation14 + $0xb0c] sm:$0xff]
    %v3264 = vld [vmem:[#allocation14 + $0xb14] sm:$0xff]
    %v3265 = vld [vmem:[#allocation14 + $0xb1c] sm:$0xff]
    %v3266 = vld [vmem:[#allocation14 + $0xb24] sm:$0xf]
    %v3267 = vld [vmem:[#allocation14 + $0xb28] sm:$0xff]
    %v3268 = vld [vmem:[#allocation14 + $0xb30] sm:$0xff]
    %v3269 = vld [vmem:[#allocation14 + $0xb38] sm:$0xff]
    %v3270 = vld [vmem:[#allocation14 + $0xb40] sm:$0xf]
    %v3271 = vld [vmem:[#allocation14 + $0xb44] sm:$0xff]
    %v3272 = vld [vmem:[#allocation14 + $0xb4c] sm:$0xff]
    %v3273 = vld [vmem:[#allocation14 + $0xb54] sm:$0xff]
    %v3274 = vld [vmem:[#allocation14 + $0xb5c] sm:$0xf]
    %v3275 = vld [vmem:[#allocation14 + $0xb60] sm:$0xff]
    %v3276 = vld [vmem:[#allocation14 + $0xb68] sm:$0xff]
    %v3277 = vld [vmem:[#allocation14 + $0xb70] sm:$0xff]
    %v3278 = vld [vmem:[#allocation14 + $0xb78] sm:$0xf]
    %v3279 = vld [vmem:[#allocation14 + $0xb7c] sm:$0xff]
    %v3280 = vld [vmem:[#allocation14 + $0xb84] sm:$0xff]
    %v3281 = vld [vmem:[#allocation14 + $0xb8c] sm:$0xff]
    %v3282 = vld [vmem:[#allocation14 + $0xb94] sm:$0xf]
    %v3283 = vld [vmem:[#allocation14 + $0xb98] sm:$0xff]
    %v3284 = vld [vmem:[#allocation14 + $0xba0] sm:$0xff]
    %v3285 = vld [vmem:[#allocation14 + $0xba8] sm:$0xff]
    %v3286 = vld [vmem:[#allocation14 + $0xbb0] sm:$0xf]
    %v3287 = vld [vmem:[#allocation14 + $0xbb4] sm:$0xff]
    %v3288 = vld [vmem:[#allocation14 + $0xbbc] sm:$0xff]
    %v3289 = vld [vmem:[#allocation14 + $0xbc4] sm:$0xff]
    %v3290 = vld [vmem:[#allocation14 + $0xbcc] sm:$0xf]
    %v3291 = vld [vmem:[#allocation14 + $0xbd0] sm:$0xff]
    %v3292 = vld [vmem:[#allocation14 + $0xbd8] sm:$0xff]
    %v3293 = vld [vmem:[#allocation14 + $0xbe0] sm:$0xff]
    %v3294 = vld [vmem:[#allocation14 + $0xbe8] sm:$0xf]
    %v3295 = vld [vmem:[#allocation14 + $0xbec] sm:$0xff]
    %v3296 = vld [vmem:[#allocation14 + $0xbf4] sm:$0xff]
    %v3297 = vld [vmem:[#allocation14 + $0xbfc] sm:$0xff]
    %v3298 = vld [vmem:[#allocation14 + $0xc04] sm:$0xf]
    %v3299 = vld [vmem:[#allocation14 + $0xc08] sm:$0xff]
    %v3300 = vld [vmem:[#allocation14 + $0xc10] sm:$0xff]
    %v3301 = vld [vmem:[#allocation14 + $0xc18] sm:$0xff]
    %v3302 = vld [vmem:[#allocation14 + $0xc20] sm:$0xf]
    %v3303 = vld [vmem:[#allocation14 + $0xc24] sm:$0xff]
    %v3304 = vld [vmem:[#allocation14 + $0xc2c] sm:$0xff]
    %v3305 = vld [vmem:[#allocation14 + $0xc34] sm:$0xff]
    %v3306 = vld [vmem:[#allocation14 + $0xc3c] sm:$0xf]
    %v3307 = vld [vmem:[#allocation14 + $0xc40] sm:$0xff]
    %v3308 = vld [vmem:[#allocation14 + $0xc48] sm:$0xff]
    %v3309 = vld [vmem:[#allocation14 + $0xc50] sm:$0xff]
    %v3310 = vld [vmem:[#allocation14 + $0xc58] sm:$0xf]
    %v3311 = vld [vmem:[#allocation14 + $0xc5c] sm:$0xff]
    %v3312 = vld [vmem:[#allocation14 + $0xc64] sm:$0xff]
    %v3313 = vld [vmem:[#allocation14 + $0xc6c] sm:$0xff]
    %v3314 = vld [vmem:[#allocation14 + $0xc74] sm:$0xf]
    %v3315 = vld [vmem:[#allocation14 + $0xc78] sm:$0xff]
    %v3316 = vld [vmem:[#allocation14 + $0xc80] sm:$0xff]
    %v3317 = vld [vmem:[#allocation14 + $0xc88] sm:$0xff]
    %v3318 = vld [vmem:[#allocation14 + $0xc90] sm:$0xf]
    %v3319 = vld [vmem:[#allocation14 + $0xc94] sm:$0xff]
    %v3320 = vld [vmem:[#allocation14 + $0xc9c] sm:$0xff]
    %v3321 = vld [vmem:[#allocation14 + $0xca4] sm:$0xff]
    %v3322 = vld [vmem:[#allocation14 + $0xcac] sm:$0xf]
    %v3323 = vld [vmem:[#allocation14 + $0xcb0] sm:$0xff]
    %v3324 = vld [vmem:[#allocation14 + $0xcb8] sm:$0xff]
    %v3325 = vld [vmem:[#allocation14 + $0xcc0] sm:$0xff]
    %v3326 = vld [vmem:[#allocation14 + $0xcc8] sm:$0xf]
    %v3327 = vld [vmem:[#allocation14 + $0xccc] sm:$0xff]
    %v3328 = vld [vmem:[#allocation14 + $0xcd4] sm:$0xff]
    %v3329 = vld [vmem:[#allocation14 + $0xcdc] sm:$0xff]
    %v3330 = vld [vmem:[#allocation14 + $0xce4] sm:$0xf]
    %v3331 = vld [vmem:[#allocation14 + $0xce8] sm:$0xff]
    %v3332 = vld [vmem:[#allocation14 + $0xcf0] sm:$0xff]
    %v3333 = vld [vmem:[#allocation14 + $0xcf8] sm:$0xff]
    %v3334 = vld [vmem:[#allocation14 + $0xd00] sm:$0xf]
    %v3335 = vld [vmem:[#allocation14 + $0xd04] sm:$0xff]
    %v3336 = vld [vmem:[#allocation14 + $0xd0c] sm:$0xff]
    %v3337 = vld [vmem:[#allocation14 + $0xd14] sm:$0xff]
    %v3338 = vld [vmem:[#allocation14 + $0xd1c] sm:$0xf]
    %v3339 = vld [vmem:[#allocation14 + $0xd20] sm:$0xff]
    %v3340 = vld [vmem:[#allocation14 + $0xd28] sm:$0xff]
    %v3341 = vld [vmem:[#allocation14 + $0xd30] sm:$0xff]
    %v3342 = vld [vmem:[#allocation14 + $0xd38] sm:$0xf]
    %v3343 = vld [vmem:[#allocation14 + $0xd3c] sm:$0xff]
    %v3344 = vld [vmem:[#allocation14 + $0xd44] sm:$0xff]
    %v3345 = vld [vmem:[#allocation14 + $0xd4c] sm:$0xff]
    %v3346 = vld [vmem:[#allocation14 + $0xd54] sm:$0xf]
    %v3347 = vld [vmem:[#allocation14 + $0xd58] sm:$0xff]
    %v3348 = vld [vmem:[#allocation14 + $0xd60] sm:$0xff]
    %v3349 = vld [vmem:[#allocation14 + $0xd68] sm:$0xff]
    %v3350 = vld [vmem:[#allocation14 + $0xd70] sm:$0xf]
    %v3351 = vld [vmem:[#allocation14 + $0xd74] sm:$0xff]
    %v3352 = vld [vmem:[#allocation14 + $0xd7c] sm:$0xff]
    %v3353 = vld [vmem:[#allocation14 + $0xd84] sm:$0xff]
    %v3354 = vld [vmem:[#allocation14 + $0xd8c] sm:$0xf]
    %v3355 = vld [vmem:[#allocation14 + $0xd90] sm:$0xff]
    %v3356 = vld [vmem:[#allocation14 + $0xd98] sm:$0xff]
    %v3357 = vld [vmem:[#allocation14 + $0xda0] sm:$0xff]
    %v3358 = vld [vmem:[#allocation14 + $0xda8] sm:$0xf]
    %v3359 = vld [vmem:[#allocation14 + $0xdac] sm:$0xff]
    %v3360 = vld [vmem:[#allocation14 + $0xdb4] sm:$0xff]
    %v3361 = vld [vmem:[#allocation14 + $0xdbc] sm:$0xff]
    %v3362 = vld [vmem:[#allocation14 + $0xdc4] sm:$0xf]
    %v3363 = vld [vmem:[#allocation14 + $0xdc8] sm:$0xff]
    %v3364 = vld [vmem:[#allocation14 + $0xdd0] sm:$0xff]
    %v3365 = vld [vmem:[#allocation14 + $0xdd8] sm:$0xff]
    %v3366 = vld [vmem:[#allocation14 + $0xde0] sm:$0xf]
    %v3367 = vld [vmem:[#allocation14 + $0xde4] sm:$0xff]
    %v3368 = vld [vmem:[#allocation14 + $0xdec] sm:$0xff]
    %v3369 = vld [vmem:[#allocation14 + $0xdf4] sm:$0xff]
    %v3370 = vld [vmem:[#allocation14 + $0xdfc] sm:$0xf]
    %v3883 = vunpack.c.l.b16 %v2859
    %v3884 = vunpack.c.h.b16 %v2859
    %v3885 = vunpack.c.l.b16 %v2860
    %v3886 = vunpack.c.h.b16 %v2860
    %v3887 = vunpack.c.l.b16 %v2861
    %v3888 = vunpack.c.h.b16 %v2861
    %v3889 = vunpack.c.l.b16 %v2862
    %v3890 = vunpack.c.l.b16 %v2863
    %v3891 = vunpack.c.h.b16 %v2863
    %v3892 = vunpack.c.l.b16 %v2864
    %v3893 = vunpack.c.h.b16 %v2864
    %v3894 = vunpack.c.l.b16 %v2865
    %v3895 = vunpack.c.h.b16 %v2865
    %v3896 = vunpack.c.l.b16 %v2866
    %v3897 = vunpack.c.l.b16 %v2867
    %v3898 = vunpack.c.h.b16 %v2867
    %v3899 = vunpack.c.l.b16 %v2868
    %v3900 = vunpack.c.h.b16 %v2868
    %v3901 = vunpack.c.l.b16 %v2869
    %v3902 = vunpack.c.h.b16 %v2869
    %v3903 = vunpack.c.l.b16 %v2870
    %v3904 = vunpack.c.l.b16 %v2871
    %v3905 = vunpack.c.h.b16 %v2871
    %v3906 = vunpack.c.l.b16 %v2872
    %v3907 = vunpack.c.h.b16 %v2872
    %v3908 = vunpack.c.l.b16 %v2873
    %v3909 = vunpack.c.h.b16 %v2873
    %v3910 = vunpack.c.l.b16 %v2874
    %v3911 = vunpack.c.l.b16 %v2875
    %v3912 = vunpack.c.h.b16 %v2875
    %v3913 = vunpack.c.l.b16 %v2876
    %v3914 = vunpack.c.h.b16 %v2876
    %v3915 = vunpack.c.l.b16 %v2877
    %v3916 = vunpack.c.h.b16 %v2877
    %v3917 = vunpack.c.l.b16 %v2878
    %v3918 = vunpack.c.l.b16 %v2879
    %v3919 = vunpack.c.h.b16 %v2879
    %v3920 = vunpack.c.l.b16 %v2880
    %v3921 = vunpack.c.h.b16 %v2880
    %v3922 = vunpack.c.l.b16 %v2881
    %v3923 = vunpack.c.h.b16 %v2881
    %v3924 = vunpack.c.l.b16 %v2882
    %v3925 = vunpack.c.l.b16 %v2883
    %v3926 = vunpack.c.h.b16 %v2883
    %v3927 = vunpack.c.l.b16 %v2884
    %v3928 = vunpack.c.h.b16 %v2884
    %v3929 = vunpack.c.l.b16 %v2885
    %v3930 = vunpack.c.h.b16 %v2885
    %v3931 = vunpack.c.l.b16 %v2886
    %v3932 = vunpack.c.l.b16 %v2887
    %v3933 = vunpack.c.h.b16 %v2887
    %v3934 = vunpack.c.l.b16 %v2888
    %v3935 = vunpack.c.h.b16 %v2888
    %v3936 = vunpack.c.l.b16 %v2889
    %v3937 = vunpack.c.h.b16 %v2889
    %v3938 = vunpack.c.l.b16 %v2890
    %v3939 = vunpack.c.l.b16 %v2891
    %v3940 = vunpack.c.h.b16 %v2891
    %v3941 = vunpack.c.l.b16 %v2892
    %v3942 = vunpack.c.h.b16 %v2892
    %v3943 = vunpack.c.l.b16 %v2893
    %v3944 = vunpack.c.h.b16 %v2893
    %v3945 = vunpack.c.l.b16 %v2894
    %v3946 = vunpack.c.l.b16 %v2895
    %v3947 = vunpack.c.h.b16 %v2895
    %v3948 = vunpack.c.l.b16 %v2896
    %v3949 = vunpack.c.h.b16 %v2896
    %v3950 = vunpack.c.l.b16 %v2897
    %v3951 = vunpack.c.h.b16 %v2897
    %v3952 = vunpack.c.l.b16 %v2898
    %v3953 = vunpack.c.l.b16 %v2899
    %v3954 = vunpack.c.h.b16 %v2899
    %v3955 = vunpack.c.l.b16 %v2900
    %v3956 = vunpack.c.h.b16 %v2900
    %v3957 = vunpack.c.l.b16 %v2901
    %v3958 = vunpack.c.h.b16 %v2901
    %v3959 = vunpack.c.l.b16 %v2902
    %v3960 = vunpack.c.l.b16 %v2903
    %v3961 = vunpack.c.h.b16 %v2903
    %v3962 = vunpack.c.l.b16 %v2904
    %v3963 = vunpack.c.h.b16 %v2904
    %v3964 = vunpack.c.l.b16 %v2905
    %v3965 = vunpack.c.h.b16 %v2905
    %v3966 = vunpack.c.l.b16 %v2906
    %v3967 = vunpack.c.l.b16 %v2907
    %v3968 = vunpack.c.h.b16 %v2907
    %v3969 = vunpack.c.l.b16 %v2908
    %v3970 = vunpack.c.h.b16 %v2908
    %v3971 = vunpack.c.l.b16 %v2909
    %v3972 = vunpack.c.h.b16 %v2909
    %v3973 = vunpack.c.l.b16 %v2910
    %v3974 = vunpack.c.l.b16 %v2911
    %v3975 = vunpack.c.h.b16 %v2911
    %v3976 = vunpack.c.l.b16 %v2912
    %v3977 = vunpack.c.h.b16 %v2912
    %v3978 = vunpack.c.l.b16 %v2913
    %v3979 = vunpack.c.h.b16 %v2913
    %v3980 = vunpack.c.l.b16 %v2914
    %v3981 = vunpack.c.l.b16 %v2915
    %v3982 = vunpack.c.h.b16 %v2915
    %v3983 = vunpack.c.l.b16 %v2916
    %v3984 = vunpack.c.h.b16 %v2916
    %v3985 = vunpack.c.l.b16 %v2917
    %v3986 = vunpack.c.h.b16 %v2917
    %v3987 = vunpack.c.l.b16 %v2918
    %v3988 = vunpack.c.l.b16 %v2919
    %v3989 = vunpack.c.h.b16 %v2919
    %v3990 = vunpack.c.l.b16 %v2920
    %v3991 = vunpack.c.h.b16 %v2920
    %v3992 = vunpack.c.l.b16 %v2921
    %v3993 = vunpack.c.h.b16 %v2921
    %v3994 = vunpack.c.l.b16 %v2922
    %v3995 = vunpack.c.l.b16 %v2923
    %v3996 = vunpack.c.h.b16 %v2923
    %v3997 = vunpack.c.l.b16 %v2924
    %v3998 = vunpack.c.h.b16 %v2924
    %v3999 = vunpack.c.l.b16 %v2925
    %v4000 = vunpack.c.h.b16 %v2925
    %v4001 = vunpack.c.l.b16 %v2926
    %v4002 = vunpack.c.l.b16 %v2927
    %v4003 = vunpack.c.h.b16 %v2927
    %v4004 = vunpack.c.l.b16 %v2928
    %v4005 = vunpack.c.h.b16 %v2928
    %v4006 = vunpack.c.l.b16 %v2929
    %v4007 = vunpack.c.h.b16 %v2929
    %v4008 = vunpack.c.l.b16 %v2930
    %v4009 = vunpack.c.l.b16 %v2931
    %v4010 = vunpack.c.h.b16 %v2931
    %v4011 = vunpack.c.l.b16 %v2932
    %v4012 = vunpack.c.h.b16 %v2932
    %v4013 = vunpack.c.l.b16 %v2933
    %v4014 = vunpack.c.h.b16 %v2933
    %v4015 = vunpack.c.l.b16 %v2934
    %v4016 = vunpack.c.l.b16 %v2935
    %v4017 = vunpack.c.h.b16 %v2935
    %v4018 = vunpack.c.l.b16 %v2936
    %v4019 = vunpack.c.h.b16 %v2936
    %v4020 = vunpack.c.l.b16 %v2937
    %v4021 = vunpack.c.h.b16 %v2937
    %v4022 = vunpack.c.l.b16 %v2938
    %v4023 = vunpack.c.l.b16 %v2939
    %v4024 = vunpack.c.h.b16 %v2939
    %v4025 = vunpack.c.l.b16 %v2940
    %v4026 = vunpack.c.h.b16 %v2940
    %v4027 = vunpack.c.l.b16 %v2941
    %v4028 = vunpack.c.h.b16 %v2941
    %v4029 = vunpack.c.l.b16 %v2942
    %v4030 = vunpack.c.l.b16 %v2943
    %v4031 = vunpack.c.h.b16 %v2943
    %v4032 = vunpack.c.l.b16 %v2944
    %v4033 = vunpack.c.h.b16 %v2944
    %v4034 = vunpack.c.l.b16 %v2945
    %v4035 = vunpack.c.h.b16 %v2945
    %v4036 = vunpack.c.l.b16 %v2946
    %v4037 = vunpack.c.l.b16 %v2947
    %v4038 = vunpack.c.h.b16 %v2947
    %v4039 = vunpack.c.l.b16 %v2948
    %v4040 = vunpack.c.h.b16 %v2948
    %v4041 = vunpack.c.l.b16 %v2949
    %v4042 = vunpack.c.h.b16 %v2949
    %v4043 = vunpack.c.l.b16 %v2950
    %v4044 = vunpack.c.l.b16 %v2951
    %v4045 = vunpack.c.h.b16 %v2951
    %v4046 = vunpack.c.l.b16 %v2952
    %v4047 = vunpack.c.h.b16 %v2952
    %v4048 = vunpack.c.l.b16 %v2953
    %v4049 = vunpack.c.h.b16 %v2953
    %v4050 = vunpack.c.l.b16 %v2954
    %v4051 = vunpack.c.l.b16 %v2955
    %v4052 = vunpack.c.h.b16 %v2955
    %v4053 = vunpack.c.l.b16 %v2956
    %v4054 = vunpack.c.h.b16 %v2956
    %v4055 = vunpack.c.l.b16 %v2957
    %v4056 = vunpack.c.h.b16 %v2957
    %v4057 = vunpack.c.l.b16 %v2958
    %v4058 = vunpack.c.l.b16 %v2959
    %v4059 = vunpack.c.h.b16 %v2959
    %v4060 = vunpack.c.l.b16 %v2960
    %v4061 = vunpack.c.h.b16 %v2960
    %v4062 = vunpack.c.l.b16 %v2961
    %v4063 = vunpack.c.h.b16 %v2961
    %v4064 = vunpack.c.l.b16 %v2962
    %v4065 = vunpack.c.l.b16 %v2963
    %v4066 = vunpack.c.h.b16 %v2963
    %v4067 = vunpack.c.l.b16 %v2964
    %v4068 = vunpack.c.h.b16 %v2964
    %v4069 = vunpack.c.l.b16 %v2965
    %v4070 = vunpack.c.h.b16 %v2965
    %v4071 = vunpack.c.l.b16 %v2966
    %v4072 = vunpack.c.l.b16 %v2967
    %v4073 = vunpack.c.h.b16 %v2967
    %v4074 = vunpack.c.l.b16 %v2968
    %v4075 = vunpack.c.h.b16 %v2968
    %v4076 = vunpack.c.l.b16 %v2969
    %v4077 = vunpack.c.h.b16 %v2969
    %v4078 = vunpack.c.l.b16 %v2970
    %v4079 = vunpack.c.l.b16 %v2971
    %v4080 = vunpack.c.h.b16 %v2971
    %v4081 = vunpack.c.l.b16 %v2972
    %v4082 = vunpack.c.h.b16 %v2972
    %v4083 = vunpack.c.l.b16 %v2973
    %v4084 = vunpack.c.h.b16 %v2973
    %v4085 = vunpack.c.l.b16 %v2974
    %v4086 = vunpack.c.l.b16 %v2975
    %v4087 = vunpack.c.h.b16 %v2975
    %v4088 = vunpack.c.l.b16 %v2976
    %v4089 = vunpack.c.h.b16 %v2976
    %v4090 = vunpack.c.l.b16 %v2977
    %v4091 = vunpack.c.h.b16 %v2977
    %v4092 = vunpack.c.l.b16 %v2978
    %v4093 = vunpack.c.l.b16 %v2979
    %v4094 = vunpack.c.h.b16 %v2979
    %v4095 = vunpack.c.l.b16 %v2980
    %v4096 = vunpack.c.h.b16 %v2980
    %v4097 = vunpack.c.l.b16 %v2981
    %v4098 = vunpack.c.h.b16 %v2981
    %v4099 = vunpack.c.l.b16 %v2982
    %v4100 = vunpack.c.l.b16 %v2983
    %v4101 = vunpack.c.h.b16 %v2983
    %v4102 = vunpack.c.l.b16 %v2984
    %v4103 = vunpack.c.h.b16 %v2984
    %v4104 = vunpack.c.l.b16 %v2985
    %v4105 = vunpack.c.h.b16 %v2985
    %v4106 = vunpack.c.l.b16 %v2986
    %v4107 = vunpack.c.l.b16 %v2987
    %v4108 = vunpack.c.h.b16 %v2987
    %v4109 = vunpack.c.l.b16 %v2988
    %v4110 = vunpack.c.h.b16 %v2988
    %v4111 = vunpack.c.l.b16 %v2989
    %v4112 = vunpack.c.h.b16 %v2989
    %v4113 = vunpack.c.l.b16 %v2990
    %v4114 = vunpack.c.l.b16 %v2991
    %v4115 = vunpack.c.h.b16 %v2991
    %v4116 = vunpack.c.l.b16 %v2992
    %v4117 = vunpack.c.h.b16 %v2992
    %v4118 = vunpack.c.l.b16 %v2993
    %v4119 = vunpack.c.h.b16 %v2993
    %v4120 = vunpack.c.l.b16 %v2994
    %v4121 = vunpack.c.l.b16 %v2995
    %v4122 = vunpack.c.h.b16 %v2995
    %v4123 = vunpack.c.l.b16 %v2996
    %v4124 = vunpack.c.h.b16 %v2996
    %v4125 = vunpack.c.l.b16 %v2997
    %v4126 = vunpack.c.h.b16 %v2997
    %v4127 = vunpack.c.l.b16 %v2998
    %v4128 = vunpack.c.l.b16 %v2999
    %v4129 = vunpack.c.h.b16 %v2999
    %v4130 = vunpack.c.l.b16 %v3000
    %v4131 = vunpack.c.h.b16 %v3000
    %v4132 = vunpack.c.l.b16 %v3001
    %v4133 = vunpack.c.h.b16 %v3001
    %v4134 = vunpack.c.l.b16 %v3002
    %v4135 = vunpack.c.l.b16 %v3003
    %v4136 = vunpack.c.h.b16 %v3003
    %v4137 = vunpack.c.l.b16 %v3004
    %v4138 = vunpack.c.h.b16 %v3004
    %v4139 = vunpack.c.l.b16 %v3005
    %v4140 = vunpack.c.h.b16 %v3005
    %v4141 = vunpack.c.l.b16 %v3006
    %v4142 = vunpack.c.l.b16 %v3007
    %v4143 = vunpack.c.h.b16 %v3007
    %v4144 = vunpack.c.l.b16 %v3008
    %v4145 = vunpack.c.h.b16 %v3008
    %v4146 = vunpack.c.l.b16 %v3009
    %v4147 = vunpack.c.h.b16 %v3009
    %v4148 = vunpack.c.l.b16 %v3010
    %v4149 = vunpack.c.l.b16 %v3011
    %v4150 = vunpack.c.h.b16 %v3011
    %v4151 = vunpack.c.l.b16 %v3012
    %v4152 = vunpack.c.h.b16 %v3012
    %v4153 = vunpack.c.l.b16 %v3013
    %v4154 = vunpack.c.h.b16 %v3013
    %v4155 = vunpack.c.l.b16 %v3014
    %v4156 = vunpack.c.l.b16 %v3015
    %v4157 = vunpack.c.h.b16 %v3015
    %v4158 = vunpack.c.l.b16 %v3016
    %v4159 = vunpack.c.h.b16 %v3016
    %v4160 = vunpack.c.l.b16 %v3017
    %v4161 = vunpack.c.h.b16 %v3017
    %v4162 = vunpack.c.l.b16 %v3018
    %v4163 = vunpack.c.l.b16 %v3019
    %v4164 = vunpack.c.h.b16 %v3019
    %v4165 = vunpack.c.l.b16 %v3020
    %v4166 = vunpack.c.h.b16 %v3020
    %v4167 = vunpack.c.l.b16 %v3021
    %v4168 = vunpack.c.h.b16 %v3021
    %v4169 = vunpack.c.l.b16 %v3022
    %v4170 = vunpack.c.l.b16 %v3023
    %v4171 = vunpack.c.h.b16 %v3023
    %v4172 = vunpack.c.l.b16 %v3024
    %v4173 = vunpack.c.h.b16 %v3024
    %v4174 = vunpack.c.l.b16 %v3025
    %v4175 = vunpack.c.h.b16 %v3025
    %v4176 = vunpack.c.l.b16 %v3026
    %v4177 = vunpack.c.l.b16 %v3027
    %v4178 = vunpack.c.h.b16 %v3027
    %v4179 = vunpack.c.l.b16 %v3028
    %v4180 = vunpack.c.h.b16 %v3028
    %v4181 = vunpack.c.l.b16 %v3029
    %v4182 = vunpack.c.h.b16 %v3029
    %v4183 = vunpack.c.l.b16 %v3030
    %v4184 = vunpack.c.l.b16 %v3031
    %v4185 = vunpack.c.h.b16 %v3031
    %v4186 = vunpack.c.l.b16 %v3032
    %v4187 = vunpack.c.h.b16 %v3032
    %v4188 = vunpack.c.l.b16 %v3033
    %v4189 = vunpack.c.h.b16 %v3033
    %v4190 = vunpack.c.l.b16 %v3034
    %v4191 = vunpack.c.l.b16 %v3035
    %v4192 = vunpack.c.h.b16 %v3035
    %v4193 = vunpack.c.l.b16 %v3036
    %v4194 = vunpack.c.h.b16 %v3036
    %v4195 = vunpack.c.l.b16 %v3037
    %v4196 = vunpack.c.h.b16 %v3037
    %v4197 = vunpack.c.l.b16 %v3038
    %v4198 = vunpack.c.l.b16 %v3039
    %v4199 = vunpack.c.h.b16 %v3039
    %v4200 = vunpack.c.l.b16 %v3040
    %v4201 = vunpack.c.h.b16 %v3040
    %v4202 = vunpack.c.l.b16 %v3041
    %v4203 = vunpack.c.h.b16 %v3041
    %v4204 = vunpack.c.l.b16 %v3042
    %v4205 = vunpack.c.l.b16 %v3043
    %v4206 = vunpack.c.h.b16 %v3043
    %v4207 = vunpack.c.l.b16 %v3044
    %v4208 = vunpack.c.h.b16 %v3044
    %v4209 = vunpack.c.l.b16 %v3045
    %v4210 = vunpack.c.h.b16 %v3045
    %v4211 = vunpack.c.l.b16 %v3046
    %v4212 = vunpack.c.l.b16 %v3047
    %v4213 = vunpack.c.h.b16 %v3047
    %v4214 = vunpack.c.l.b16 %v3048
    %v4215 = vunpack.c.h.b16 %v3048
    %v4216 = vunpack.c.l.b16 %v3049
    %v4217 = vunpack.c.h.b16 %v3049
    %v4218 = vunpack.c.l.b16 %v3050
    %v4219 = vunpack.c.l.b16 %v3051
    %v4220 = vunpack.c.h.b16 %v3051
    %v4221 = vunpack.c.l.b16 %v3052
    %v4222 = vunpack.c.h.b16 %v3052
    %v4223 = vunpack.c.l.b16 %v3053
    %v4224 = vunpack.c.h.b16 %v3053
    %v4225 = vunpack.c.l.b16 %v3054
    %v4226 = vunpack.c.l.b16 %v3055
    %v4227 = vunpack.c.h.b16 %v3055
    %v4228 = vunpack.c.l.b16 %v3056
    %v4229 = vunpack.c.h.b16 %v3056
    %v4230 = vunpack.c.l.b16 %v3057
    %v4231 = vunpack.c.h.b16 %v3057
    %v4232 = vunpack.c.l.b16 %v3058
    %v4233 = vunpack.c.l.b16 %v3059
    %v4234 = vunpack.c.h.b16 %v3059
    %v4235 = vunpack.c.l.b16 %v3060
    %v4236 = vunpack.c.h.b16 %v3060
    %v4237 = vunpack.c.l.b16 %v3061
    %v4238 = vunpack.c.h.b16 %v3061
    %v4239 = vunpack.c.l.b16 %v3062
    %v4240 = vunpack.c.l.b16 %v3063
    %v4241 = vunpack.c.h.b16 %v3063
    %v4242 = vunpack.c.l.b16 %v3064
    %v4243 = vunpack.c.h.b16 %v3064
    %v4244 = vunpack.c.l.b16 %v3065
    %v4245 = vunpack.c.h.b16 %v3065
    %v4246 = vunpack.c.l.b16 %v3066
    %v4247 = vunpack.c.l.b16 %v3067
    %v4248 = vunpack.c.h.b16 %v3067
    %v4249 = vunpack.c.l.b16 %v3068
    %v4250 = vunpack.c.h.b16 %v3068
    %v4251 = vunpack.c.l.b16 %v3069
    %v4252 = vunpack.c.h.b16 %v3069
    %v4253 = vunpack.c.l.b16 %v3070
    %v4254 = vunpack.c.l.b16 %v3071
    %v4255 = vunpack.c.h.b16 %v3071
    %v4256 = vunpack.c.l.b16 %v3072
    %v4257 = vunpack.c.h.b16 %v3072
    %v4258 = vunpack.c.l.b16 %v3073
    %v4259 = vunpack.c.h.b16 %v3073
    %v4260 = vunpack.c.l.b16 %v3074
    %v4261 = vunpack.c.l.b16 %v3075
    %v4262 = vunpack.c.h.b16 %v3075
    %v4263 = vunpack.c.l.b16 %v3076
    %v4264 = vunpack.c.h.b16 %v3076
    %v4265 = vunpack.c.l.b16 %v3077
    %v4266 = vunpack.c.h.b16 %v3077
    %v4267 = vunpack.c.l.b16 %v3078
    %v4268 = vunpack.c.l.b16 %v3079
    %v4269 = vunpack.c.h.b16 %v3079
    %v4270 = vunpack.c.l.b16 %v3080
    %v4271 = vunpack.c.h.b16 %v3080
    %v4272 = vunpack.c.l.b16 %v3081
    %v4273 = vunpack.c.h.b16 %v3081
    %v4274 = vunpack.c.l.b16 %v3082
    %v4275 = vunpack.c.l.b16 %v3083
    %v4276 = vunpack.c.h.b16 %v3083
    %v4277 = vunpack.c.l.b16 %v3084
    %v4278 = vunpack.c.h.b16 %v3084
    %v4279 = vunpack.c.l.b16 %v3085
    %v4280 = vunpack.c.h.b16 %v3085
    %v4281 = vunpack.c.l.b16 %v3086
    %v4282 = vunpack.c.l.b16 %v3087
    %v4283 = vunpack.c.h.b16 %v3087
    %v4284 = vunpack.c.l.b16 %v3088
    %v4285 = vunpack.c.h.b16 %v3088
    %v4286 = vunpack.c.l.b16 %v3089
    %v4287 = vunpack.c.h.b16 %v3089
    %v4288 = vunpack.c.l.b16 %v3090
    %v4289 = vunpack.c.l.b16 %v3091
    %v4290 = vunpack.c.h.b16 %v3091
    %v4291 = vunpack.c.l.b16 %v3092
    %v4292 = vunpack.c.h.b16 %v3092
    %v4293 = vunpack.c.l.b16 %v3093
    %v4294 = vunpack.c.h.b16 %v3093
    %v4295 = vunpack.c.l.b16 %v3094
    %v4296 = vunpack.c.l.b16 %v3095
    %v4297 = vunpack.c.h.b16 %v3095
    %v4298 = vunpack.c.l.b16 %v3096
    %v4299 = vunpack.c.h.b16 %v3096
    %v4300 = vunpack.c.l.b16 %v3097
    %v4301 = vunpack.c.h.b16 %v3097
    %v4302 = vunpack.c.l.b16 %v3098
    %v4303 = vunpack.c.l.b16 %v3099
    %v4304 = vunpack.c.h.b16 %v3099
    %v4305 = vunpack.c.l.b16 %v3100
    %v4306 = vunpack.c.h.b16 %v3100
    %v4307 = vunpack.c.l.b16 %v3101
    %v4308 = vunpack.c.h.b16 %v3101
    %v4309 = vunpack.c.l.b16 %v3102
    %v4310 = vunpack.c.l.b16 %v3103
    %v4311 = vunpack.c.h.b16 %v3103
    %v4312 = vunpack.c.l.b16 %v3104
    %v4313 = vunpack.c.h.b16 %v3104
    %v4314 = vunpack.c.l.b16 %v3105
    %v4315 = vunpack.c.h.b16 %v3105
    %v4316 = vunpack.c.l.b16 %v3106
    %v4317 = vunpack.c.l.b16 %v3107
    %v4318 = vunpack.c.h.b16 %v3107
    %v4319 = vunpack.c.l.b16 %v3108
    %v4320 = vunpack.c.h.b16 %v3108
    %v4321 = vunpack.c.l.b16 %v3109
    %v4322 = vunpack.c.h.b16 %v3109
    %v4323 = vunpack.c.l.b16 %v3110
    %v4324 = vunpack.c.l.b16 %v3111
    %v4325 = vunpack.c.h.b16 %v3111
    %v4326 = vunpack.c.l.b16 %v3112
    %v4327 = vunpack.c.h.b16 %v3112
    %v4328 = vunpack.c.l.b16 %v3113
    %v4329 = vunpack.c.h.b16 %v3113
    %v4330 = vunpack.c.l.b16 %v3114
    %v4331 = vunpack.c.l.b16 %v3115
    %v4332 = vunpack.c.h.b16 %v3115
    %v4333 = vunpack.c.l.b16 %v3116
    %v4334 = vunpack.c.h.b16 %v3116
    %v4335 = vunpack.c.l.b16 %v3117
    %v4336 = vunpack.c.h.b16 %v3117
    %v4337 = vunpack.c.l.b16 %v3118
    %v4338 = vunpack.c.l.b16 %v3119
    %v4339 = vunpack.c.h.b16 %v3119
    %v4340 = vunpack.c.l.b16 %v3120
    %v4341 = vunpack.c.h.b16 %v3120
    %v4342 = vunpack.c.l.b16 %v3121
    %v4343 = vunpack.c.h.b16 %v3121
    %v4344 = vunpack.c.l.b16 %v3122
    %v4345 = vunpack.c.l.b16 %v3123
    %v4346 = vunpack.c.h.b16 %v3123
    %v4347 = vunpack.c.l.b16 %v3124
    %v4348 = vunpack.c.h.b16 %v3124
    %v4349 = vunpack.c.l.b16 %v3125
    %v4350 = vunpack.c.h.b16 %v3125
    %v4351 = vunpack.c.l.b16 %v3126
    %v4352 = vunpack.c.l.b16 %v3127
    %v4353 = vunpack.c.h.b16 %v3127
    %v4354 = vunpack.c.l.b16 %v3128
    %v4355 = vunpack.c.h.b16 %v3128
    %v4356 = vunpack.c.l.b16 %v3129
    %v4357 = vunpack.c.h.b16 %v3129
    %v4358 = vunpack.c.l.b16 %v3130
    %v4359 = vunpack.c.l.b16 %v3131
    %v4360 = vunpack.c.h.b16 %v3131
    %v4361 = vunpack.c.l.b16 %v3132
    %v4362 = vunpack.c.h.b16 %v3132
    %v4363 = vunpack.c.l.b16 %v3133
    %v4364 = vunpack.c.h.b16 %v3133
    %v4365 = vunpack.c.l.b16 %v3134
    %v4366 = vunpack.c.l.b16 %v3135
    %v4367 = vunpack.c.h.b16 %v3135
    %v4368 = vunpack.c.l.b16 %v3136
    %v4369 = vunpack.c.h.b16 %v3136
    %v4370 = vunpack.c.l.b16 %v3137
    %v4371 = vunpack.c.h.b16 %v3137
    %v4372 = vunpack.c.l.b16 %v3138
    %v4373 = vunpack.c.l.b16 %v3139
    %v4374 = vunpack.c.h.b16 %v3139
    %v4375 = vunpack.c.l.b16 %v3140
    %v4376 = vunpack.c.h.b16 %v3140
    %v4377 = vunpack.c.l.b16 %v3141
    %v4378 = vunpack.c.h.b16 %v3141
    %v4379 = vunpack.c.l.b16 %v3142
    %v4380 = vunpack.c.l.b16 %v3143
    %v4381 = vunpack.c.h.b16 %v3143
    %v4382 = vunpack.c.l.b16 %v3144
    %v4383 = vunpack.c.h.b16 %v3144
    %v4384 = vunpack.c.l.b16 %v3145
    %v4385 = vunpack.c.h.b16 %v3145
    %v4386 = vunpack.c.l.b16 %v3146
    %v4387 = vunpack.c.l.b16 %v3147
    %v4388 = vunpack.c.h.b16 %v3147
    %v4389 = vunpack.c.l.b16 %v3148
    %v4390 = vunpack.c.h.b16 %v3148
    %v4391 = vunpack.c.l.b16 %v3149
    %v4392 = vunpack.c.h.b16 %v3149
    %v4393 = vunpack.c.l.b16 %v3150
    %v4394 = vunpack.c.l.b16 %v3151
    %v4395 = vunpack.c.h.b16 %v3151
    %v4396 = vunpack.c.l.b16 %v3152
    %v4397 = vunpack.c.h.b16 %v3152
    %v4398 = vunpack.c.l.b16 %v3153
    %v4399 = vunpack.c.h.b16 %v3153
    %v4400 = vunpack.c.l.b16 %v3154
    %v4401 = vunpack.c.l.b16 %v3155
    %v4402 = vunpack.c.h.b16 %v3155
    %v4403 = vunpack.c.l.b16 %v3156
    %v4404 = vunpack.c.h.b16 %v3156
    %v4405 = vunpack.c.l.b16 %v3157
    %v4406 = vunpack.c.h.b16 %v3157
    %v4407 = vunpack.c.l.b16 %v3158
    %v4408 = vunpack.c.l.b16 %v3159
    %v4409 = vunpack.c.h.b16 %v3159
    %v4410 = vunpack.c.l.b16 %v3160
    %v4411 = vunpack.c.h.b16 %v3160
    %v4412 = vunpack.c.l.b16 %v3161
    %v4413 = vunpack.c.h.b16 %v3161
    %v4414 = vunpack.c.l.b16 %v3162
    %v4415 = vunpack.c.l.b16 %v3163
    %v4416 = vunpack.c.h.b16 %v3163
    %v4417 = vunpack.c.l.b16 %v3164
    %v4418 = vunpack.c.h.b16 %v3164
    %v4419 = vunpack.c.l.b16 %v3165
    %v4420 = vunpack.c.h.b16 %v3165
    %v4421 = vunpack.c.l.b16 %v3166
    %v4422 = vunpack.c.l.b16 %v3167
    %v4423 = vunpack.c.h.b16 %v3167
    %v4424 = vunpack.c.l.b16 %v3168
    %v4425 = vunpack.c.h.b16 %v3168
    %v4426 = vunpack.c.l.b16 %v3169
    %v4427 = vunpack.c.h.b16 %v3169
    %v4428 = vunpack.c.l.b16 %v3170
    %v4429 = vunpack.c.l.b16 %v3171
    %v4430 = vunpack.c.h.b16 %v3171
    %v4431 = vunpack.c.l.b16 %v3172
    %v4432 = vunpack.c.h.b16 %v3172
    %v4433 = vunpack.c.l.b16 %v3173
    %v4434 = vunpack.c.h.b16 %v3173
    %v4435 = vunpack.c.l.b16 %v3174
    %v4436 = vunpack.c.l.b16 %v3175
    %v4437 = vunpack.c.h.b16 %v3175
    %v4438 = vunpack.c.l.b16 %v3176
    %v4439 = vunpack.c.h.b16 %v3176
    %v4440 = vunpack.c.l.b16 %v3177
    %v4441 = vunpack.c.h.b16 %v3177
    %v4442 = vunpack.c.l.b16 %v3178
    %v4443 = vunpack.c.l.b16 %v3179
    %v4444 = vunpack.c.h.b16 %v3179
    %v4445 = vunpack.c.l.b16 %v3180
    %v4446 = vunpack.c.h.b16 %v3180
    %v4447 = vunpack.c.l.b16 %v3181
    %v4448 = vunpack.c.h.b16 %v3181
    %v4449 = vunpack.c.l.b16 %v3182
    %v4450 = vunpack.c.l.b16 %v3183
    %v4451 = vunpack.c.h.b16 %v3183
    %v4452 = vunpack.c.l.b16 %v3184
    %v4453 = vunpack.c.h.b16 %v3184
    %v4454 = vunpack.c.l.b16 %v3185
    %v4455 = vunpack.c.h.b16 %v3185
    %v4456 = vunpack.c.l.b16 %v3186
    %v4457 = vunpack.c.l.b16 %v3187
    %v4458 = vunpack.c.h.b16 %v3187
    %v4459 = vunpack.c.l.b16 %v3188
    %v4460 = vunpack.c.h.b16 %v3188
    %v4461 = vunpack.c.l.b16 %v3189
    %v4462 = vunpack.c.h.b16 %v3189
    %v4463 = vunpack.c.l.b16 %v3190
    %v4464 = vunpack.c.l.b16 %v3191
    %v4465 = vunpack.c.h.b16 %v3191
    %v4466 = vunpack.c.l.b16 %v3192
    %v4467 = vunpack.c.h.b16 %v3192
    %v4468 = vunpack.c.l.b16 %v3193
    %v4469 = vunpack.c.h.b16 %v3193
    %v4470 = vunpack.c.l.b16 %v3194
    %v4471 = vunpack.c.l.b16 %v3195
    %v4472 = vunpack.c.h.b16 %v3195
    %v4473 = vunpack.c.l.b16 %v3196
    %v4474 = vunpack.c.h.b16 %v3196
    %v4475 = vunpack.c.l.b16 %v3197
    %v4476 = vunpack.c.h.b16 %v3197
    %v4477 = vunpack.c.l.b16 %v3198
    %v4478 = vunpack.c.l.b16 %v3199
    %v4479 = vunpack.c.h.b16 %v3199
    %v4480 = vunpack.c.l.b16 %v3200
    %v4481 = vunpack.c.h.b16 %v3200
    %v4482 = vunpack.c.l.b16 %v3201
    %v4483 = vunpack.c.h.b16 %v3201
    %v4484 = vunpack.c.l.b16 %v3202
    %v4485 = vunpack.c.l.b16 %v3203
    %v4486 = vunpack.c.h.b16 %v3203
    %v4487 = vunpack.c.l.b16 %v3204
    %v4488 = vunpack.c.h.b16 %v3204
    %v4489 = vunpack.c.l.b16 %v3205
    %v4490 = vunpack.c.h.b16 %v3205
    %v4491 = vunpack.c.l.b16 %v3206
    %v4492 = vunpack.c.l.b16 %v3207
    %v4493 = vunpack.c.h.b16 %v3207
    %v4494 = vunpack.c.l.b16 %v3208
    %v4495 = vunpack.c.h.b16 %v3208
    %v4496 = vunpack.c.l.b16 %v3209
    %v4497 = vunpack.c.h.b16 %v3209
    %v4498 = vunpack.c.l.b16 %v3210
    %v4499 = vunpack.c.l.b16 %v3211
    %v4500 = vunpack.c.h.b16 %v3211
    %v4501 = vunpack.c.l.b16 %v3212
    %v4502 = vunpack.c.h.b16 %v3212
    %v4503 = vunpack.c.l.b16 %v3213
    %v4504 = vunpack.c.h.b16 %v3213
    %v4505 = vunpack.c.l.b16 %v3214
    %v4506 = vunpack.c.l.b16 %v3215
    %v4507 = vunpack.c.h.b16 %v3215
    %v4508 = vunpack.c.l.b16 %v3216
    %v4509 = vunpack.c.h.b16 %v3216
    %v4510 = vunpack.c.l.b16 %v3217
    %v4511 = vunpack.c.h.b16 %v3217
    %v4512 = vunpack.c.l.b16 %v3218
    %v4513 = vunpack.c.l.b16 %v3219
    %v4514 = vunpack.c.h.b16 %v3219
    %v4515 = vunpack.c.l.b16 %v3220
    %v4516 = vunpack.c.h.b16 %v3220
    %v4517 = vunpack.c.l.b16 %v3221
    %v4518 = vunpack.c.h.b16 %v3221
    %v4519 = vunpack.c.l.b16 %v3222
    %v4520 = vunpack.c.l.b16 %v3223
    %v4521 = vunpack.c.h.b16 %v3223
    %v4522 = vunpack.c.l.b16 %v3224
    %v4523 = vunpack.c.h.b16 %v3224
    %v4524 = vunpack.c.l.b16 %v3225
    %v4525 = vunpack.c.h.b16 %v3225
    %v4526 = vunpack.c.l.b16 %v3226
    %v4527 = vunpack.c.l.b16 %v3227
    %v4528 = vunpack.c.h.b16 %v3227
    %v4529 = vunpack.c.l.b16 %v3228
    %v4530 = vunpack.c.h.b16 %v3228
    %v4531 = vunpack.c.l.b16 %v3229
    %v4532 = vunpack.c.h.b16 %v3229
    %v4533 = vunpack.c.l.b16 %v3230
    %v4534 = vunpack.c.l.b16 %v3231
    %v4535 = vunpack.c.h.b16 %v3231
    %v4536 = vunpack.c.l.b16 %v3232
    %v4537 = vunpack.c.h.b16 %v3232
    %v4538 = vunpack.c.l.b16 %v3233
    %v4539 = vunpack.c.h.b16 %v3233
    %v4540 = vunpack.c.l.b16 %v3234
    %v4541 = vunpack.c.l.b16 %v3235
    %v4542 = vunpack.c.h.b16 %v3235
    %v4543 = vunpack.c.l.b16 %v3236
    %v4544 = vunpack.c.h.b16 %v3236
    %v4545 = vunpack.c.l.b16 %v3237
    %v4546 = vunpack.c.h.b16 %v3237
    %v4547 = vunpack.c.l.b16 %v3238
    %v4548 = vunpack.c.l.b16 %v3239
    %v4549 = vunpack.c.h.b16 %v3239
    %v4550 = vunpack.c.l.b16 %v3240
    %v4551 = vunpack.c.h.b16 %v3240
    %v4552 = vunpack.c.l.b16 %v3241
    %v4553 = vunpack.c.h.b16 %v3241
    %v4554 = vunpack.c.l.b16 %v3242
    %v4555 = vunpack.c.l.b16 %v3243
    %v4556 = vunpack.c.h.b16 %v3243
    %v4557 = vunpack.c.l.b16 %v3244
    %v4558 = vunpack.c.h.b16 %v3244
    %v4559 = vunpack.c.l.b16 %v3245
    %v4560 = vunpack.c.h.b16 %v3245
    %v4561 = vunpack.c.l.b16 %v3246
    %v4562 = vunpack.c.l.b16 %v3247
    %v4563 = vunpack.c.h.b16 %v3247
    %v4564 = vunpack.c.l.b16 %v3248
    %v4565 = vunpack.c.h.b16 %v3248
    %v4566 = vunpack.c.l.b16 %v3249
    %v4567 = vunpack.c.h.b16 %v3249
    %v4568 = vunpack.c.l.b16 %v3250
    %v4569 = vunpack.c.l.b16 %v3251
    %v4570 = vunpack.c.h.b16 %v3251
    %v4571 = vunpack.c.l.b16 %v3252
    %v4572 = vunpack.c.h.b16 %v3252
    %v4573 = vunpack.c.l.b16 %v3253
    %v4574 = vunpack.c.h.b16 %v3253
    %v4575 = vunpack.c.l.b16 %v3254
    %v4576 = vunpack.c.l.b16 %v3255
    %v4577 = vunpack.c.h.b16 %v3255
    %v4578 = vunpack.c.l.b16 %v3256
    %v4579 = vunpack.c.h.b16 %v3256
    %v4580 = vunpack.c.l.b16 %v3257
    %v4581 = vunpack.c.h.b16 %v3257
    %v4582 = vunpack.c.l.b16 %v3258
    %v4583 = vunpack.c.l.b16 %v3259
    %v4584 = vunpack.c.h.b16 %v3259
    %v4585 = vunpack.c.l.b16 %v3260
    %v4586 = vunpack.c.h.b16 %v3260
    %v4587 = vunpack.c.l.b16 %v3261
    %v4588 = vunpack.c.h.b16 %v3261
    %v4589 = vunpack.c.l.b16 %v3262
    %v4590 = vunpack.c.l.b16 %v3263
    %v4591 = vunpack.c.h.b16 %v3263
    %v4592 = vunpack.c.l.b16 %v3264
    %v4593 = vunpack.c.h.b16 %v3264
    %v4594 = vunpack.c.l.b16 %v3265
    %v4595 = vunpack.c.h.b16 %v3265
    %v4596 = vunpack.c.l.b16 %v3266
    %v4597 = vunpack.c.l.b16 %v3267
    %v4598 = vunpack.c.h.b16 %v3267
    %v4599 = vunpack.c.l.b16 %v3268
    %v4600 = vunpack.c.h.b16 %v3268
    %v4601 = vunpack.c.l.b16 %v3269
    %v4602 = vunpack.c.h.b16 %v3269
    %v4603 = vunpack.c.l.b16 %v3270
    %v4604 = vunpack.c.l.b16 %v3271
    %v4605 = vunpack.c.h.b16 %v3271
    %v4606 = vunpack.c.l.b16 %v3272
    %v4607 = vunpack.c.h.b16 %v3272
    %v4608 = vunpack.c.l.b16 %v3273
    %v4609 = vunpack.c.h.b16 %v3273
    %v4610 = vunpack.c.l.b16 %v3274
    %v4611 = vunpack.c.l.b16 %v3275
    %v4612 = vunpack.c.h.b16 %v3275
    %v4613 = vunpack.c.l.b16 %v3276
    %v4614 = vunpack.c.h.b16 %v3276
    %v4615 = vunpack.c.l.b16 %v3277
    %v4616 = vunpack.c.h.b16 %v3277
    %v4617 = vunpack.c.l.b16 %v3278
    %v4618 = vunpack.c.l.b16 %v3279
    %v4619 = vunpack.c.h.b16 %v3279
    %v4620 = vunpack.c.l.b16 %v3280
    %v4621 = vunpack.c.h.b16 %v3280
    %v4622 = vunpack.c.l.b16 %v3281
    %v4623 = vunpack.c.h.b16 %v3281
    %v4624 = vunpack.c.l.b16 %v3282
    %v4625 = vunpack.c.l.b16 %v3283
    %v4626 = vunpack.c.h.b16 %v3283
    %v4627 = vunpack.c.l.b16 %v3284
    %v4628 = vunpack.c.h.b16 %v3284
    %v4629 = vunpack.c.l.b16 %v3285
    %v4630 = vunpack.c.h.b16 %v3285
    %v4631 = vunpack.c.l.b16 %v3286
    %v4632 = vunpack.c.l.b16 %v3287
    %v4633 = vunpack.c.h.b16 %v3287
    %v4634 = vunpack.c.l.b16 %v3288
    %v4635 = vunpack.c.h.b16 %v3288
    %v4636 = vunpack.c.l.b16 %v3289
    %v4637 = vunpack.c.h.b16 %v3289
    %v4638 = vunpack.c.l.b16 %v3290
    %v4639 = vunpack.c.l.b16 %v3291
    %v4640 = vunpack.c.h.b16 %v3291
    %v4641 = vunpack.c.l.b16 %v3292
    %v4642 = vunpack.c.h.b16 %v3292
    %v4643 = vunpack.c.l.b16 %v3293
    %v4644 = vunpack.c.h.b16 %v3293
    %v4645 = vunpack.c.l.b16 %v3294
    %v4646 = vunpack.c.l.b16 %v3295
    %v4647 = vunpack.c.h.b16 %v3295
    %v4648 = vunpack.c.l.b16 %v3296
    %v4649 = vunpack.c.h.b16 %v3296
    %v4650 = vunpack.c.l.b16 %v3297
    %v4651 = vunpack.c.h.b16 %v3297
    %v4652 = vunpack.c.l.b16 %v3298
    %v4653 = vunpack.c.l.b16 %v3299
    %v4654 = vunpack.c.h.b16 %v3299
    %v4655 = vunpack.c.l.b16 %v3300
    %v4656 = vunpack.c.h.b16 %v3300
    %v4657 = vunpack.c.l.b16 %v3301
    %v4658 = vunpack.c.h.b16 %v3301
    %v4659 = vunpack.c.l.b16 %v3302
    %v4660 = vunpack.c.l.b16 %v3303
    %v4661 = vunpack.c.h.b16 %v3303
    %v4662 = vunpack.c.l.b16 %v3304
    %v4663 = vunpack.c.h.b16 %v3304
    %v4664 = vunpack.c.l.b16 %v3305
    %v4665 = vunpack.c.h.b16 %v3305
    %v4666 = vunpack.c.l.b16 %v3306
    %v4667 = vunpack.c.l.b16 %v3307
    %v4668 = vunpack.c.h.b16 %v3307
    %v4669 = vunpack.c.l.b16 %v3308
    %v4670 = vunpack.c.h.b16 %v3308
    %v4671 = vunpack.c.l.b16 %v3309
    %v4672 = vunpack.c.h.b16 %v3309
    %v4673 = vunpack.c.l.b16 %v3310
    %v4674 = vunpack.c.l.b16 %v3311
    %v4675 = vunpack.c.h.b16 %v3311
    %v4676 = vunpack.c.l.b16 %v3312
    %v4677 = vunpack.c.h.b16 %v3312
    %v4678 = vunpack.c.l.b16 %v3313
    %v4679 = vunpack.c.h.b16 %v3313
    %v4680 = vunpack.c.l.b16 %v3314
    %v4681 = vunpack.c.l.b16 %v3315
    %v4682 = vunpack.c.h.b16 %v3315
    %v4683 = vunpack.c.l.b16 %v3316
    %v4684 = vunpack.c.h.b16 %v3316
    %v4685 = vunpack.c.l.b16 %v3317
    %v4686 = vunpack.c.h.b16 %v3317
    %v4687 = vunpack.c.l.b16 %v3318
    %v4688 = vunpack.c.l.b16 %v3319
    %v4689 = vunpack.c.h.b16 %v3319
    %v4690 = vunpack.c.l.b16 %v3320
    %v4691 = vunpack.c.h.b16 %v3320
    %v4692 = vunpack.c.l.b16 %v3321
    %v4693 = vunpack.c.h.b16 %v3321
    %v4694 = vunpack.c.l.b16 %v3322
    %v4695 = vunpack.c.l.b16 %v3323
    %v4696 = vunpack.c.h.b16 %v3323
    %v4697 = vunpack.c.l.b16 %v3324
    %v4698 = vunpack.c.h.b16 %v3324
    %v4699 = vunpack.c.l.b16 %v3325
    %v4700 = vunpack.c.h.b16 %v3325
    %v4701 = vunpack.c.l.b16 %v3326
    %v4702 = vunpack.c.l.b16 %v3327
    %v4703 = vunpack.c.h.b16 %v3327
    %v4704 = vunpack.c.l.b16 %v3328
    %v4705 = vunpack.c.h.b16 %v3328
    %v4706 = vunpack.c.l.b16 %v3329
    %v4707 = vunpack.c.h.b16 %v3329
    %v4708 = vunpack.c.l.b16 %v3330
    %v4709 = vunpack.c.l.b16 %v3331
    %v4710 = vunpack.c.h.b16 %v3331
    %v4711 = vunpack.c.l.b16 %v3332
    %v4712 = vunpack.c.h.b16 %v3332
    %v4713 = vunpack.c.l.b16 %v3333
    %v4714 = vunpack.c.h.b16 %v3333
    %v4715 = vunpack.c.l.b16 %v3334
    %v4716 = vunpack.c.l.b16 %v3335
    %v4717 = vunpack.c.h.b16 %v3335
    %v4718 = vunpack.c.l.b16 %v3336
    %v4719 = vunpack.c.h.b16 %v3336
    %v4720 = vunpack.c.l.b16 %v3337
    %v4721 = vunpack.c.h.b16 %v3337
    %v4722 = vunpack.c.l.b16 %v3338
    %v4723 = vunpack.c.l.b16 %v3339
    %v4724 = vunpack.c.h.b16 %v3339
    %v4725 = vunpack.c.l.b16 %v3340
    %v4726 = vunpack.c.h.b16 %v3340
    %v4727 = vunpack.c.l.b16 %v3341
    %v4728 = vunpack.c.h.b16 %v3341
    %v4729 = vunpack.c.l.b16 %v3342
    %v4730 = vunpack.c.l.b16 %v3343
    %v4731 = vunpack.c.h.b16 %v3343
    %v4732 = vunpack.c.l.b16 %v3344
    %v4733 = vunpack.c.h.b16 %v3344
    %v4734 = vunpack.c.l.b16 %v3345
    %v4735 = vunpack.c.h.b16 %v3345
    %v4736 = vunpack.c.l.b16 %v3346
    %v4737 = vunpack.c.l.b16 %v3347
    %v4738 = vunpack.c.h.b16 %v3347
    %v4739 = vunpack.c.l.b16 %v3348
    %v4740 = vunpack.c.h.b16 %v3348
    %v4741 = vunpack.c.l.b16 %v3349
    %v4742 = vunpack.c.h.b16 %v3349
    %v4743 = vunpack.c.l.b16 %v3350
    %v4744 = vunpack.c.l.b16 %v3351
    %v4745 = vunpack.c.h.b16 %v3351
    %v4746 = vunpack.c.l.b16 %v3352
    %v4747 = vunpack.c.h.b16 %v3352
    %v4748 = vunpack.c.l.b16 %v3353
    %v4749 = vunpack.c.h.b16 %v3353
    %v4750 = vunpack.c.l.b16 %v3354
    %v4751 = vunpack.c.l.b16 %v3355
    %v4752 = vunpack.c.h.b16 %v3355
    %v4753 = vunpack.c.l.b16 %v3356
    %v4754 = vunpack.c.h.b16 %v3356
    %v4755 = vunpack.c.l.b16 %v3357
    %v4756 = vunpack.c.h.b16 %v3357
    %v4757 = vunpack.c.l.b16 %v3358
    %v4758 = vunpack.c.l.b16 %v3359
    %v4759 = vunpack.c.h.b16 %v3359
    %v4760 = vunpack.c.l.b16 %v3360
    %v4761 = vunpack.c.h.b16 %v3360
    %v4762 = vunpack.c.l.b16 %v3361
    %v4763 = vunpack.c.h.b16 %v3361
    %v4764 = vunpack.c.l.b16 %v3362
    %v4765 = vunpack.c.l.b16 %v3363
    %v4766 = vunpack.c.h.b16 %v3363
    %v4767 = vunpack.c.l.b16 %v3364
    %v4768 = vunpack.c.h.b16 %v3364
    %v4769 = vunpack.c.l.b16 %v3365
    %v4770 = vunpack.c.h.b16 %v3365
    %v4771 = vunpack.c.l.b16 %v3366
    %v4772 = vunpack.c.l.b16 %v3367
    %v4773 = vunpack.c.h.b16 %v3367
    %v4774 = vunpack.c.l.b16 %v3368
    %v4775 = vunpack.c.h.b16 %v3368
    %v4776 = vunpack.c.l.b16 %v3369
    %v4777 = vunpack.c.h.b16 %v3369
    %v4778 = vunpack.c.l.b16 %v3370
    %v4779 = vpack.c.b16 %v3890, %v3883
    %v4780 = vpack.c.b16 %v3891, %v3884
    %v4781 = vpack.c.b16 %v3892, %v3885
    %v4782 = vpack.c.b16 %v3893, %v3886
    %v4783 = vpack.c.b16 %v3894, %v3887
    %v4784 = vpack.c.b16 %v3895, %v3888
    %v4785 = vpack.c.b16 %v3896, %v3889
    %v4786 = vpack.c.b16 %v3904, %v3897
    %v4787 = vpack.c.b16 %v3905, %v3898
    %v4788 = vpack.c.b16 %v3906, %v3899
    %v4789 = vpack.c.b16 %v3907, %v3900
    %v4790 = vpack.c.b16 %v3908, %v3901
    %v4791 = vpack.c.b16 %v3909, %v3902
    %v4792 = vpack.c.b16 %v3910, %v3903
    %v4793 = vpack.c.b16 %v3918, %v3911
    %v4794 = vpack.c.b16 %v3919, %v3912
    %v4795 = vpack.c.b16 %v3920, %v3913
    %v4796 = vpack.c.b16 %v3921, %v3914
    %v4797 = vpack.c.b16 %v3922, %v3915
    %v4798 = vpack.c.b16 %v3923, %v3916
    %v4799 = vpack.c.b16 %v3924, %v3917
    %v4800 = vpack.c.b16 %v3932, %v3925
    %v4801 = vpack.c.b16 %v3933, %v3926
    %v4802 = vpack.c.b16 %v3934, %v3927
    %v4803 = vpack.c.b16 %v3935, %v3928
    %v4804 = vpack.c.b16 %v3936, %v3929
    %v4805 = vpack.c.b16 %v3937, %v3930
    %v4806 = vpack.c.b16 %v3938, %v3931
    %v4807 = vpack.c.b16 %v3946, %v3939
    %v4808 = vpack.c.b16 %v3947, %v3940
    %v4809 = vpack.c.b16 %v3948, %v3941
    %v4810 = vpack.c.b16 %v3949, %v3942
    %v4811 = vpack.c.b16 %v3950, %v3943
    %v4812 = vpack.c.b16 %v3951, %v3944
    %v4813 = vpack.c.b16 %v3952, %v3945
    %v4814 = vpack.c.b16 %v3960, %v3953
    %v4815 = vpack.c.b16 %v3961, %v3954
    %v4816 = vpack.c.b16 %v3962, %v3955
    %v4817 = vpack.c.b16 %v3963, %v3956
    %v4818 = vpack.c.b16 %v3964, %v3957
    %v4819 = vpack.c.b16 %v3965, %v3958
    %v4820 = vpack.c.b16 %v3966, %v3959
    %v4821 = vpack.c.b16 %v3974, %v3967
    %v4822 = vpack.c.b16 %v3975, %v3968
    %v4823 = vpack.c.b16 %v3976, %v3969
    %v4824 = vpack.c.b16 %v3977, %v3970
    %v4825 = vpack.c.b16 %v3978, %v3971
    %v4826 = vpack.c.b16 %v3979, %v3972
    %v4827 = vpack.c.b16 %v3980, %v3973
    %v4828 = vpack.c.b16 %v3988, %v3981
    %v4829 = vpack.c.b16 %v3989, %v3982
    %v4830 = vpack.c.b16 %v3990, %v3983
    %v4831 = vpack.c.b16 %v3991, %v3984
    %v4832 = vpack.c.b16 %v3992, %v3985
    %v4833 = vpack.c.b16 %v3993, %v3986
    %v4834 = vpack.c.b16 %v3994, %v3987
    %v4835 = vpack.c.b16 %v4002, %v3995
    %v4836 = vpack.c.b16 %v4003, %v3996
    %v4837 = vpack.c.b16 %v4004, %v3997
    %v4838 = vpack.c.b16 %v4005, %v3998
    %v4839 = vpack.c.b16 %v4006, %v3999
    %v4840 = vpack.c.b16 %v4007, %v4000
    %v4841 = vpack.c.b16 %v4008, %v4001
    %v4842 = vpack.c.b16 %v4016, %v4009
    %v4843 = vpack.c.b16 %v4017, %v4010
    %v4844 = vpack.c.b16 %v4018, %v4011
    %v4845 = vpack.c.b16 %v4019, %v4012
    %v4846 = vpack.c.b16 %v4020, %v4013
    %v4847 = vpack.c.b16 %v4021, %v4014
    %v4848 = vpack.c.b16 %v4022, %v4015
    %v4849 = vpack.c.b16 %v4030, %v4023
    %v4850 = vpack.c.b16 %v4031, %v4024
    %v4851 = vpack.c.b16 %v4032, %v4025
    %v4852 = vpack.c.b16 %v4033, %v4026
    %v4853 = vpack.c.b16 %v4034, %v4027
    %v4854 = vpack.c.b16 %v4035, %v4028
    %v4855 = vpack.c.b16 %v4036, %v4029
    %v4856 = vpack.c.b16 %v4044, %v4037
    %v4857 = vpack.c.b16 %v4045, %v4038
    %v4858 = vpack.c.b16 %v4046, %v4039
    %v4859 = vpack.c.b16 %v4047, %v4040
    %v4860 = vpack.c.b16 %v4048, %v4041
    %v4861 = vpack.c.b16 %v4049, %v4042
    %v4862 = vpack.c.b16 %v4050, %v4043
    %v4863 = vpack.c.b16 %v4058, %v4051
    %v4864 = vpack.c.b16 %v4059, %v4052
    %v4865 = vpack.c.b16 %v4060, %v4053
    %v4866 = vpack.c.b16 %v4061, %v4054
    %v4867 = vpack.c.b16 %v4062, %v4055
    %v4868 = vpack.c.b16 %v4063, %v4056
    %v4869 = vpack.c.b16 %v4064, %v4057
    %v4870 = vpack.c.b16 %v4072, %v4065
    %v4871 = vpack.c.b16 %v4073, %v4066
    %v4872 = vpack.c.b16 %v4074, %v4067
    %v4873 = vpack.c.b16 %v4075, %v4068
    %v4874 = vpack.c.b16 %v4076, %v4069
    %v4875 = vpack.c.b16 %v4077, %v4070
    %v4876 = vpack.c.b16 %v4078, %v4071
    %v4877 = vpack.c.b16 %v4086, %v4079
    %v4878 = vpack.c.b16 %v4087, %v4080
    %v4879 = vpack.c.b16 %v4088, %v4081
    %v4880 = vpack.c.b16 %v4089, %v4082
    %v4881 = vpack.c.b16 %v4090, %v4083
    %v4882 = vpack.c.b16 %v4091, %v4084
    %v4883 = vpack.c.b16 %v4092, %v4085
    %v4884 = vpack.c.b16 %v4100, %v4093
    %v4885 = vpack.c.b16 %v4101, %v4094
    %v4886 = vpack.c.b16 %v4102, %v4095
    %v4887 = vpack.c.b16 %v4103, %v4096
    %v4888 = vpack.c.b16 %v4104, %v4097
    %v4889 = vpack.c.b16 %v4105, %v4098
    %v4890 = vpack.c.b16 %v4106, %v4099
    %v4891 = vpack.c.b16 %v4114, %v4107
    %v4892 = vpack.c.b16 %v4115, %v4108
    %v4893 = vpack.c.b16 %v4116, %v4109
    %v4894 = vpack.c.b16 %v4117, %v4110
    %v4895 = vpack.c.b16 %v4118, %v4111
    %v4896 = vpack.c.b16 %v4119, %v4112
    %v4897 = vpack.c.b16 %v4120, %v4113
    %v4898 = vpack.c.b16 %v4128, %v4121
    %v4899 = vpack.c.b16 %v4129, %v4122
    %v4900 = vpack.c.b16 %v4130, %v4123
    %v4901 = vpack.c.b16 %v4131, %v4124
    %v4902 = vpack.c.b16 %v4132, %v4125
    %v4903 = vpack.c.b16 %v4133, %v4126
    %v4904 = vpack.c.b16 %v4134, %v4127
    %v4905 = vpack.c.b16 %v4142, %v4135
    %v4906 = vpack.c.b16 %v4143, %v4136
    %v4907 = vpack.c.b16 %v4144, %v4137
    %v4908 = vpack.c.b16 %v4145, %v4138
    %v4909 = vpack.c.b16 %v4146, %v4139
    %v4910 = vpack.c.b16 %v4147, %v4140
    %v4911 = vpack.c.b16 %v4148, %v4141
    %v4912 = vpack.c.b16 %v4156, %v4149
    %v4913 = vpack.c.b16 %v4157, %v4150
    %v4914 = vpack.c.b16 %v4158, %v4151
    %v4915 = vpack.c.b16 %v4159, %v4152
    %v4916 = vpack.c.b16 %v4160, %v4153
    %v4917 = vpack.c.b16 %v4161, %v4154
    %v4918 = vpack.c.b16 %v4162, %v4155
    %v4919 = vpack.c.b16 %v4170, %v4163
    %v4920 = vpack.c.b16 %v4171, %v4164
    %v4921 = vpack.c.b16 %v4172, %v4165
    %v4922 = vpack.c.b16 %v4173, %v4166
    %v4923 = vpack.c.b16 %v4174, %v4167
    %v4924 = vpack.c.b16 %v4175, %v4168
    %v4925 = vpack.c.b16 %v4176, %v4169
    %v4926 = vpack.c.b16 %v4184, %v4177
    %v4927 = vpack.c.b16 %v4185, %v4178
    %v4928 = vpack.c.b16 %v4186, %v4179
    %v4929 = vpack.c.b16 %v4187, %v4180
    %v4930 = vpack.c.b16 %v4188, %v4181
    %v4931 = vpack.c.b16 %v4189, %v4182
    %v4932 = vpack.c.b16 %v4190, %v4183
    %v4933 = vpack.c.b16 %v4198, %v4191
    %v4934 = vpack.c.b16 %v4199, %v4192
    %v4935 = vpack.c.b16 %v4200, %v4193
    %v4936 = vpack.c.b16 %v4201, %v4194
    %v4937 = vpack.c.b16 %v4202, %v4195
    %v4938 = vpack.c.b16 %v4203, %v4196
    %v4939 = vpack.c.b16 %v4204, %v4197
    %v4940 = vpack.c.b16 %v4212, %v4205
    %v4941 = vpack.c.b16 %v4213, %v4206
    %v4942 = vpack.c.b16 %v4214, %v4207
    %v4943 = vpack.c.b16 %v4215, %v4208
    %v4944 = vpack.c.b16 %v4216, %v4209
    %v4945 = vpack.c.b16 %v4217, %v4210
    %v4946 = vpack.c.b16 %v4218, %v4211
    %v4947 = vpack.c.b16 %v4226, %v4219
    %v4948 = vpack.c.b16 %v4227, %v4220
    %v4949 = vpack.c.b16 %v4228, %v4221
    %v4950 = vpack.c.b16 %v4229, %v4222
    %v4951 = vpack.c.b16 %v4230, %v4223
    %v4952 = vpack.c.b16 %v4231, %v4224
    %v4953 = vpack.c.b16 %v4232, %v4225
    %v4954 = vpack.c.b16 %v4240, %v4233
    %v4955 = vpack.c.b16 %v4241, %v4234
    %v4956 = vpack.c.b16 %v4242, %v4235
    %v4957 = vpack.c.b16 %v4243, %v4236
    %v4958 = vpack.c.b16 %v4244, %v4237
    %v4959 = vpack.c.b16 %v4245, %v4238
    %v4960 = vpack.c.b16 %v4246, %v4239
    %v4961 = vpack.c.b16 %v4254, %v4247
    %v4962 = vpack.c.b16 %v4255, %v4248
    %v4963 = vpack.c.b16 %v4256, %v4249
    %v4964 = vpack.c.b16 %v4257, %v4250
    %v4965 = vpack.c.b16 %v4258, %v4251
    %v4966 = vpack.c.b16 %v4259, %v4252
    %v4967 = vpack.c.b16 %v4260, %v4253
    %v4968 = vpack.c.b16 %v4268, %v4261
    %v4969 = vpack.c.b16 %v4269, %v4262
    %v4970 = vpack.c.b16 %v4270, %v4263
    %v4971 = vpack.c.b16 %v4271, %v4264
    %v4972 = vpack.c.b16 %v4272, %v4265
    %v4973 = vpack.c.b16 %v4273, %v4266
    %v4974 = vpack.c.b16 %v4274, %v4267
    %v4975 = vpack.c.b16 %v4282, %v4275
    %v4976 = vpack.c.b16 %v4283, %v4276
    %v4977 = vpack.c.b16 %v4284, %v4277
    %v4978 = vpack.c.b16 %v4285, %v4278
    %v4979 = vpack.c.b16 %v4286, %v4279
    %v4980 = vpack.c.b16 %v4287, %v4280
    %v4981 = vpack.c.b16 %v4288, %v4281
    %v4982 = vpack.c.b16 %v4296, %v4289
    %v4983 = vpack.c.b16 %v4297, %v4290
    %v4984 = vpack.c.b16 %v4298, %v4291
    %v4985 = vpack.c.b16 %v4299, %v4292
    %v4986 = vpack.c.b16 %v4300, %v4293
    %v4987 = vpack.c.b16 %v4301, %v4294
    %v4988 = vpack.c.b16 %v4302, %v4295
    %v4989 = vpack.c.b16 %v4310, %v4303
    %v4990 = vpack.c.b16 %v4311, %v4304
    %v4991 = vpack.c.b16 %v4312, %v4305
    %v4992 = vpack.c.b16 %v4313, %v4306
    %v4993 = vpack.c.b16 %v4314, %v4307
    %v4994 = vpack.c.b16 %v4315, %v4308
    %v4995 = vpack.c.b16 %v4316, %v4309
    %v4996 = vpack.c.b16 %v4324, %v4317
    %v4997 = vpack.c.b16 %v4325, %v4318
    %v4998 = vpack.c.b16 %v4326, %v4319
    %v4999 = vpack.c.b16 %v4327, %v4320
    %v5000 = vpack.c.b16 %v4328, %v4321
    %v5001 = vpack.c.b16 %v4329, %v4322
    %v5002 = vpack.c.b16 %v4330, %v4323
    %v5003 = vpack.c.b16 %v4338, %v4331
    %v5004 = vpack.c.b16 %v4339, %v4332
    %v5005 = vpack.c.b16 %v4340, %v4333
    %v5006 = vpack.c.b16 %v4341, %v4334
    %v5007 = vpack.c.b16 %v4342, %v4335
    %v5008 = vpack.c.b16 %v4343, %v4336
    %v5009 = vpack.c.b16 %v4344, %v4337
    %v5010 = vpack.c.b16 %v4352, %v4345
    %v5011 = vpack.c.b16 %v4353, %v4346
    %v5012 = vpack.c.b16 %v4354, %v4347
    %v5013 = vpack.c.b16 %v4355, %v4348
    %v5014 = vpack.c.b16 %v4356, %v4349
    %v5015 = vpack.c.b16 %v4357, %v4350
    %v5016 = vpack.c.b16 %v4358, %v4351
    %v5017 = vpack.c.b16 %v4366, %v4359
    %v5018 = vpack.c.b16 %v4367, %v4360
    %v5019 = vpack.c.b16 %v4368, %v4361
    %v5020 = vpack.c.b16 %v4369, %v4362
    %v5021 = vpack.c.b16 %v4370, %v4363
    %v5022 = vpack.c.b16 %v4371, %v4364
    %v5023 = vpack.c.b16 %v4372, %v4365
    %v5024 = vpack.c.b16 %v4380, %v4373
    %v5025 = vpack.c.b16 %v4381, %v4374
    %v5026 = vpack.c.b16 %v4382, %v4375
    %v5027 = vpack.c.b16 %v4383, %v4376
    %v5028 = vpack.c.b16 %v4384, %v4377
    %v5029 = vpack.c.b16 %v4385, %v4378
    %v5030 = vpack.c.b16 %v4386, %v4379
    %v5031 = vpack.c.b16 %v4394, %v4387
    %v5032 = vpack.c.b16 %v4395, %v4388
    %v5033 = vpack.c.b16 %v4396, %v4389
    %v5034 = vpack.c.b16 %v4397, %v4390
    %v5035 = vpack.c.b16 %v4398, %v4391
    %v5036 = vpack.c.b16 %v4399, %v4392
    %v5037 = vpack.c.b16 %v4400, %v4393
    %v5038 = vpack.c.b16 %v4408, %v4401
    %v5039 = vpack.c.b16 %v4409, %v4402
    %v5040 = vpack.c.b16 %v4410, %v4403
    %v5041 = vpack.c.b16 %v4411, %v4404
    %v5042 = vpack.c.b16 %v4412, %v4405
    %v5043 = vpack.c.b16 %v4413, %v4406
    %v5044 = vpack.c.b16 %v4414, %v4407
    %v5045 = vpack.c.b16 %v4422, %v4415
    %v5046 = vpack.c.b16 %v4423, %v4416
    %v5047 = vpack.c.b16 %v4424, %v4417
    %v5048 = vpack.c.b16 %v4425, %v4418
    %v5049 = vpack.c.b16 %v4426, %v4419
    %v5050 = vpack.c.b16 %v4427, %v4420
    %v5051 = vpack.c.b16 %v4428, %v4421
    %v5052 = vpack.c.b16 %v4436, %v4429
    %v5053 = vpack.c.b16 %v4437, %v4430
    %v5054 = vpack.c.b16 %v4438, %v4431
    %v5055 = vpack.c.b16 %v4439, %v4432
    %v5056 = vpack.c.b16 %v4440, %v4433
    %v5057 = vpack.c.b16 %v4441, %v4434
    %v5058 = vpack.c.b16 %v4442, %v4435
    %v5059 = vpack.c.b16 %v4450, %v4443
    %v5060 = vpack.c.b16 %v4451, %v4444
    %v5061 = vpack.c.b16 %v4452, %v4445
    %v5062 = vpack.c.b16 %v4453, %v4446
    %v5063 = vpack.c.b16 %v4454, %v4447
    %v5064 = vpack.c.b16 %v4455, %v4448
    %v5065 = vpack.c.b16 %v4456, %v4449
    %v5066 = vpack.c.b16 %v4464, %v4457
    %v5067 = vpack.c.b16 %v4465, %v4458
    %v5068 = vpack.c.b16 %v4466, %v4459
    %v5069 = vpack.c.b16 %v4467, %v4460
    %v5070 = vpack.c.b16 %v4468, %v4461
    %v5071 = vpack.c.b16 %v4469, %v4462
    %v5072 = vpack.c.b16 %v4470, %v4463
    %v5073 = vpack.c.b16 %v4478, %v4471
    %v5074 = vpack.c.b16 %v4479, %v4472
    %v5075 = vpack.c.b16 %v4480, %v4473
    %v5076 = vpack.c.b16 %v4481, %v4474
    %v5077 = vpack.c.b16 %v4482, %v4475
    %v5078 = vpack.c.b16 %v4483, %v4476
    %v5079 = vpack.c.b16 %v4484, %v4477
    %v5080 = vpack.c.b16 %v4492, %v4485
    %v5081 = vpack.c.b16 %v4493, %v4486
    %v5082 = vpack.c.b16 %v4494, %v4487
    %v5083 = vpack.c.b16 %v4495, %v4488
    %v5084 = vpack.c.b16 %v4496, %v4489
    %v5085 = vpack.c.b16 %v4497, %v4490
    %v5086 = vpack.c.b16 %v4498, %v4491
    %v5087 = vpack.c.b16 %v4506, %v4499
    %v5088 = vpack.c.b16 %v4507, %v4500
    %v5089 = vpack.c.b16 %v4508, %v4501
    %v5090 = vpack.c.b16 %v4509, %v4502
    %v5091 = vpack.c.b16 %v4510, %v4503
    %v5092 = vpack.c.b16 %v4511, %v4504
    %v5093 = vpack.c.b16 %v4512, %v4505
    %v5094 = vpack.c.b16 %v4520, %v4513
    %v5095 = vpack.c.b16 %v4521, %v4514
    %v5096 = vpack.c.b16 %v4522, %v4515
    %v5097 = vpack.c.b16 %v4523, %v4516
    %v5098 = vpack.c.b16 %v4524, %v4517
    %v5099 = vpack.c.b16 %v4525, %v4518
    %v5100 = vpack.c.b16 %v4526, %v4519
    %v5101 = vpack.c.b16 %v4534, %v4527
    %v5102 = vpack.c.b16 %v4535, %v4528
    %v5103 = vpack.c.b16 %v4536, %v4529
    %v5104 = vpack.c.b16 %v4537, %v4530
    %v5105 = vpack.c.b16 %v4538, %v4531
    %v5106 = vpack.c.b16 %v4539, %v4532
    %v5107 = vpack.c.b16 %v4540, %v4533
    %v5108 = vpack.c.b16 %v4548, %v4541
    %v5109 = vpack.c.b16 %v4549, %v4542
    %v5110 = vpack.c.b16 %v4550, %v4543
    %v5111 = vpack.c.b16 %v4551, %v4544
    %v5112 = vpack.c.b16 %v4552, %v4545
    %v5113 = vpack.c.b16 %v4553, %v4546
    %v5114 = vpack.c.b16 %v4554, %v4547
    %v5115 = vpack.c.b16 %v4562, %v4555
    %v5116 = vpack.c.b16 %v4563, %v4556
    %v5117 = vpack.c.b16 %v4564, %v4557
    %v5118 = vpack.c.b16 %v4565, %v4558
    %v5119 = vpack.c.b16 %v4566, %v4559
    %v5120 = vpack.c.b16 %v4567, %v4560
    %v5121 = vpack.c.b16 %v4568, %v4561
    %v5122 = vpack.c.b16 %v4576, %v4569
    %v5123 = vpack.c.b16 %v4577, %v4570
    %v5124 = vpack.c.b16 %v4578, %v4571
    %v5125 = vpack.c.b16 %v4579, %v4572
    %v5126 = vpack.c.b16 %v4580, %v4573
    %v5127 = vpack.c.b16 %v4581, %v4574
    %v5128 = vpack.c.b16 %v4582, %v4575
    %v5129 = vpack.c.b16 %v4590, %v4583
    %v5130 = vpack.c.b16 %v4591, %v4584
    %v5131 = vpack.c.b16 %v4592, %v4585
    %v5132 = vpack.c.b16 %v4593, %v4586
    %v5133 = vpack.c.b16 %v4594, %v4587
    %v5134 = vpack.c.b16 %v4595, %v4588
    %v5135 = vpack.c.b16 %v4596, %v4589
    %v5136 = vpack.c.b16 %v4604, %v4597
    %v5137 = vpack.c.b16 %v4605, %v4598
    %v5138 = vpack.c.b16 %v4606, %v4599
    %v5139 = vpack.c.b16 %v4607, %v4600
    %v5140 = vpack.c.b16 %v4608, %v4601
    %v5141 = vpack.c.b16 %v4609, %v4602
    %v5142 = vpack.c.b16 %v4610, %v4603
    %v5143 = vpack.c.b16 %v4618, %v4611
    %v5144 = vpack.c.b16 %v4619, %v4612
    %v5145 = vpack.c.b16 %v4620, %v4613
    %v5146 = vpack.c.b16 %v4621, %v4614
    %v5147 = vpack.c.b16 %v4622, %v4615
    %v5148 = vpack.c.b16 %v4623, %v4616
    %v5149 = vpack.c.b16 %v4624, %v4617
    %v5150 = vpack.c.b16 %v4632, %v4625
    %v5151 = vpack.c.b16 %v4633, %v4626
    %v5152 = vpack.c.b16 %v4634, %v4627
    %v5153 = vpack.c.b16 %v4635, %v4628
    %v5154 = vpack.c.b16 %v4636, %v4629
    %v5155 = vpack.c.b16 %v4637, %v4630
    %v5156 = vpack.c.b16 %v4638, %v4631
    %v5157 = vpack.c.b16 %v4646, %v4639
    %v5158 = vpack.c.b16 %v4647, %v4640
    %v5159 = vpack.c.b16 %v4648, %v4641
    %v5160 = vpack.c.b16 %v4649, %v4642
    %v5161 = vpack.c.b16 %v4650, %v4643
    %v5162 = vpack.c.b16 %v4651, %v4644
    %v5163 = vpack.c.b16 %v4652, %v4645
    %v5164 = vpack.c.b16 %v4660, %v4653
    %v5165 = vpack.c.b16 %v4661, %v4654
    %v5166 = vpack.c.b16 %v4662, %v4655
    %v5167 = vpack.c.b16 %v4663, %v4656
    %v5168 = vpack.c.b16 %v4664, %v4657
    %v5169 = vpack.c.b16 %v4665, %v4658
    %v5170 = vpack.c.b16 %v4666, %v4659
    %v5171 = vpack.c.b16 %v4674, %v4667
    %v5172 = vpack.c.b16 %v4675, %v4668
    %v5173 = vpack.c.b16 %v4676, %v4669
    %v5174 = vpack.c.b16 %v4677, %v4670
    %v5175 = vpack.c.b16 %v4678, %v4671
    %v5176 = vpack.c.b16 %v4679, %v4672
    %v5177 = vpack.c.b16 %v4680, %v4673
    %v5178 = vpack.c.b16 %v4688, %v4681
    %v5179 = vpack.c.b16 %v4689, %v4682
    %v5180 = vpack.c.b16 %v4690, %v4683
    %v5181 = vpack.c.b16 %v4691, %v4684
    %v5182 = vpack.c.b16 %v4692, %v4685
    %v5183 = vpack.c.b16 %v4693, %v4686
    %v5184 = vpack.c.b16 %v4694, %v4687
    %v5185 = vpack.c.b16 %v4702, %v4695
    %v5186 = vpack.c.b16 %v4703, %v4696
    %v5187 = vpack.c.b16 %v4704, %v4697
    %v5188 = vpack.c.b16 %v4705, %v4698
    %v5189 = vpack.c.b16 %v4706, %v4699
    %v5190 = vpack.c.b16 %v4707, %v4700
    %v5191 = vpack.c.b16 %v4708, %v4701
    %v5192 = vpack.c.b16 %v4716, %v4709
    %v5193 = vpack.c.b16 %v4717, %v4710
    %v5194 = vpack.c.b16 %v4718, %v4711
    %v5195 = vpack.c.b16 %v4719, %v4712
    %v5196 = vpack.c.b16 %v4720, %v4713
    %v5197 = vpack.c.b16 %v4721, %v4714
    %v5198 = vpack.c.b16 %v4722, %v4715
    %v5199 = vpack.c.b16 %v4730, %v4723
    %v5200 = vpack.c.b16 %v4731, %v4724
    %v5201 = vpack.c.b16 %v4732, %v4725
    %v5202 = vpack.c.b16 %v4733, %v4726
    %v5203 = vpack.c.b16 %v4734, %v4727
    %v5204 = vpack.c.b16 %v4735, %v4728
    %v5205 = vpack.c.b16 %v4736, %v4729
    %v5206 = vpack.c.b16 %v4744, %v4737
    %v5207 = vpack.c.b16 %v4745, %v4738
    %v5208 = vpack.c.b16 %v4746, %v4739
    %v5209 = vpack.c.b16 %v4747, %v4740
    %v5210 = vpack.c.b16 %v4748, %v4741
    %v5211 = vpack.c.b16 %v4749, %v4742
    %v5212 = vpack.c.b16 %v4750, %v4743
    %v5213 = vpack.c.b16 %v4758, %v4751
    %v5214 = vpack.c.b16 %v4759, %v4752
    %v5215 = vpack.c.b16 %v4760, %v4753
    %v5216 = vpack.c.b16 %v4761, %v4754
    %v5217 = vpack.c.b16 %v4762, %v4755
    %v5218 = vpack.c.b16 %v4763, %v4756
    %v5219 = vpack.c.b16 %v4764, %v4757
    %v5220 = vpack.c.b16 %v4772, %v4765
    %v5221 = vpack.c.b16 %v4773, %v4766
    %v5222 = vpack.c.b16 %v4774, %v4767
    %v5223 = vpack.c.b16 %v4775, %v4768
    %v5224 = vpack.c.b16 %v4776, %v4769
    %v5225 = vpack.c.b16 %v4777, %v4770
    %v5226 = vpack.c.b16 %v4778, %v4771
    %5675 = vmatprep.subr.bf16.mxu0 %v4829
    %5676 = vmatpush1.bf16.msra.mxu0 %v4828
    %5677 = vmatprep.subr.bf16.mxu0 %v4822
    %5678 = vmatpush1.bf16.msra.mxu0 %v4821
    %5679 = vmatprep.subr.bf16.mxu0 %v4815
    %5680 = vmatpush1.bf16.msra.mxu0 %v4814
    %5681 = vmatprep.subr.bf16.mxu0 %v4808
    %5682 = vmatpush1.bf16.msra.mxu0 %v4807
    %5683 = vmatprep.subr.bf16.mxu0 %v4801
    %5684 = vmatpush1.bf16.msra.mxu0 %v4800
    %5685 = vmatprep.subr.bf16.mxu0 %v4794
    %5686 = vmatpush1.bf16.msra.mxu0 %v4793
    %5687 = vmatprep.subr.bf16.mxu0 %v4787
    %5688 = vmatpush1.bf16.msra.mxu0 %v4786
    %5689 = vmatprep.subr.bf16.mxu0 %v4780
    %5690 = vmatpush1.bf16.msra.mxu0 %v4779
    %5691 = vmatprep.subr.bf16.mxu0 %v4885
    %5692 = vmatpush2.bf16.msra.mxu0 %v4884
    %5693 = vmatprep.subr.bf16.mxu0 %v4878
    %5694 = vmatpush2.bf16.msra.mxu0 %v4877
    %5695 = vmatprep.subr.bf16.mxu0 %v4871
    %5696 = vmatpush2.bf16.msra.mxu0 %v4870
    %5697 = vmatprep.subr.bf16.mxu0 %v4864
    %5698 = vmatpush2.bf16.msra.mxu0 %v4863
    %5699 = vmatprep.subr.bf16.mxu0 %v4857
    %5700 = vmatpush2.bf16.msra.mxu0 %v4856
    %5701 = vmatprep.subr.bf16.mxu0 %v4850
    %5702 = vmatpush2.bf16.msra.mxu0 %v4849
    %5703 = vmatprep.subr.bf16.mxu0 %v4843
    %5704 = vmatpush2.bf16.msra.mxu0 %v4842
    %5705 = vmatprep.subr.bf16.mxu0 %v4836
    %5706 = vmatpush2.bf16.msra.mxu0 %v4835
    %5707 = vmatprep.mubr.bf16.mxu0 %v2852
    %5708 = vmatmul.mubr.bf16.gmra.mxu0 %v2851
    %v5709 = vpop.f32.mrf.mxu0
    %v5710 = vadd.f32 0.0, %v5709
    %v5711 = vpop.f32.mrf.mxu0
    %v5712 = vadd.f32 0.0, %v5711
    %v5713 = vpop.f32.mrf.mxu0
    %v5714 = vpop.f32.mrf.mxu0
    %5715 = vdwg.mxu0
    %5716 = vmatprep.subr.bf16.mxu0 %v4941
    %5717 = vmatpush1.bf16.msra.mxu0 %v4940
    %5718 = vmatprep.subr.bf16.mxu0 %v4934
    %5719 = vmatpush1.bf16.msra.mxu0 %v4933
    %5720 = vmatprep.subr.bf16.mxu0 %v4927
    %5721 = vmatpush1.bf16.msra.mxu0 %v4926
    %5722 = vmatprep.subr.bf16.mxu0 %v4920
    %5723 = vmatpush1.bf16.msra.mxu0 %v4919
    %5724 = vmatprep.subr.bf16.mxu0 %v4913
    %5725 = vmatpush1.bf16.msra.mxu0 %v4912
    %5726 = vmatprep.subr.bf16.mxu0 %v4906
    %5727 = vmatpush1.bf16.msra.mxu0 %v4905
    %5728 = vmatprep.subr.bf16.mxu0 %v4899
    %5729 = vmatpush1.bf16.msra.mxu0 %v4898
    %5730 = vmatprep.subr.bf16.mxu0 %v4892
    %5731 = vmatpush1.bf16.msra.mxu0 %v4891
    %5732 = vmatprep.subr.bf16.mxu0 %v4997
    %5733 = vmatpush2.bf16.msra.mxu0 %v4996
    %5734 = vmatprep.subr.bf16.mxu0 %v4990
    %5735 = vmatpush2.bf16.msra.mxu0 %v4989
    %5736 = vmatprep.subr.bf16.mxu0 %v4983
    %5737 = vmatpush2.bf16.msra.mxu0 %v4982
    %5738 = vmatprep.subr.bf16.mxu0 %v4976
    %5739 = vmatpush2.bf16.msra.mxu0 %v4975
    %5740 = vmatprep.subr.bf16.mxu0 %v4969
    %5741 = vmatpush2.bf16.msra.mxu0 %v4968
    %5742 = vmatprep.subr.bf16.mxu0 %v4962
    %5743 = vmatpush2.bf16.msra.mxu0 %v4961
    %5744 = vmatprep.subr.bf16.mxu0 %v4955
    %5745 = vmatpush2.bf16.msra.mxu0 %v4954
    %5746 = vmatprep.subr.bf16.mxu0 %v4948
    %5747 = vmatpush2.bf16.msra.mxu0 %v4947
    %5748 = vmatprep.mubr.bf16.mxu0 %v2854
    %5749 = vmatmul.mubr.bf16.gmra.mxu0 %v2853
    %v5750 = vpop.f32.mrf.mxu0
    %v5751 = vadd.f32 %v5710, %v5750
    %v5752 = vpop.f32.mrf.mxu0
    %v5753 = vadd.f32 %v5712, %v5752
    %v5754 = vpop.f32.mrf.mxu0
    %v5755 = vpop.f32.mrf.mxu0
    %5756 = vdwg.mxu0
    %5757 = vmatprep.subr.bf16.mxu0 %v5053
    %5758 = vmatpush1.bf16.msra.mxu0 %v5052
    %5759 = vmatprep.subr.bf16.mxu0 %v5046
    %5760 = vmatpush1.bf16.msra.mxu0 %v5045
    %5761 = vmatprep.subr.bf16.mxu0 %v5039
    %5762 = vmatpush1.bf16.msra.mxu0 %v5038
    %5763 = vmatprep.subr.bf16.mxu0 %v5032
    %5764 = vmatpush1.bf16.msra.mxu0 %v5031
    %5765 = vmatprep.subr.bf16.mxu0 %v5025
    %5766 = vmatpush1.bf16.msra.mxu0 %v5024
    %5767 = vmatprep.subr.bf16.mxu0 %v5018
    %5768 = vmatpush1.bf16.msra.mxu0 %v5017
    %5769 = vmatprep.subr.bf16.mxu0 %v5011
    %5770 = vmatpush1.bf16.msra.mxu0 %v5010
    %5771 = vmatprep.subr.bf16.mxu0 %v5004
    %5772 = vmatpush1.bf16.msra.mxu0 %v5003
    %5773 = vmatprep.subr.bf16.mxu0 %v5109
    %5774 = vmatpush2.bf16.msra.mxu0 %v5108
    %5775 = vmatprep.subr.bf16.mxu0 %v5102
    %5776 = vmatpush2.bf16.msra.mxu0 %v5101
    %5777 = vmatprep.subr.bf16.mxu0 %v5095
    %5778 = vmatpush2.bf16.msra.mxu0 %v5094
    %5779 = vmatprep.subr.bf16.mxu0 %v5088
    %5780 = vmatpush2.bf16.msra.mxu0 %v5087
    %5781 = vmatprep.subr.bf16.mxu0 %v5081
    %5782 = vmatpush2.bf16.msra.mxu0 %v5080
    %5783 = vmatprep.subr.bf16.mxu0 %v5074
    %5784 = vmatpush2.bf16.msra.mxu0 %v5073
    %5785 = vmatprep.subr.bf16.mxu0 %v5067
    %5786 = vmatpush2.bf16.msra.mxu0 %v5066
    %5787 = vmatprep.subr.bf16.mxu0 %v5060
    %5788 = vmatpush2.bf16.msra.mxu0 %v5059
    %5789 = vmatprep.mubr.bf16.mxu0 %v2856
    %5790 = vmatmul.mubr.bf16.gmra.mxu0 %v2855
    %v5791 = vpop.f32.mrf.mxu0
    %v5792 = vadd.f32 %v5751, %v5791
    %v5793 = vpop.f32.mrf.mxu0
    %v5794 = vadd.f32 %v5753, %v5793
    %v5795 = vpop.f32.mrf.mxu0
    %v5796 = vpop.f32.mrf.mxu0
    %5797 = vdwg.mxu0
    %5798 = vmatprep.subr.bf16.mxu0 %v5165
    %5799 = vmatpush1.bf16.msra.mxu0 %v5164
    %5800 = vmatprep.subr.bf16.mxu0 %v5158
    %5801 = vmatpush1.bf16.msra.mxu0 %v5157
    %5802 = vmatprep.subr.bf16.mxu0 %v5151
    %5803 = vmatpush1.bf16.msra.mxu0 %v5150
    %5804 = vmatprep.subr.bf16.mxu0 %v5144
    %5805 = vmatpush1.bf16.msra.mxu0 %v5143
    %5806 = vmatprep.subr.bf16.mxu0 %v5137
    %5807 = vmatpush1.bf16.msra.mxu0 %v5136
    %5808 = vmatprep.subr.bf16.mxu0 %v5130
    %5809 = vmatpush1.bf16.msra.mxu0 %v5129
    %5810 = vmatprep.subr.bf16.mxu0 %v5123
    %5811 = vmatpush1.bf16.msra.mxu0 %v5122
    %5812 = vmatprep.subr.bf16.mxu0 %v5116
    %5813 = vmatpush1.bf16.msra.mxu0 %v5115
    %5814 = vmatprep.subr.bf16.mxu0 %v5221
    %5815 = vmatpush2.bf16.msra.mxu0 %v5220
    %5816 = vmatprep.subr.bf16.mxu0 %v5214
    %5817 = vmatpush2.bf16.msra.mxu0 %v5213
    %5818 = vmatprep.subr.bf16.mxu0 %v5207
    %5819 = vmatpush2.bf16.msra.mxu0 %v5206
    %5820 = vmatprep.subr.bf16.mxu0 %v5200
    %5821 = vmatpush2.bf16.msra.mxu0 %v5199
    %5822 = vmatprep.subr.bf16.mxu0 %v5193
    %5823 = vmatpush2.bf16.msra.mxu0 %v5192
    %5824 = vmatprep.subr.bf16.mxu0 %v5186
    %5825 = vmatpush2.bf16.msra.mxu0 %v5185
    %5826 = vmatprep.subr.bf16.mxu0 %v5179
    %5827 = vmatpush2.bf16.msra.mxu0 %v5178
    %5828 = vmatprep.subr.bf16.mxu0 %v5172
    %5829 = vmatpush2.bf16.msra.mxu0 %v5171
    %5830 = vmatprep.mubr.bf16.mxu0 %v2858
    %5831 = vmatmul.mubr.bf16.gmra.mxu0 %v2857
    %v5832 = vpop.f32.mrf.mxu0
    %v5833 = vadd.f32 %v5792, %v5832
    %v5834 = vpop.f32.mrf.mxu0
    %v5835 = vadd.f32 %v5794, %v5834
    %v5836 = vpop.f32.mrf.mxu0
    %v5837 = vpop.f32.mrf.mxu0
    %5838 = vdwg.mxu0
    %5839 = vmatprep.subr.bf16.mxu0 %v4831
    %5840 = vmatpush1.bf16.msra.mxu0 %v4830
    %5841 = vmatprep.subr.bf16.mxu0 %v4824
    %5842 = vmatpush1.bf16.msra.mxu0 %v4823
    %5843 = vmatprep.subr.bf16.mxu0 %v4817
    %5844 = vmatpush1.bf16.msra.mxu0 %v4816
    %5845 = vmatprep.subr.bf16.mxu0 %v4810
    %5846 = vmatpush1.bf16.msra.mxu0 %v4809
    %5847 = vmatprep.subr.bf16.mxu0 %v4803
    %5848 = vmatpush1.bf16.msra.mxu0 %v4802
    %5849 = vmatprep.subr.bf16.mxu0 %v4796
    %5850 = vmatpush1.bf16.msra.mxu0 %v4795
    %5851 = vmatprep.subr.bf16.mxu0 %v4789
    %5852 = vmatpush1.bf16.msra.mxu0 %v4788
    %5853 = vmatprep.subr.bf16.mxu0 %v4782
    %5854 = vmatpush1.bf16.msra.mxu0 %v4781
    %5855 = vmatprep.subr.bf16.mxu0 %v4887
    %5856 = vmatpush2.bf16.msra.mxu0 %v4886
    %5857 = vmatprep.subr.bf16.mxu0 %v4880
    %5858 = vmatpush2.bf16.msra.mxu0 %v4879
    %5859 = vmatprep.subr.bf16.mxu0 %v4873
    %5860 = vmatpush2.bf16.msra.mxu0 %v4872
    %5861 = vmatprep.subr.bf16.mxu0 %v4866
    %5862 = vmatpush2.bf16.msra.mxu0 %v4865
    %5863 = vmatprep.subr.bf16.mxu0 %v4859
    %5864 = vmatpush2.bf16.msra.mxu0 %v4858
    %5865 = vmatprep.subr.bf16.mxu0 %v4852
    %5866 = vmatpush2.bf16.msra.mxu0 %v4851
    %5867 = vmatprep.subr.bf16.mxu0 %v4845
    %5868 = vmatpush2.bf16.msra.mxu0 %v4844
    %5869 = vmatprep.subr.bf16.mxu0 %v4838
    %5870 = vmatpush2.bf16.msra.mxu0 %v4837
    %5871 = vmatprep.mubr.bf16.mxu0 %v2852
    %5872 = vmatmul.mubr.bf16.gmra.mxu0 %v2851
    %v5873 = vpop.f32.mrf.mxu0
    %v5874 = vadd.f32 0.0, %v5873
    %v5875 = vpop.f32.mrf.mxu0
    %v5876 = vadd.f32 0.0, %v5875
    %v5877 = vpop.f32.mrf.mxu0
    %v5878 = vpop.f32.mrf.mxu0
    %5879 = vdwg.mxu0
    %5880 = vmatprep.subr.bf16.mxu0 %v4943
    %5881 = vmatpush1.bf16.msra.mxu0 %v4942
    %5882 = vmatprep.subr.bf16.mxu0 %v4936
    %5883 = vmatpush1.bf16.msra.mxu0 %v4935
    %5884 = vmatprep.subr.bf16.mxu0 %v4929
    %5885 = vmatpush1.bf16.msra.mxu0 %v4928
    %5886 = vmatprep.subr.bf16.mxu0 %v4922
    %5887 = vmatpush1.bf16.msra.mxu0 %v4921
    %5888 = vmatprep.subr.bf16.mxu0 %v4915
    %5889 = vmatpush1.bf16.msra.mxu0 %v4914
    %5890 = vmatprep.subr.bf16.mxu0 %v4908
    %5891 = vmatpush1.bf16.msra.mxu0 %v4907
    %5892 = vmatprep.subr.bf16.mxu0 %v4901
    %5893 = vmatpush1.bf16.msra.mxu0 %v4900
    %5894 = vmatprep.subr.bf16.mxu0 %v4894
    %5895 = vmatpush1.bf16.msra.mxu0 %v4893
    %5896 = vmatprep.subr.bf16.mxu0 %v4999
    %5897 = vmatpush2.bf16.msra.mxu0 %v4998
    %5898 = vmatprep.subr.bf16.mxu0 %v4992
    %5899 = vmatpush2.bf16.msra.mxu0 %v4991
    %5900 = vmatprep.subr.bf16.mxu0 %v4985
    %5901 = vmatpush2.bf16.msra.mxu0 %v4984
    %5902 = vmatprep.subr.bf16.mxu0 %v4978
    %5903 = vmatpush2.bf16.msra.mxu0 %v4977
    %5904 = vmatprep.subr.bf16.mxu0 %v4971
    %5905 = vmatpush2.bf16.msra.mxu0 %v4970
    %5906 = vmatprep.subr.bf16.mxu0 %v4964
    %5907 = vmatpush2.bf16.msra.mxu0 %v4963
    %5908 = vmatprep.subr.bf16.mxu0 %v4957
    %5909 = vmatpush2.bf16.msra.mxu0 %v4956
    %5910 = vmatprep.subr.bf16.mxu0 %v4950
    %5911 = vmatpush2.bf16.msra.mxu0 %v4949
    %5912 = vmatprep.mubr.bf16.mxu0 %v2854
    %5913 = vmatmul.mubr.bf16.gmra.mxu0 %v2853
    %v5914 = vpop.f32.mrf.mxu0
    %v5915 = vadd.f32 %v5874, %v5914
    %v5916 = vpop.f32.mrf.mxu0
    %v5917 = vadd.f32 %v5876, %v5916
    %v5918 = vpop.f32.mrf.mxu0
    %v5919 = vpop.f32.mrf.mxu0
    %5920 = vdwg.mxu0
    %5921 = vmatprep.subr.bf16.mxu0 %v5055
    %5922 = vmatpush1.bf16.msra.mxu0 %v5054
    %5923 = vmatprep.subr.bf16.mxu0 %v5048
    %5924 = vmatpush1.bf16.msra.mxu0 %v5047
    %5925 = vmatprep.subr.bf16.mxu0 %v5041
    %5926 = vmatpush1.bf16.msra.mxu0 %v5040
    %5927 = vmatprep.subr.bf16.mxu0 %v5034
    %5928 = vmatpush1.bf16.msra.mxu0 %v5033
    %5929 = vmatprep.subr.bf16.mxu0 %v5027
    %5930 = vmatpush1.bf16.msra.mxu0 %v5026
    %5931 = vmatprep.subr.bf16.mxu0 %v5020
    %5932 = vmatpush1.bf16.msra.mxu0 %v5019
    %5933 = vmatprep.subr.bf16.mxu0 %v5013
    %5934 = vmatpush1.bf16.msra.mxu0 %v5012
    %5935 = vmatprep.subr.bf16.mxu0 %v5006
    %5936 = vmatpush1.bf16.msra.mxu0 %v5005
    %5937 = vmatprep.subr.bf16.mxu0 %v5111
    %5938 = vmatpush2.bf16.msra.mxu0 %v5110
    %5939 = vmatprep.subr.bf16.mxu0 %v5104
    %5940 = vmatpush2.bf16.msra.mxu0 %v5103
    %5941 = vmatprep.subr.bf16.mxu0 %v5097
    %5942 = vmatpush2.bf16.msra.mxu0 %v5096
    %5943 = vmatprep.subr.bf16.mxu0 %v5090
    %5944 = vmatpush2.bf16.msra.mxu0 %v5089
    %5945 = vmatprep.subr.bf16.mxu0 %v5083
    %5946 = vmatpush2.bf16.msra.mxu0 %v5082
    %5947 = vmatprep.subr.bf16.mxu0 %v5076
    %5948 = vmatpush2.bf16.msra.mxu0 %v5075
    %5949 = vmatprep.subr.bf16.mxu0 %v5069
    %5950 = vmatpush2.bf16.msra.mxu0 %v5068
    %5951 = vmatprep.subr.bf16.mxu0 %v5062
    %5952 = vmatpush2.bf16.msra.mxu0 %v5061
    %5953 = vmatprep.mubr.bf16.mxu0 %v2856
    %5954 = vmatmul.mubr.bf16.gmra.mxu0 %v2855
    %v5955 = vpop.f32.mrf.mxu0
    %v5956 = vadd.f32 %v5915, %v5955
    %v5957 = vpop.f32.mrf.mxu0
    %v5958 = vadd.f32 %v5917, %v5957
    %v5959 = vpop.f32.mrf.mxu0
    %v5960 = vpop.f32.mrf.mxu0
    %5961 = vdwg.mxu0
    %5962 = vmatprep.subr.bf16.mxu0 %v5167
    %5963 = vmatpush1.bf16.msra.mxu0 %v5166
    %5964 = vmatprep.subr.bf16.mxu0 %v5160
    %5965 = vmatpush1.bf16.msra.mxu0 %v5159
    %5966 = vmatprep.subr.bf16.mxu0 %v5153
    %5967 = vmatpush1.bf16.msra.mxu0 %v5152
    %5968 = vmatprep.subr.bf16.mxu0 %v5146
    %5969 = vmatpush1.bf16.msra.mxu0 %v5145
    %5970 = vmatprep.subr.bf16.mxu0 %v5139
    %5971 = vmatpush1.bf16.msra.mxu0 %v5138
    %5972 = vmatprep.subr.bf16.mxu0 %v5132
    %5973 = vmatpush1.bf16.msra.mxu0 %v5131
    %5974 = vmatprep.subr.bf16.mxu0 %v5125
    %5975 = vmatpush1.bf16.msra.mxu0 %v5124
    %5976 = vmatprep.subr.bf16.mxu0 %v5118
    %5977 = vmatpush1.bf16.msra.mxu0 %v5117
    %5978 = vmatprep.subr.bf16.mxu0 %v5223
    %5979 = vmatpush2.bf16.msra.mxu0 %v5222
    %5980 = vmatprep.subr.bf16.mxu0 %v5216
    %5981 = vmatpush2.bf16.msra.mxu0 %v5215
    %5982 = vmatprep.subr.bf16.mxu0 %v5209
    %5983 = vmatpush2.bf16.msra.mxu0 %v5208
    %5984 = vmatprep.subr.bf16.mxu0 %v5202
    %5985 = vmatpush2.bf16.msra.mxu0 %v5201
    %5986 = vmatprep.subr.bf16.mxu0 %v5195
    %5987 = vmatpush2.bf16.msra.mxu0 %v5194
    %5988 = vmatprep.subr.bf16.mxu0 %v5188
    %5989 = vmatpush2.bf16.msra.mxu0 %v5187
    %5990 = vmatprep.subr.bf16.mxu0 %v5181
    %5991 = vmatpush2.bf16.msra.mxu0 %v5180
    %5992 = vmatprep.subr.bf16.mxu0 %v5174
    %5993 = vmatpush2.bf16.msra.mxu0 %v5173
    %5994 = vmatprep.mubr.bf16.mxu0 %v2858
    %5995 = vmatmul.mubr.bf16.gmra.mxu0 %v2857
    %v5996 = vpop.f32.mrf.mxu0
    %v5997 = vadd.f32 %v5956, %v5996
    %v5998 = vpop.f32.mrf.mxu0
    %v5999 = vadd.f32 %v5958, %v5998
    %v6000 = vpop.f32.mrf.mxu0
    %v6001 = vpop.f32.mrf.mxu0
    %6002 = vdwg.mxu0
    %6003 = vmatprep.subr.bf16.mxu0 %v4833
    %6004 = vmatpush1.bf16.msra.mxu0 %v4832
    %6005 = vmatprep.subr.bf16.mxu0 %v4826
    %6006 = vmatpush1.bf16.msra.mxu0 %v4825
    %6007 = vmatprep.subr.bf16.mxu0 %v4819
    %6008 = vmatpush1.bf16.msra.mxu0 %v4818
    %6009 = vmatprep.subr.bf16.mxu0 %v4812
    %6010 = vmatpush1.bf16.msra.mxu0 %v4811
    %6011 = vmatprep.subr.bf16.mxu0 %v4805
    %6012 = vmatpush1.bf16.msra.mxu0 %v4804
    %6013 = vmatprep.subr.bf16.mxu0 %v4798
    %6014 = vmatpush1.bf16.msra.mxu0 %v4797
    %6015 = vmatprep.subr.bf16.mxu0 %v4791
    %6016 = vmatpush1.bf16.msra.mxu0 %v4790
    %6017 = vmatprep.subr.bf16.mxu0 %v4784
    %6018 = vmatpush1.bf16.msra.mxu0 %v4783
    %6019 = vmatprep.subr.bf16.mxu0 %v4889
    %6020 = vmatpush2.bf16.msra.mxu0 %v4888
    %6021 = vmatprep.subr.bf16.mxu0 %v4882
    %6022 = vmatpush2.bf16.msra.mxu0 %v4881
    %6023 = vmatprep.subr.bf16.mxu0 %v4875
    %6024 = vmatpush2.bf16.msra.mxu0 %v4874
    %6025 = vmatprep.subr.bf16.mxu0 %v4868
    %6026 = vmatpush2.bf16.msra.mxu0 %v4867
    %6027 = vmatprep.subr.bf16.mxu0 %v4861
    %6028 = vmatpush2.bf16.msra.mxu0 %v4860
    %6029 = vmatprep.subr.bf16.mxu0 %v4854
    %6030 = vmatpush2.bf16.msra.mxu0 %v4853
    %6031 = vmatprep.subr.bf16.mxu0 %v4847
    %6032 = vmatpush2.bf16.msra.mxu0 %v4846
    %6033 = vmatprep.subr.bf16.mxu0 %v4840
    %6034 = vmatpush2.bf16.msra.mxu0 %v4839
    %6035 = vmatprep.mubr.bf16.mxu0 %v2852
    %6036 = vmatmul.mubr.bf16.gmra.mxu0 %v2851
    %v6037 = vpop.f32.mrf.mxu0
    %v6038 = vadd.f32 0.0, %v6037
    %v6039 = vpop.f32.mrf.mxu0
    %v6040 = vadd.f32 0.0, %v6039
    %v6041 = vpop.f32.mrf.mxu0
    %v6042 = vpop.f32.mrf.mxu0
    %6043 = vdwg.mxu0
    %6044 = vmatprep.subr.bf16.mxu0 %v4945
    %6045 = vmatpush1.bf16.msra.mxu0 %v4944
    %6046 = vmatprep.subr.bf16.mxu0 %v4938
    %6047 = vmatpush1.bf16.msra.mxu0 %v4937
    %6048 = vmatprep.subr.bf16.mxu0 %v4931
    %6049 = vmatpush1.bf16.msra.mxu0 %v4930
    %6050 = vmatprep.subr.bf16.mxu0 %v4924
    %6051 = vmatpush1.bf16.msra.mxu0 %v4923
    %6052 = vmatprep.subr.bf16.mxu0 %v4917
    %6053 = vmatpush1.bf16.msra.mxu0 %v4916
    %6054 = vmatprep.subr.bf16.mxu0 %v4910
    %6055 = vmatpush1.bf16.msra.mxu0 %v4909
    %6056 = vmatprep.subr.bf16.mxu0 %v4903
    %6057 = vmatpush1.bf16.msra.mxu0 %v4902
    %6058 = vmatprep.subr.bf16.mxu0 %v4896
    %6059 = vmatpush1.bf16.msra.mxu0 %v4895
    %6060 = vmatprep.subr.bf16.mxu0 %v5001
    %6061 = vmatpush2.bf16.msra.mxu0 %v5000
    %6062 = vmatprep.subr.bf16.mxu0 %v4994
    %6063 = vmatpush2.bf16.msra.mxu0 %v4993
    %6064 = vmatprep.subr.bf16.mxu0 %v4987
    %6065 = vmatpush2.bf16.msra.mxu0 %v4986
    %6066 = vmatprep.subr.bf16.mxu0 %v4980
    %6067 = vmatpush2.bf16.msra.mxu0 %v4979
    %6068 = vmatprep.subr.bf16.mxu0 %v4973
    %6069 = vmatpush2.bf16.msra.mxu0 %v4972
    %6070 = vmatprep.subr.bf16.mxu0 %v4966
    %6071 = vmatpush2.bf16.msra.mxu0 %v4965
    %6072 = vmatprep.subr.bf16.mxu0 %v4959
    %6073 = vmatpush2.bf16.msra.mxu0 %v4958
    %6074 = vmatprep.subr.bf16.mxu0 %v4952
    %6075 = vmatpush2.bf16.msra.mxu0 %v4951
    %6076 = vmatprep.mubr.bf16.mxu0 %v2854
    %6077 = vmatmul.mubr.bf16.gmra.mxu0 %v2853
    %v6078 = vpop.f32.mrf.mxu0
    %v6079 = vadd.f32 %v6038, %v6078
    %v6080 = vpop.f32.mrf.mxu0
    %v6081 = vadd.f32 %v6040, %v6080
    %v6082 = vpop.f32.mrf.mxu0
    %v6083 = vpop.f32.mrf.mxu0
    %6084 = vdwg.mxu0
    %6085 = vmatprep.subr.bf16.mxu0 %v5057
    %6086 = vmatpush1.bf16.msra.mxu0 %v5056
    %6087 = vmatprep.subr.bf16.mxu0 %v5050
    %6088 = vmatpush1.bf16.msra.mxu0 %v5049
    %6089 = vmatprep.subr.bf16.mxu0 %v5043
    %6090 = vmatpush1.bf16.msra.mxu0 %v5042
    %6091 = vmatprep.subr.bf16.mxu0 %v5036
    %6092 = vmatpush1.bf16.msra.mxu0 %v5035
    %6093 = vmatprep.subr.bf16.mxu0 %v5029
    %6094 = vmatpush1.bf16.msra.mxu0 %v5028
    %6095 = vmatprep.subr.bf16.mxu0 %v5022
    %6096 = vmatpush1.bf16.msra.mxu0 %v5021
    %6097 = vmatprep.subr.bf16.mxu0 %v5015
    %6098 = vmatpush1.bf16.msra.mxu0 %v5014
    %6099 = vmatprep.subr.bf16.mxu0 %v5008
    %6100 = vmatpush1.bf16.msra.mxu0 %v5007
    %6101 = vmatprep.subr.bf16.mxu0 %v5113
    %6102 = vmatpush2.bf16.msra.mxu0 %v5112
    %6103 = vmatprep.subr.bf16.mxu0 %v5106
    %6104 = vmatpush2.bf16.msra.mxu0 %v5105
    %6105 = vmatprep.subr.bf16.mxu0 %v5099
    %6106 = vmatpush2.bf16.msra.mxu0 %v5098
    %6107 = vmatprep.subr.bf16.mxu0 %v5092
    %6108 = vmatpush2.bf16.msra.mxu0 %v5091
    %6109 = vmatprep.subr.bf16.mxu0 %v5085
    %6110 = vmatpush2.bf16.msra.mxu0 %v5084
    %6111 = vmatprep.subr.bf16.mxu0 %v5078
    %6112 = vmatpush2.bf16.msra.mxu0 %v5077
    %6113 = vmatprep.subr.bf16.mxu0 %v5071
    %6114 = vmatpush2.bf16.msra.mxu0 %v5070
    %6115 = vmatprep.subr.bf16.mxu0 %v5064
    %6116 = vmatpush2.bf16.msra.mxu0 %v5063
    %6117 = vmatprep.mubr.bf16.mxu0 %v2856
    %6118 = vmatmul.mubr.bf16.gmra.mxu0 %v2855
    %v6119 = vpop.f32.mrf.mxu0
    %v6120 = vadd.f32 %v6079, %v6119
    %v6121 = vpop.f32.mrf.mxu0
    %v6122 = vadd.f32 %v6081, %v6121
    %v6123 = vpop.f32.mrf.mxu0
    %v6124 = vpop.f32.mrf.mxu0
    %6125 = vdwg.mxu0
    %6126 = vmatprep.subr.bf16.mxu0 %v5169
    %6127 = vmatpush1.bf16.msra.mxu0 %v5168
    %6128 = vmatprep.subr.bf16.mxu0 %v5162
    %6129 = vmatpush1.bf16.msra.mxu0 %v5161
    %6130 = vmatprep.subr.bf16.mxu0 %v5155
    %6131 = vmatpush1.bf16.msra.mxu0 %v5154
    %6132 = vmatprep.subr.bf16.mxu0 %v5148
    %6133 = vmatpush1.bf16.msra.mxu0 %v5147
    %6134 = vmatprep.subr.bf16.mxu0 %v5141
    %6135 = vmatpush1.bf16.msra.mxu0 %v5140
    %6136 = vmatprep.subr.bf16.mxu0 %v5134
    %6137 = vmatpush1.bf16.msra.mxu0 %v5133
    %6138 = vmatprep.subr.bf16.mxu0 %v5127
    %6139 = vmatpush1.bf16.msra.mxu0 %v5126
    %6140 = vmatprep.subr.bf16.mxu0 %v5120
    %6141 = vmatpush1.bf16.msra.mxu0 %v5119
    %6142 = vmatprep.subr.bf16.mxu0 %v5225
    %6143 = vmatpush2.bf16.msra.mxu0 %v5224
    %6144 = vmatprep.subr.bf16.mxu0 %v5218
    %6145 = vmatpush2.bf16.msra.mxu0 %v5217
    %6146 = vmatprep.subr.bf16.mxu0 %v5211
    %6147 = vmatpush2.bf16.msra.mxu0 %v5210
    %6148 = vmatprep.subr.bf16.mxu0 %v5204
    %6149 = vmatpush2.bf16.msra.mxu0 %v5203
    %6150 = vmatprep.subr.bf16.mxu0 %v5197
    %6151 = vmatpush2.bf16.msra.mxu0 %v5196
    %6152 = vmatprep.subr.bf16.mxu0 %v5190
    %6153 = vmatpush2.bf16.msra.mxu0 %v5189
    %6154 = vmatprep.subr.bf16.mxu0 %v5183
    %6155 = vmatpush2.bf16.msra.mxu0 %v5182
    %6156 = vmatprep.subr.bf16.mxu0 %v5176
    %6157 = vmatpush2.bf16.msra.mxu0 %v5175
    %6158 = vmatprep.mubr.bf16.mxu0 %v2858
    %6159 = vmatmul.mubr.bf16.gmra.mxu0 %v2857
    %v6160 = vpop.f32.mrf.mxu0
    %v6161 = vadd.f32 %v6120, %v6160
    %v6162 = vpop.f32.mrf.mxu0
    %v6163 = vadd.f32 %v6122, %v6162
    %v6164 = vpop.f32.mrf.mxu0
    %v6165 = vpop.f32.mrf.mxu0
    %6166 = vdwg.mxu0
    %6167 = vmatprep.subr.bf16.mxu0 0
    %6168 = vmatpush1.bf16.msra.mxu0 %v4834
    %6169 = vmatprep.subr.bf16.mxu0 0
    %6170 = vmatpush1.bf16.msra.mxu0 %v4827
    %6171 = vmatprep.subr.bf16.mxu0 0
    %6172 = vmatpush1.bf16.msra.mxu0 %v4820
    %6173 = vmatprep.subr.bf16.mxu0 0
    %6174 = vmatpush1.bf16.msra.mxu0 %v4813
    %6175 = vmatprep.subr.bf16.mxu0 0
    %6176 = vmatpush1.bf16.msra.mxu0 %v4806
    %6177 = vmatprep.subr.bf16.mxu0 0
    %6178 = vmatpush1.bf16.msra.mxu0 %v4799
    %6179 = vmatprep.subr.bf16.mxu0 0
    %6180 = vmatpush1.bf16.msra.mxu0 %v4792
    %6181 = vmatprep.subr.bf16.mxu0 0
    %6182 = vmatpush1.bf16.msra.mxu0 %v4785
    %6183 = vmatprep.subr.bf16.mxu0 0
    %6184 = vmatpush2.bf16.msra.mxu0 %v4890
    %6185 = vmatprep.subr.bf16.mxu0 0
    %6186 = vmatpush2.bf16.msra.mxu0 %v4883
    %6187 = vmatprep.subr.bf16.mxu0 0
    %6188 = vmatpush2.bf16.msra.mxu0 %v4876
    %6189 = vmatprep.subr.bf16.mxu0 0
    %6190 = vmatpush2.bf16.msra.mxu0 %v4869
    %6191 = vmatprep.subr.bf16.mxu0 0
    %6192 = vmatpush2.bf16.msra.mxu0 %v4862
    %6193 = vmatprep.subr.bf16.mxu0 0
    %6194 = vmatpush2.bf16.msra.mxu0 %v4855
    %6195 = vmatprep.subr.bf16.mxu0 0
    %6196 = vmatpush2.bf16.msra.mxu0 %v4848
    %6197 = vmatprep.subr.bf16.mxu0 0
    %6198 = vmatpush2.bf16.msra.mxu0 %v4841
    %6199 = vmatprep.mubr.bf16.mxu0 %v2852
    %6200 = vmatmul.mubr.bf16.gmra.mxu0 %v2851
    %v6201 = vpop.f32.mrf.mxu0
    %v6202 = vadd.f32 0.0, %v6201
    %v6203 = vpop.f32.mrf.mxu0
    %v6204 = vpop.f32.mrf.mxu0
    %v6205 = vpop.f32.mrf.mxu0
    %6206 = vdwg.mxu0
    %6207 = vmatprep.subr.bf16.mxu0 0
    %6208 = vmatpush1.bf16.msra.mxu0 %v4946
    %6209 = vmatprep.subr.bf16.mxu0 0
    %6210 = vmatpush1.bf16.msra.mxu0 %v4939
    %6211 = vmatprep.subr.bf16.mxu0 0
    %6212 = vmatpush1.bf16.msra.mxu0 %v4932
    %6213 = vmatprep.subr.bf16.mxu0 0
    %6214 = vmatpush1.bf16.msra.mxu0 %v4925
    %6215 = vmatprep.subr.bf16.mxu0 0
    %6216 = vmatpush1.bf16.msra.mxu0 %v4918
    %6217 = vmatprep.subr.bf16.mxu0 0
    %6218 = vmatpush1.bf16.msra.mxu0 %v4911
    %6219 = vmatprep.subr.bf16.mxu0 0
    %6220 = vmatpush1.bf16.msra.mxu0 %v4904
    %6221 = vmatprep.subr.bf16.mxu0 0
    %6222 = vmatpush1.bf16.msra.mxu0 %v4897
    %6223 = vmatprep.subr.bf16.mxu0 0
    %6224 = vmatpush2.bf16.msra.mxu0 %v5002
    %6225 = vmatprep.subr.bf16.mxu0 0
    %6226 = vmatpush2.bf16.msra.mxu0 %v4995
    %6227 = vmatprep.subr.bf16.mxu0 0
    %6228 = vmatpush2.bf16.msra.mxu0 %v4988
    %6229 = vmatprep.subr.bf16.mxu0 0
    %6230 = vmatpush2.bf16.msra.mxu0 %v4981
    %6231 = vmatprep.subr.bf16.mxu0 0
    %6232 = vmatpush2.bf16.msra.mxu0 %v4974
    %6233 = vmatprep.subr.bf16.mxu0 0
    %6234 = vmatpush2.bf16.msra.mxu0 %v4967
    %6235 = vmatprep.subr.bf16.mxu0 0
    %6236 = vmatpush2.bf16.msra.mxu0 %v4960
    %6237 = vmatprep.subr.bf16.mxu0 0
    %6238 = vmatpush2.bf16.msra.mxu0 %v4953
    %6239 = vmatprep.mubr.bf16.mxu0 %v2854
    %6240 = vmatmul.mubr.bf16.gmra.mxu0 %v2853
    %v6241 = vpop.f32.mrf.mxu0
    %v6242 = vadd.f32 %v6202, %v6241
    %v6243 = vpop.f32.mrf.mxu0
    %v6244 = vpop.f32.mrf.mxu0
    %v6245 = vpop.f32.mrf.mxu0
    %6246 = vdwg.mxu0
    %6247 = vmatprep.subr.bf16.mxu0 0
    %6248 = vmatpush1.bf16.msra.mxu0 %v5058
    %6249 = vmatprep.subr.bf16.mxu0 0
    %6250 = vmatpush1.bf16.msra.mxu0 %v5051
    %6251 = vmatprep.subr.bf16.mxu0 0
    %6252 = vmatpush1.bf16.msra.mxu0 %v5044
    %6253 = vmatprep.subr.bf16.mxu0 0
    %6254 = vmatpush1.bf16.msra.mxu0 %v5037
    %6255 = vmatprep.subr.bf16.mxu0 0
    %6256 = vmatpush1.bf16.msra.mxu0 %v5030
    %6257 = vmatprep.subr.bf16.mxu0 0
    %6258 = vmatpush1.bf16.msra.mxu0 %v5023
    %6259 = vmatprep.subr.bf16.mxu0 0
    %6260 = vmatpush1.bf16.msra.mxu0 %v5016
    %6261 = vmatprep.subr.bf16.mxu0 0
    %6262 = vmatpush1.bf16.msra.mxu0 %v5009
    %6263 = vmatprep.subr.bf16.mxu0 0
    %6264 = vmatpush2.bf16.msra.mxu0 %v5114
    %6265 = vmatprep.subr.bf16.mxu0 0
    %6266 = vmatpush2.bf16.msra.mxu0 %v5107
    %6267 = vmatprep.subr.bf16.mxu0 0
    %6268 = vmatpush2.bf16.msra.mxu0 %v5100
    %6269 = vmatprep.subr.bf16.mxu0 0
    %6270 = vmatpush2.bf16.msra.mxu0 %v5093
    %6271 = vmatprep.subr.bf16.mxu0 0
    %6272 = vmatpush2.bf16.msra.mxu0 %v5086
    %6273 = vmatprep.subr.bf16.mxu0 0
    %6274 = vmatpush2.bf16.msra.mxu0 %v5079
    %6275 = vmatprep.subr.bf16.mxu0 0
    %6276 = vmatpush2.bf16.msra.mxu0 %v5072
    %6277 = vmatprep.subr.bf16.mxu0 0
    %6278 = vmatpush2.bf16.msra.mxu0 %v5065
    %6279 = vmatprep.mubr.bf16.mxu0 %v2856
    %6280 = vmatmul.mubr.bf16.gmra.mxu0 %v2855
    %v6281 = vpop.f32.mrf.mxu0
    %v6282 = vadd.f32 %v6242, %v6281
    %v6283 = vpop.f32.mrf.mxu0
    %v6284 = vpop.f32.mrf.mxu0
    %v6285 = vpop.f32.mrf.mxu0
    %6286 = vdwg.mxu0
    %6287 = vmatprep.subr.bf16.mxu0 0
    %6288 = vmatpush1.bf16.msra.mxu0 %v5170
    %6289 = vmatprep.subr.bf16.mxu0 0
    %6290 = vmatpush1.bf16.msra.mxu0 %v5163
    %6291 = vmatprep.subr.bf16.mxu0 0
    %6292 = vmatpush1.bf16.msra.mxu0 %v5156
    %6293 = vmatprep.subr.bf16.mxu0 0
    %6294 = vmatpush1.bf16.msra.mxu0 %v5149
    %6295 = vmatprep.subr.bf16.mxu0 0
    %6296 = vmatpush1.bf16.msra.mxu0 %v5142
    %6297 = vmatprep.subr.bf16.mxu0 0
    %6298 = vmatpush1.bf16.msra.mxu0 %v5135
    %6299 = vmatprep.subr.bf16.mxu0 0
    %6300 = vmatpush1.bf16.msra.mxu0 %v5128
    %6301 = vmatprep.subr.bf16.mxu0 0
    %6302 = vmatpush1.bf16.msra.mxu0 %v5121
    %6303 = vmatprep.subr.bf16.mxu0 0
    %6304 = vmatpush2.bf16.msra.mxu0 %v5226
    %6305 = vmatprep.subr.bf16.mxu0 0
    %6306 = vmatpush2.bf16.msra.mxu0 %v5219
    %6307 = vmatprep.subr.bf16.mxu0 0
    %6308 = vmatpush2.bf16.msra.mxu0 %v5212
    %6309 = vmatprep.subr.bf16.mxu0 0
    %6310 = vmatpush2.bf16.msra.mxu0 %v5205
    %6311 = vmatprep.subr.bf16.mxu0 0
    %6312 = vmatpush2.bf16.msra.mxu0 %v5198
    %6313 = vmatprep.subr.bf16.mxu0 0
    %6314 = vmatpush2.bf16.msra.mxu0 %v5191
    %6315 = vmatprep.subr.bf16.mxu0 0
    %6316 = vmatpush2.bf16.msra.mxu0 %v5184
    %6317 = vmatprep.subr.bf16.mxu0 0
    %6318 = vmatpush2.bf16.msra.mxu0 %v5177
    %6319 = vmatprep.mubr.bf16.mxu0 %v2858
    %6320 = vmatmul.mubr.bf16.gmra.mxu0 %v2857
    %v6321 = vpop.f32.mrf.mxu0
    %v6322 = vadd.f32 %v6282, %v6321
    %v6323 = vpop.f32.mrf.mxu0
    %v6324 = vpop.f32.mrf.mxu0
    %v6325 = vpop.f32.mrf.mxu0
    %6326 = vdwg.mxu0
    %v6327 = vpack.c.bf16 %v5833, %v5833
    %v6328 = vpack.c.bf16 %v5835, %v5835
    %v6329 = vpack.c.bf16 %v5997, %v5997
    %v6330 = vpack.c.bf16 %v5999, %v5999
    %v6331 = vpack.c.bf16 %v6161, %v6161
    %v6332 = vpack.c.bf16 %v6163, %v6163
    %v6333 = vpack.c.bf16 %v6322, %v6322
    %v6334 = vld [vmem:[#allocation16] sm:$0xff]
    %v6336 = vlaneseq
    %v6337 = vshrl.u32 %v6336, 7
    %v6338 = vsub.s32 0, %v6337
    %v6339 = vrot.slane %v6334, %v6338
    %v6340 = vlaneseq
    %v6341 = vshrl.u32 %v6340, 7
    %v6342 = vsub.s32 1, %v6341
    %v6343 = vrot.slane %v6334, %v6342
    %v6344 = vlaneseq
    %v6345 = vshrl.u32 %v6344, 7
    %v6346 = vsub.s32 2, %v6345
    %v6347 = vrot.slane %v6334, %v6346
    %v6348 = vlaneseq
    %v6349 = vshrl.u32 %v6348, 7
    %v6350 = vsub.s32 3, %v6349
    %v6351 = vrot.slane %v6334, %v6350
    %v6352 = vlaneseq
    %v6353 = vshrl.u32 %v6352, 7
    %v6354 = vsub.s32 4, %v6353
    %v6355 = vrot.slane %v6334, %v6354
    %v6356 = vlaneseq
    %v6357 = vshrl.u32 %v6356, 7
    %v6358 = vsub.s32 5, %v6357
    %v6359 = vrot.slane %v6334, %v6358
    %v6360 = vlaneseq
    %v6361 = vshrl.u32 %v6360, 7
    %v6362 = vsub.s32 6, %v6361
    %v6363 = vrot.slane %v6334, %v6362
    %v6371 = vpack.c.bf16 %v6339, %v6339
    %v6372 = vpack.c.bf16 %v6343, %v6343
    %v6373 = vpack.c.bf16 %v6347, %v6347
    %v6374 = vpack.c.bf16 %v6351, %v6351
    %v6375 = vpack.c.bf16 %v6355, %v6355
    %v6376 = vpack.c.bf16 %v6359, %v6359
    %v6377 = vpack.c.bf16 %v6363, %v6363
    %v6379 = vpack.i.b16 %v6371, %v6371
    %v6381 = vlaneseq
    %v6382 = vshrl.u32 %v6381, 7
    %v6383 = vsub.s32 0, %v6382
    %v6384 = vrot.slane %v6379, %v6383
    %v6386 = vpack.i.b16 %v6372, %v6372
    %v6388 = vlaneseq
    %v6389 = vshrl.u32 %v6388, 7
    %v6390 = vsub.s32 0, %v6389
    %v6391 = vrot.slane %v6386, %v6390
    %v6393 = vpack.i.b16 %v6373, %v6373
    %v6395 = vlaneseq
    %v6396 = vshrl.u32 %v6395, 7
    %v6397 = vsub.s32 0, %v6396
    %v6398 = vrot.slane %v6393, %v6397
    %v6400 = vpack.i.b16 %v6374, %v6374
    %v6402 = vlaneseq
    %v6403 = vshrl.u32 %v6402, 7
    %v6404 = vsub.s32 0, %v6403
    %v6405 = vrot.slane %v6400, %v6404
    %v6407 = vpack.i.b16 %v6375, %v6375
    %v6409 = vlaneseq
    %v6410 = vshrl.u32 %v6409, 7
    %v6411 = vsub.s32 0, %v6410
    %v6412 = vrot.slane %v6407, %v6411
    %v6414 = vpack.i.b16 %v6376, %v6376
    %v6416 = vlaneseq
    %v6417 = vshrl.u32 %v6416, 7
    %v6418 = vsub.s32 0, %v6417
    %v6419 = vrot.slane %v6414, %v6418
    %v6421 = vpack.i.b16 %v6377, %v6377
    %v6423 = vlaneseq
    %v6424 = vshrl.u32 %v6423, 7
    %v6425 = vsub.s32 0, %v6424
    %v6426 = vrot.slane %v6421, %v6425
    %v6427 = vadd.bf16 %v6327, %v6384
    %v6428 = vadd.bf16 %v6328, %v6391
    %v6429 = vadd.bf16 %v6329, %v6398
    %v6430 = vadd.bf16 %v6330, %v6405
    %v6431 = vadd.bf16 %v6331, %v6412
    %v6432 = vadd.bf16 %v6332, %v6419
    %v6433 = vadd.bf16 %v6333, %v6426
    %v6434 = vtanh.bf16.pop %v6427
    %v6435 = vtanh.bf16.pop %v6428
    %v6436 = vtanh.bf16.pop %v6429
    %v6437 = vtanh.bf16.pop %v6430
    %v6438 = vtanh.bf16.pop %v6431
    %v6439 = vtanh.bf16.pop %v6432
    %v6440 = vtanh.bf16.pop %v6433
    %v6448 = vunpack.c.l.b16 %v6434
    %v6449 = vunpack.c.l.b16 %v6435
    %v6450 = vunpack.c.l.b16 %v6436
    %v6451 = vunpack.c.l.b16 %v6437
    %v6452 = vunpack.c.l.b16 %v6438
    %v6453 = vunpack.c.l.b16 %v6439
    %v6454 = vunpack.c.l.b16 %v6440
    %v6455 = vpack.c.b16 %v6449, %v6448
    %v6456 = vpack.c.b16 %v6451, %v6450
    %v6457 = vpack.c.b16 %v6453, %v6452
    %v6458 = vpack.c.b16 %v6454, %v6454
    %6463 = vst [vmem:[#allocation17] sm:$0xff] %v6455
    %6464 = vst [vmem:[#allocation17 + $0x8] sm:$0xff] %v6456
    %6465 = vst [vmem:[#allocation17 + $0x10] sm:$0xff] %v6457
    %6466 = vst [vmem:[#allocation17 + $0x18] sm:$0xf] %v6458
    // Predicated region
    $region74: #{tpu_custom_call.1} parent=1 // pred_check
      _
    $region75: #{tpu_custom_call.1} parent=1 // pred_check_branch
      %6468 = sbr.rel (0) target = $region77
    $region76: #{tpu_custom_call.1} parent=1 // pred_region
      %s6470 = ssub.s32 448, 448
      %6471 = vsyncadd [#allocation4], %s6470
      %s6473 = sshll.u32 [#allocation17], 4
      %s6474 = int_to_ptr.vmem [resolvable:$true] %s6473
      %6476 = dma.vmem_to_hbm [thread:$0]  %s6474, 448, %s9, [#allocation4]
    $region77: #{tpu_custom_call.1} parent=1 // pred_fallthru
      _
    // Predicated region
    $region78: #{tpu_custom_call.1} parent=1 // pred_check
      _
    $region79: #{tpu_custom_call.1} parent=1 // pred_check_branch
      %6478 = sbr.rel (0) target = $region81
    $region80: #{tpu_custom_call.1} parent=1 // pred_region
      %6479 = dma.done [#allocation4], 448
    $region81: #{tpu_custom_call.1} parent=1 // pred_fallthru
      _
    %6480 = vsyncpa [#allocation3], 1
    %6481 = vsyncpa [#allocation6], 1
    %6482 = vsyncpa [#allocation9], 1
    %6483 = vsyncpa [#allocation12], 1
    %6484 = vsyncpa [#allocation15], 1
    %6485 = vsyncpa [#allocation4], 1

// kernel: tpu_custom_call.1
$region0: #{tpu_custom_call.1}
  #allocation0 [shape = 'u32[]', space=smem, size = 0x4, offset = 0x4, fixed_abs, tag = 'smem constant byte address 0x4 - core index']
  #allocation1 [shape = 'u32[144,128]{1,0:T(1,128)}', space=vmem, size = 0x12000, scoped, tag = 'internal scratch']
  %s0 = inlined_call_operand.hbm [shape: bf16[8,128], index: 0, kind: input, shape index: {}]
  %s1 = inlined_call_operand.hbm [shape: bf16[128,256], index: 1, kind: input, shape index: {}]
  %s2 = inlined_call_operand.hbm [shape: f32[1,256], index: 2, kind: input, shape index: {}]
  %s3 = inlined_call_operand.hbm [shape: bf16[256,512], index: 3, kind: input, shape index: {}]
  %s4 = inlined_call_operand.hbm [shape: f32[1,512], index: 4, kind: input, shape index: {}]
  %s5 = inlined_call_operand.hbm [shape: bf16[512,1024], index: 5, kind: input, shape index: {}]
  %s6 = inlined_call_operand.hbm [shape: f32[1,1024], index: 6, kind: input, shape index: {}]
  %s7 = inlined_call_operand.hbm [shape: bf16[1024,896], index: 7, kind: input, shape index: {}]
  %s8 = inlined_call_operand.hbm [shape: f32[1,896], index: 8, kind: input, shape index: {}]
  %s9 = inlined_call_operand.hbm [shape: bf16[8,896], index: 9, kind: output, shape index: {}]
  %s10 = sld [smem:[#allocation0]]
  $region82: #{tpu_custom_call.1} parent=0
    _
  %s12 = ssub.s32 1, %s10
  %s13 = scalar_select 0, %s12, %s10
  $region1: #{tpu_custom_call.1} parent=0
    #allocation2 [shape = 'u8[2048]{0}', space=vmem, size = 0x800, scoped, tag = 'input window, operand 0, single buffered']
    #allocation3 [shape = 's32[1]{0}', space=sflag, size = 0x4, scoped, tag = 'scoped memory for tpu_custom_call.1']
    #allocation4 [shape = 's32[1]{0}', space=sflag, size = 0x4, scoped, tag = 'scoped memory for tpu_custom_call.1']
    #allocation5 [shape = 'u8[65536]{0}', space=vmem, size = 0x10000, scoped, tag = 'input window, operand 1, single buffered']
    #allocation6 [shape = 's32[1]{0}', space=sflag, size = 0x4, scoped, tag = 'scoped memory for tpu_custom_call.1']
    #allocation7 [shape = 'u8[1024]{0}', space=vmem, size = 0x400, scoped, tag = 'input window, operand 2, single buffered']
    #allocation8 [shape = 'u8[262144]{0}', space=vmem, size = 0x40000, scoped, tag = 'input window, operand 3, single buffered']
    #allocation9 [shape = 's32[1]{0}', space=sflag, size = 0x4, scoped, tag = 'scoped memory for tpu_custom_call.1']
    #allocation10 [shape = 'u8[2048]{0}', space=vmem, size = 0x800, scoped, tag = 'input window, operand 4, single buffered']
    #allocation11 [shape = 'u8[1048576]{0}', space=vmem, size = 0x100000, scoped, tag = 'input window, operand 5, single buffered']
    #allocation12 [shape = 's32[1]{0}', space=sflag, size = 0x4, scoped, tag = 'scoped memory for tpu_custom_call.1']
    #allocation13 [shape = 'u8[4096]{0}', space=vmem, size = 0x1000, scoped, tag = 'input window, operand 6, single buffered']
    #allocation14 [shape = 'u8[1835008]{0}', space=vmem, size = 0x1c0000, scoped, tag = 'input window, operand 7, single buffered']
    #allocation15 [shape = 's32[1]{0}', space=sflag, size = 0x4, scoped, tag = 'scoped memory for tpu_custom_call.1']
    #allocation16 [shape = 'u8[3584]{0}', space=vmem, size = 0x1000, scoped, tag = 'input window, operand 8, single buffered']
    #allocation17 [shape = 'u8[14336]{0}', space=vmem, size = 0x3800, scoped, tag = 'output window, operand 0, single buffered']
    %14 = vsyncpa [#allocation3], 0
    %15 = vsyncpa [#allocation6], 0
    %16 = vsyncpa [#allocation9], 0
    %17 = vsyncpa [#allocation12], 0
    %18 = vsyncpa [#allocation15], 0
    %19 = vsyncpa [#allocation4], 0
    // Predicated region
    $region2: #{tpu_custom_call.1} parent=1 // pred_check
      _
    $region3: #{tpu_custom_call.1} parent=1 // pred_check_branch
      %21 = sbr.rel (0) target = $region5
    $region4: #{tpu_custom_call.1} parent=1 // pred_region
      %s23 = ssub.s32 64, 64
      %24 = vsyncadd [#allocation3], %s23
      %s26 = sshll.u32 [#allocation2], 4
      %s27 = int_to_ptr.vmem [resolvable:$true] %s26
      %29 = dma.hbm_to_vmem [thread:$0]  %s0, 64, %s27, [#allocation3]
    $region5: #{tpu_custom_call.1} parent=1 // pred_fallthru
      _
    // Predicated region
    $region6: #{tpu_custom_call.1} parent=1 // pred_check
      _
    $region7: #{tpu_custom_call.1} parent=1 // pred_check_branch
      %31 = sbr.rel (0) target = $region9
    $region8: #{tpu_custom_call.1} parent=1 // pred_region
      %s33 = ssub.s32 2048, 2048
      %34 = vsyncadd [#allocation6], %s33
      %s35 = sshll.u32 [#allocation5], 4
      %s36 = int_to_ptr.vmem [resolvable:$true] %s35
      %41 = dma.hbm_to_vmem [thread:$0]  %s1, 2048, %s36, [#allocation6], 128, 128, 8
    $region9: #{tpu_custom_call.1} parent=1 // pred_fallthru
      _
    // Predicated region
    $region10: #{tpu_custom_call.1} parent=1 // pred_check
      _
    $region11: #{tpu_custom_call.1} parent=1 // pred_check_branch
      %43 = sbr.rel (0) target = $region13
    $region12: #{tpu_custom_call.1} parent=1 // pred_region
      %s45 = ssub.s32 32, 32
      %46 = vsyncadd [#allocation6], %s45
      %s48 = sshll.u32 [#allocation7], 4
      %s49 = int_to_ptr.vmem [resolvable:$true] %s48
      %51 = dma.hbm_to_vmem [thread:$0]  %s2, 32, %s49, [#allocation6]
    $region13: #{tpu_custom_call.1} parent=1 // pred_fallthru
      _
    // Predicated region
    $region14: #{tpu_custom_call.1} parent=1 // pred_check
      _
    $region15: #{tpu_custom_call.1} parent=1 // pred_check_branch
      %53 = sbr.rel (0) target = $region17
    $region16: #{tpu_custom_call.1} parent=1 // pred_region
      %s55 = ssub.s32 8192, 8192
      %56 = vsyncadd [#allocation9], %s55
      %s57 = sshll.u32 [#allocation8], 4
      %s58 = int_to_ptr.vmem [resolvable:$true] %s57
      %63 = dma.hbm_to_vmem [thread:$0]  %s3, 8192, %s58, [#allocation9], 256, 256, 16
    $region17: #{tpu_custom_call.1} parent=1 // pred_fallthru
      _
    // Predicated region
    $region18: #{tpu_custom_call.1} parent=1 // pred_check
      _
    $region19: #{tpu_custom_call.1} parent=1 // pred_check_branch
      %65 = sbr.rel (0) target = $region21
    $region20: #{tpu_custom_call.1} parent=1 // pred_region
      %s67 = ssub.s32 64, 64
      %68 = vsyncadd [#allocation9], %s67
      %s70 = sshll.u32 [#allocation10], 4
      %s71 = int_to_ptr.vmem [resolvable:$true] %s70
      %73 = dma.hbm_to_vmem [thread:$0]  %s4, 64, %s71, [#allocation9]
    $region21: #{tpu_custom_call.1} parent=1 // pred_fallthru
      _
    // Predicated region
    $region22: #{tpu_custom_call.1} parent=1 // pred_check
      _
    $region23: #{tpu_custom_call.1} parent=1 // pred_check_branch
      %75 = sbr.rel (0) target = $region25
    $region24: #{tpu_custom_call.1} parent=1 // pred_region
      %s77 = ssub.s32 32768, 32768
      %78 = vsyncadd [#allocation12], %s77
      %s79 = sshll.u32 [#allocation11], 4
      %s80 = int_to_ptr.vmem [resolvable:$true] %s79
      %85 = dma.hbm_to_vmem [thread:$0]  %s5, 32768, %s80, [#allocation12], 512, 512, 32
    $region25: #{tpu_custom_call.1} parent=1 // pred_fallthru
      _
    // Predicated region
    $region26: #{tpu_custom_call.1} parent=1 // pred_check
      _
    $region27: #{tpu_custom_call.1} parent=1 // pred_check_branch
      %87 = sbr.rel (0) target = $region29
    $region28: #{tpu_custom_call.1} parent=1 // pred_region
      %s89 = ssub.s32 128, 128
      %90 = vsyncadd [#allocation12], %s89
      %s92 = sshll.u32 [#allocation13], 4
      %s93 = int_to_ptr.vmem [resolvable:$true] %s92
      %95 = dma.hbm_to_vmem [thread:$0]  %s6, 128, %s93, [#allocation12]
    $region29: #{tpu_custom_call.1} parent=1 // pred_fallthru
      _
    // Predicated region
    $region30: #{tpu_custom_call.1} parent=1 // pred_check
      _
    $region31: #{tpu_custom_call.1} parent=1 // pred_check_branch
      %97 = sbr.rel (0) target = $region33
    $region32: #{tpu_custom_call.1} parent=1 // pred_region
      %s99 = ssub.s32 57344, 57344
      %100 = vsyncadd [#allocation15], %s99
      %s101 = sshll.u32 [#allocation14], 4
      %s102 = int_to_ptr.vmem [resolvable:$true] %s101
      %107 = dma.hbm_to_vmem [thread:$0]  %s7, 57344, %s102, [#allocation15], 448, 448, 28
    $region33: #{tpu_custom_call.1} parent=1 // pred_fallthru
      _
    // Predicated region
    $region34: #{tpu_custom_call.1} parent=1 // pred_check
      _
    $region35: #{tpu_custom_call.1} parent=1 // pred_check_branch
      %109 = sbr.rel (0) target = $region37
    $region36: #{tpu_custom_call.1} parent=1 // pred_region
      %s111 = ssub.s32 112, 112
      %112 = vsyncadd [#allocation15], %s111
      %s114 = sshll.u32 [#allocation16], 4
      %s115 = int_to_ptr.vmem [resolvable:$true] %s114
      %117 = dma.hbm_to_vmem [thread:$0]  %s8, 112, %s115, [#allocation15]
    $region37: #{tpu_custom_call.1} parent=1 // pred_fallthru
      _
    // Predicated region
    $region38: #{tpu_custom_call.1} parent=1 // pred_check
      _
    $region39: #{tpu_custom_call.1} parent=1 // pred_check_branch
      %119 = sbr.rel (0) target = $region41
    $region40: #{tpu_custom_call.1} parent=1 // pred_region
      %120 = dma.done [#allocation3], 64
    $region41: #{tpu_custom_call.1} parent=1 // pred_fallthru
      _
    // Predicated region
    $region42: #{tpu_custom_call.1} parent=1 // pred_check
      _
    $region43: #{tpu_custom_call.1} parent=1 // pred_check_branch
      %122 = sbr.rel (0) target = $region45
    $region44: #{tpu_custom_call.1} parent=1 // pred_region
      %123 = dma.done [#allocation6], 2048
    $region45: #{tpu_custom_call.1} parent=1 // pred_fallthru
      _
    // Predicated region
    $region46: #{tpu_custom_call.1} parent=1 // pred_check
      _
    $region47: #{tpu_custom_call.1} parent=1 // pred_check_branch
      %125 = sbr.rel (0) target = $region49
    $region48: #{tpu_custom_call.1} parent=1 // pred_region
      %126 = dma.done [#allocation6], 32
    $region49: #{tpu_custom_call.1} parent=1 // pred_fallthru
      _
    // Predicated region
    $region50: #{tpu_custom_call.1} parent=1 // pred_check
      _
    $region51: #{tpu_custom_call.1} parent=1 // pred_check_branch
      %128 = sbr.rel (0) target = $region53
    $region52: #{tpu_custom_call.1} parent=1 // pred_region
      %129 = dma.done [#allocation9], 8192
    $region53: #{tpu_custom_call.1} parent=1 // pred_fallthru
      _
    // Predicated region
    $region54: #{tpu_custom_call.1} parent=1 // pred_check
      _
    $region55: #{tpu_custom_call.1} parent=1 // pred_check_branch
      %131 = sbr.rel (0) target = $region57
    $region56: #{tpu_custom_call.1} parent=1 // pred_region
      %132 = dma.done [#allocation9], 64
    $region57: #{tpu_custom_call.1} parent=1 // pred_fallthru
      _
    // Predicated region
    $region58: #{tpu_custom_call.1} parent=1 // pred_check
      _
    $region59: #{tpu_custom_call.1} parent=1 // pred_check_branch
      %134 = sbr.rel (0) target = $region61
    $region60: #{tpu_custom_call.1} parent=1 // pred_region
      %135 = dma.done [#allocation12], 32768
    $region61: #{tpu_custom_call.1} parent=1 // pred_fallthru
      _
    // Predicated region
    $region62: #{tpu_custom_call.1} parent=1 // pred_check
      _
    $region63: #{tpu_custom_call.1} parent=1 // pred_check_branch
      %137 = sbr.rel (0) target = $region65
    $region64: #{tpu_custom_call.1} parent=1 // pred_region
      %138 = dma.done [#allocation12], 128
    $region65: #{tpu_custom_call.1} parent=1 // pred_fallthru
      _
    // Predicated region
    $region66: #{tpu_custom_call.1} parent=1 // pred_check
      _
    $region67: #{tpu_custom_call.1} parent=1 // pred_check_branch
      %140 = sbr.rel (0) target = $region69
    $region68: #{tpu_custom_call.1} parent=1 // pred_region
      %141 = dma.done [#allocation15], 57344
    $region69: #{tpu_custom_call.1} parent=1 // pred_fallthru
      _
    // Predicated region
    $region70: #{tpu_custom_call.1} parent=1 // pred_check
      _
    $region71: #{tpu_custom_call.1} parent=1 // pred_check_branch
      %143 = sbr.rel (0) target = $region73
    $region72: #{tpu_custom_call.1} parent=1 // pred_region
      %144 = dma.done [#allocation15], 112
    $region73: #{tpu_custom_call.1} parent=1 // pred_fallthru
      _
    %v147 = vld [vmem:[#allocation2] sm:$0xf]
    %v148 = vld [vmem:[#allocation5] sm:$0xff]
    %v149 = vld [vmem:[#allocation5 + $0x8] sm:$0xff]
    %v150 = vld [vmem:[#allocation5 + $0x10] sm:$0xff]
    %v151 = vld [vmem:[#allocation5 + $0x18] sm:$0xff]
    %v152 = vld [vmem:[#allocation5 + $0x20] sm:$0xff]
    %v153 = vld [vmem:[#allocation5 + $0x28] sm:$0xff]
    %v154 = vld [vmem:[#allocation5 + $0x30] sm:$0xff]
    %v155 = vld [vmem:[#allocation5 + $0x38] sm:$0xff]
    %v156 = vld [vmem:[#allocation5 + $0x40] sm:$0xff]
    %v157 = vld [vmem:[#allocation5 + $0x48] sm:$0xff]
    %v158 = vld [vmem:[#allocation5 + $0x50] sm:$0xff]
    %v159 = vld [vmem:[#allocation5 + $0x58] sm:$0xff]
    %v160 = vld [vmem:[#allocation5 + $0x60] sm:$0xff]
    %v161 = vld [vmem:[#allocation5 + $0x68] sm:$0xff]
    %v162 = vld [vmem:[#allocation5 + $0x70] sm:$0xff]
    %v163 = vld [vmem:[#allocation5 + $0x78] sm:$0xff]
    %v180 = vunpack.c.l.b16 %v148
    %v181 = vunpack.c.h.b16 %v148
    %v182 = vunpack.c.l.b16 %v149
    %v183 = vunpack.c.h.b16 %v149
    %v184 = vunpack.c.l.b16 %v150
    %v185 = vunpack.c.h.b16 %v150
    %v186 = vunpack.c.l.b16 %v151
    %v187 = vunpack.c.h.b16 %v151
    %v188 = vunpack.c.l.b16 %v152
    %v189 = vunpack.c.h.b16 %v152
    %v190 = vunpack.c.l.b16 %v153
    %v191 = vunpack.c.h.b16 %v153
    %v192 = vunpack.c.l.b16 %v154
    %v193 = vunpack.c.h.b16 %v154
    %v194 = vunpack.c.l.b16 %v155
    %v195 = vunpack.c.h.b16 %v155
    %v196 = vunpack.c.l.b16 %v156
    %v197 = vunpack.c.h.b16 %v156
    %v198 = vunpack.c.l.b16 %v157
    %v199 = vunpack.c.h.b16 %v157
    %v200 = vunpack.c.l.b16 %v158
    %v201 = vunpack.c.h.b16 %v158
    %v202 = vunpack.c.l.b16 %v159
    %v203 = vunpack.c.h.b16 %v159
    %v204 = vunpack.c.l.b16 %v160
    %v205 = vunpack.c.h.b16 %v160
    %v206 = vunpack.c.l.b16 %v161
    %v207 = vunpack.c.h.b16 %v161
    %v208 = vunpack.c.l.b16 %v162
    %v209 = vunpack.c.h.b16 %v162
    %v210 = vunpack.c.l.b16 %v163
    %v211 = vunpack.c.h.b16 %v163
    %v212 = vpack.c.b16 %v182, %v180
    %v213 = vpack.c.b16 %v183, %v181
    %v214 = vpack.c.b16 %v186, %v184
    %v215 = vpack.c.b16 %v187, %v185
    %v216 = vpack.c.b16 %v190, %v188
    %v217 = vpack.c.b16 %v191, %v189
    %v218 = vpack.c.b16 %v194, %v192
    %v219 = vpack.c.b16 %v195, %v193
    %v220 = vpack.c.b16 %v198, %v196
    %v221 = vpack.c.b16 %v199, %v197
    %v222 = vpack.c.b16 %v202, %v200
    %v223 = vpack.c.b16 %v203, %v201
    %v224 = vpack.c.b16 %v206, %v204
    %v225 = vpack.c.b16 %v207, %v205
    %v226 = vpack.c.b16 %v210, %v208
    %v227 = vpack.c.b16 %v211, %v209
    %244 = vmatprep.subr.bf16.mxu0 %v227
    %245 = vmatpush1.bf16.msra.mxu0 %v226
    %246 = vmatprep.subr.bf16.mxu0 %v225
    %247 = vmatpush1.bf16.msra.mxu0 %v224
    %248 = vmatprep.subr.bf16.mxu0 %v223
    %249 = vmatpush1.bf16.msra.mxu0 %v222
    %250 = vmatprep.subr.bf16.mxu0 %v221
    %251 = vmatpush1.bf16.msra.mxu0 %v220
    %252 = vmatprep.subr.bf16.mxu0 %v219
    %253 = vmatpush1.bf16.msra.mxu0 %v218
    %254 = vmatprep.subr.bf16.mxu0 %v217
    %255 = vmatpush1.bf16.msra.mxu0 %v216
    %256 = vmatprep.subr.bf16.mxu0 %v215
    %257 = vmatpush1.bf16.msra.mxu0 %v214
    %258 = vmatprep.subr.bf16.mxu0 %v213
    %259 = vmatpush1.bf16.msra.mxu0 %v212
    %260 = vmatprep.subr.bf16.mxu0 0
    %261 = vmatpush2.bf16.msra.mxu0 0
    %262 = vmatprep.subr.bf16.mxu0 0
    %263 = vmatpush2.bf16.msra.mxu0 0
    %264 = vmatprep.subr.bf16.mxu0 0
    %265 = vmatpush2.bf16.msra.mxu0 0
    %266 = vmatprep.subr.bf16.mxu0 0
    %267 = vmatpush2.bf16.msra.mxu0 0
    %268 = vmatprep.subr.bf16.mxu0 0
    %269 = vmatpush2.bf16.msra.mxu0 0
    %270 = vmatprep.subr.bf16.mxu0 0
    %271 = vmatpush2.bf16.msra.mxu0 0
    %272 = vmatprep.subr.bf16.mxu0 0
    %273 = vmatpush2.bf16.msra.mxu0 0
    %274 = vmatprep.subr.bf16.mxu0 0
    %275 = vmatpush2.bf16.msra.mxu0 0
    %276 = vmatprep.mubr.bf16.mxu0 0
    %277 = vmatmul.mubr.bf16.gmra.mxu0 %v147
    %v278 = vpop.f32.mrf.mxu0
    %v279 = vadd.f32 0.0, %v278
    %v280 = vpop.f32.mrf.mxu0
    %v281 = vadd.f32 0.0, %v280
    %v282 = vpop.f32.mrf.mxu0
    %v283 = vpop.f32.mrf.mxu0
    %284 = vdwg.mxu0
    %v285 = vpack.c.bf16 %v279, %v279
    %v286 = vpack.c.bf16 %v281, %v281
    %v287 = vld [vmem:[#allocation7] sm:$0x3]
    %v289 = vlaneseq
    %v290 = vshrl.u32 %v289, 7
    %v291 = vsub.s32 0, %v290
    %v292 = vrot.slane %v287, %v291
    %v293 = vlaneseq
    %v294 = vshrl.u32 %v293, 7
    %v295 = vsub.s32 1, %v294
    %v296 = vrot.slane %v287, %v295
    %v299 = vpack.c.bf16 %v292, %v292
    %v300 = vpack.c.bf16 %v296, %v296
    %v302 = vpack.i.b16 %v299, %v299
    %v304 = vlaneseq
    %v305 = vshrl.u32 %v304, 7
    %v306 = vsub.s32 0, %v305
    %v307 = vrot.slane %v302, %v306
    %v309 = vpack.i.b16 %v300, %v300
    %v311 = vlaneseq
    %v312 = vshrl.u32 %v311, 7
    %v313 = vsub.s32 0, %v312
    %v314 = vrot.slane %v309, %v313
    %v315 = vadd.bf16 %v285, %v307
    %v316 = vadd.bf16 %v286, %v314
    %v317 = vmul.bf16 %v315, 1045249613
    %v318 = vmul.bf16 %v316, 1045249613
    %v319 = vmax.bf16 %v315, %v317
    %v320 = vmax.bf16 %v316, %v318
    %v321 = vld [vmem:[#allocation8] sm:$0xff]
    %v322 = vld [vmem:[#allocation8 + $0x8] sm:$0xff]
    %v323 = vld [vmem:[#allocation8 + $0x10] sm:$0xff]
    %v324 = vld [vmem:[#allocation8 + $0x18] sm:$0xff]
    %v325 = vld [vmem:[#allocation8 + $0x20] sm:$0xff]
    %v326 = vld [vmem:[#allocation8 + $0x28] sm:$0xff]
    %v327 = vld [vmem:[#allocation8 + $0x30] sm:$0xff]
    %v328 = vld [vmem:[#allocation8 + $0x38] sm:$0xff]
    %v329 = vld [vmem:[#allocation8 + $0x40] sm:$0xff]
    %v330 = vld [vmem:[#allocation8 + $0x48] sm:$0xff]
    %v331 = vld [vmem:[#allocation8 + $0x50] sm:$0xff]
    %v332 = vld [vmem:[#allocation8 + $0x58] sm:$0xff]
    %v333 = vld [vmem:[#allocation8 + $0x60] sm:$0xff]
    %v334 = vld [vmem:[#allocation8 + $0x68] sm:$0xff]
    %v335 = vld [vmem:[#allocation8 + $0x70] sm:$0xff]
    %v336 = vld [vmem:[#allocation8 + $0x78] sm:$0xff]
    %v337 = vld [vmem:[#allocation8 + $0x80] sm:$0xff]
    %v338 = vld [vmem:[#allocation8 + $0x88] sm:$0xff]
    %v339 = vld [vmem:[#allocation8 + $0x90] sm:$0xff]
    %v340 = vld [vmem:[#allocation8 + $0x98] sm:$0xff]
    %v341 = vld [vmem:[#allocation8 + $0xa0] sm:$0xff]
    %v342 = vld [vmem:[#allocation8 + $0xa8] sm:$0xff]
    %v343 = vld [vmem:[#allocation8 + $0xb0] sm:$0xff]
    %v344 = vld [vmem:[#allocation8 + $0xb8] sm:$0xff]
    %v345 = vld [vmem:[#allocation8 + $0xc0] sm:$0xff]
    %v346 = vld [vmem:[#allocation8 + $0xc8] sm:$0xff]
    %v347 = vld [vmem:[#allocation8 + $0xd0] sm:$0xff]
    %v348 = vld [vmem:[#allocation8 + $0xd8] sm:$0xff]
    %v349 = vld [vmem:[#allocation8 + $0xe0] sm:$0xff]
    %v350 = vld [vmem:[#allocation8 + $0xe8] sm:$0xff]
    %v351 = vld [vmem:[#allocation8 + $0xf0] sm:$0xff]
    %v352 = vld [vmem:[#allocation8 + $0xf8] sm:$0xff]
    %v353 = vld [vmem:[#allocation8 + $0x100] sm:$0xff]
    %v354 = vld [vmem:[#allocation8 + $0x108] sm:$0xff]
    %v355 = vld [vmem:[#allocation8 + $0x110] sm:$0xff]
    %v356 = vld [vmem:[#allocation8 + $0x118] sm:$0xff]
    %v357 = vld [vmem:[#allocation8 + $0x120] sm:$0xff]
    %v358 = vld [vmem:[#allocation8 + $0x128] sm:$0xff]
    %v359 = vld [vmem:[#allocation8 + $0x130] sm:$0xff]
    %v360 = vld [vmem:[#allocation8 + $0x138] sm:$0xff]
    %v361 = vld [vmem:[#allocation8 + $0x140] sm:$0xff]
    %v362 = vld [vmem:[#allocation8 + $0x148] sm:$0xff]
    %v363 = vld [vmem:[#allocation8 + $0x150] sm:$0xff]
    %v364 = vld [vmem:[#allocation8 + $0x158] sm:$0xff]
    %v365 = vld [vmem:[#allocation8 + $0x160] sm:$0xff]
    %v366 = vld [vmem:[#allocation8 + $0x168] sm:$0xff]
    %v367 = vld [vmem:[#allocation8 + $0x170] sm:$0xff]
    %v368 = vld [vmem:[#allocation8 + $0x178] sm:$0xff]
    %v369 = vld [vmem:[#allocation8 + $0x180] sm:$0xff]
    %v370 = vld [vmem:[#allocation8 + $0x188] sm:$0xff]
    %v371 = vld [vmem:[#allocation8 + $0x190] sm:$0xff]
    %v372 = vld [vmem:[#allocation8 + $0x198] sm:$0xff]
    %v373 = vld [vmem:[#allocation8 + $0x1a0] sm:$0xff]
    %v374 = vld [vmem:[#allocation8 + $0x1a8] sm:$0xff]
    %v375 = vld [vmem:[#allocation8 + $0x1b0] sm:$0xff]
    %v376 = vld [vmem:[#allocation8 + $0x1b8] sm:$0xff]
    %v377 = vld [vmem:[#allocation8 + $0x1c0] sm:$0xff]
    %v378 = vld [vmem:[#allocation8 + $0x1c8] sm:$0xff]
    %v379 = vld [vmem:[#allocation8 + $0x1d0] sm:$0xff]
    %v380 = vld [vmem:[#allocation8 + $0x1d8] sm:$0xff]
    %v381 = vld [vmem:[#allocation8 + $0x1e0] sm:$0xff]
    %v382 = vld [vmem:[#allocation8 + $0x1e8] sm:$0xff]
    %v383 = vld [vmem:[#allocation8 + $0x1f0] sm:$0xff]
    %v384 = vld [vmem:[#allocation8 + $0x1f8] sm:$0xff]
    %v449 = vunpack.c.l.b16 %v321
    %v450 = vunpack.c.h.b16 %v321
    %v451 = vunpack.c.l.b16 %v322
    %v452 = vunpack.c.h.b16 %v322
    %v453 = vunpack.c.l.b16 %v323
    %v454 = vunpack.c.h.b16 %v323
    %v455 = vunpack.c.l.b16 %v324
    %v456 = vunpack.c.h.b16 %v324
    %v457 = vunpack.c.l.b16 %v325
    %v458 = vunpack.c.h.b16 %v325
    %v459 = vunpack.c.l.b16 %v326
    %v460 = vunpack.c.h.b16 %v326
    %v461 = vunpack.c.l.b16 %v327
    %v462 = vunpack.c.h.b16 %v327
    %v463 = vunpack.c.l.b16 %v328
    %v464 = vunpack.c.h.b16 %v328
    %v465 = vunpack.c.l.b16 %v329
    %v466 = vunpack.c.h.b16 %v329
    %v467 = vunpack.c.l.b16 %v330
    %v468 = vunpack.c.h.b16 %v330
    %v469 = vunpack.c.l.b16 %v331
    %v470 = vunpack.c.h.b16 %v331
    %v471 = vunpack.c.l.b16 %v332
    %v472 = vunpack.c.h.b16 %v332
    %v473 = vunpack.c.l.b16 %v333
    %v474 = vunpack.c.h.b16 %v333
    %v475 = vunpack.c.l.b16 %v334
    %v476 = vunpack.c.h.b16 %v334
    %v477 = vunpack.c.l.b16 %v335
    %v478 = vunpack.c.h.b16 %v335
    %v479 = vunpack.c.l.b16 %v336
    %v480 = vunpack.c.h.b16 %v336
    %v481 = vunpack.c.l.b16 %v337
    %v482 = vunpack.c.h.b16 %v337
    %v483 = vunpack.c.l.b16 %v338
    %v484 = vunpack.c.h.b16 %v338
    %v485 = vunpack.c.l.b16 %v339
    %v486 = vunpack.c.h.b16 %v339
    %v487 = vunpack.c.l.b16 %v340
    %v488 = vunpack.c.h.b16 %v340
    %v489 = vunpack.c.l.b16 %v341
    %v490 = vunpack.c.h.b16 %v341
    %v491 = vunpack.c.l.b16 %v342
    %v492 = vunpack.c.h.b16 %v342
    %v493 = vunpack.c.l.b16 %v343
    %v494 = vunpack.c.h.b16 %v343
    %v495 = vunpack.c.l.b16 %v344
    %v496 = vunpack.c.h.b16 %v344
    %v497 = vunpack.c.l.b16 %v345
    %v498 = vunpack.c.h.b16 %v345
    %v499 = vunpack.c.l.b16 %v346
    %v500 = vunpack.c.h.b16 %v346
    %v501 = vunpack.c.l.b16 %v347
    %v502 = vunpack.c.h.b16 %v347
    %v503 = vunpack.c.l.b16 %v348
    %v504 = vunpack.c.h.b16 %v348
    %v505 = vunpack.c.l.b16 %v349
    %v506 = vunpack.c.h.b16 %v349
    %v507 = vunpack.c.l.b16 %v350
    %v508 = vunpack.c.h.b16 %v350
    %v509 = vunpack.c.l.b16 %v351
    %v510 = vunpack.c.h.b16 %v351
    %v511 = vunpack.c.l.b16 %v352
    %v512 = vunpack.c.h.b16 %v352
    %v513 = vunpack.c.l.b16 %v353
    %v514 = vunpack.c.h.b16 %v353
    %v515 = vunpack.c.l.b16 %v354
    %v516 = vunpack.c.h.b16 %v354
    %v517 = vunpack.c.l.b16 %v355
    %v518 = vunpack.c.h.b16 %v355
    %v519 = vunpack.c.l.b16 %v356
    %v520 = vunpack.c.h.b16 %v356
    %v521 = vunpack.c.l.b16 %v357
    %v522 = vunpack.c.h.b16 %v357
    %v523 = vunpack.c.l.b16 %v358
    %v524 = vunpack.c.h.b16 %v358
    %v525 = vunpack.c.l.b16 %v359
    %v526 = vunpack.c.h.b16 %v359
    %v527 = vunpack.c.l.b16 %v360
    %v528 = vunpack.c.h.b16 %v360
    %v529 = vunpack.c.l.b16 %v361
    %v530 = vunpack.c.h.b16 %v361
    %v531 = vunpack.c.l.b16 %v362
    %v532 = vunpack.c.h.b16 %v362
    %v533 = vunpack.c.l.b16 %v363
    %v534 = vunpack.c.h.b16 %v363
    %v535 = vunpack.c.l.b16 %v364
    %v536 = vunpack.c.h.b16 %v364
    %v537 = vunpack.c.l.b16 %v365
    %v538 = vunpack.c.h.b16 %v365
    %v539 = vunpack.c.l.b16 %v366
    %v540 = vunpack.c.h.b16 %v366
    %v541 = vunpack.c.l.b16 %v367
    %v542 = vunpack.c.h.b16 %v367
    %v543 = vunpack.c.l.b16 %v368
    %v544 = vunpack.c.h.b16 %v368
    %v545 = vunpack.c.l.b16 %v369
    %v546 = vunpack.c.h.b16 %v369
    %v547 = vunpack.c.l.b16 %v370
    %v548 = vunpack.c.h.b16 %v370
    %v549 = vunpack.c.l.b16 %v371
    %v550 = vunpack.c.h.b16 %v371
    %v551 = vunpack.c.l.b16 %v372
    %v552 = vunpack.c.h.b16 %v372
    %v553 = vunpack.c.l.b16 %v373
    %v554 = vunpack.c.h.b16 %v373
    %v555 = vunpack.c.l.b16 %v374
    %v556 = vunpack.c.h.b16 %v374
    %v557 = vunpack.c.l.b16 %v375
    %v558 = vunpack.c.h.b16 %v375
    %v559 = vunpack.c.l.b16 %v376
    %v560 = vunpack.c.h.b16 %v376
    %v561 = vunpack.c.l.b16 %v377
    %v562 = vunpack.c.h.b16 %v377
    %v563 = vunpack.c.l.b16 %v378
    %v564 = vunpack.c.h.b16 %v378
    %v565 = vunpack.c.l.b16 %v379
    %v566 = vunpack.c.h.b16 %v379
    %v567 = vunpack.c.l.b16 %v380
    %v568 = vunpack.c.h.b16 %v380
    %v569 = vunpack.c.l.b16 %v381
    %v570 = vunpack.c.h.b16 %v381
    %v571 = vunpack.c.l.b16 %v382
    %v572 = vunpack.c.h.b16 %v382
    %v573 = vunpack.c.l.b16 %v383
    %v574 = vunpack.c.h.b16 %v383
    %v575 = vunpack.c.l.b16 %v384
    %v576 = vunpack.c.h.b16 %v384
    %v577 = vpack.c.b16 %v453, %v449
    %v578 = vpack.c.b16 %v454, %v450
    %v579 = vpack.c.b16 %v455, %v451
    %v580 = vpack.c.b16 %v456, %v452
    %v581 = vpack.c.b16 %v461, %v457
    %v582 = vpack.c.b16 %v462, %v458
    %v583 = vpack.c.b16 %v463, %v459
    %v584 = vpack.c.b16 %v464, %v460
    %v585 = vpack.c.b16 %v469, %v465
    %v586 = vpack.c.b16 %v470, %v466
    %v587 = vpack.c.b16 %v471, %v467
    %v588 = vpack.c.b16 %v472, %v468
    %v589 = vpack.c.b16 %v477, %v473
    %v590 = vpack.c.b16 %v478, %v474
    %v591 = vpack.c.b16 %v479, %v475
    %v592 = vpack.c.b16 %v480, %v476
    %v593 = vpack.c.b16 %v485, %v481
    %v594 = vpack.c.b16 %v486, %v482
    %v595 = vpack.c.b16 %v487, %v483
    %v596 = vpack.c.b16 %v488, %v484
    %v597 = vpack.c.b16 %v493, %v489
    %v598 = vpack.c.b16 %v494, %v490
    %v599 = vpack.c.b16 %v495, %v491
    %v600 = vpack.c.b16 %v496, %v492
    %v601 = vpack.c.b16 %v501, %v497
    %v602 = vpack.c.b16 %v502, %v498
    %v603 = vpack.c.b16 %v503, %v499
    %v604 = vpack.c.b16 %v504, %v500
    %v605 = vpack.c.b16 %v509, %v505
    %v606 = vpack.c.b16 %v510, %v506
    %v607 = vpack.c.b16 %v511, %v507
    %v608 = vpack.c.b16 %v512, %v508
    %v609 = vpack.c.b16 %v517, %v513
    %v610 = vpack.c.b16 %v518, %v514
    %v611 = vpack.c.b16 %v519, %v515
    %v612 = vpack.c.b16 %v520, %v516
    %v613 = vpack.c.b16 %v525, %v521
    %v614 = vpack.c.b16 %v526, %v522
    %v615 = vpack.c.b16 %v527, %v523
    %v616 = vpack.c.b16 %v528, %v524
    %v617 = vpack.c.b16 %v533, %v529
    %v618 = vpack.c.b16 %v534, %v530
    %v619 = vpack.c.b16 %v535, %v531
    %v620 = vpack.c.b16 %v536, %v532
    %v621 = vpack.c.b16 %v541, %v537
    %v622 = vpack.c.b16 %v542, %v538
    %v623 = vpack.c.b16 %v543, %v539
    %v624 = vpack.c.b16 %v544, %v540
    %v625 = vpack.c.b16 %v549, %v545
    %v626 = vpack.c.b16 %v550, %v546
    %v627 = vpack.c.b16 %v551, %v547
    %v628 = vpack.c.b16 %v552, %v548
    %v629 = vpack.c.b16 %v557, %v553
    %v630 = vpack.c.b16 %v558, %v554
    %v631 = vpack.c.b16 %v559, %v555
    %v632 = vpack.c.b16 %v560, %v556
    %v633 = vpack.c.b16 %v565, %v561
    %v634 = vpack.c.b16 %v566, %v562
    %v635 = vpack.c.b16 %v567, %v563
    %v636 = vpack.c.b16 %v568, %v564
    %v637 = vpack.c.b16 %v573, %v569
    %v638 = vpack.c.b16 %v574, %v570
    %v639 = vpack.c.b16 %v575, %v571
    %v640 = vpack.c.b16 %v576, %v572
    %705 = vmatprep.subr.bf16.mxu0 %v606
    %706 = vmatpush1.bf16.msra.mxu0 %v605
    %707 = vmatprep.subr.bf16.mxu0 %v602
    %708 = vmatpush1.bf16.msra.mxu0 %v601
    %709 = vmatprep.subr.bf16.mxu0 %v598
    %710 = vmatpush1.bf16.msra.mxu0 %v597
    %711 = vmatprep.subr.bf16.mxu0 %v594
    %712 = vmatpush1.bf16.msra.mxu0 %v593
    %713 = vmatprep.subr.bf16.mxu0 %v590
    %714 = vmatpush1.bf16.msra.mxu0 %v589
    %715 = vmatprep.subr.bf16.mxu0 %v586
    %716 = vmatpush1.bf16.msra.mxu0 %v585
    %717 = vmatprep.subr.bf16.mxu0 %v582
    %718 = vmatpush1.bf16.msra.mxu0 %v581
    %719 = vmatprep.subr.bf16.mxu0 %v578
    %720 = vmatpush1.bf16.msra.mxu0 %v577
    %721 = vmatprep.subr.bf16.mxu0 %v638
    %722 = vmatpush2.bf16.msra.mxu0 %v637
    %723 = vmatprep.subr.bf16.mxu0 %v634
    %724 = vmatpush2.bf16.msra.mxu0 %v633
    %725 = vmatprep.subr.bf16.mxu0 %v630
    %726 = vmatpush2.bf16.msra.mxu0 %v629
    %727 = vmatprep.subr.bf16.mxu0 %v626
    %728 = vmatpush2.bf16.msra.mxu0 %v625
    %729 = vmatprep.subr.bf16.mxu0 %v622
    %730 = vmatpush2.bf16.msra.mxu0 %v621
    %731 = vmatprep.subr.bf16.mxu0 %v618
    %732 = vmatpush2.bf16.msra.mxu0 %v617
    %733 = vmatprep.subr.bf16.mxu0 %v614
    %734 = vmatpush2.bf16.msra.mxu0 %v613
    %735 = vmatprep.subr.bf16.mxu0 %v610
    %736 = vmatpush2.bf16.msra.mxu0 %v609
    %737 = vmatprep.mubr.bf16.mxu0 %v320
    %738 = vmatmul.mubr.bf16.gmra.mxu0 %v319
    %v739 = vpop.f32.mrf.mxu0
    %v740 = vadd.f32 0.0, %v739
    %v741 = vpop.f32.mrf.mxu0
    %v742 = vadd.f32 0.0, %v741
    %v743 = vpop.f32.mrf.mxu0
    %v744 = vpop.f32.mrf.mxu0
    %745 = vdwg.mxu0
    %746 = vmatprep.subr.bf16.mxu0 %v608
    %747 = vmatpush1.bf16.msra.mxu0 %v607
    %748 = vmatprep.subr.bf16.mxu0 %v604
    %749 = vmatpush1.bf16.msra.mxu0 %v603
    %750 = vmatprep.subr.bf16.mxu0 %v600
    %751 = vmatpush1.bf16.msra.mxu0 %v599
    %752 = vmatprep.subr.bf16.mxu0 %v596
    %753 = vmatpush1.bf16.msra.mxu0 %v595
    %754 = vmatprep.subr.bf16.mxu0 %v592
    %755 = vmatpush1.bf16.msra.mxu0 %v591
    %756 = vmatprep.subr.bf16.mxu0 %v588
    %757 = vmatpush1.bf16.msra.mxu0 %v587
    %758 = vmatprep.subr.bf16.mxu0 %v584
    %759 = vmatpush1.bf16.msra.mxu0 %v583
    %760 = vmatprep.subr.bf16.mxu0 %v580
    %761 = vmatpush1.bf16.msra.mxu0 %v579
    %762 = vmatprep.subr.bf16.mxu0 %v640
    %763 = vmatpush2.bf16.msra.mxu0 %v639
    %764 = vmatprep.subr.bf16.mxu0 %v636
    %765 = vmatpush2.bf16.msra.mxu0 %v635
    %766 = vmatprep.subr.bf16.mxu0 %v632
    %767 = vmatpush2.bf16.msra.mxu0 %v631
    %768 = vmatprep.subr.bf16.mxu0 %v628
    %769 = vmatpush2.bf16.msra.mxu0 %v627
    %770 = vmatprep.subr.bf16.mxu0 %v624
    %771 = vmatpush2.bf16.msra.mxu0 %v623
    %772 = vmatprep.subr.bf16.mxu0 %v620
    %773 = vmatpush2.bf16.msra.mxu0 %v619
    %774 = vmatprep.subr.bf16.mxu0 %v616
    %775 = vmatpush2.bf16.msra.mxu0 %v615
    %776 = vmatprep.subr.bf16.mxu0 %v612
    %777 = vmatpush2.bf16.msra.mxu0 %v611
    %778 = vmatprep.mubr.bf16.mxu0 %v320
    %779 = vmatmul.mubr.bf16.gmra.mxu0 %v319
    %v780 = vpop.f32.mrf.mxu0
    %v781 = vadd.f32 0.0, %v780
    %v782 = vpop.f32.mrf.mxu0
    %v783 = vadd.f32 0.0, %v782
    %v784 = vpop.f32.mrf.mxu0
    %v785 = vpop.f32.mrf.mxu0
    %786 = vdwg.mxu0
    %v787 = vpack.c.bf16 %v740, %v740
    %v788 = vpack.c.bf16 %v742, %v742
    %v789 = vpack.c.bf16 %v781, %v781
    %v790 = vpack.c.bf16 %v783, %v783
    %v791 = vld [vmem:[#allocation10] sm:$0xf]
    %v793 = vlaneseq
    %v794 = vshrl.u32 %v793, 7
    %v795 = vsub.s32 0, %v794
    %v796 = vrot.slane %v791, %v795
    %v797 = vlaneseq
    %v798 = vshrl.u32 %v797, 7
    %v799 = vsub.s32 1, %v798
    %v800 = vrot.slane %v791, %v799
    %v801 = vlaneseq
    %v802 = vshrl.u32 %v801, 7
    %v803 = vsub.s32 2, %v802
    %v804 = vrot.slane %v791, %v803
    %v805 = vlaneseq
    %v806 = vshrl.u32 %v805, 7
    %v807 = vsub.s32 3, %v806
    %v808 = vrot.slane %v791, %v807
    %v813 = vpack.c.bf16 %v796, %v796
    %v814 = vpack.c.bf16 %v800, %v800
    %v815 = vpack.c.bf16 %v804, %v804
    %v816 = vpack.c.bf16 %v808, %v808
    %v818 = vpack.i.b16 %v813, %v813
    %v820 = vlaneseq
    %v821 = vshrl.u32 %v820, 7
    %v822 = vsub.s32 0, %v821
    %v823 = vrot.slane %v818, %v822
    %v825 = vpack.i.b16 %v814, %v814
    %v827 = vlaneseq
    %v828 = vshrl.u32 %v827, 7
    %v829 = vsub.s32 0, %v828
    %v830 = vrot.slane %v825, %v829
    %v832 = vpack.i.b16 %v815, %v815
    %v834 = vlaneseq
    %v835 = vshrl.u32 %v834, 7
    %v836 = vsub.s32 0, %v835
    %v837 = vrot.slane %v832, %v836
    %v839 = vpack.i.b16 %v816, %v816
    %v841 = vlaneseq
    %v842 = vshrl.u32 %v841, 7
    %v843 = vsub.s32 0, %v842
    %v844 = vrot.slane %v839, %v843
    %v845 = vadd.bf16 %v787, %v823
    %v846 = vadd.bf16 %v788, %v830
    %v847 = vadd.bf16 %v789, %v837
    %v848 = vadd.bf16 %v790, %v844
    %v849 = vmul.bf16 %v845, 1045249613
    %v850 = vmul.bf16 %v846, 1045249613
    %v851 = vmul.bf16 %v847, 1045249613
    %v852 = vmul.bf16 %v848, 1045249613
    %v853 = vmax.bf16 %v845, %v849
    %v854 = vmax.bf16 %v846, %v850
    %v855 = vmax.bf16 %v847, %v851
    %v856 = vmax.bf16 %v848, %v852
    %v857 = vld [vmem:[#allocation11] sm:$0xff]
    %v858 = vld [vmem:[#allocation11 + $0x8] sm:$0xff]
    %v859 = vld [vmem:[#allocation11 + $0x10] sm:$0xff]
    %v860 = vld [vmem:[#allocation11 + $0x18] sm:$0xff]
    %v861 = vld [vmem:[#allocation11 + $0x20] sm:$0xff]
    %v862 = vld [vmem:[#allocation11 + $0x28] sm:$0xff]
    %v863 = vld [vmem:[#allocation11 + $0x30] sm:$0xff]
    %v864 = vld [vmem:[#allocation11 + $0x38] sm:$0xff]
    %v865 = vld [vmem:[#allocation11 + $0x40] sm:$0xff]
    %v866 = vld [vmem:[#allocation11 + $0x48] sm:$0xff]
    %v867 = vld [vmem:[#allocation11 + $0x50] sm:$0xff]
    %v868 = vld [vmem:[#allocation11 + $0x58] sm:$0xff]
    %v869 = vld [vmem:[#allocation11 + $0x60] sm:$0xff]
    %v870 = vld [vmem:[#allocation11 + $0x68] sm:$0xff]
    %v871 = vld [vmem:[#allocation11 + $0x70] sm:$0xff]
    %v872 = vld [vmem:[#allocation11 + $0x78] sm:$0xff]
    %v873 = vld [vmem:[#allocation11 + $0x80] sm:$0xff]
    %v874 = vld [vmem:[#allocation11 + $0x88] sm:$0xff]
    %v875 = vld [vmem:[#allocation11 + $0x90] sm:$0xff]
    %v876 = vld [vmem:[#allocation11 + $0x98] sm:$0xff]
    %v877 = vld [vmem:[#allocation11 + $0xa0] sm:$0xff]
    %v878 = vld [vmem:[#allocation11 + $0xa8] sm:$0xff]
    %v879 = vld [vmem:[#allocation11 + $0xb0] sm:$0xff]
    %v880 = vld [vmem:[#allocation11 + $0xb8] sm:$0xff]
    %v881 = vld [vmem:[#allocation11 + $0xc0] sm:$0xff]
    %v882 = vld [vmem:[#allocation11 + $0xc8] sm:$0xff]
    %v883 = vld [vmem:[#allocation11 + $0xd0] sm:$0xff]
    %v884 = vld [vmem:[#allocation11 + $0xd8] sm:$0xff]
    %v885 = vld [vmem:[#allocation11 + $0xe0] sm:$0xff]
    %v886 = vld [vmem:[#allocation11 + $0xe8] sm:$0xff]
    %v887 = vld [vmem:[#allocation11 + $0xf0] sm:$0xff]
    %v888 = vld [vmem:[#allocation11 + $0xf8] sm:$0xff]
    %v889 = vld [vmem:[#allocation11 + $0x100] sm:$0xff]
    %v890 = vld [vmem:[#allocation11 + $0x108] sm:$0xff]
    %v891 = vld [vmem:[#allocation11 + $0x110] sm:$0xff]
    %v892 = vld [vmem:[#allocation11 + $0x118] sm:$0xff]
    %v893 = vld [vmem:[#allocation11 + $0x120] sm:$0xff]
    %v894 = vld [vmem:[#allocation11 + $0x128] sm:$0xff]
    %v895 = vld [vmem:[#allocation11 + $0x130] sm:$0xff]
    %v896 = vld [vmem:[#allocation11 + $0x138] sm:$0xff]
    %v897 = vld [vmem:[#allocation11 + $0x140] sm:$0xff]
    %v898 = vld [vmem:[#allocation11 + $0x148] sm:$0xff]
    %v899 = vld [vmem:[#allocation11 + $0x150] sm:$0xff]
    %v900 = vld [vmem:[#allocation11 + $0x158] sm:$0xff]
    %v901 = vld [vmem:[#allocation11 + $0x160] sm:$0xff]
    %v902 = vld [vmem:[#allocation11 + $0x168] sm:$0xff]
    %v903 = vld [vmem:[#allocation11 + $0x170] sm:$0xff]
    %v904 = vld [vmem:[#allocation11 + $0x178] sm:$0xff]
    %v905 = vld [vmem:[#allocation11 + $0x180] sm:$0xff]
    %v906 = vld [vmem:[#allocation11 + $0x188] sm:$0xff]
    %v907 = vld [vmem:[#allocation11 + $0x190] sm:$0xff]
    %v908 = vld [vmem:[#allocation11 + $0x198] sm:$0xff]
    %v909 = vld [vmem:[#allocation11 + $0x1a0] sm:$0xff]
    %v910 = vld [vmem:[#allocation11 + $0x1a8] sm:$0xff]
    %v911 = vld [vmem:[#allocation11 + $0x1b0] sm:$0xff]
    %v912 = vld [vmem:[#allocation11 + $0x1b8] sm:$0xff]
    %v913 = vld [vmem:[#allocation11 + $0x1c0] sm:$0xff]
    %v914 = vld [vmem:[#allocation11 + $0x1c8] sm:$0xff]
    %v915 = vld [vmem:[#allocation11 + $0x1d0] sm:$0xff]
    %v916 = vld [vmem:[#allocation11 + $0x1d8] sm:$0xff]
    %v917 = vld [vmem:[#allocation11 + $0x1e0] sm:$0xff]
    %v918 = vld [vmem:[#allocation11 + $0x1e8] sm:$0xff]
    %v919 = vld [vmem:[#allocation11 + $0x1f0] sm:$0xff]
    %v920 = vld [vmem:[#allocation11 + $0x1f8] sm:$0xff]
    %v921 = vld [vmem:[#allocation11 + $0x200] sm:$0xff]
    %v922 = vld [vmem:[#allocation11 + $0x208] sm:$0xff]
    %v923 = vld [vmem:[#allocation11 + $0x210] sm:$0xff]
    %v924 = vld [vmem:[#allocation11 + $0x218] sm:$0xff]
    %v925 = vld [vmem:[#allocation11 + $0x220] sm:$0xff]
    %v926 = vld [vmem:[#allocation11 + $0x228] sm:$0xff]
    %v927 = vld [vmem:[#allocation11 + $0x230] sm:$0xff]
    %v928 = vld [vmem:[#allocation11 + $0x238] sm:$0xff]
    %v929 = vld [vmem:[#allocation11 + $0x240] sm:$0xff]
    %v930 = vld [vmem:[#allocation11 + $0x248] sm:$0xff]
    %v931 = vld [vmem:[#allocation11 + $0x250] sm:$0xff]
    %v932 = vld [vmem:[#allocation11 + $0x258] sm:$0xff]
    %v933 = vld [vmem:[#allocation11 + $0x260] sm:$0xff]
    %v934 = vld [vmem:[#allocation11 + $0x268] sm:$0xff]
    %v935 = vld [vmem:[#allocation11 + $0x270] sm:$0xff]
    %v936 = vld [vmem:[#allocation11 + $0x278] sm:$0xff]
    %v937 = vld [vmem:[#allocation11 + $0x280] sm:$0xff]
    %v938 = vld [vmem:[#allocation11 + $0x288] sm:$0xff]
    %v939 = vld [vmem:[#allocation11 + $0x290] sm:$0xff]
    %v940 = vld [vmem:[#allocation11 + $0x298] sm:$0xff]
    %v941 = vld [vmem:[#allocation11 + $0x2a0] sm:$0xff]
    %v942 = vld [vmem:[#allocation11 + $0x2a8] sm:$0xff]
    %v943 = vld [vmem:[#allocation11 + $0x2b0] sm:$0xff]
    %v944 = vld [vmem:[#allocation11 + $0x2b8] sm:$0xff]
    %v945 = vld [vmem:[#allocation11 + $0x2c0] sm:$0xff]
    %v946 = vld [vmem:[#allocation11 + $0x2c8] sm:$0xff]
    %v947 = vld [vmem:[#allocation11 + $0x2d0] sm:$0xff]
    %v948 = vld [vmem:[#allocation11 + $0x2d8] sm:$0xff]
    %v949 = vld [vmem:[#allocation11 + $0x2e0] sm:$0xff]
    %v950 = vld [vmem:[#allocation11 + $0x2e8] sm:$0xff]
    %v951 = vld [vmem:[#allocation11 + $0x2f0] sm:$0xff]
    %v952 = vld [vmem:[#allocation11 + $0x2f8] sm:$0xff]
    %v953 = vld [vmem:[#allocation11 + $0x300] sm:$0xff]
    %v954 = vld [vmem:[#allocation11 + $0x308] sm:$0xff]
    %v955 = vld [vmem:[#allocation11 + $0x310] sm:$0xff]
    %v956 = vld [vmem:[#allocation11 + $0x318] sm:$0xff]
    %v957 = vld [vmem:[#allocation11 + $0x320] sm:$0xff]
    %v958 = vld [vmem:[#allocation11 + $0x328] sm:$0xff]
    %v959 = vld [vmem:[#allocation11 + $0x330] sm:$0xff]
    %v960 = vld [vmem:[#allocation11 + $0x338] sm:$0xff]
    %v961 = vld [vmem:[#allocation11 + $0x340] sm:$0xff]
    %v962 = vld [vmem:[#allocation11 + $0x348] sm:$0xff]
    %v963 = vld [vmem:[#allocation11 + $0x350] sm:$0xff]
    %v964 = vld [vmem:[#allocation11 + $0x358] sm:$0xff]
    %v965 = vld [vmem:[#allocation11 + $0x360] sm:$0xff]
    %v966 = vld [vmem:[#allocation11 + $0x368] sm:$0xff]
    %v967 = vld [vmem:[#allocation11 + $0x370] sm:$0xff]
    %v968 = vld [vmem:[#allocation11 + $0x378] sm:$0xff]
    %v969 = vld [vmem:[#allocation11 + $0x380] sm:$0xff]
    %v970 = vld [vmem:[#allocation11 + $0x388] sm:$0xff]
    %v971 = vld [vmem:[#allocation11 + $0x390] sm:$0xff]
    %v972 = vld [vmem:[#allocation11 + $0x398] sm:$0xff]
    %v973 = vld [vmem:[#allocation11 + $0x3a0] sm:$0xff]
    %v974 = vld [vmem:[#allocation11 + $0x3a8] sm:$0xff]
    %v975 = vld [vmem:[#allocation11 + $0x3b0] sm:$0xff]
    %v976 = vld [vmem:[#allocation11 + $0x3b8] sm:$0xff]
    %v977 = vld [vmem:[#allocation11 + $0x3c0] sm:$0xff]
    %v978 = vld [vmem:[#allocation11 + $0x3c8] sm:$0xff]
    %v979 = vld [vmem:[#allocation11 + $0x3d0] sm:$0xff]
    %v980 = vld [vmem:[#allocation11 + $0x3d8] sm:$0xff]
    %v981 = vld [vmem:[#allocation11 + $0x3e0] sm:$0xff]
    %v982 = vld [vmem:[#allocation11 + $0x3e8] sm:$0xff]
    %v983 = vld [vmem:[#allocation11 + $0x3f0] sm:$0xff]
    %v984 = vld [vmem:[#allocation11 + $0x3f8] sm:$0xff]
    %v985 = vld [vmem:[#allocation11 + $0x400] sm:$0xff]
    %v986 = vld [vmem:[#allocation11 + $0x408] sm:$0xff]
    %v987 = vld [vmem:[#allocation11 + $0x410] sm:$0xff]
    %v988 = vld [vmem:[#allocation11 + $0x418] sm:$0xff]
    %v989 = vld [vmem:[#allocation11 + $0x420] sm:$0xff]
    %v990 = vld [vmem:[#allocation11 + $0x428] sm:$0xff]
    %v991 = vld [vmem:[#allocation11 + $0x430] sm:$0xff]
    %v992 = vld [vmem:[#allocation11 + $0x438] sm:$0xff]
    %v993 = vld [vmem:[#allocation11 + $0x440] sm:$0xff]
    %v994 = vld [vmem:[#allocation11 + $0x448] sm:$0xff]
    %v995 = vld [vmem:[#allocation11 + $0x450] sm:$0xff]
    %v996 = vld [vmem:[#allocation11 + $0x458] sm:$0xff]
    %v997 = vld [vmem:[#allocation11 + $0x460] sm:$0xff]
    %v998 = vld [vmem:[#allocation11 + $0x468] sm:$0xff]
    %v999 = vld [vmem:[#allocation11 + $0x470] sm:$0xff]
    %v1000 = vld [vmem:[#allocation11 + $0x478] sm:$0xff]
    %v1001 = vld [vmem:[#allocation11 + $0x480] sm:$0xff]
    %v1002 = vld [vmem:[#allocation11 + $0x488] sm:$0xff]
    %v1003 = vld [vmem:[#allocation11 + $0x490] sm:$0xff]
    %v1004 = vld [vmem:[#allocation11 + $0x498] sm:$0xff]
    %v1005 = vld [vmem:[#allocation11 + $0x4a0] sm:$0xff]
    %v1006 = vld [vmem:[#allocation11 + $0x4a8] sm:$0xff]
    %v1007 = vld [vmem:[#allocation11 + $0x4b0] sm:$0xff]
    %v1008 = vld [vmem:[#allocation11 + $0x4b8] sm:$0xff]
    %v1009 = vld [vmem:[#allocation11 + $0x4c0] sm:$0xff]
    %v1010 = vld [vmem:[#allocation11 + $0x4c8] sm:$0xff]
    %v1011 = vld [vmem:[#allocation11 + $0x4d0] sm:$0xff]
    %v1012 = vld [vmem:[#allocation11 + $0x4d8] sm:$0xff]
    %v1013 = vld [vmem:[#allocation11 + $0x4e0] sm:$0xff]
    %v1014 = vld [vmem:[#allocation11 + $0x4e8] sm:$0xff]
    %v1015 = vld [vmem:[#allocation11 + $0x4f0] sm:$0xff]
    %v1016 = vld [vmem:[#allocation11 + $0x4f8] sm:$0xff]
    %v1017 = vld [vmem:[#allocation11 + $0x500] sm:$0xff]
    %v1018 = vld [vmem:[#allocation11 + $0x508] sm:$0xff]
    %v1019 = vld [vmem:[#allocation11 + $0x510] sm:$0xff]
    %v1020 = vld [vmem:[#allocation11 + $0x518] sm:$0xff]
    %v1021 = vld [vmem:[#allocation11 + $0x520] sm:$0xff]
    %v1022 = vld [vmem:[#allocation11 + $0x528] sm:$0xff]
    %v1023 = vld [vmem:[#allocation11 + $0x530] sm:$0xff]
    %v1024 = vld [vmem:[#allocation11 + $0x538] sm:$0xff]
    %v1025 = vld [vmem:[#allocation11 + $0x540] sm:$0xff]
    %v1026 = vld [vmem:[#allocation11 + $0x548] sm:$0xff]
    %v1027 = vld [vmem:[#allocation11 + $0x550] sm:$0xff]
    %v1028 = vld [vmem:[#allocation11 + $0x558] sm:$0xff]
    %v1029 = vld [vmem:[#allocation11 + $0x560] sm:$0xff]
    %v1030 = vld [vmem:[#allocation11 + $0x568] sm:$0xff]
    %v1031 = vld [vmem:[#allocation11 + $0x570] sm:$0xff]
    %v1032 = vld [vmem:[#allocation11 + $0x578] sm:$0xff]
    %v1033 = vld [vmem:[#allocation11 + $0x580] sm:$0xff]
    %v1034 = vld [vmem:[#allocation11 + $0x588] sm:$0xff]
    %v1035 = vld [vmem:[#allocation11 + $0x590] sm:$0xff]
    %v1036 = vld [vmem:[#allocation11 + $0x598] sm:$0xff]
    %v1037 = vld [vmem:[#allocation11 + $0x5a0] sm:$0xff]
    %v1038 = vld [vmem:[#allocation11 + $0x5a8] sm:$0xff]
    %v1039 = vld [vmem:[#allocation11 + $0x5b0] sm:$0xff]
    %v1040 = vld [vmem:[#allocation11 + $0x5b8] sm:$0xff]
    %v1041 = vld [vmem:[#allocation11 + $0x5c0] sm:$0xff]
    %v1042 = vld [vmem:[#allocation11 + $0x5c8] sm:$0xff]
    %v1043 = vld [vmem:[#allocation11 + $0x5d0] sm:$0xff]
    %v1044 = vld [vmem:[#allocation11 + $0x5d8] sm:$0xff]
    %v1045 = vld [vmem:[#allocation11 + $0x5e0] sm:$0xff]
    %v1046 = vld [vmem:[#allocation11 + $0x5e8] sm:$0xff]
    %v1047 = vld [vmem:[#allocation11 + $0x5f0] sm:$0xff]
    %v1048 = vld [vmem:[#allocation11 + $0x5f8] sm:$0xff]
    %v1049 = vld [vmem:[#allocation11 + $0x600] sm:$0xff]
    %v1050 = vld [vmem:[#allocation11 + $0x608] sm:$0xff]
    %v1051 = vld [vmem:[#allocation11 + $0x610] sm:$0xff]
    %v1052 = vld [vmem:[#allocation11 + $0x618] sm:$0xff]
    %v1053 = vld [vmem:[#allocation11 + $0x620] sm:$0xff]
    %v1054 = vld [vmem:[#allocation11 + $0x628] sm:$0xff]
    %v1055 = vld [vmem:[#allocation11 + $0x630] sm:$0xff]
    %v1056 = vld [vmem:[#allocation11 + $0x638] sm:$0xff]
    %v1057 = vld [vmem:[#allocation11 + $0x640] sm:$0xff]
    %v1058 = vld [vmem:[#allocation11 + $0x648] sm:$0xff]
    %v1059 = vld [vmem:[#allocation11 + $0x650] sm:$0xff]
    %v1060 = vld [vmem:[#allocation11 + $0x658] sm:$0xff]
    %v1061 = vld [vmem:[#allocation11 + $0x660] sm:$0xff]
    %v1062 = vld [vmem:[#allocation11 + $0x668] sm:$0xff]
    %v1063 = vld [vmem:[#allocation11 + $0x670] sm:$0xff]
    %v1064 = vld [vmem:[#allocation11 + $0x678] sm:$0xff]
    %v1065 = vld [vmem:[#allocation11 + $0x680] sm:$0xff]
    %v1066 = vld [vmem:[#allocation11 + $0x688] sm:$0xff]
    %v1067 = vld [vmem:[#allocation11 + $0x690] sm:$0xff]
    %v1068 = vld [vmem:[#allocation11 + $0x698] sm:$0xff]
    %v1069 = vld [vmem:[#allocation11 + $0x6a0] sm:$0xff]
    %v1070 = vld [vmem:[#allocation11 + $0x6a8] sm:$0xff]
    %v1071 = vld [vmem:[#allocation11 + $0x6b0] sm:$0xff]
    %v1072 = vld [vmem:[#allocation11 + $0x6b8] sm:$0xff]
    %v1073 = vld [vmem:[#allocation11 + $0x6c0] sm:$0xff]
    %v1074 = vld [vmem:[#allocation11 + $0x6c8] sm:$0xff]
    %v1075 = vld [vmem:[#allocation11 + $0x6d0] sm:$0xff]
    %v1076 = vld [vmem:[#allocation11 + $0x6d8] sm:$0xff]
    %v1077 = vld [vmem:[#allocation11 + $0x6e0] sm:$0xff]
    %v1078 = vld [vmem:[#allocation11 + $0x6e8] sm:$0xff]
    %v1079 = vld [vmem:[#allocation11 + $0x6f0] sm:$0xff]
    %v1080 = vld [vmem:[#allocation11 + $0x6f8] sm:$0xff]
    %v1081 = vld [vmem:[#allocation11 + $0x700] sm:$0xff]
    %v1082 = vld [vmem:[#allocation11 + $0x708] sm:$0xff]
    %v1083 = vld [vmem:[#allocation11 + $0x710] sm:$0xff]
    %v1084 = vld [vmem:[#allocation11 + $0x718] sm:$0xff]
    %v1085 = vld [vmem:[#allocation11 + $0x720] sm:$0xff]
    %v1086 = vld [vmem:[#allocation11 + $0x728] sm:$0xff]
    %v1087 = vld [vmem:[#allocation11 + $0x730] sm:$0xff]
    %v1088 = vld [vmem:[#allocation11 + $0x738] sm:$0xff]
    %v1089 = vld [vmem:[#allocation11 + $0x740] sm:$0xff]
    %v1090 = vld [vmem:[#allocation11 + $0x748] sm:$0xff]
    %v1091 = vld [vmem:[#allocation11 + $0x750] sm:$0xff]
    %v1092 = vld [vmem:[#allocation11 + $0x758] sm:$0xff]
    %v1093 = vld [vmem:[#allocation11 + $0x760] sm:$0xff]
    %v1094 = vld [vmem:[#allocation11 + $0x768] sm:$0xff]
    %v1095 = vld [vmem:[#allocation11 + $0x770] sm:$0xff]
    %v1096 = vld [vmem:[#allocation11 + $0x778] sm:$0xff]
    %v1097 = vld [vmem:[#allocation11 + $0x780] sm:$0xff]
    %v1098 = vld [vmem:[#allocation11 + $0x788] sm:$0xff]
    %v1099 = vld [vmem:[#allocation11 + $0x790] sm:$0xff]
    %v1100 = vld [vmem:[#allocation11 + $0x798] sm:$0xff]
    %v1101 = vld [vmem:[#allocation11 + $0x7a0] sm:$0xff]
    %v1102 = vld [vmem:[#allocation11 + $0x7a8] sm:$0xff]
    %v1103 = vld [vmem:[#allocation11 + $0x7b0] sm:$0xff]
    %v1104 = vld [vmem:[#allocation11 + $0x7b8] sm:$0xff]
    %v1105 = vld [vmem:[#allocation11 + $0x7c0] sm:$0xff]
    %v1106 = vld [vmem:[#allocation11 + $0x7c8] sm:$0xff]
    %v1107 = vld [vmem:[#allocation11 + $0x7d0] sm:$0xff]
    %v1108 = vld [vmem:[#allocation11 + $0x7d8] sm:$0xff]
    %v1109 = vld [vmem:[#allocation11 + $0x7e0] sm:$0xff]
    %v1110 = vld [vmem:[#allocation11 + $0x7e8] sm:$0xff]
    %v1111 = vld [vmem:[#allocation11 + $0x7f0] sm:$0xff]
    %v1112 = vld [vmem:[#allocation11 + $0x7f8] sm:$0xff]
    %v1369 = vunpack.c.l.b16 %v857
    %v1370 = vunpack.c.h.b16 %v857
    %v1371 = vunpack.c.l.b16 %v858
    %v1372 = vunpack.c.h.b16 %v858
    %v1373 = vunpack.c.l.b16 %v859
    %v1374 = vunpack.c.h.b16 %v859
    %v1375 = vunpack.c.l.b16 %v860
    %v1376 = vunpack.c.h.b16 %v860
    %v1377 = vunpack.c.l.b16 %v861
    %v1378 = vunpack.c.h.b16 %v861
    %v1379 = vunpack.c.l.b16 %v862
    %v1380 = vunpack.c.h.b16 %v862
    %v1381 = vunpack.c.l.b16 %v863
    %v1382 = vunpack.c.h.b16 %v863
    %v1383 = vunpack.c.l.b16 %v864
    %v1384 = vunpack.c.h.b16 %v864
    %v1385 = vunpack.c.l.b16 %v865
    %v1386 = vunpack.c.h.b16 %v865
    %v1387 = vunpack.c.l.b16 %v866
    %v1388 = vunpack.c.h.b16 %v866
    %v1389 = vunpack.c.l.b16 %v867
    %v1390 = vunpack.c.h.b16 %v867
    %v1391 = vunpack.c.l.b16 %v868
    %v1392 = vunpack.c.h.b16 %v868
    %v1393 = vunpack.c.l.b16 %v869
    %v1394 = vunpack.c.h.b16 %v869
    %v1395 = vunpack.c.l.b16 %v870
    %v1396 = vunpack.c.h.b16 %v870
    %v1397 = vunpack.c.l.b16 %v871
    %v1398 = vunpack.c.h.b16 %v871
    %v1399 = vunpack.c.l.b16 %v872
    %v1400 = vunpack.c.h.b16 %v872
    %v1401 = vunpack.c.l.b16 %v873
    %v1402 = vunpack.c.h.b16 %v873
    %v1403 = vunpack.c.l.b16 %v874
    %v1404 = vunpack.c.h.b16 %v874
    %v1405 = vunpack.c.l.b16 %v875
    %v1406 = vunpack.c.h.b16 %v875
    %v1407 = vunpack.c.l.b16 %v876
    %v1408 = vunpack.c.h.b16 %v876
    %v1409 = vunpack.c.l.b16 %v877
    %v1410 = vunpack.c.h.b16 %v877
    %v1411 = vunpack.c.l.b16 %v878
    %v1412 = vunpack.c.h.b16 %v878
    %v1413 = vunpack.c.l.b16 %v879
    %v1414 = vunpack.c.h.b16 %v879
    %v1415 = vunpack.c.l.b16 %v880
    %v1416 = vunpack.c.h.b16 %v880
    %v1417 = vunpack.c.l.b16 %v881
    %v1418 = vunpack.c.h.b16 %v881
    %v1419 = vunpack.c.l.b16 %v882
    %v1420 = vunpack.c.h.b16 %v882
    %v1421 = vunpack.c.l.b16 %v883
    %v1422 = vunpack.c.h.b16 %v883
    %v1423 = vunpack.c.l.b16 %v884
    %v1424 = vunpack.c.h.b16 %v884
    %v1425 = vunpack.c.l.b16 %v885
    %v1426 = vunpack.c.h.b16 %v885
    %v1427 = vunpack.c.l.b16 %v886
    %v1428 = vunpack.c.h.b16 %v886
    %v1429 = vunpack.c.l.b16 %v887
    %v1430 = vunpack.c.h.b16 %v887
    %v1431 = vunpack.c.l.b16 %v888
    %v1432 = vunpack.c.h.b16 %v888
    %v1433 = vunpack.c.l.b16 %v889
    %v1434 = vunpack.c.h.b16 %v889
    %v1435 = vunpack.c.l.b16 %v890
    %v1436 = vunpack.c.h.b16 %v890
    %v1437 = vunpack.c.l.b16 %v891
    %v1438 = vunpack.c.h.b16 %v891
    %v1439 = vunpack.c.l.b16 %v892
    %v1440 = vunpack.c.h.b16 %v892
    %v1441 = vunpack.c.l.b16 %v893
    %v1442 = vunpack.c.h.b16 %v893
    %v1443 = vunpack.c.l.b16 %v894
    %v1444 = vunpack.c.h.b16 %v894
    %v1445 = vunpack.c.l.b16 %v895
    %v1446 = vunpack.c.h.b16 %v895
    %v1447 = vunpack.c.l.b16 %v896
    %v1448 = vunpack.c.h.b16 %v896
    %v1449 = vunpack.c.l.b16 %v897
    %v1450 = vunpack.c.h.b16 %v897
    %v1451 = vunpack.c.l.b16 %v898
    %v1452 = vunpack.c.h.b16 %v898
    %v1453 = vunpack.c.l.b16 %v899
    %v1454 = vunpack.c.h.b16 %v899
    %v1455 = vunpack.c.l.b16 %v900
    %v1456 = vunpack.c.h.b16 %v900
    %v1457 = vunpack.c.l.b16 %v901
    %v1458 = vunpack.c.h.b16 %v901
    %v1459 = vunpack.c.l.b16 %v902
    %v1460 = vunpack.c.h.b16 %v902
    %v1461 = vunpack.c.l.b16 %v903
    %v1462 = vunpack.c.h.b16 %v903
    %v1463 = vunpack.c.l.b16 %v904
    %v1464 = vunpack.c.h.b16 %v904
    %v1465 = vunpack.c.l.b16 %v905
    %v1466 = vunpack.c.h.b16 %v905
    %v1467 = vunpack.c.l.b16 %v906
    %v1468 = vunpack.c.h.b16 %v906
    %v1469 = vunpack.c.l.b16 %v907
    %v1470 = vunpack.c.h.b16 %v907
    %v1471 = vunpack.c.l.b16 %v908
    %v1472 = vunpack.c.h.b16 %v908
    %v1473 = vunpack.c.l.b16 %v909
    %v1474 = vunpack.c.h.b16 %v909
    %v1475 = vunpack.c.l.b16 %v910
    %v1476 = vunpack.c.h.b16 %v910
    %v1477 = vunpack.c.l.b16 %v911
    %v1478 = vunpack.c.h.b16 %v911
    %v1479 = vunpack.c.l.b16 %v912
    %v1480 = vunpack.c.h.b16 %v912
    %v1481 = vunpack.c.l.b16 %v913
    %v1482 = vunpack.c.h.b16 %v913
    %v1483 = vunpack.c.l.b16 %v914
    %v1484 = vunpack.c.h.b16 %v914
    %v1485 = vunpack.c.l.b16 %v915
    %v1486 = vunpack.c.h.b16 %v915
    %v1487 = vunpack.c.l.b16 %v916
    %v1488 = vunpack.c.h.b16 %v916
    %v1489 = vunpack.c.l.b16 %v917
    %v1490 = vunpack.c.h.b16 %v917
    %v1491 = vunpack.c.l.b16 %v918
    %v1492 = vunpack.c.h.b16 %v918
    %v1493 = vunpack.c.l.b16 %v919
    %v1494 = vunpack.c.h.b16 %v919
    %v1495 = vunpack.c.l.b16 %v920
    %v1496 = vunpack.c.h.b16 %v920
    %v1497 = vunpack.c.l.b16 %v921
    %v1498 = vunpack.c.h.b16 %v921
    %v1499 = vunpack.c.l.b16 %v922
    %v1500 = vunpack.c.h.b16 %v922
    %v1501 = vunpack.c.l.b16 %v923
    %v1502 = vunpack.c.h.b16 %v923
    %v1503 = vunpack.c.l.b16 %v924
    %v1504 = vunpack.c.h.b16 %v924
    %v1505 = vunpack.c.l.b16 %v925
    %v1506 = vunpack.c.h.b16 %v925
    %v1507 = vunpack.c.l.b16 %v926
    %v1508 = vunpack.c.h.b16 %v926
    %v1509 = vunpack.c.l.b16 %v927
    %v1510 = vunpack.c.h.b16 %v927
    %v1511 = vunpack.c.l.b16 %v928
    %v1512 = vunpack.c.h.b16 %v928
    %v1513 = vunpack.c.l.b16 %v929
    %v1514 = vunpack.c.h.b16 %v929
    %v1515 = vunpack.c.l.b16 %v930
    %v1516 = vunpack.c.h.b16 %v930
    %v1517 = vunpack.c.l.b16 %v931
    %v1518 = vunpack.c.h.b16 %v931
    %v1519 = vunpack.c.l.b16 %v932
    %v1520 = vunpack.c.h.b16 %v932
    %v1521 = vunpack.c.l.b16 %v933
    %v1522 = vunpack.c.h.b16 %v933
    %v1523 = vunpack.c.l.b16 %v934
    %v1524 = vunpack.c.h.b16 %v934
    %v1525 = vunpack.c.l.b16 %v935
    %v1526 = vunpack.c.h.b16 %v935
    %v1527 = vunpack.c.l.b16 %v936
    %v1528 = vunpack.c.h.b16 %v936
    %v1529 = vunpack.c.l.b16 %v937
    %v1530 = vunpack.c.h.b16 %v937
    %v1531 = vunpack.c.l.b16 %v938
    %v1532 = vunpack.c.h.b16 %v938
    %v1533 = vunpack.c.l.b16 %v939
    %v1534 = vunpack.c.h.b16 %v939
    %v1535 = vunpack.c.l.b16 %v940
    %v1536 = vunpack.c.h.b16 %v940
    %v1537 = vunpack.c.l.b16 %v941
    %v1538 = vunpack.c.h.b16 %v941
    %v1539 = vunpack.c.l.b16 %v942
    %v1540 = vunpack.c.h.b16 %v942
    %v1541 = vunpack.c.l.b16 %v943
    %v1542 = vunpack.c.h.b16 %v943
    %v1543 = vunpack.c.l.b16 %v944
    %v1544 = vunpack.c.h.b16 %v944
    %v1545 = vunpack.c.l.b16 %v945
    %v1546 = vunpack.c.h.b16 %v945
    %v1547 = vunpack.c.l.b16 %v946
    %v1548 = vunpack.c.h.b16 %v946
    %v1549 = vunpack.c.l.b16 %v947
    %v1550 = vunpack.c.h.b16 %v947
    %v1551 = vunpack.c.l.b16 %v948
    %v1552 = vunpack.c.h.b16 %v948
    %v1553 = vunpack.c.l.b16 %v949
    %v1554 = vunpack.c.h.b16 %v949
    %v1555 = vunpack.c.l.b16 %v950
    %v1556 = vunpack.c.h.b16 %v950
    %v1557 = vunpack.c.l.b16 %v951
    %v1558 = vunpack.c.h.b16 %v951
    %v1559 = vunpack.c.l.b16 %v952
    %v1560 = vunpack.c.h.b16 %v952
    %v1561 = vunpack.c.l.b16 %v953
    %v1562 = vunpack.c.h.b16 %v953
    %v1563 = vunpack.c.l.b16 %v954
    %v1564 = vunpack.c.h.b16 %v954
    %v1565 = vunpack.c.l.b16 %v955
    %v1566 = vunpack.c.h.b16 %v955
    %v1567 = vunpack.c.l.b16 %v956
    %v1568 = vunpack.c.h.b16 %v956
    %v1569 = vunpack.c.l.b16 %v957
    %v1570 = vunpack.c.h.b16 %v957
    %v1571 = vunpack.c.l.b16 %v958
    %v1572 = vunpack.c.h.b16 %v958
    %v1573 = vunpack.c.l.b16 %v959
    %v1574 = vunpack.c.h.b16 %v959
    %v1575 = vunpack.c.l.b16 %v960
    %v1576 = vunpack.c.h.b16 %v960
    %v1577 = vunpack.c.l.b16 %v961
    %v1578 = vunpack.c.h.b16 %v961
    %v1579 = vunpack.c.l.b16 %v962
    %v1580 = vunpack.c.h.b16 %v962
    %v1581 = vunpack.c.l.b16 %v963
    %v1582 = vunpack.c.h.b16 %v963
    %v1583 = vunpack.c.l.b16 %v964
    %v1584 = vunpack.c.h.b16 %v964
    %v1585 = vunpack.c.l.b16 %v965
    %v1586 = vunpack.c.h.b16 %v965
    %v1587 = vunpack.c.l.b16 %v966
    %v1588 = vunpack.c.h.b16 %v966
    %v1589 = vunpack.c.l.b16 %v967
    %v1590 = vunpack.c.h.b16 %v967
    %v1591 = vunpack.c.l.b16 %v968
    %v1592 = vunpack.c.h.b16 %v968
    %v1593 = vunpack.c.l.b16 %v969
    %v1594 = vunpack.c.h.b16 %v969
    %v1595 = vunpack.c.l.b16 %v970
    %v1596 = vunpack.c.h.b16 %v970
    %v1597 = vunpack.c.l.b16 %v971
    %v1598 = vunpack.c.h.b16 %v971
    %v1599 = vunpack.c.l.b16 %v972
    %v1600 = vunpack.c.h.b16 %v972
    %v1601 = vunpack.c.l.b16 %v973
    %v1602 = vunpack.c.h.b16 %v973
    %v1603 = vunpack.c.l.b16 %v974
    %v1604 = vunpack.c.h.b16 %v974
    %v1605 = vunpack.c.l.b16 %v975
    %v1606 = vunpack.c.h.b16 %v975
    %v1607 = vunpack.c.l.b16 %v976
    %v1608 = vunpack.c.h.b16 %v976
    %v1609 = vunpack.c.l.b16 %v977
    %v1610 = vunpack.c.h.b16 %v977
    %v1611 = vunpack.c.l.b16 %v978
    %v1612 = vunpack.c.h.b16 %v978
    %v1613 = vunpack.c.l.b16 %v979
    %v1614 = vunpack.c.h.b16 %v979
    %v1615 = vunpack.c.l.b16 %v980
    %v1616 = vunpack.c.h.b16 %v980
    %v1617 = vunpack.c.l.b16 %v981
    %v1618 = vunpack.c.h.b16 %v981
    %v1619 = vunpack.c.l.b16 %v982
    %v1620 = vunpack.c.h.b16 %v982
    %v1621 = vunpack.c.l.b16 %v983
    %v1622 = vunpack.c.h.b16 %v983
    %v1623 = vunpack.c.l.b16 %v984
    %v1624 = vunpack.c.h.b16 %v984
    %v1625 = vunpack.c.l.b16 %v985
    %v1626 = vunpack.c.h.b16 %v985
    %v1627 = vunpack.c.l.b16 %v986
    %v1628 = vunpack.c.h.b16 %v986
    %v1629 = vunpack.c.l.b16 %v987
    %v1630 = vunpack.c.h.b16 %v987
    %v1631 = vunpack.c.l.b16 %v988
    %v1632 = vunpack.c.h.b16 %v988
    %v1633 = vunpack.c.l.b16 %v989
    %v1634 = vunpack.c.h.b16 %v989
    %v1635 = vunpack.c.l.b16 %v990
    %v1636 = vunpack.c.h.b16 %v990
    %v1637 = vunpack.c.l.b16 %v991
    %v1638 = vunpack.c.h.b16 %v991
    %v1639 = vunpack.c.l.b16 %v992
    %v1640 = vunpack.c.h.b16 %v992
    %v1641 = vunpack.c.l.b16 %v993
    %v1642 = vunpack.c.h.b16 %v993
    %v1643 = vunpack.c.l.b16 %v994
    %v1644 = vunpack.c.h.b16 %v994
    %v1645 = vunpack.c.l.b16 %v995
    %v1646 = vunpack.c.h.b16 %v995
    %v1647 = vunpack.c.l.b16 %v996
    %v1648 = vunpack.c.h.b16 %v996
    %v1649 = vunpack.c.l.b16 %v997
    %v1650 = vunpack.c.h.b16 %v997
    %v1651 = vunpack.c.l.b16 %v998
    %v1652 = vunpack.c.h.b16 %v998
    %v1653 = vunpack.c.l.b16 %v999
    %v1654 = vunpack.c.h.b16 %v999
    %v1655 = vunpack.c.l.b16 %v1000
    %v1656 = vunpack.c.h.b16 %v1000
    %v1657 = vunpack.c.l.b16 %v1001
    %v1658 = vunpack.c.h.b16 %v1001
    %v1659 = vunpack.c.l.b16 %v1002
    %v1660 = vunpack.c.h.b16 %v1002
    %v1661 = vunpack.c.l.b16 %v1003
    %v1662 = vunpack.c.h.b16 %v1003
    %v1663 = vunpack.c.l.b16 %v1004
    %v1664 = vunpack.c.h.b16 %v1004
    %v1665 = vunpack.c.l.b16 %v1005
    %v1666 = vunpack.c.h.b16 %v1005
    %v1667 = vunpack.c.l.b16 %v1006
    %v1668 = vunpack.c.h.b16 %v1006
    %v1669 = vunpack.c.l.b16 %v1007
    %v1670 = vunpack.c.h.b16 %v1007
    %v1671 = vunpack.c.l.b16 %v1008
    %v1672 = vunpack.c.h.b16 %v1008
    %v1673 = vunpack.c.l.b16 %v1009
    %v1674 = vunpack.c.h.b16 %v1009
    %v1675 = vunpack.c.l.b16 %v1010
    %v1676 = vunpack.c.h.b16 %v1010
    %v1677 = vunpack.c.l.b16 %v1011
    %v1678 = vunpack.c.h.b16 %v1011
    %v1679 = vunpack.c.l.b16 %v1012
    %v1680 = vunpack.c.h.b16 %v1012
    %v1681 = vunpack.c.l.b16 %v1013
    %v1682 = vunpack.c.h.b16 %v1013
    %v1683 = vunpack.c.l.b16 %v1014
    %v1684 = vunpack.c.h.b16 %v1014
    %v1685 = vunpack.c.l.b16 %v1015
    %v1686 = vunpack.c.h.b16 %v1015
    %v1687 = vunpack.c.l.b16 %v1016
    %v1688 = vunpack.c.h.b16 %v1016
    %v1689 = vunpack.c.l.b16 %v1017
    %v1690 = vunpack.c.h.b16 %v1017
    %v1691 = vunpack.c.l.b16 %v1018
    %v1692 = vunpack.c.h.b16 %v1018
    %v1693 = vunpack.c.l.b16 %v1019
    %v1694 = vunpack.c.h.b16 %v1019
    %v1695 = vunpack.c.l.b16 %v1020
    %v1696 = vunpack.c.h.b16 %v1020
    %v1697 = vunpack.c.l.b16 %v1021
    %v1698 = vunpack.c.h.b16 %v1021
    %v1699 = vunpack.c.l.b16 %v1022
    %v1700 = vunpack.c.h.b16 %v1022
    %v1701 = vunpack.c.l.b16 %v1023
    %v1702 = vunpack.c.h.b16 %v1023
    %v1703 = vunpack.c.l.b16 %v1024
    %v1704 = vunpack.c.h.b16 %v1024
    %v1705 = vunpack.c.l.b16 %v1025
    %v1706 = vunpack.c.h.b16 %v1025
    %v1707 = vunpack.c.l.b16 %v1026
    %v1708 = vunpack.c.h.b16 %v1026
    %v1709 = vunpack.c.l.b16 %v1027
    %v1710 = vunpack.c.h.b16 %v1027
    %v1711 = vunpack.c.l.b16 %v1028
    %v1712 = vunpack.c.h.b16 %v1028
    %v1713 = vunpack.c.l.b16 %v1029
    %v1714 = vunpack.c.h.b16 %v1029
    %v1715 = vunpack.c.l.b16 %v1030
    %v1716 = vunpack.c.h.b16 %v1030
    %v1717 = vunpack.c.l.b16 %v1031
    %v1718 = vunpack.c.h.b16 %v1031
    %v1719 = vunpack.c.l.b16 %v1032
    %v1720 = vunpack.c.h.b16 %v1032
    %v1721 = vunpack.c.l.b16 %v1033
    %v1722 = vunpack.c.h.b16 %v1033
    %v1723 = vunpack.c.l.b16 %v1034
    %v1724 = vunpack.c.h.b16 %v1034
    %v1725 = vunpack.c.l.b16 %v1035
    %v1726 = vunpack.c.h.b16 %v1035
    %v1727 = vunpack.c.l.b16 %v1036
    %v1728 = vunpack.c.h.b16 %v1036
    %v1729 = vunpack.c.l.b16 %v1037
    %v1730 = vunpack.c.h.b16 %v1037
    %v1731 = vunpack.c.l.b16 %v1038
    %v1732 = vunpack.c.h.b16 %v1038
    %v1733 = vunpack.c.l.b16 %v1039
    %v1734 = vunpack.c.h.b16 %v1039
    %v1735 = vunpack.c.l.b16 %v1040
    %v1736 = vunpack.c.h.b16 %v1040
    %v1737 = vunpack.c.l.b16 %v1041
    %v1738 = vunpack.c.h.b16 %v1041
    %v1739 = vunpack.c.l.b16 %v1042
    %v1740 = vunpack.c.h.b16 %v1042
    %v1741 = vunpack.c.l.b16 %v1043
    %v1742 = vunpack.c.h.b16 %v1043
    %v1743 = vunpack.c.l.b16 %v1044
    %v1744 = vunpack.c.h.b16 %v1044
    %v1745 = vunpack.c.l.b16 %v1045
    %v1746 = vunpack.c.h.b16 %v1045
    %v1747 = vunpack.c.l.b16 %v1046
    %v1748 = vunpack.c.h.b16 %v1046
    %v1749 = vunpack.c.l.b16 %v1047
    %v1750 = vunpack.c.h.b16 %v1047
    %v1751 = vunpack.c.l.b16 %v1048
    %v1752 = vunpack.c.h.b16 %v1048
    %v1753 = vunpack.c.l.b16 %v1049
    %v1754 = vunpack.c.h.b16 %v1049
    %v1755 = vunpack.c.l.b16 %v1050
    %v1756 = vunpack.c.h.b16 %v1050
    %v1757 = vunpack.c.l.b16 %v1051
    %v1758 = vunpack.c.h.b16 %v1051
    %v1759 = vunpack.c.l.b16 %v1052
    %v1760 = vunpack.c.h.b16 %v1052
    %v1761 = vunpack.c.l.b16 %v1053
    %v1762 = vunpack.c.h.b16 %v1053
    %v1763 = vunpack.c.l.b16 %v1054
    %v1764 = vunpack.c.h.b16 %v1054
    %v1765 = vunpack.c.l.b16 %v1055
    %v1766 = vunpack.c.h.b16 %v1055
    %v1767 = vunpack.c.l.b16 %v1056
    %v1768 = vunpack.c.h.b16 %v1056
    %v1769 = vunpack.c.l.b16 %v1057
    %v1770 = vunpack.c.h.b16 %v1057
    %v1771 = vunpack.c.l.b16 %v1058
    %v1772 = vunpack.c.h.b16 %v1058
    %v1773 = vunpack.c.l.b16 %v1059
    %v1774 = vunpack.c.h.b16 %v1059
    %v1775 = vunpack.c.l.b16 %v1060
    %v1776 = vunpack.c.h.b16 %v1060
    %v1777 = vunpack.c.l.b16 %v1061
    %v1778 = vunpack.c.h.b16 %v1061
    %v1779 = vunpack.c.l.b16 %v1062
    %v1780 = vunpack.c.h.b16 %v1062
    %v1781 = vunpack.c.l.b16 %v1063
    %v1782 = vunpack.c.h.b16 %v1063
    %v1783 = vunpack.c.l.b16 %v1064
    %v1784 = vunpack.c.h.b16 %v1064
    %v1785 = vunpack.c.l.b16 %v1065
    %v1786 = vunpack.c.h.b16 %v1065
    %v1787 = vunpack.c.l.b16 %v1066
    %v1788 = vunpack.c.h.b16 %v1066
    %v1789 = vunpack.c.l.b16 %v1067
    %v1790 = vunpack.c.h.b16 %v1067
    %v1791 = vunpack.c.l.b16 %v1068
    %v1792 = vunpack.c.h.b16 %v1068
    %v1793 = vunpack.c.l.b16 %v1069
    %v1794 = vunpack.c.h.b16 %v1069
    %v1795 = vunpack.c.l.b16 %v1070
    %v1796 = vunpack.c.h.b16 %v1070
    %v1797 = vunpack.c.l.b16 %v1071
    %v1798 = vunpack.c.h.b16 %v1071
    %v1799 = vunpack.c.l.b16 %v1072
    %v1800 = vunpack.c.h.b16 %v1072
    %v1801 = vunpack.c.l.b16 %v1073
    %v1802 = vunpack.c.h.b16 %v1073
    %v1803 = vunpack.c.l.b16 %v1074
    %v1804 = vunpack.c.h.b16 %v1074
    %v1805 = vunpack.c.l.b16 %v1075
    %v1806 = vunpack.c.h.b16 %v1075
    %v1807 = vunpack.c.l.b16 %v1076
    %v1808 = vunpack.c.h.b16 %v1076
    %v1809 = vunpack.c.l.b16 %v1077
    %v1810 = vunpack.c.h.b16 %v1077
    %v1811 = vunpack.c.l.b16 %v1078
    %v1812 = vunpack.c.h.b16 %v1078
    %v1813 = vunpack.c.l.b16 %v1079
    %v1814 = vunpack.c.h.b16 %v1079
    %v1815 = vunpack.c.l.b16 %v1080
    %v1816 = vunpack.c.h.b16 %v1080
    %v1817 = vunpack.c.l.b16 %v1081
    %v1818 = vunpack.c.h.b16 %v1081
    %v1819 = vunpack.c.l.b16 %v1082
    %v1820 = vunpack.c.h.b16 %v1082
    %v1821 = vunpack.c.l.b16 %v1083
    %v1822 = vunpack.c.h.b16 %v1083
    %v1823 = vunpack.c.l.b16 %v1084
    %v1824 = vunpack.c.h.b16 %v1084
    %v1825 = vunpack.c.l.b16 %v1085
    %v1826 = vunpack.c.h.b16 %v1085
    %v1827 = vunpack.c.l.b16 %v1086
    %v1828 = vunpack.c.h.b16 %v1086
    %v1829 = vunpack.c.l.b16 %v1087
    %v1830 = vunpack.c.h.b16 %v1087
    %v1831 = vunpack.c.l.b16 %v1088
    %v1832 = vunpack.c.h.b16 %v1088
    %v1833 = vunpack.c.l.b16 %v1089
    %v1834 = vunpack.c.h.b16 %v1089
    %v1835 = vunpack.c.l.b16 %v1090
    %v1836 = vunpack.c.h.b16 %v1090
    %v1837 = vunpack.c.l.b16 %v1091
    %v1838 = vunpack.c.h.b16 %v1091
    %v1839 = vunpack.c.l.b16 %v1092
    %v1840 = vunpack.c.h.b16 %v1092
    %v1841 = vunpack.c.l.b16 %v1093
    %v1842 = vunpack.c.h.b16 %v1093
    %v1843 = vunpack.c.l.b16 %v1094
    %v1844 = vunpack.c.h.b16 %v1094
    %v1845 = vunpack.c.l.b16 %v1095
    %v1846 = vunpack.c.h.b16 %v1095
    %v1847 = vunpack.c.l.b16 %v1096
    %v1848 = vunpack.c.h.b16 %v1096
    %v1849 = vunpack.c.l.b16 %v1097
    %v1850 = vunpack.c.h.b16 %v1097
    %v1851 = vunpack.c.l.b16 %v1098
    %v1852 = vunpack.c.h.b16 %v1098
    %v1853 = vunpack.c.l.b16 %v1099
    %v1854 = vunpack.c.h.b16 %v1099
    %v1855 = vunpack.c.l.b16 %v1100
    %v1856 = vunpack.c.h.b16 %v1100
    %v1857 = vunpack.c.l.b16 %v1101
    %v1858 = vunpack.c.h.b16 %v1101
    %v1859 = vunpack.c.l.b16 %v1102
    %v1860 = vunpack.c.h.b16 %v1102
    %v1861 = vunpack.c.l.b16 %v1103
    %v1862 = vunpack.c.h.b16 %v1103
    %v1863 = vunpack.c.l.b16 %v1104
    %v1864 = vunpack.c.h.b16 %v1104
    %v1865 = vunpack.c.l.b16 %v1105
    %v1866 = vunpack.c.h.b16 %v1105
    %v1867 = vunpack.c.l.b16 %v1106
    %v1868 = vunpack.c.h.b16 %v1106
    %v1869 = vunpack.c.l.b16 %v1107
    %v1870 = vunpack.c.h.b16 %v1107
    %v1871 = vunpack.c.l.b16 %v1108
    %v1872 = vunpack.c.h.b16 %v1108
    %v1873 = vunpack.c.l.b16 %v1109
    %v1874 = vunpack.c.h.b16 %v1109
    %v1875 = vunpack.c.l.b16 %v1110
    %v1876 = vunpack.c.h.b16 %v1110
    %v1877 = vunpack.c.l.b16 %v1111
    %v1878 = vunpack.c.h.b16 %v1111
    %v1879 = vunpack.c.l.b16 %v1112
    %v1880 = vunpack.c.h.b16 %v1112
    %v1881 = vpack.c.b16 %v1377, %v1369
    %v1882 = vpack.c.b16 %v1378, %v1370
    %v1883 = vpack.c.b16 %v1379, %v1371
    %v1884 = vpack.c.b16 %v1380, %v1372
    %v1885 = vpack.c.b16 %v1381, %v1373
    %v1886 = vpack.c.b16 %v1382, %v1374
    %v1887 = vpack.c.b16 %v1383, %v1375
    %v1888 = vpack.c.b16 %v1384, %v1376
    %v1889 = vpack.c.b16 %v1393, %v1385
    %v1890 = vpack.c.b16 %v1394, %v1386
    %v1891 = vpack.c.b16 %v1395, %v1387
    %v1892 = vpack.c.b16 %v1396, %v1388
    %v1893 = vpack.c.b16 %v1397, %v1389
    %v1894 = vpack.c.b16 %v1398, %v1390
    %v1895 = vpack.c.b16 %v1399, %v1391
    %v1896 = vpack.c.b16 %v1400, %v1392
    %v1897 = vpack.c.b16 %v1409, %v1401
    %v1898 = vpack.c.b16 %v1410, %v1402
    %v1899 = vpack.c.b16 %v1411, %v1403
    %v1900 = vpack.c.b16 %v1412, %v1404
    %v1901 = vpack.c.b16 %v1413, %v1405
    %v1902 = vpack.c.b16 %v1414, %v1406
    %v1903 = vpack.c.b16 %v1415, %v1407
    %v1904 = vpack.c.b16 %v1416, %v1408
    %v1905 = vpack.c.b16 %v1425, %v1417
    %v1906 = vpack.c.b16 %v1426, %v1418
    %v1907 = vpack.c.b16 %v1427, %v1419
    %v1908 = vpack.c.b16 %v1428, %v1420
    %v1909 = vpack.c.b16 %v1429, %v1421
    %v1910 = vpack.c.b16 %v1430, %v1422
    %v1911 = vpack.c.b16 %v1431, %v1423
    %v1912 = vpack.c.b16 %v1432, %v1424
    %v1913 = vpack.c.b16 %v1441, %v1433
    %v1914 = vpack.c.b16 %v1442, %v1434
    %v1915 = vpack.c.b16 %v1443, %v1435
    %v1916 = vpack.c.b16 %v1444, %v1436
    %v1917 = vpack.c.b16 %v1445, %v1437
    %v1918 = vpack.c.b16 %v1446, %v1438
    %v1919 = vpack.c.b16 %v1447, %v1439
    %v1920 = vpack.c.b16 %v1448, %v1440
    %v1921 = vpack.c.b16 %v1457, %v1449
    %v1922 = vpack.c.b16 %v1458, %v1450
    %v1923 = vpack.c.b16 %v1459, %v1451
    %v1924 = vpack.c.b16 %v1460, %v1452
    %v1925 = vpack.c.b16 %v1461, %v1453
    %v1926 = vpack.c.b16 %v1462, %v1454
    %v1927 = vpack.c.b16 %v1463, %v1455
    %v1928 = vpack.c.b16 %v1464, %v1456
    %v1929 = vpack.c.b16 %v1473, %v1465
    %v1930 = vpack.c.b16 %v1474, %v1466
    %v1931 = vpack.c.b16 %v1475, %v1467
    %v1932 = vpack.c.b16 %v1476, %v1468
    %v1933 = vpack.c.b16 %v1477, %v1469
    %v1934 = vpack.c.b16 %v1478, %v1470
    %v1935 = vpack.c.b16 %v1479, %v1471
    %v1936 = vpack.c.b16 %v1480, %v1472
    %v1937 = vpack.c.b16 %v1489, %v1481
    %v1938 = vpack.c.b16 %v1490, %v1482
    %v1939 = vpack.c.b16 %v1491, %v1483
    %v1940 = vpack.c.b16 %v1492, %v1484
    %v1941 = vpack.c.b16 %v1493, %v1485
    %v1942 = vpack.c.b16 %v1494, %v1486
    %v1943 = vpack.c.b16 %v1495, %v1487
    %v1944 = vpack.c.b16 %v1496, %v1488
    %v1945 = vpack.c.b16 %v1505, %v1497
    %v1946 = vpack.c.b16 %v1506, %v1498
    %v1947 = vpack.c.b16 %v1507, %v1499
    %v1948 = vpack.c.b16 %v1508, %v1500
    %v1949 = vpack.c.b16 %v1509, %v1501
    %v1950 = vpack.c.b16 %v1510, %v1502
    %v1951 = vpack.c.b16 %v1511, %v1503
    %v1952 = vpack.c.b16 %v1512, %v1504
    %v1953 = vpack.c.b16 %v1521, %v1513
    %v1954 = vpack.c.b16 %v1522, %v1514
    %v1955 = vpack.c.b16 %v1523, %v1515
    %v1956 = vpack.c.b16 %v1524, %v1516
    %v1957 = vpack.c.b16 %v1525, %v1517
    %v1958 = vpack.c.b16 %v1526, %v1518
    %v1959 = vpack.c.b16 %v1527, %v1519
    %v1960 = vpack.c.b16 %v1528, %v1520
    %v1961 = vpack.c.b16 %v1537, %v1529
    %v1962 = vpack.c.b16 %v1538, %v1530
    %v1963 = vpack.c.b16 %v1539, %v1531
    %v1964 = vpack.c.b16 %v1540, %v1532
    %v1965 = vpack.c.b16 %v1541, %v1533
    %v1966 = vpack.c.b16 %v1542, %v1534
    %v1967 = vpack.c.b16 %v1543, %v1535
    %v1968 = vpack.c.b16 %v1544, %v1536
    %v1969 = vpack.c.b16 %v1553, %v1545
    %v1970 = vpack.c.b16 %v1554, %v1546
    %v1971 = vpack.c.b16 %v1555, %v1547
    %v1972 = vpack.c.b16 %v1556, %v1548
    %v1973 = vpack.c.b16 %v1557, %v1549
    %v1974 = vpack.c.b16 %v1558, %v1550
    %v1975 = vpack.c.b16 %v1559, %v1551
    %v1976 = vpack.c.b16 %v1560, %v1552
    %v1977 = vpack.c.b16 %v1569, %v1561
    %v1978 = vpack.c.b16 %v1570, %v1562
    %v1979 = vpack.c.b16 %v1571, %v1563
    %v1980 = vpack.c.b16 %v1572, %v1564
    %v1981 = vpack.c.b16 %v1573, %v1565
    %v1982 = vpack.c.b16 %v1574, %v1566
    %v1983 = vpack.c.b16 %v1575, %v1567
    %v1984 = vpack.c.b16 %v1576, %v1568
    %v1985 = vpack.c.b16 %v1585, %v1577
    %v1986 = vpack.c.b16 %v1586, %v1578
    %v1987 = vpack.c.b16 %v1587, %v1579
    %v1988 = vpack.c.b16 %v1588, %v1580
    %v1989 = vpack.c.b16 %v1589, %v1581
    %v1990 = vpack.c.b16 %v1590, %v1582
    %v1991 = vpack.c.b16 %v1591, %v1583
    %v1992 = vpack.c.b16 %v1592, %v1584
    %v1993 = vpack.c.b16 %v1601, %v1593
    %v1994 = vpack.c.b16 %v1602, %v1594
    %v1995 = vpack.c.b16 %v1603, %v1595
    %v1996 = vpack.c.b16 %v1604, %v1596
    %v1997 = vpack.c.b16 %v1605, %v1597
    %v1998 = vpack.c.b16 %v1606, %v1598
    %v1999 = vpack.c.b16 %v1607, %v1599
    %v2000 = vpack.c.b16 %v1608, %v1600
    %v2001 = vpack.c.b16 %v1617, %v1609
    %v2002 = vpack.c.b16 %v1618, %v1610
    %v2003 = vpack.c.b16 %v1619, %v1611
    %v2004 = vpack.c.b16 %v1620, %v1612
    %v2005 = vpack.c.b16 %v1621, %v1613
    %v2006 = vpack.c.b16 %v1622, %v1614
    %v2007 = vpack.c.b16 %v1623, %v1615
    %v2008 = vpack.c.b16 %v1624, %v1616
    %v2009 = vpack.c.b16 %v1633, %v1625
    %v2010 = vpack.c.b16 %v1634, %v1626
    %v2011 = vpack.c.b16 %v1635, %v1627
    %v2012 = vpack.c.b16 %v1636, %v1628
    %v2013 = vpack.c.b16 %v1637, %v1629
    %v2014 = vpack.c.b16 %v1638, %v1630
    %v2015 = vpack.c.b16 %v1639, %v1631
    %v2016 = vpack.c.b16 %v1640, %v1632
    %v2017 = vpack.c.b16 %v1649, %v1641
    %v2018 = vpack.c.b16 %v1650, %v1642
    %v2019 = vpack.c.b16 %v1651, %v1643
    %v2020 = vpack.c.b16 %v1652, %v1644
    %v2021 = vpack.c.b16 %v1653, %v1645
    %v2022 = vpack.c.b16 %v1654, %v1646
    %v2023 = vpack.c.b16 %v1655, %v1647
    %v2024 = vpack.c.b16 %v1656, %v1648
    %v2025 = vpack.c.b16 %v1665, %v1657
    %v2026 = vpack.c.b16 %v1666, %v1658
    %v2027 = vpack.c.b16 %v1667, %v1659
    %v2028 = vpack.c.b16 %v1668, %v1660
    %v2029 = vpack.c.b16 %v1669, %v1661
    %v2030 = vpack.c.b16 %v1670, %v1662
    %v2031 = vpack.c.b16 %v1671, %v1663
    %v2032 = vpack.c.b16 %v1672, %v1664
    %v2033 = vpack.c.b16 %v1681, %v1673
    %v2034 = vpack.c.b16 %v1682, %v1674
    %v2035 = vpack.c.b16 %v1683, %v1675
    %v2036 = vpack.c.b16 %v1684, %v1676
    %v2037 = vpack.c.b16 %v1685, %v1677
    %v2038 = vpack.c.b16 %v1686, %v1678
    %v2039 = vpack.c.b16 %v1687, %v1679
    %v2040 = vpack.c.b16 %v1688, %v1680
    %v2041 = vpack.c.b16 %v1697, %v1689
    %v2042 = vpack.c.b16 %v1698, %v1690
    %v2043 = vpack.c.b16 %v1699, %v1691
    %v2044 = vpack.c.b16 %v1700, %v1692
    %v2045 = vpack.c.b16 %v1701, %v1693
    %v2046 = vpack.c.b16 %v1702, %v1694
    %v2047 = vpack.c.b16 %v1703, %v1695
    %v2048 = vpack.c.b16 %v1704, %v1696
    %v2049 = vpack.c.b16 %v1713, %v1705
    %v2050 = vpack.c.b16 %v1714, %v1706
    %v2051 = vpack.c.b16 %v1715, %v1707
    %v2052 = vpack.c.b16 %v1716, %v1708
    %v2053 = vpack.c.b16 %v1717, %v1709
    %v2054 = vpack.c.b16 %v1718, %v1710
    %v2055 = vpack.c.b16 %v1719, %v1711
    %v2056 = vpack.c.b16 %v1720, %v1712
    %v2057 = vpack.c.b16 %v1729, %v1721
    %v2058 = vpack.c.b16 %v1730, %v1722
    %v2059 = vpack.c.b16 %v1731, %v1723
    %v2060 = vpack.c.b16 %v1732, %v1724
    %v2061 = vpack.c.b16 %v1733, %v1725
    %v2062 = vpack.c.b16 %v1734, %v1726
    %v2063 = vpack.c.b16 %v1735, %v1727
    %v2064 = vpack.c.b16 %v1736, %v1728
    %v2065 = vpack.c.b16 %v1745, %v1737
    %v2066 = vpack.c.b16 %v1746, %v1738
    %v2067 = vpack.c.b16 %v1747, %v1739
    %v2068 = vpack.c.b16 %v1748, %v1740
    %v2069 = vpack.c.b16 %v1749, %v1741
    %v2070 = vpack.c.b16 %v1750, %v1742
    %v2071 = vpack.c.b16 %v1751, %v1743
    %v2072 = vpack.c.b16 %v1752, %v1744
    %v2073 = vpack.c.b16 %v1761, %v1753
    %v2074 = vpack.c.b16 %v1762, %v1754
    %v2075 = vpack.c.b16 %v1763, %v1755
    %v2076 = vpack.c.b16 %v1764, %v1756
    %v2077 = vpack.c.b16 %v1765, %v1757
    %v2078 = vpack.c.b16 %v1766, %v1758
    %v2079 = vpack.c.b16 %v1767, %v1759
    %v2080 = vpack.c.b16 %v1768, %v1760
    %v2081 = vpack.c.b16 %v1777, %v1769
    %v2082 = vpack.c.b16 %v1778, %v1770
    %v2083 = vpack.c.b16 %v1779, %v1771
    %v2084 = vpack.c.b16 %v1780, %v1772
    %v2085 = vpack.c.b16 %v1781, %v1773
    %v2086 = vpack.c.b16 %v1782, %v1774
    %v2087 = vpack.c.b16 %v1783, %v1775
    %v2088 = vpack.c.b16 %v1784, %v1776
    %v2089 = vpack.c.b16 %v1793, %v1785
    %v2090 = vpack.c.b16 %v1794, %v1786
    %v2091 = vpack.c.b16 %v1795, %v1787
    %v2092 = vpack.c.b16 %v1796, %v1788
    %v2093 = vpack.c.b16 %v1797, %v1789
    %v2094 = vpack.c.b16 %v1798, %v1790
    %v2095 = vpack.c.b16 %v1799, %v1791
    %v2096 = vpack.c.b16 %v1800, %v1792
    %v2097 = vpack.c.b16 %v1809, %v1801
    %v2098 = vpack.c.b16 %v1810, %v1802
    %v2099 = vpack.c.b16 %v1811, %v1803
    %v2100 = vpack.c.b16 %v1812, %v1804
    %v2101 = vpack.c.b16 %v1813, %v1805
    %v2102 = vpack.c.b16 %v1814, %v1806
    %v2103 = vpack.c.b16 %v1815, %v1807
    %v2104 = vpack.c.b16 %v1816, %v1808
    %v2105 = vpack.c.b16 %v1825, %v1817
    %v2106 = vpack.c.b16 %v1826, %v1818
    %v2107 = vpack.c.b16 %v1827, %v1819
    %v2108 = vpack.c.b16 %v1828, %v1820
    %v2109 = vpack.c.b16 %v1829, %v1821
    %v2110 = vpack.c.b16 %v1830, %v1822
    %v2111 = vpack.c.b16 %v1831, %v1823
    %v2112 = vpack.c.b16 %v1832, %v1824
    %v2113 = vpack.c.b16 %v1841, %v1833
    %v2114 = vpack.c.b16 %v1842, %v1834
    %v2115 = vpack.c.b16 %v1843, %v1835
    %v2116 = vpack.c.b16 %v1844, %v1836
    %v2117 = vpack.c.b16 %v1845, %v1837
    %v2118 = vpack.c.b16 %v1846, %v1838
    %v2119 = vpack.c.b16 %v1847, %v1839
    %v2120 = vpack.c.b16 %v1848, %v1840
    %v2121 = vpack.c.b16 %v1857, %v1849
    %v2122 = vpack.c.b16 %v1858, %v1850
    %v2123 = vpack.c.b16 %v1859, %v1851
    %v2124 = vpack.c.b16 %v1860, %v1852
    %v2125 = vpack.c.b16 %v1861, %v1853
    %v2126 = vpack.c.b16 %v1862, %v1854
    %v2127 = vpack.c.b16 %v1863, %v1855
    %v2128 = vpack.c.b16 %v1864, %v1856
    %v2129 = vpack.c.b16 %v1873, %v1865
    %v2130 = vpack.c.b16 %v1874, %v1866
    %v2131 = vpack.c.b16 %v1875, %v1867
    %v2132 = vpack.c.b16 %v1876, %v1868
    %v2133 = vpack.c.b16 %v1877, %v1869
    %v2134 = vpack.c.b16 %v1878, %v1870
    %v2135 = vpack.c.b16 %v1879, %v1871
    %v2136 = vpack.c.b16 %v1880, %v1872
    %2393 = vmatprep.subr.bf16.mxu0 %v1938
    %2394 = vmatpush1.bf16.msra.mxu0 %v1937
    %2395 = vmatprep.subr.bf16.mxu0 %v1930
    %2396 = vmatpush1.bf16.msra.mxu0 %v1929
    %2397 = vmatprep.subr.bf16.mxu0 %v1922
    %2398 = vmatpush1.bf16.msra.mxu0 %v1921
    %2399 = vmatprep.subr.bf16.mxu0 %v1914
    %2400 = vmatpush1.bf16.msra.mxu0 %v1913
    %2401 = vmatprep.subr.bf16.mxu0 %v1906
    %2402 = vmatpush1.bf16.msra.mxu0 %v1905
    %2403 = vmatprep.subr.bf16.mxu0 %v1898
    %2404 = vmatpush1.bf16.msra.mxu0 %v1897
    %2405 = vmatprep.subr.bf16.mxu0 %v1890
    %2406 = vmatpush1.bf16.msra.mxu0 %v1889
    %2407 = vmatprep.subr.bf16.mxu0 %v1882
    %2408 = vmatpush1.bf16.msra.mxu0 %v1881
    %2409 = vmatprep.subr.bf16.mxu0 %v2002
    %2410 = vmatpush2.bf16.msra.mxu0 %v2001
    %2411 = vmatprep.subr.bf16.mxu0 %v1994
    %2412 = vmatpush2.bf16.msra.mxu0 %v1993
    %2413 = vmatprep.subr.bf16.mxu0 %v1986
    %2414 = vmatpush2.bf16.msra.mxu0 %v1985
    %2415 = vmatprep.subr.bf16.mxu0 %v1978
    %2416 = vmatpush2.bf16.msra.mxu0 %v1977
    %2417 = vmatprep.subr.bf16.mxu0 %v1970
    %2418 = vmatpush2.bf16.msra.mxu0 %v1969
    %2419 = vmatprep.subr.bf16.mxu0 %v1962
    %2420 = vmatpush2.bf16.msra.mxu0 %v1961
    %2421 = vmatprep.subr.bf16.mxu0 %v1954
    %2422 = vmatpush2.bf16.msra.mxu0 %v1953
    %2423 = vmatprep.subr.bf16.mxu0 %v1946
    %2424 = vmatpush2.bf16.msra.mxu0 %v1945
    %2425 = vmatprep.mubr.bf16.mxu0 %v854
    %2426 = vmatmul.mubr.bf16.gmra.mxu0 %v853
    %v2427 = vpop.f32.mrf.mxu0
    %v2428 = vadd.f32 0.0, %v2427
    %v2429 = vpop.f32.mrf.mxu0
    %v2430 = vadd.f32 0.0, %v2429
    %v2431 = vpop.f32.mrf.mxu0
    %v2432 = vpop.f32.mrf.mxu0
    %2433 = vdwg.mxu0
    %2434 = vmatprep.subr.bf16.mxu0 %v2066
    %2435 = vmatpush1.bf16.msra.mxu0 %v2065
    %2436 = vmatprep.subr.bf16.mxu0 %v2058
    %2437 = vmatpush1.bf16.msra.mxu0 %v2057
    %2438 = vmatprep.subr.bf16.mxu0 %v2050
    %2439 = vmatpush1.bf16.msra.mxu0 %v2049
    %2440 = vmatprep.subr.bf16.mxu0 %v2042
    %2441 = vmatpush1.bf16.msra.mxu0 %v2041
    %2442 = vmatprep.subr.bf16.mxu0 %v2034
    %2443 = vmatpush1.bf16.msra.mxu0 %v2033
    %2444 = vmatprep.subr.bf16.mxu0 %v2026
    %2445 = vmatpush1.bf16.msra.mxu0 %v2025
    %2446 = vmatprep.subr.bf16.mxu0 %v2018
    %2447 = vmatpush1.bf16.msra.mxu0 %v2017
    %2448 = vmatprep.subr.bf16.mxu0 %v2010
    %2449 = vmatpush1.bf16.msra.mxu0 %v2009
    %2450 = vmatprep.subr.bf16.mxu0 %v2130
    %2451 = vmatpush2.bf16.msra.mxu0 %v2129
    %2452 = vmatprep.subr.bf16.mxu0 %v2122
    %2453 = vmatpush2.bf16.msra.mxu0 %v2121
    %2454 = vmatprep.subr.bf16.mxu0 %v2114
    %2455 = vmatpush2.bf16.msra.mxu0 %v2113
    %2456 = vmatprep.subr.bf16.mxu0 %v2106
    %2457 = vmatpush2.bf16.msra.mxu0 %v2105
    %2458 = vmatprep.subr.bf16.mxu0 %v2098
    %2459 = vmatpush2.bf16.msra.mxu0 %v2097
    %2460 = vmatprep.subr.bf16.mxu0 %v2090
    %2461 = vmatpush2.bf16.msra.mxu0 %v2089
    %2462 = vmatprep.subr.bf16.mxu0 %v2082
    %2463 = vmatpush2.bf16.msra.mxu0 %v2081
    %2464 = vmatprep.subr.bf16.mxu0 %v2074
    %2465 = vmatpush2.bf16.msra.mxu0 %v2073
    %2466 = vmatprep.mubr.bf16.mxu0 %v856
    %2467 = vmatmul.mubr.bf16.gmra.mxu0 %v855
    %v2468 = vpop.f32.mrf.mxu0
    %v2469 = vadd.f32 %v2428, %v2468
    %v2470 = vpop.f32.mrf.mxu0
    %v2471 = vadd.f32 %v2430, %v2470
    %v2472 = vpop.f32.mrf.mxu0
    %v2473 = vpop.f32.mrf.mxu0
    %2474 = vdwg.mxu0
    %2475 = vmatprep.subr.bf16.mxu0 %v1940
    %2476 = vmatpush1.bf16.msra.mxu0 %v1939
    %2477 = vmatprep.subr.bf16.mxu0 %v1932
    %2478 = vmatpush1.bf16.msra.mxu0 %v1931
    %2479 = vmatprep.subr.bf16.mxu0 %v1924
    %2480 = vmatpush1.bf16.msra.mxu0 %v1923
    %2481 = vmatprep.subr.bf16.mxu0 %v1916
    %2482 = vmatpush1.bf16.msra.mxu0 %v1915
    %2483 = vmatprep.subr.bf16.mxu0 %v1908
    %2484 = vmatpush1.bf16.msra.mxu0 %v1907
    %2485 = vmatprep.subr.bf16.mxu0 %v1900
    %2486 = vmatpush1.bf16.msra.mxu0 %v1899
    %2487 = vmatprep.subr.bf16.mxu0 %v1892
    %2488 = vmatpush1.bf16.msra.mxu0 %v1891
    %2489 = vmatprep.subr.bf16.mxu0 %v1884
    %2490 = vmatpush1.bf16.msra.mxu0 %v1883
    %2491 = vmatprep.subr.bf16.mxu0 %v2004
    %2492 = vmatpush2.bf16.msra.mxu0 %v2003
    %2493 = vmatprep.subr.bf16.mxu0 %v1996
    %2494 = vmatpush2.bf16.msra.mxu0 %v1995
    %2495 = vmatprep.subr.bf16.mxu0 %v1988
    %2496 = vmatpush2.bf16.msra.mxu0 %v1987
    %2497 = vmatprep.subr.bf16.mxu0 %v1980
    %2498 = vmatpush2.bf16.msra.mxu0 %v1979
    %2499 = vmatprep.subr.bf16.mxu0 %v1972
    %2500 = vmatpush2.bf16.msra.mxu0 %v1971
    %2501 = vmatprep.subr.bf16.mxu0 %v1964
    %2502 = vmatpush2.bf16.msra.mxu0 %v1963
    %2503 = vmatprep.subr.bf16.mxu0 %v1956
    %2504 = vmatpush2.bf16.msra.mxu0 %v1955
    %2505 = vmatprep.subr.bf16.mxu0 %v1948
    %2506 = vmatpush2.bf16.msra.mxu0 %v1947
    %2507 = vmatprep.mubr.bf16.mxu0 %v854
    %2508 = vmatmul.mubr.bf16.gmra.mxu0 %v853
    %v2509 = vpop.f32.mrf.mxu0
    %v2510 = vadd.f32 0.0, %v2509
    %v2511 = vpop.f32.mrf.mxu0
    %v2512 = vadd.f32 0.0, %v2511
    %v2513 = vpop.f32.mrf.mxu0
    %v2514 = vpop.f32.mrf.mxu0
    %2515 = vdwg.mxu0
    %2516 = vmatprep.subr.bf16.mxu0 %v2068
    %2517 = vmatpush1.bf16.msra.mxu0 %v2067
    %2518 = vmatprep.subr.bf16.mxu0 %v2060
    %2519 = vmatpush1.bf16.msra.mxu0 %v2059
    %2520 = vmatprep.subr.bf16.mxu0 %v2052
    %2521 = vmatpush1.bf16.msra.mxu0 %v2051
    %2522 = vmatprep.subr.bf16.mxu0 %v2044
    %2523 = vmatpush1.bf16.msra.mxu0 %v2043
    %2524 = vmatprep.subr.bf16.mxu0 %v2036
    %2525 = vmatpush1.bf16.msra.mxu0 %v2035
    %2526 = vmatprep.subr.bf16.mxu0 %v2028
    %2527 = vmatpush1.bf16.msra.mxu0 %v2027
    %2528 = vmatprep.subr.bf16.mxu0 %v2020
    %2529 = vmatpush1.bf16.msra.mxu0 %v2019
    %2530 = vmatprep.subr.bf16.mxu0 %v2012
    %2531 = vmatpush1.bf16.msra.mxu0 %v2011
    %2532 = vmatprep.subr.bf16.mxu0 %v2132
    %2533 = vmatpush2.bf16.msra.mxu0 %v2131
    %2534 = vmatprep.subr.bf16.mxu0 %v2124
    %2535 = vmatpush2.bf16.msra.mxu0 %v2123
    %2536 = vmatprep.subr.bf16.mxu0 %v2116
    %2537 = vmatpush2.bf16.msra.mxu0 %v2115
    %2538 = vmatprep.subr.bf16.mxu0 %v2108
    %2539 = vmatpush2.bf16.msra.mxu0 %v2107
    %2540 = vmatprep.subr.bf16.mxu0 %v2100
    %2541 = vmatpush2.bf16.msra.mxu0 %v2099
    %2542 = vmatprep.subr.bf16.mxu0 %v2092
    %2543 = vmatpush2.bf16.msra.mxu0 %v2091
    %2544 = vmatprep.subr.bf16.mxu0 %v2084
    %2545 = vmatpush2.bf16.msra.mxu0 %v2083
    %2546 = vmatprep.subr.bf16.mxu0 %v2076
    %2547 = vmatpush2.bf16.msra.mxu0 %v2075
    %2548 = vmatprep.mubr.bf16.mxu0 %v856
    %2549 = vmatmul.mubr.bf16.gmra.mxu0 %v855
    %v2550 = vpop.f32.mrf.mxu0
    %v2551 = vadd.f32 %v2510, %v2550
    %v2552 = vpop.f32.mrf.mxu0
    %v2553 = vadd.f32 %v2512, %v2552
    %v2554 = vpop.f32.mrf.mxu0
    %v2555 = vpop.f32.mrf.mxu0
    %2556 = vdwg.mxu0
    %2557 = vmatprep.subr.bf16.mxu0 %v1942
    %2558 = vmatpush1.bf16.msra.mxu0 %v1941
    %2559 = vmatprep.subr.bf16.mxu0 %v1934
    %2560 = vmatpush1.bf16.msra.mxu0 %v1933
    %2561 = vmatprep.subr.bf16.mxu0 %v1926
    %2562 = vmatpush1.bf16.msra.mxu0 %v1925
    %2563 = vmatprep.subr.bf16.mxu0 %v1918
    %2564 = vmatpush1.bf16.msra.mxu0 %v1917
    %2565 = vmatprep.subr.bf16.mxu0 %v1910
    %2566 = vmatpush1.bf16.msra.mxu0 %v1909
    %2567 = vmatprep.subr.bf16.mxu0 %v1902
    %2568 = vmatpush1.bf16.msra.mxu0 %v1901
    %2569 = vmatprep.subr.bf16.mxu0 %v1894
    %2570 = vmatpush1.bf16.msra.mxu0 %v1893
    %2571 = vmatprep.subr.bf16.mxu0 %v1886
    %2572 = vmatpush1.bf16.msra.mxu0 %v1885
    %2573 = vmatprep.subr.bf16.mxu0 %v2006
    %2574 = vmatpush2.bf16.msra.mxu0 %v2005
    %2575 = vmatprep.subr.bf16.mxu0 %v1998
    %2576 = vmatpush2.bf16.msra.mxu0 %v1997
    %2577 = vmatprep.subr.bf16.mxu0 %v1990
    %2578 = vmatpush2.bf16.msra.mxu0 %v1989
    %2579 = vmatprep.subr.bf16.mxu0 %v1982
    %2580 = vmatpush2.bf16.msra.mxu0 %v1981
    %2581 = vmatprep.subr.bf16.mxu0 %v1974
    %2582 = vmatpush2.bf16.msra.mxu0 %v1973
    %2583 = vmatprep.subr.bf16.mxu0 %v1966
    %2584 = vmatpush2.bf16.msra.mxu0 %v1965
    %2585 = vmatprep.subr.bf16.mxu0 %v1958
    %2586 = vmatpush2.bf16.msra.mxu0 %v1957
    %2587 = vmatprep.subr.bf16.mxu0 %v1950
    %2588 = vmatpush2.bf16.msra.mxu0 %v1949
    %2589 = vmatprep.mubr.bf16.mxu0 %v854
    %2590 = vmatmul.mubr.bf16.gmra.mxu0 %v853
    %v2591 = vpop.f32.mrf.mxu0
    %v2592 = vadd.f32 0.0, %v2591
    %v2593 = vpop.f32.mrf.mxu0
    %v2594 = vadd.f32 0.0, %v2593
    %v2595 = vpop.f32.mrf.mxu0
    %v2596 = vpop.f32.mrf.mxu0
    %2597 = vdwg.mxu0
    %2598 = vmatprep.subr.bf16.mxu0 %v2070
    %2599 = vmatpush1.bf16.msra.mxu0 %v2069
    %2600 = vmatprep.subr.bf16.mxu0 %v2062
    %2601 = vmatpush1.bf16.msra.mxu0 %v2061
    %2602 = vmatprep.subr.bf16.mxu0 %v2054
    %2603 = vmatpush1.bf16.msra.mxu0 %v2053
    %2604 = vmatprep.subr.bf16.mxu0 %v2046
    %2605 = vmatpush1.bf16.msra.mxu0 %v2045
    %2606 = vmatprep.subr.bf16.mxu0 %v2038
    %2607 = vmatpush1.bf16.msra.mxu0 %v2037
    %2608 = vmatprep.subr.bf16.mxu0 %v2030
    %2609 = vmatpush1.bf16.msra.mxu0 %v2029
    %2610 = vmatprep.subr.bf16.mxu0 %v2022
    %2611 = vmatpush1.bf16.msra.mxu0 %v2021
    %2612 = vmatprep.subr.bf16.mxu0 %v2014
    %2613 = vmatpush1.bf16.msra.mxu0 %v2013
    %2614 = vmatprep.subr.bf16.mxu0 %v2134
    %2615 = vmatpush2.bf16.msra.mxu0 %v2133
    %2616 = vmatprep.subr.bf16.mxu0 %v2126
    %2617 = vmatpush2.bf16.msra.mxu0 %v2125
    %2618 = vmatprep.subr.bf16.mxu0 %v2118
    %2619 = vmatpush2.bf16.msra.mxu0 %v2117
    %2620 = vmatprep.subr.bf16.mxu0 %v2110
    %2621 = vmatpush2.bf16.msra.mxu0 %v2109
    %2622 = vmatprep.subr.bf16.mxu0 %v2102
    %2623 = vmatpush2.bf16.msra.mxu0 %v2101
    %2624 = vmatprep.subr.bf16.mxu0 %v2094
    %2625 = vmatpush2.bf16.msra.mxu0 %v2093
    %2626 = vmatprep.subr.bf16.mxu0 %v2086
    %2627 = vmatpush2.bf16.msra.mxu0 %v2085
    %2628 = vmatprep.subr.bf16.mxu0 %v2078
    %2629 = vmatpush2.bf16.msra.mxu0 %v2077
    %2630 = vmatprep.mubr.bf16.mxu0 %v856
    %2631 = vmatmul.mubr.bf16.gmra.mxu0 %v855
    %v2632 = vpop.f32.mrf.mxu0
    %v2633 = vadd.f32 %v2592, %v2632
    %v2634 = vpop.f32.mrf.mxu0
    %v2635 = vadd.f32 %v2594, %v2634
    %v2636 = vpop.f32.mrf.mxu0
    %v2637 = vpop.f32.mrf.mxu0
    %2638 = vdwg.mxu0
    %2639 = vmatprep.subr.bf16.mxu0 %v1944
    %2640 = vmatpush1.bf16.msra.mxu0 %v1943
    %2641 = vmatprep.subr.bf16.mxu0 %v1936
    %2642 = vmatpush1.bf16.msra.mxu0 %v1935
    %2643 = vmatprep.subr.bf16.mxu0 %v1928
    %2644 = vmatpush1.bf16.msra.mxu0 %v1927
    %2645 = vmatprep.subr.bf16.mxu0 %v1920
    %2646 = vmatpush1.bf16.msra.mxu0 %v1919
    %2647 = vmatprep.subr.bf16.mxu0 %v1912
    %2648 = vmatpush1.bf16.msra.mxu0 %v1911
    %2649 = vmatprep.subr.bf16.mxu0 %v1904
    %2650 = vmatpush1.bf16.msra.mxu0 %v1903
    %2651 = vmatprep.subr.bf16.mxu0 %v1896
    %2652 = vmatpush1.bf16.msra.mxu0 %v1895
    %2653 = vmatprep.subr.bf16.mxu0 %v1888
    %2654 = vmatpush1.bf16.msra.mxu0 %v1887
    %2655 = vmatprep.subr.bf16.mxu0 %v2008
    %2656 = vmatpush2.bf16.msra.mxu0 %v2007
    %2657 = vmatprep.subr.bf16.mxu0 %v2000
    %2658 = vmatpush2.bf16.msra.mxu0 %v1999
    %2659 = vmatprep.subr.bf16.mxu0 %v1992
    %2660 = vmatpush2.bf16.msra.mxu0 %v1991
    %2661 = vmatprep.subr.bf16.mxu0 %v1984
    %2662 = vmatpush2.bf16.msra.mxu0 %v1983
    %2663 = vmatprep.subr.bf16.mxu0 %v1976
    %2664 = vmatpush2.bf16.msra.mxu0 %v1975
    %2665 = vmatprep.subr.bf16.mxu0 %v1968
    %2666 = vmatpush2.bf16.msra.mxu0 %v1967
    %2667 = vmatprep.subr.bf16.mxu0 %v1960
    %2668 = vmatpush2.bf16.msra.mxu0 %v1959
    %2669 = vmatprep.subr.bf16.mxu0 %v1952
    %2670 = vmatpush2.bf16.msra.mxu0 %v1951
    %2671 = vmatprep.mubr.bf16.mxu0 %v854
    %2672 = vmatmul.mubr.bf16.gmra.mxu0 %v853
    %v2673 = vpop.f32.mrf.mxu0
    %v2674 = vadd.f32 0.0, %v2673
    %v2675 = vpop.f32.mrf.mxu0
    %v2676 = vadd.f32 0.0, %v2675
    %v2677 = vpop.f32.mrf.mxu0
    %v2678 = vpop.f32.mrf.mxu0
    %2679 = vdwg.mxu0
    %2680 = vmatprep.subr.bf16.mxu0 %v2072
    %2681 = vmatpush1.bf16.msra.mxu0 %v2071
    %2682 = vmatprep.subr.bf16.mxu0 %v2064
    %2683 = vmatpush1.bf16.msra.mxu0 %v2063
    %2684 = vmatprep.subr.bf16.mxu0 %v2056
    %2685 = vmatpush1.bf16.msra.mxu0 %v2055
    %2686 = vmatprep.subr.bf16.mxu0 %v2048
    %2687 = vmatpush1.bf16.msra.mxu0 %v2047
    %2688 = vmatprep.subr.bf16.mxu0 %v2040
    %2689 = vmatpush1.bf16.msra.mxu0 %v2039
    %2690 = vmatprep.subr.bf16.mxu0 %v2032
    %2691 = vmatpush1.bf16.msra.mxu0 %v2031
    %2692 = vmatprep.subr.bf16.mxu0 %v2024
    %2693 = vmatpush1.bf16.msra.mxu0 %v2023
    %2694 = vmatprep.subr.bf16.mxu0 %v2016
    %2695 = vmatpush1.bf16.msra.mxu0 %v2015
    %2696 = vmatprep.subr.bf16.mxu0 %v2136
    %2697 = vmatpush2.bf16.msra.mxu0 %v2135
    %2698 = vmatprep.subr.bf16.mxu0 %v2128
    %2699 = vmatpush2.bf16.msra.mxu0 %v2127
    %2700 = vmatprep.subr.bf16.mxu0 %v2120
    %2701 = vmatpush2.bf16.msra.mxu0 %v2119
    %2702 = vmatprep.subr.bf16.mxu0 %v2112
    %2703 = vmatpush2.bf16.msra.mxu0 %v2111
    %2704 = vmatprep.subr.bf16.mxu0 %v2104
    %2705 = vmatpush2.bf16.msra.mxu0 %v2103
    %2706 = vmatprep.subr.bf16.mxu0 %v2096
    %2707 = vmatpush2.bf16.msra.mxu0 %v2095
    %2708 = vmatprep.subr.bf16.mxu0 %v2088
    %2709 = vmatpush2.bf16.msra.mxu0 %v2087
    %2710 = vmatprep.subr.bf16.mxu0 %v2080
    %2711 = vmatpush2.bf16.msra.mxu0 %v2079
    %2712 = vmatprep.mubr.bf16.mxu0 %v856
    %2713 = vmatmul.mubr.bf16.gmra.mxu0 %v855
    %v2714 = vpop.f32.mrf.mxu0
    %v2715 = vadd.f32 %v2674, %v2714
    %v2716 = vpop.f32.mrf.mxu0
    %v2717 = vadd.f32 %v2676, %v2716
    %v2718 = vpop.f32.mrf.mxu0
    %v2719 = vpop.f32.mrf.mxu0
    %2720 = vdwg.mxu0
    %v2721 = vpack.c.bf16 %v2469, %v2469
    %v2722 = vpack.c.bf16 %v2471, %v2471
    %v2723 = vpack.c.bf16 %v2551, %v2551
    %v2724 = vpack.c.bf16 %v2553, %v2553
    %v2725 = vpack.c.bf16 %v2633, %v2633
    %v2726 = vpack.c.bf16 %v2635, %v2635
    %v2727 = vpack.c.bf16 %v2715, %v2715
    %v2728 = vpack.c.bf16 %v2717, %v2717
    %v2729 = vld [vmem:[#allocation13] sm:$0xff]
    %v2731 = vlaneseq
    %v2732 = vshrl.u32 %v2731, 7
    %v2733 = vsub.s32 0, %v2732
    %v2734 = vrot.slane %v2729, %v2733
    %v2735 = vlaneseq
    %v2736 = vshrl.u32 %v2735, 7
    %v2737 = vsub.s32 1, %v2736
    %v2738 = vrot.slane %v2729, %v2737
    %v2739 = vlaneseq
    %v2740 = vshrl.u32 %v2739, 7
    %v2741 = vsub.s32 2, %v2740
    %v2742 = vrot.slane %v2729, %v2741
    %v2743 = vlaneseq
    %v2744 = vshrl.u32 %v2743, 7
    %v2745 = vsub.s32 3, %v2744
    %v2746 = vrot.slane %v2729, %v2745
    %v2747 = vlaneseq
    %v2748 = vshrl.u32 %v2747, 7
    %v2749 = vsub.s32 4, %v2748
    %v2750 = vrot.slane %v2729, %v2749
    %v2751 = vlaneseq
    %v2752 = vshrl.u32 %v2751, 7
    %v2753 = vsub.s32 5, %v2752
    %v2754 = vrot.slane %v2729, %v2753
    %v2755 = vlaneseq
    %v2756 = vshrl.u32 %v2755, 7
    %v2757 = vsub.s32 6, %v2756
    %v2758 = vrot.slane %v2729, %v2757
    %v2759 = vlaneseq
    %v2760 = vshrl.u32 %v2759, 7
    %v2761 = vsub.s32 7, %v2760
    %v2762 = vrot.slane %v2729, %v2761
    %v2771 = vpack.c.bf16 %v2734, %v2734
    %v2772 = vpack.c.bf16 %v2738, %v2738
    %v2773 = vpack.c.bf16 %v2742, %v2742
    %v2774 = vpack.c.bf16 %v2746, %v2746
    %v2775 = vpack.c.bf16 %v2750, %v2750
    %v2776 = vpack.c.bf16 %v2754, %v2754
    %v2777 = vpack.c.bf16 %v2758, %v2758
    %v2778 = vpack.c.bf16 %v2762, %v2762
    %v2780 = vpack.i.b16 %v2771, %v2771
    %v2782 = vlaneseq
    %v2783 = vshrl.u32 %v2782, 7
    %v2784 = vsub.s32 0, %v2783
    %v2785 = vrot.slane %v2780, %v2784
    %v2787 = vpack.i.b16 %v2772, %v2772
    %v2789 = vlaneseq
    %v2790 = vshrl.u32 %v2789, 7
    %v2791 = vsub.s32 0, %v2790
    %v2792 = vrot.slane %v2787, %v2791
    %v2794 = vpack.i.b16 %v2773, %v2773
    %v2796 = vlaneseq
    %v2797 = vshrl.u32 %v2796, 7
    %v2798 = vsub.s32 0, %v2797
    %v2799 = vrot.slane %v2794, %v2798
    %v2801 = vpack.i.b16 %v2774, %v2774
    %v2803 = vlaneseq
    %v2804 = vshrl.u32 %v2803, 7
    %v2805 = vsub.s32 0, %v2804
    %v2806 = vrot.slane %v2801, %v2805
    %v2808 = vpack.i.b16 %v2775, %v2775
    %v2810 = vlaneseq
    %v2811 = vshrl.u32 %v2810, 7
    %v2812 = vsub.s32 0, %v2811
    %v2813 = vrot.slane %v2808, %v2812
    %v2815 = vpack.i.b16 %v2776, %v2776
    %v2817 = vlaneseq
    %v2818 = vshrl.u32 %v2817, 7
    %v2819 = vsub.s32 0, %v2818
    %v2820 = vrot.slane %v2815, %v2819
    %v2822 = vpack.i.b16 %v2777, %v2777
    %v2824 = vlaneseq
    %v2825 = vshrl.u32 %v2824, 7
    %v2826 = vsub.s32 0, %v2825
    %v2827 = vrot.slane %v2822, %v2826
    %v2829 = vpack.i.b16 %v2778, %v2778
    %v2831 = vlaneseq
    %v2832 = vshrl.u32 %v2831, 7
    %v2833 = vsub.s32 0, %v2832
    %v2834 = vrot.slane %v2829, %v2833
    %v2835 = vadd.bf16 %v2721, %v2785
    %v2836 = vadd.bf16 %v2722, %v2792
    %v2837 = vadd.bf16 %v2723, %v2799
    %v2838 = vadd.bf16 %v2724, %v2806
    %v2839 = vadd.bf16 %v2725, %v2813
    %v2840 = vadd.bf16 %v2726, %v2820
    %v2841 = vadd.bf16 %v2727, %v2827
    %v2842 = vadd.bf16 %v2728, %v2834
    %v2843 = vmul.bf16 %v2835, 1045249613
    %v2844 = vmul.bf16 %v2836, 1045249613
    %v2845 = vmul.bf16 %v2837, 1045249613
    %v2846 = vmul.bf16 %v2838, 1045249613
    %v2847 = vmul.bf16 %v2839, 1045249613
    %v2848 = vmul.bf16 %v2840, 1045249613
    %v2849 = vmul.bf16 %v2841, 1045249613
    %v2850 = vmul.bf16 %v2842, 1045249613
    %v2851 = vmax.bf16 %v2835, %v2843
    %v2852 = vmax.bf16 %v2836, %v2844
    %v2853 = vmax.bf16 %v2837, %v2845
    %v2854 = vmax.bf16 %v2838, %v2846
    %v2855 = vmax.bf16 %v2839, %v2847
    %v2856 = vmax.bf16 %v2840, %v2848
    %v2857 = vmax.bf16 %v2841, %v2849
    %v2858 = vmax.bf16 %v2842, %v2850
    %v2859 = vld [vmem:[#allocation14] sm:$0xff]
    %v2860 = vld [vmem:[#allocation14 + $0x8] sm:$0xff]
    %v2861 = vld [vmem:[#allocation14 + $0x10] sm:$0xff]
    %v2862 = vld [vmem:[#allocation14 + $0x18] sm:$0xf]
    %v2863 = vld [vmem:[#allocation14 + $0x1c] sm:$0xff]
    %v2864 = vld [vmem:[#allocation14 + $0x24] sm:$0xff]
    %v2865 = vld [vmem:[#allocation14 + $0x2c] sm:$0xff]
    %v2866 = vld [vmem:[#allocation14 + $0x34] sm:$0xf]
    %v2867 = vld [vmem:[#allocation14 + $0x38] sm:$0xff]
    %v2868 = vld [vmem:[#allocation14 + $0x40] sm:$0xff]
    %v2869 = vld [vmem:[#allocation14 + $0x48] sm:$0xff]
    %v2870 = vld [vmem:[#allocation14 + $0x50] sm:$0xf]
    %v2871 = vld [vmem:[#allocation14 + $0x54] sm:$0xff]
    %v2872 = vld [vmem:[#allocation14 + $0x5c] sm:$0xff]
    %v2873 = vld [vmem:[#allocation14 + $0x64] sm:$0xff]
    %v2874 = vld [vmem:[#allocation14 + $0x6c] sm:$0xf]
    %v2875 = vld [vmem:[#allocation14 + $0x70] sm:$0xff]
    %v2876 = vld [vmem:[#allocation14 + $0x78] sm:$0xff]
    %v2877 = vld [vmem:[#allocation14 + $0x80] sm:$0xff]
    %v2878 = vld [vmem:[#allocation14 + $0x88] sm:$0xf]
    %v2879 = vld [vmem:[#allocation14 + $0x8c] sm:$0xff]
    %v2880 = vld [vmem:[#allocation14 + $0x94] sm:$0xff]
    %v2881 = vld [vmem:[#allocation14 + $0x9c] sm:$0xff]
    %v2882 = vld [vmem:[#allocation14 + $0xa4] sm:$0xf]
    %v2883 = vld [vmem:[#allocation14 + $0xa8] sm:$0xff]
    %v2884 = vld [vmem:[#allocation14 + $0xb0] sm:$0xff]
    %v2885 = vld [vmem:[#allocation14 + $0xb8] sm:$0xff]
    %v2886 = vld [vmem:[#allocation14 + $0xc0] sm:$0xf]
    %v2887 = vld [vmem:[#allocation14 + $0xc4] sm:$0xff]
    %v2888 = vld [vmem:[#allocation14 + $0xcc] sm:$0xff]
    %v2889 = vld [vmem:[#allocation14 + $0xd4] sm:$0xff]
    %v2890 = vld [vmem:[#allocation14 + $0xdc] sm:$0xf]
    %v2891 = vld [vmem:[#allocation14 + $0xe0] sm:$0xff]
    %v2892 = vld [vmem:[#allocation14 + $0xe8] sm:$0xff]
    %v2893 = vld [vmem:[#allocation14 + $0xf0] sm:$0xff]
    %v2894 = vld [vmem:[#allocation14 + $0xf8] sm:$0xf]
    %v2895 = vld [vmem:[#allocation14 + $0xfc] sm:$0xff]
    %v2896 = vld [vmem:[#allocation14 + $0x104] sm:$0xff]
    %v2897 = vld [vmem:[#allocation14 + $0x10c] sm:$0xff]
    %v2898 = vld [vmem:[#allocation14 + $0x114] sm:$0xf]
    %v2899 = vld [vmem:[#allocation14 + $0x118] sm:$0xff]
    %v2900 = vld [vmem:[#allocation14 + $0x120] sm:$0xff]
    %v2901 = vld [vmem:[#allocation14 + $0x128] sm:$0xff]
    %v2902 = vld [vmem:[#allocation14 + $0x130] sm:$0xf]
    %v2903 = vld [vmem:[#allocation14 + $0x134] sm:$0xff]
    %v2904 = vld [vmem:[#allocation14 + $0x13c] sm:$0xff]
    %v2905 = vld [vmem:[#allocation14 + $0x144] sm:$0xff]
    %v2906 = vld [vmem:[#allocation14 + $0x14c] sm:$0xf]
    %v2907 = vld [vmem:[#allocation14 + $0x150] sm:$0xff]
    %v2908 = vld [vmem:[#allocation14 + $0x158] sm:$0xff]
    %v2909 = vld [vmem:[#allocation14 + $0x160] sm:$0xff]
    %v2910 = vld [vmem:[#allocation14 + $0x168] sm:$0xf]
    %v2911 = vld [vmem:[#allocation14 + $0x16c] sm:$0xff]
    %v2912 = vld [vmem:[#allocation14 + $0x174] sm:$0xff]
    %v2913 = vld [vmem:[#allocation14 + $0x17c] sm:$0xff]
    %v2914 = vld [vmem:[#allocation14 + $0x184] sm:$0xf]
    %v2915 = vld [vmem:[#allocation14 + $0x188] sm:$0xff]
    %v2916 = vld [vmem:[#allocation14 + $0x190] sm:$0xff]
    %v2917 = vld [vmem:[#allocation14 + $0x198] sm:$0xff]
    %v2918 = vld [vmem:[#allocation14 + $0x1a0] sm:$0xf]
    %v2919 = vld [vmem:[#allocation14 + $0x1a4] sm:$0xff]
    %v2920 = vld [vmem:[#allocation14 + $0x1ac] sm:$0xff]
    %v2921 = vld [vmem:[#allocation14 + $0x1b4] sm:$0xff]
    %v2922 = vld [vmem:[#allocation14 + $0x1bc] sm:$0xf]
    %v2923 = vld [vmem:[#allocation14 + $0x1c0] sm:$0xff]
    %v2924 = vld [vmem:[#allocation14 + $0x1c8] sm:$0xff]
    %v2925 = vld [vmem:[#allocation14 + $0x1d0] sm:$0xff]
    %v2926 = vld [vmem:[#allocation14 + $0x1d8] sm:$0xf]
    %v2927 = vld [vmem:[#allocation14 + $0x1dc] sm:$0xff]
    %v2928 = vld [vmem:[#allocation14 + $0x1e4] sm:$0xff]
    %v2929 = vld [vmem:[#allocation14 + $0x1ec] sm:$0xff]
    %v2930 = vld [vmem:[#allocation14 + $0x1f4] sm:$0xf]
    %v2931 = vld [vmem:[#allocation14 + $0x1f8] sm:$0xff]
    %v2932 = vld [vmem:[#allocation14 + $0x200] sm:$0xff]
    %v2933 = vld [vmem:[#allocation14 + $0x208] sm:$0xff]
    %v2934 = vld [vmem:[#allocation14 + $0x210] sm:$0xf]
    %v2935 = vld [vmem:[#allocation14 + $0x214] sm:$0xff]
    %v2936 = vld [vmem:[#allocation14 + $0x21c] sm:$0xff]
    %v2937 = vld [vmem:[#allocation14 + $0x224] sm:$0xff]
    %v2938 = vld [vmem:[#allocation14 + $0x22c] sm:$0xf]
    %v2939 = vld [vmem:[#allocation14 + $0x230] sm:$0xff]
    %v2940 = vld [vmem:[#allocation14 + $0x238] sm:$0xff]
    %v2941 = vld [vmem:[#allocation14 + $0x240] sm:$0xff]
    %v2942 = vld [vmem:[#allocation14 + $0x248] sm:$0xf]
    %v2943 = vld [vmem:[#allocation14 + $0x24c] sm:$0xff]
    %v2944 = vld [vmem:[#allocation14 + $0x254] sm:$0xff]
    %v2945 = vld [vmem:[#allocation14 + $0x25c] sm:$0xff]
    %v2946 = vld [vmem:[#allocation14 + $0x264] sm:$0xf]
    %v2947 = vld [vmem:[#allocation14 + $0x268] sm:$0xff]
    %v2948 = vld [vmem:[#allocation14 + $0x270] sm:$0xff]
    %v2949 = vld [vmem:[#allocation14 + $0x278] sm:$0xff]
    %v2950 = vld [vmem:[#allocation14 + $0x280] sm:$0xf]
    %v2951 = vld [vmem:[#allocation14 + $0x284] sm:$0xff]
    %v2952 = vld [vmem:[#allocation14 + $0x28c] sm:$0xff]
    %v2953 = vld [vmem:[#allocation14 + $0x294] sm:$0xff]
    %v2954 = vld [vmem:[#allocation14 + $0x29c] sm:$0xf]
    %v2955 = vld [vmem:[#allocation14 + $0x2a0] sm:$0xff]
    %v2956 = vld [vmem:[#allocation14 + $0x2a8] sm:$0xff]
    %v2957 = vld [vmem:[#allocation14 + $0x2b0] sm:$0xff]
    %v2958 = vld [vmem:[#allocation14 + $0x2b8] sm:$0xf]
    %v2959 = vld [vmem:[#allocation14 + $0x2bc] sm:$0xff]
    %v2960 = vld [vmem:[#allocation14 + $0x2c4] sm:$0xff]
    %v2961 = vld [vmem:[#allocation14 + $0x2cc] sm:$0xff]
    %v2962 = vld [vmem:[#allocation14 + $0x2d4] sm:$0xf]
    %v2963 = vld [vmem:[#allocation14 + $0x2d8] sm:$0xff]
    %v2964 = vld [vmem:[#allocation14 + $0x2e0] sm:$0xff]
    %v2965 = vld [vmem:[#allocation14 + $0x2e8] sm:$0xff]
    %v2966 = vld [vmem:[#allocation14 + $0x2f0] sm:$0xf]
    %v2967 = vld [vmem:[#allocation14 + $0x2f4] sm:$0xff]
    %v2968 = vld [vmem:[#allocation14 + $0x2fc] sm:$0xff]
    %v2969 = vld [vmem:[#allocation14 + $0x304] sm:$0xff]
    %v2970 = vld [vmem:[#allocation14 + $0x30c] sm:$0xf]
    %v2971 = vld [vmem:[#allocation14 + $0x310] sm:$0xff]
    %v2972 = vld [vmem:[#allocation14 + $0x318] sm:$0xff]
    %v2973 = vld [vmem:[#allocation14 + $0x320] sm:$0xff]
    %v2974 = vld [vmem:[#allocation14 + $0x328] sm:$0xf]
    %v2975 = vld [vmem:[#allocation14 + $0x32c] sm:$0xff]
    %v2976 = vld [vmem:[#allocation14 + $0x334] sm:$0xff]
    %v2977 = vld [vmem:[#allocation14 + $0x33c] sm:$0xff]
    %v2978 = vld [vmem:[#allocation14 + $0x344] sm:$0xf]
    %v2979 = vld [vmem:[#allocation14 + $0x348] sm:$0xff]
    %v2980 = vld [vmem:[#allocation14 + $0x350] sm:$0xff]
    %v2981 = vld [vmem:[#allocation14 + $0x358] sm:$0xff]
    %v2982 = vld [vmem:[#allocation14 + $0x360] sm:$0xf]
    %v2983 = vld [vmem:[#allocation14 + $0x364] sm:$0xff]
    %v2984 = vld [vmem:[#allocation14 + $0x36c] sm:$0xff]
    %v2985 = vld [vmem:[#allocation14 + $0x374] sm:$0xff]
    %v2986 = vld [vmem:[#allocation14 + $0x37c] sm:$0xf]
    %v2987 = vld [vmem:[#allocation14 + $0x380] sm:$0xff]
    %v2988 = vld [vmem:[#allocation14 + $0x388] sm:$0xff]
    %v2989 = vld [vmem:[#allocation14 + $0x390] sm:$0xff]
    %v2990 = vld [vmem:[#allocation14 + $0x398] sm:$0xf]
    %v2991 = vld [vmem:[#allocation14 + $0x39c] sm:$0xff]
    %v2992 = vld [vmem:[#allocation14 + $0x3a4] sm:$0xff]
    %v2993 = vld [vmem:[#allocation14 + $0x3ac] sm:$0xff]
    %v2994 = vld [vmem:[#allocation14 + $0x3b4] sm:$0xf]
    %v2995 = vld [vmem:[#allocation14 + $0x3b8] sm:$0xff]
    %v2996 = vld [vmem:[#allocation14 + $0x3c0] sm:$0xff]
    %v2997 = vld [vmem:[#allocation14 + $0x3c8] sm:$0xff]
    %v2998 = vld [vmem:[#allocation14 + $0x3d0] sm:$0xf]
    %v2999 = vld [vmem:[#allocation14 + $0x3d4] sm:$0xff]
    %v3000 = vld [vmem:[#allocation14 + $0x3dc] sm:$0xff]
    %v3001 = vld [vmem:[#allocation14 + $0x3e4] sm:$0xff]
    %v3002 = vld [vmem:[#allocation14 + $0x3ec] sm:$0xf]
    %v3003 = vld [vmem:[#allocation14 + $0x3f0] sm:$0xff]
    %v3004 = vld [vmem:[#allocation14 + $0x3f8] sm:$0xff]
    %v3005 = vld [vmem:[#allocation14 + $0x400] sm:$0xff]
    %v3006 = vld [vmem:[#allocation14 + $0x408] sm:$0xf]
    %v3007 = vld [vmem:[#allocation14 + $0x40c] sm:$0xff]
    %v3008 = vld [vmem:[#allocation14 + $0x414] sm:$0xff]
    %v3009 = vld [vmem:[#allocation14 + $0x41c] sm:$0xff]
    %v3010 = vld [vmem:[#allocation14 + $0x424] sm:$0xf]
    %v3011 = vld [vmem:[#allocation14 + $0x428] sm:$0xff]
    %v3012 = vld [vmem:[#allocation14 + $0x430] sm:$0xff]
    %v3013 = vld [vmem:[#allocation14 + $0x438] sm:$0xff]
    %v3014 = vld [vmem:[#allocation14 + $0x440] sm:$0xf]
    %v3015 = vld [vmem:[#allocation14 + $0x444] sm:$0xff]
    %v3016 = vld [vmem:[#allocation14 + $0x44c] sm:$0xff]
    %v3017 = vld [vmem:[#allocation14 + $0x454] sm:$0xff]
    %v3018 = vld [vmem:[#allocation14 + $0x45c] sm:$0xf]
    %v3019 = vld [vmem:[#allocation14 + $0x460] sm:$0xff]
    %v3020 = vld [vmem:[#allocation14 + $0x468] sm:$0xff]
    %v3021 = vld [vmem:[#allocation14 + $0x470] sm:$0xff]
    %v3022 = vld [vmem:[#allocation14 + $0x478] sm:$0xf]
    %v3023 = vld [vmem:[#allocation14 + $0x47c] sm:$0xff]
    %v3024 = vld [vmem:[#allocation14 + $0x484] sm:$0xff]
    %v3025 = vld [vmem:[#allocation14 + $0x48c] sm:$0xff]
    %v3026 = vld [vmem:[#allocation14 + $0x494] sm:$0xf]
    %v3027 = vld [vmem:[#allocation14 + $0x498] sm:$0xff]
    %v3028 = vld [vmem:[#allocation14 + $0x4a0] sm:$0xff]
    %v3029 = vld [vmem:[#allocation14 + $0x4a8] sm:$0xff]
    %v3030 = vld [vmem:[#allocation14 + $0x4b0] sm:$0xf]
    %v3031 = vld [vmem:[#allocation14 + $0x4b4] sm:$0xff]
    %v3032 = vld [vmem:[#allocation14 + $0x4bc] sm:$0xff]
    %v3033 = vld [vmem:[#allocation14 + $0x4c4] sm:$0xff]
    %v3034 = vld [vmem:[#allocation14 + $0x4cc] sm:$0xf]
    %v3035 = vld [vmem:[#allocation14 + $0x4d0] sm:$0xff]
    %v3036 = vld [vmem:[#allocation14 + $0x4d8] sm:$0xff]
    %v3037 = vld [vmem:[#allocation14 + $0x4e0] sm:$0xff]
    %v3038 = vld [vmem:[#allocation14 + $0x4e8] sm:$0xf]
    %v3039 = vld [vmem:[#allocation14 + $0x4ec] sm:$0xff]
    %v3040 = vld [vmem:[#allocation14 + $0x4f4] sm:$0xff]
    %v3041 = vld [vmem:[#allocation14 + $0x4fc] sm:$0xff]
    %v3042 = vld [vmem:[#allocation14 + $0x504] sm:$0xf]
    %v3043 = vld [vmem:[#allocation14 + $0x508] sm:$0xff]
    %v3044 = vld [vmem:[#allocation14 + $0x510] sm:$0xff]
    %v3045 = vld [vmem:[#allocation14 + $0x518] sm:$0xff]
    %v3046 = vld [vmem:[#allocation14 + $0x520] sm:$0xf]
    %v3047 = vld [vmem:[#allocation14 + $0x524] sm:$0xff]
    %v3048 = vld [vmem:[#allocation14 + $0x52c] sm:$0xff]
    %v3049 = vld [vmem:[#allocation14 + $0x534] sm:$0xff]
    %v3050 = vld [vmem:[#allocation14 + $0x53c] sm:$0xf]
    %v3051 = vld [vmem:[#allocation14 + $0x540] sm:$0xff]
    %v3052 = vld [vmem:[#allocation14 + $0x548] sm:$0xff]
    %v3053 = vld [vmem:[#allocation14 + $0x550] sm:$0xff]
    %v3054 = vld [vmem:[#allocation14 + $0x558] sm:$0xf]
    %v3055 = vld [vmem:[#allocation14 + $0x55c] sm:$0xff]
    %v3056 = vld [vmem:[#allocation14 + $0x564] sm:$0xff]
    %v3057 = vld [vmem:[#allocation14 + $0x56c] sm:$0xff]
    %v3058 = vld [vmem:[#allocation14 + $0x574] sm:$0xf]
    %v3059 = vld [vmem:[#allocation14 + $0x578] sm:$0xff]
    %v3060 = vld [vmem:[#allocation14 + $0x580] sm:$0xff]
    %v3061 = vld [vmem:[#allocation14 + $0x588] sm:$0xff]
    %v3062 = vld [vmem:[#allocation14 + $0x590] sm:$0xf]
    %v3063 = vld [vmem:[#allocation14 + $0x594] sm:$0xff]
    %v3064 = vld [vmem:[#allocation14 + $0x59c] sm:$0xff]
    %v3065 = vld [vmem:[#allocation14 + $0x5a4] sm:$0xff]
    %v3066 = vld [vmem:[#allocation14 + $0x5ac] sm:$0xf]
    %v3067 = vld [vmem:[#allocation14 + $0x5b0] sm:$0xff]
    %v3068 = vld [vmem:[#allocation14 + $0x5b8] sm:$0xff]
    %v3069 = vld [vmem:[#allocation14 + $0x5c0] sm:$0xff]
    %v3070 = vld [vmem:[#allocation14 + $0x5c8] sm:$0xf]
    %v3071 = vld [vmem:[#allocation14 + $0x5cc] sm:$0xff]
    %v3072 = vld [vmem:[#allocation14 + $0x5d4] sm:$0xff]
    %v3073 = vld [vmem:[#allocation14 + $0x5dc] sm:$0xff]
    %v3074 = vld [vmem:[#allocation14 + $0x5e4] sm:$0xf]
    %v3075 = vld [vmem:[#allocation14 + $0x5e8] sm:$0xff]
    %v3076 = vld [vmem:[#allocation14 + $0x5f0] sm:$0xff]
    %v3077 = vld [vmem:[#allocation14 + $0x5f8] sm:$0xff]
    %v3078 = vld [vmem:[#allocation14 + $0x600] sm:$0xf]
    %v3079 = vld [vmem:[#allocation14 + $0x604] sm:$0xff]
    %v3080 = vld [vmem:[#allocation14 + $0x60c] sm:$0xff]
    %v3081 = vld [vmem:[#allocation14 + $0x614] sm:$0xff]
    %v3082 = vld [vmem:[#allocation14 + $0x61c] sm:$0xf]
    %v3083 = vld [vmem:[#allocation14 + $0x620] sm:$0xff]
    %v3084 = vld [vmem:[#allocation14 + $0x628] sm:$0xff]
    %v3085 = vld [vmem:[#allocation14 + $0x630] sm:$0xff]
    %v3086 = vld [vmem:[#allocation14 + $0x638] sm:$0xf]
    %v3087 = vld [vmem:[#allocation14 + $0x63c] sm:$0xff]
    %v3088 = vld [vmem:[#allocation14 + $0x644] sm:$0xff]
    %v3089 = vld [vmem:[#allocation14 + $0x64c] sm:$0xff]
    %v3090 = vld [vmem:[#allocation14 + $0x654] sm:$0xf]
    %v3091 = vld [vmem:[#allocation14 + $0x658] sm:$0xff]
    %v3092 = vld [vmem:[#allocation14 + $0x660] sm:$0xff]
    %v3093 = vld [vmem:[#allocation14 + $0x668] sm:$0xff]
    %v3094 = vld [vmem:[#allocation14 + $0x670] sm:$0xf]
    %v3095 = vld [vmem:[#allocation14 + $0x674] sm:$0xff]
    %v3096 = vld [vmem:[#allocation14 + $0x67c] sm:$0xff]
    %v3097 = vld [vmem:[#allocation14 + $0x684] sm:$0xff]
    %v3098 = vld [vmem:[#allocation14 + $0x68c] sm:$0xf]
    %v3099 = vld [vmem:[#allocation14 + $0x690] sm:$0xff]
    %v3100 = vld [vmem:[#allocation14 + $0x698] sm:$0xff]
    %v3101 = vld [vmem:[#allocation14 + $0x6a0] sm:$0xff]
    %v3102 = vld [vmem:[#allocation14 + $0x6a8] sm:$0xf]
    %v3103 = vld [vmem:[#allocation14 + $0x6ac] sm:$0xff]
    %v3104 = vld [vmem:[#allocation14 + $0x6b4] sm:$0xff]
    %v3105 = vld [vmem:[#allocation14 + $0x6bc] sm:$0xff]
    %v3106 = vld [vmem:[#allocation14 + $0x6c4] sm:$0xf]
    %v3107 = vld [vmem:[#allocation14 + $0x6c8] sm:$0xff]
    %v3108 = vld [vmem:[#allocation14 + $0x6d0] sm:$0xff]
    %v3109 = vld [vmem:[#allocation14 + $0x6d8] sm:$0xff]
    %v3110 = vld [vmem:[#allocation14 + $0x6e0] sm:$0xf]
    %v3111 = vld [vmem:[#allocation14 + $0x6e4] sm:$0xff]
    %v3112 = vld [vmem:[#allocation14 + $0x6ec] sm:$0xff]
    %v3113 = vld [vmem:[#allocation14 + $0x6f4] sm:$0xff]
    %v3114 = vld [vmem:[#allocation14 + $0x6fc] sm:$0xf]
    %v3115 = vld [vmem:[#allocation14 + $0x700] sm:$0xff]
    %v3116 = vld [vmem:[#allocation14 + $0x708] sm:$0xff]
    %v3117 = vld [vmem:[#allocation14 + $0x710] sm:$0xff]
    %v3118 = vld [vmem:[#allocation14 + $0x718] sm:$0xf]
    %v3119 = vld [vmem:[#allocation14 + $0x71c] sm:$0xff]
    %v3120 = vld [vmem:[#allocation14 + $0x724] sm:$0xff]
    %v3121 = vld [vmem:[#allocation14 + $0x72c] sm:$0xff]
    %v3122 = vld [vmem:[#allocation14 + $0x734] sm:$0xf]
    %v3123 = vld [vmem:[#allocation14 + $0x738] sm:$0xff]
    %v3124 = vld [vmem:[#allocation14 + $0x740] sm:$0xff]
    %v3125 = vld [vmem:[#allocation14 + $0x748] sm:$0xff]
    %v3126 = vld [vmem:[#allocation14 + $0x750] sm:$0xf]
    %v3127 = vld [vmem:[#allocation14 + $0x754] sm:$0xff]
    %v3128 = vld [vmem:[#allocation14 + $0x75c] sm:$0xff]
    %v3129 = vld [vmem:[#allocation14 + $0x764] sm:$0xff]
    %v3130 = vld [vmem:[#allocation14 + $0x76c] sm:$0xf]
    %v3131 = vld [vmem:[#allocation14 + $0x770] sm:$0xff]
    %v3132 = vld [vmem:[#allocation14 + $0x778] sm:$0xff]
    %v3133 = vld [vmem:[#allocation14 + $0x780] sm:$0xff]
    %v3134 = vld [vmem:[#allocation14 + $0x788] sm:$0xf]
    %v3135 = vld [vmem:[#allocation14 + $0x78c] sm:$0xff]
    %v3136 = vld [vmem:[#allocation14 + $0x794] sm:$0xff]
    %v3137 = vld [vmem:[#allocation14 + $0x79c] sm:$0xff]
    %v3138 = vld [vmem:[#allocation14 + $0x7a4] sm:$0xf]
    %v3139 = vld [vmem:[#allocation14 + $0x7a8] sm:$0xff]
    %v3140 = vld [vmem:[#allocation14 + $0x7b0] sm:$0xff]
    %v3141 = vld [vmem:[#allocation14 + $0x7b8] sm:$0xff]
    %v3142 = vld [vmem:[#allocation14 + $0x7c0] sm:$0xf]
    %v3143 = vld [vmem:[#allocation14 + $0x7c4] sm:$0xff]
    %v3144 = vld [vmem:[#allocation14 + $0x7cc] sm:$0xff]
    %v3145 = vld [vmem:[#allocation14 + $0x7d4] sm:$0xff]
    %v3146 = vld [vmem:[#allocation14 + $0x7dc] sm:$0xf]
    %v3147 = vld [vmem:[#allocation14 + $0x7e0] sm:$0xff]
    %v3148 = vld [vmem:[#allocation14 + $0x7e8] sm:$0xff]
    %v3149 = vld [vmem:[#allocation14 + $0x7f0] sm:$0xff]
    %v3150 = vld [vmem:[#allocation14 + $0x7f8] sm:$0xf]
    %v3151 = vld [vmem:[#allocation14 + $0x7fc] sm:$0xff]
    %v3152 = vld [vmem:[#allocation14 + $0x804] sm:$0xff]
    %v3153 = vld [vmem:[#allocation14 + $0x80c] sm:$0xff]
    %v3154 = vld [vmem:[#allocation14 + $0x814] sm:$0xf]
    %v3155 = vld [vmem:[#allocation14 + $0x818] sm:$0xff]
    %v3156 = vld [vmem:[#allocation14 + $0x820] sm:$0xff]
    %v3157 = vld [vmem:[#allocation14 + $0x828] sm:$0xff]
    %v3158 = vld [vmem:[#allocation14 + $0x830] sm:$0xf]
    %v3159 = vld [vmem:[#allocation14 + $0x834] sm:$0xff]
    %v3160 = vld [vmem:[#allocation14 + $0x83c] sm:$0xff]
    %v3161 = vld [vmem:[#allocation14 + $0x844] sm:$0xff]
    %v3162 = vld [vmem:[#allocation14 + $0x84c] sm:$0xf]
    %v3163 = vld [vmem:[#allocation14 + $0x850] sm:$0xff]
    %v3164 = vld [vmem:[#allocation14 + $0x858] sm:$0xff]
    %v3165 = vld [vmem:[#allocation14 + $0x860] sm:$0xff]
    %v3166 = vld [vmem:[#allocation14 + $0x868] sm:$0xf]
    %v3167 = vld [vmem:[#allocation14 + $0x86c] sm:$0xff]
    %v3168 = vld [vmem:[#allocation14 + $0x874] sm:$0xff]
    %v3169 = vld [vmem:[#allocation14 + $0x87c] sm:$0xff]
    %v3170 = vld [vmem:[#allocation14 + $0x884] sm:$0xf]
    %v3171 = vld [vmem:[#allocation14 + $0x888] sm:$0xff]
    %v3172 = vld [vmem:[#allocation14 + $0x890] sm:$0xff]
    %v3173 = vld [vmem:[#allocation14 + $0x898] sm:$0xff]
    %v3174 = vld [vmem:[#allocation14 + $0x8a0] sm:$0xf]
    %v3175 = vld [vmem:[#allocation14 + $0x8a4] sm:$0xff]
    %v3176 = vld [vmem:[#allocation14 + $0x8ac] sm:$0xff]
    %v3177 = vld [vmem:[#allocation14 + $0x8b4] sm:$0xff]
    %v3178 = vld [vmem:[#allocation14 + $0x8bc] sm:$0xf]
    %v3179 = vld [vmem:[#allocation14 + $0x8c0] sm:$0xff]
    %v3180 = vld [vmem:[#allocation14 + $0x8c8] sm:$0xff]
    %v3181 = vld [vmem:[#allocation14 + $0x8d0] sm:$0xff]
    %v3182 = vld [vmem:[#allocation14 + $0x8d8] sm:$0xf]
    %v3183 = vld [vmem:[#allocation14 + $0x8dc] sm:$0xff]
    %v3184 = vld [vmem:[#allocation14 + $0x8e4] sm:$0xff]
    %v3185 = vld [vmem:[#allocation14 + $0x8ec] sm:$0xff]
    %v3186 = vld [vmem:[#allocation14 + $0x8f4] sm:$0xf]
    %v3187 = vld [vmem:[#allocation14 + $0x8f8] sm:$0xff]
    %v3188 = vld [vmem:[#allocation14 + $0x900] sm:$0xff]
    %v3189 = vld [vmem:[#allocation14 + $0x908] sm:$0xff]
    %v3190 = vld [vmem:[#allocation14 + $0x910] sm:$0xf]
    %v3191 = vld [vmem:[#allocation14 + $0x914] sm:$0xff]
    %v3192 = vld [vmem:[#allocation14 + $0x91c] sm:$0xff]
    %v3193 = vld [vmem:[#allocation14 + $0x924] sm:$0xff]
    %v3194 = vld [vmem:[#allocation14 + $0x92c] sm:$0xf]
    %v3195 = vld [vmem:[#allocation14 + $0x930] sm:$0xff]
    %v3196 = vld [vmem:[#allocation14 + $0x938] sm:$0xff]
    %v3197 = vld [vmem:[#allocation14 + $0x940] sm:$0xff]
    %v3198 = vld [vmem:[#allocation14 + $0x948] sm:$0xf]
    %v3199 = vld [vmem:[#allocation14 + $0x94c] sm:$0xff]
    %v3200 = vld [vmem:[#allocation14 + $0x954] sm:$0xff]
    %v3201 = vld [vmem:[#allocation14 + $0x95c] sm:$0xff]
    %v3202 = vld [vmem:[#allocation14 + $0x964] sm:$0xf]
    %v3203 = vld [vmem:[#allocation14 + $0x968] sm:$0xff]
    %v3204 = vld [vmem:[#allocation14 + $0x970] sm:$0xff]
    %v3205 = vld [vmem:[#allocation14 + $0x978] sm:$0xff]
    %v3206 = vld [vmem:[#allocation14 + $0x980] sm:$0xf]
    %v3207 = vld [vmem:[#allocation14 + $0x984] sm:$0xff]
    %v3208 = vld [vmem:[#allocation14 + $0x98c] sm:$0xff]
    %v3209 = vld [vmem:[#allocation14 + $0x994] sm:$0xff]
    %v3210 = vld [vmem:[#allocation14 + $0x99c] sm:$0xf]
    %v3211 = vld [vmem:[#allocation14 + $0x9a0] sm:$0xff]
    %v3212 = vld [vmem:[#allocation14 + $0x9a8] sm:$0xff]
    %v3213 = vld [vmem:[#allocation14 + $0x9b0] sm:$0xff]
    %v3214 = vld [vmem:[#allocation14 + $0x9b8] sm:$0xf]
    %v3215 = vld [vmem:[#allocation14 + $0x9bc] sm:$0xff]
    %v3216 = vld [vmem:[#allocation14 + $0x9c4] sm:$0xff]
    %v3217 = vld [vmem:[#allocation14 + $0x9cc] sm:$0xff]
    %v3218 = vld [vmem:[#allocation14 + $0x9d4] sm:$0xf]
    %v3219 = vld [vmem:[#allocation14 + $0x9d8] sm:$0xff]
    %v3220 = vld [vmem:[#allocation14 + $0x9e0] sm:$0xff]
    %v3221 = vld [vmem:[#allocation14 + $0x9e8] sm:$0xff]
    %v3222 = vld [vmem:[#allocation14 + $0x9f0] sm:$0xf]
    %v3223 = vld [vmem:[#allocation14 + $0x9f4] sm:$0xff]
    %v3224 = vld [vmem:[#allocation14 + $0x9fc] sm:$0xff]
    %v3225 = vld [vmem:[#allocation14 + $0xa04] sm:$0xff]
    %v3226 = vld [vmem:[#allocation14 + $0xa0c] sm:$0xf]
    %v3227 = vld [vmem:[#allocation14 + $0xa10] sm:$0xff]
    %v3228 = vld [vmem:[#allocation14 + $0xa18] sm:$0xff]
    %v3229 = vld [vmem:[#allocation14 + $0xa20] sm:$0xff]
    %v3230 = vld [vmem:[#allocation14 + $0xa28] sm:$0xf]
    %v3231 = vld [vmem:[#allocation14 + $0xa2c] sm:$0xff]
    %v3232 = vld [vmem:[#allocation14 + $0xa34] sm:$0xff]
    %v3233 = vld [vmem:[#allocation14 + $0xa3c] sm:$0xff]
    %v3234 = vld [vmem:[#allocation14 + $0xa44] sm:$0xf]
    %v3235 = vld [vmem:[#allocation14 + $0xa48] sm:$0xff]
    %v3236 = vld [vmem:[#allocation14 + $0xa50] sm:$0xff]
    %v3237 = vld [vmem:[#allocation14 + $0xa58] sm:$0xff]
    %v3238 = vld [vmem:[#allocation14 + $0xa60] sm:$0xf]
    %v3239 = vld [vmem:[#allocation14 + $0xa64] sm:$0xff]
    %v3240 = vld [vmem:[#allocation14 + $0xa6c] sm:$0xff]
    %v3241 = vld [vmem:[#allocation14 + $0xa74] sm:$0xff]
    %v3242 = vld [vmem:[#allocation14 + $0xa7c] sm:$0xf]
    %v3243 = vld [vmem:[#allocation14 + $0xa80] sm:$0xff]
    %v3244 = vld [vmem:[#allocation14 + $0xa88] sm:$0xff]
    %v3245 = vld [vmem:[#allocation14 + $0xa90] sm:$0xff]
    %v3246 = vld [vmem:[#allocation14 + $0xa98] sm:$0xf]
    %v3247 = vld [vmem:[#allocation14 + $0xa9c] sm:$0xff]
    %v3248 = vld [vmem:[#allocation14 + $0xaa4] sm:$0xff]
    %v3249 = vld [vmem:[#allocation14 + $0xaac] sm:$0xff]
    %v3250 = vld [vmem:[#allocation14 + $0xab4] sm:$0xf]
    %v3251 = vld [vmem:[#allocation14 + $0xab8] sm:$0xff]
    %v3252 = vld [vmem:[#allocation14 + $0xac0] sm:$0xff]
    %v3253 = vld [vmem:[#allocation14 + $0xac8] sm:$0xff]
    %v3254 = vld [vmem:[#allocation14 + $0xad0] sm:$0xf]
    %v3255 = vld [vmem:[#allocation14 + $0xad4] sm:$0xff]
    %v3256 = vld [vmem:[#allocation14 + $0xadc] sm:$0xff]
    %v3257 = vld [vmem:[#allocation14 + $0xae4] sm:$0xff]
    %v3258 = vld [vmem:[#allocation14 + $0xaec] sm:$0xf]
    %v3259 = vld [vmem:[#allocation14 + $0xaf0] sm:$0xff]
    %v3260 = vld [vmem:[#allocation14 + $0xaf8] sm:$0xff]
    %v3261 = vld [vmem:[#allocation14 + $0xb00] sm:$0xff]
    %v3262 = vld [vmem:[#allocation14 + $0xb08] sm:$0xf]
    %v3263 = vld [vmem:[#allocation14 + $0xb0c] sm:$0xff]
    %v3264 = vld [vmem:[#allocation14 + $0xb14] sm:$0xff]
    %v3265 = vld [vmem:[#allocation14 + $0xb1c] sm:$0xff]
    %v3266 = vld [vmem:[#allocation14 + $0xb24] sm:$0xf]
    %v3267 = vld [vmem:[#allocation14 + $0xb28] sm:$0xff]
    %v3268 = vld [vmem:[#allocation14 + $0xb30] sm:$0xff]
    %v3269 = vld [vmem:[#allocation14 + $0xb38] sm:$0xff]
    %v3270 = vld [vmem:[#allocation14 + $0xb40] sm:$0xf]
    %v3271 = vld [vmem:[#allocation14 + $0xb44] sm:$0xff]
    %v3272 = vld [vmem:[#allocation14 + $0xb4c] sm:$0xff]
    %v3273 = vld [vmem:[#allocation14 + $0xb54] sm:$0xff]
    %v3274 = vld [vmem:[#allocation14 + $0xb5c] sm:$0xf]
    %v3275 = vld [vmem:[#allocation14 + $0xb60] sm:$0xff]
    %v3276 = vld [vmem:[#allocation14 + $0xb68] sm:$0xff]
    %v3277 = vld [vmem:[#allocation14 + $0xb70] sm:$0xff]
    %v3278 = vld [vmem:[#allocation14 + $0xb78] sm:$0xf]
    %v3279 = vld [vmem:[#allocation14 + $0xb7c] sm:$0xff]
    %v3280 = vld [vmem:[#allocation14 + $0xb84] sm:$0xff]
    %v3281 = vld [vmem:[#allocation14 + $0xb8c] sm:$0xff]
    %v3282 = vld [vmem:[#allocation14 + $0xb94] sm:$0xf]
    %v3283 = vld [vmem:[#allocation14 + $0xb98] sm:$0xff]
    %v3284 = vld [vmem:[#allocation14 + $0xba0] sm:$0xff]
    %v3285 = vld [vmem:[#allocation14 + $0xba8] sm:$0xff]
    %v3286 = vld [vmem:[#allocation14 + $0xbb0] sm:$0xf]
    %v3287 = vld [vmem:[#allocation14 + $0xbb4] sm:$0xff]
    %v3288 = vld [vmem:[#allocation14 + $0xbbc] sm:$0xff]
    %v3289 = vld [vmem:[#allocation14 + $0xbc4] sm:$0xff]
    %v3290 = vld [vmem:[#allocation14 + $0xbcc] sm:$0xf]
    %v3291 = vld [vmem:[#allocation14 + $0xbd0] sm:$0xff]
    %v3292 = vld [vmem:[#allocation14 + $0xbd8] sm:$0xff]
    %v3293 = vld [vmem:[#allocation14 + $0xbe0] sm:$0xff]
    %v3294 = vld [vmem:[#allocation14 + $0xbe8] sm:$0xf]
    %v3295 = vld [vmem:[#allocation14 + $0xbec] sm:$0xff]
    %v3296 = vld [vmem:[#allocation14 + $0xbf4] sm:$0xff]
    %v3297 = vld [vmem:[#allocation14 + $0xbfc] sm:$0xff]
    %v3298 = vld [vmem:[#allocation14 + $0xc04] sm:$0xf]
    %v3299 = vld [vmem:[#allocation14 + $0xc08] sm:$0xff]
    %v3300 = vld [vmem:[#allocation14 + $0xc10] sm:$0xff]
    %v3301 = vld [vmem:[#allocation14 + $0xc18] sm:$0xff]
    %v3302 = vld [vmem:[#allocation14 + $0xc20] sm:$0xf]
    %v3303 = vld [vmem:[#allocation14 + $0xc24] sm:$0xff]
    %v3304 = vld [vmem:[#allocation14 + $0xc2c] sm:$0xff]
    %v3305 = vld [vmem:[#allocation14 + $0xc34] sm:$0xff]
    %v3306 = vld [vmem:[#allocation14 + $0xc3c] sm:$0xf]
    %v3307 = vld [vmem:[#allocation14 + $0xc40] sm:$0xff]
    %v3308 = vld [vmem:[#allocation14 + $0xc48] sm:$0xff]
    %v3309 = vld [vmem:[#allocation14 + $0xc50] sm:$0xff]
    %v3310 = vld [vmem:[#allocation14 + $0xc58] sm:$0xf]
    %v3311 = vld [vmem:[#allocation14 + $0xc5c] sm:$0xff]
    %v3312 = vld [vmem:[#allocation14 + $0xc64] sm:$0xff]
    %v3313 = vld [vmem:[#allocation14 + $0xc6c] sm:$0xff]
    %v3314 = vld [vmem:[#allocation14 + $0xc74] sm:$0xf]
    %v3315 = vld [vmem:[#allocation14 + $0xc78] sm:$0xff]
    %v3316 = vld [vmem:[#allocation14 + $0xc80] sm:$0xff]
    %v3317 = vld [vmem:[#allocation14 + $0xc88] sm:$0xff]
    %v3318 = vld [vmem:[#allocation14 + $0xc90] sm:$0xf]
    %v3319 = vld [vmem:[#allocation14 + $0xc94] sm:$0xff]
    %v3320 = vld [vmem:[#allocation14 + $0xc9c] sm:$0xff]
    %v3321 = vld [vmem:[#allocation14 + $0xca4] sm:$0xff]
    %v3322 = vld [vmem:[#allocation14 + $0xcac] sm:$0xf]
    %v3323 = vld [vmem:[#allocation14 + $0xcb0] sm:$0xff]
    %v3324 = vld [vmem:[#allocation14 + $0xcb8] sm:$0xff]
    %v3325 = vld [vmem:[#allocation14 + $0xcc0] sm:$0xff]
    %v3326 = vld [vmem:[#allocation14 + $0xcc8] sm:$0xf]
    %v3327 = vld [vmem:[#allocation14 + $0xccc] sm:$0xff]
    %v3328 = vld [vmem:[#allocation14 + $0xcd4] sm:$0xff]
    %v3329 = vld [vmem:[#allocation14 + $0xcdc] sm:$0xff]
    %v3330 = vld [vmem:[#allocation14 + $0xce4] sm:$0xf]
    %v3331 = vld [vmem:[#allocation14 + $0xce8] sm:$0xff]
    %v3332 = vld [vmem:[#allocation14 + $0xcf0] sm:$0xff]
    %v3333 = vld [vmem:[#allocation14 + $0xcf8] sm:$0xff]
    %v3334 = vld [vmem:[#allocation14 + $0xd00] sm:$0xf]
    %v3335 = vld [vmem:[#allocation14 + $0xd04] sm:$0xff]
    %v3336 = vld [vmem:[#allocation14 + $0xd0c] sm:$0xff]
    %v3337 = vld [vmem:[#allocation14 + $0xd14] sm:$0xff]
    %v3338 = vld [vmem:[#allocation14 + $0xd1c] sm:$0xf]
    %v3339 = vld [vmem:[#allocation14 + $0xd20] sm:$0xff]
    %v3340 = vld [vmem:[#allocation14 + $0xd28] sm:$0xff]
    %v3341 = vld [vmem:[#allocation14 + $0xd30] sm:$0xff]
    %v3342 = vld [vmem:[#allocation14 + $0xd38] sm:$0xf]
    %v3343 = vld [vmem:[#allocation14 + $0xd3c] sm:$0xff]
    %v3344 = vld [vmem:[#allocation14 + $0xd44] sm:$0xff]
    %v3345 = vld [vmem:[#allocation14 + $0xd4c] sm:$0xff]
    %v3346 = vld [vmem:[#allocation14 + $0xd54] sm:$0xf]
    %v3347 = vld [vmem:[#allocation14 + $0xd58] sm:$0xff]
    %v3348 = vld [vmem:[#allocation14 + $0xd60] sm:$0xff]
    %v3349 = vld [vmem:[#allocation14 + $0xd68] sm:$0xff]
    %v3350 = vld [vmem:[#allocation14 + $0xd70] sm:$0xf]
    %v3351 = vld [vmem:[#allocation14 + $0xd74] sm:$0xff]
    %v3352 = vld [vmem:[#allocation14 + $0xd7c] sm:$0xff]
    %v3353 = vld [vmem:[#allocation14 + $0xd84] sm:$0xff]
    %v3354 = vld [vmem:[#allocation14 + $0xd8c] sm:$0xf]
    %v3355 = vld [vmem:[#allocation14 + $0xd90] sm:$0xff]
    %v3356 = vld [vmem:[#allocation14 + $0xd98] sm:$0xff]
    %v3357 = vld [vmem:[#allocation14 + $0xda0] sm:$0xff]
    %v3358 = vld [vmem:[#allocation14 + $0xda8] sm:$0xf]
    %v3359 = vld [vmem:[#allocation14 + $0xdac] sm:$0xff]
    %v3360 = vld [vmem:[#allocation14 + $0xdb4] sm:$0xff]
    %v3361 = vld [vmem:[#allocation14 + $0xdbc] sm:$0xff]
    %v3362 = vld [vmem:[#allocation14 + $0xdc4] sm:$0xf]
    %v3363 = vld [vmem:[#allocation14 + $0xdc8] sm:$0xff]
    %v3364 = vld [vmem:[#allocation14 + $0xdd0] sm:$0xff]
    %v3365 = vld [vmem:[#allocation14 + $0xdd8] sm:$0xff]
    %v3366 = vld [vmem:[#allocation14 + $0xde0] sm:$0xf]
    %v3367 = vld [vmem:[#allocation14 + $0xde4] sm:$0xff]
    %v3368 = vld [vmem:[#allocation14 + $0xdec] sm:$0xff]
    %v3369 = vld [vmem:[#allocation14 + $0xdf4] sm:$0xff]
    %v3370 = vld [vmem:[#allocation14 + $0xdfc] sm:$0xf]
    %v3883 = vunpack.c.l.b16 %v2859
    %v3884 = vunpack.c.h.b16 %v2859
    %v3885 = vunpack.c.l.b16 %v2860
    %v3886 = vunpack.c.h.b16 %v2860
    %v3887 = vunpack.c.l.b16 %v2861
    %v3888 = vunpack.c.h.b16 %v2861
    %v3889 = vunpack.c.l.b16 %v2862
    %v3890 = vunpack.c.l.b16 %v2863
    %v3891 = vunpack.c.h.b16 %v2863
    %v3892 = vunpack.c.l.b16 %v2864
    %v3893 = vunpack.c.h.b16 %v2864
    %v3894 = vunpack.c.l.b16 %v2865
    %v3895 = vunpack.c.h.b16 %v2865
    %v3896 = vunpack.c.l.b16 %v2866
    %v3897 = vunpack.c.l.b16 %v2867
    %v3898 = vunpack.c.h.b16 %v2867
    %v3899 = vunpack.c.l.b16 %v2868
    %v3900 = vunpack.c.h.b16 %v2868
    %v3901 = vunpack.c.l.b16 %v2869
    %v3902 = vunpack.c.h.b16 %v2869
    %v3903 = vunpack.c.l.b16 %v2870
    %v3904 = vunpack.c.l.b16 %v2871
    %v3905 = vunpack.c.h.b16 %v2871
    %v3906 = vunpack.c.l.b16 %v2872
    %v3907 = vunpack.c.h.b16 %v2872
    %v3908 = vunpack.c.l.b16 %v2873
    %v3909 = vunpack.c.h.b16 %v2873
    %v3910 = vunpack.c.l.b16 %v2874
    %v3911 = vunpack.c.l.b16 %v2875
    %v3912 = vunpack.c.h.b16 %v2875
    %v3913 = vunpack.c.l.b16 %v2876
    %v3914 = vunpack.c.h.b16 %v2876
    %v3915 = vunpack.c.l.b16 %v2877
    %v3916 = vunpack.c.h.b16 %v2877
    %v3917 = vunpack.c.l.b16 %v2878
    %v3918 = vunpack.c.l.b16 %v2879
    %v3919 = vunpack.c.h.b16 %v2879
    %v3920 = vunpack.c.l.b16 %v2880
    %v3921 = vunpack.c.h.b16 %v2880
    %v3922 = vunpack.c.l.b16 %v2881
    %v3923 = vunpack.c.h.b16 %v2881
    %v3924 = vunpack.c.l.b16 %v2882
    %v3925 = vunpack.c.l.b16 %v2883
    %v3926 = vunpack.c.h.b16 %v2883
    %v3927 = vunpack.c.l.b16 %v2884
    %v3928 = vunpack.c.h.b16 %v2884
    %v3929 = vunpack.c.l.b16 %v2885
    %v3930 = vunpack.c.h.b16 %v2885
    %v3931 = vunpack.c.l.b16 %v2886
    %v3932 = vunpack.c.l.b16 %v2887
    %v3933 = vunpack.c.h.b16 %v2887
    %v3934 = vunpack.c.l.b16 %v2888
    %v3935 = vunpack.c.h.b16 %v2888
    %v3936 = vunpack.c.l.b16 %v2889
    %v3937 = vunpack.c.h.b16 %v2889
    %v3938 = vunpack.c.l.b16 %v2890
    %v3939 = vunpack.c.l.b16 %v2891
    %v3940 = vunpack.c.h.b16 %v2891
    %v3941 = vunpack.c.l.b16 %v2892
    %v3942 = vunpack.c.h.b16 %v2892
    %v3943 = vunpack.c.l.b16 %v2893
    %v3944 = vunpack.c.h.b16 %v2893
    %v3945 = vunpack.c.l.b16 %v2894
    %v3946 = vunpack.c.l.b16 %v2895
    %v3947 = vunpack.c.h.b16 %v2895
    %v3948 = vunpack.c.l.b16 %v2896
    %v3949 = vunpack.c.h.b16 %v2896
    %v3950 = vunpack.c.l.b16 %v2897
    %v3951 = vunpack.c.h.b16 %v2897
    %v3952 = vunpack.c.l.b16 %v2898
    %v3953 = vunpack.c.l.b16 %v2899
    %v3954 = vunpack.c.h.b16 %v2899
    %v3955 = vunpack.c.l.b16 %v2900
    %v3956 = vunpack.c.h.b16 %v2900
    %v3957 = vunpack.c.l.b16 %v2901
    %v3958 = vunpack.c.h.b16 %v2901
    %v3959 = vunpack.c.l.b16 %v2902
    %v3960 = vunpack.c.l.b16 %v2903
    %v3961 = vunpack.c.h.b16 %v2903
    %v3962 = vunpack.c.l.b16 %v2904
    %v3963 = vunpack.c.h.b16 %v2904
    %v3964 = vunpack.c.l.b16 %v2905
    %v3965 = vunpack.c.h.b16 %v2905
    %v3966 = vunpack.c.l.b16 %v2906
    %v3967 = vunpack.c.l.b16 %v2907
    %v3968 = vunpack.c.h.b16 %v2907
    %v3969 = vunpack.c.l.b16 %v2908
    %v3970 = vunpack.c.h.b16 %v2908
    %v3971 = vunpack.c.l.b16 %v2909
    %v3972 = vunpack.c.h.b16 %v2909
    %v3973 = vunpack.c.l.b16 %v2910
    %v3974 = vunpack.c.l.b16 %v2911
    %v3975 = vunpack.c.h.b16 %v2911
    %v3976 = vunpack.c.l.b16 %v2912
    %v3977 = vunpack.c.h.b16 %v2912
    %v3978 = vunpack.c.l.b16 %v2913
    %v3979 = vunpack.c.h.b16 %v2913
    %v3980 = vunpack.c.l.b16 %v2914
    %v3981 = vunpack.c.l.b16 %v2915
    %v3982 = vunpack.c.h.b16 %v2915
    %v3983 = vunpack.c.l.b16 %v2916
    %v3984 = vunpack.c.h.b16 %v2916
    %v3985 = vunpack.c.l.b16 %v2917
    %v3986 = vunpack.c.h.b16 %v2917
    %v3987 = vunpack.c.l.b16 %v2918
    %v3988 = vunpack.c.l.b16 %v2919
    %v3989 = vunpack.c.h.b16 %v2919
    %v3990 = vunpack.c.l.b16 %v2920
    %v3991 = vunpack.c.h.b16 %v2920
    %v3992 = vunpack.c.l.b16 %v2921
    %v3993 = vunpack.c.h.b16 %v2921
    %v3994 = vunpack.c.l.b16 %v2922
    %v3995 = vunpack.c.l.b16 %v2923
    %v3996 = vunpack.c.h.b16 %v2923
    %v3997 = vunpack.c.l.b16 %v2924
    %v3998 = vunpack.c.h.b16 %v2924
    %v3999 = vunpack.c.l.b16 %v2925
    %v4000 = vunpack.c.h.b16 %v2925
    %v4001 = vunpack.c.l.b16 %v2926
    %v4002 = vunpack.c.l.b16 %v2927
    %v4003 = vunpack.c.h.b16 %v2927
    %v4004 = vunpack.c.l.b16 %v2928
    %v4005 = vunpack.c.h.b16 %v2928
    %v4006 = vunpack.c.l.b16 %v2929
    %v4007 = vunpack.c.h.b16 %v2929
    %v4008 = vunpack.c.l.b16 %v2930
    %v4009 = vunpack.c.l.b16 %v2931
    %v4010 = vunpack.c.h.b16 %v2931
    %v4011 = vunpack.c.l.b16 %v2932
    %v4012 = vunpack.c.h.b16 %v2932
    %v4013 = vunpack.c.l.b16 %v2933
    %v4014 = vunpack.c.h.b16 %v2933
    %v4015 = vunpack.c.l.b16 %v2934
    %v4016 = vunpack.c.l.b16 %v2935
    %v4017 = vunpack.c.h.b16 %v2935
    %v4018 = vunpack.c.l.b16 %v2936
    %v4019 = vunpack.c.h.b16 %v2936
    %v4020 = vunpack.c.l.b16 %v2937
    %v4021 = vunpack.c.h.b16 %v2937
    %v4022 = vunpack.c.l.b16 %v2938
    %v4023 = vunpack.c.l.b16 %v2939
    %v4024 = vunpack.c.h.b16 %v2939
    %v4025 = vunpack.c.l.b16 %v2940
    %v4026 = vunpack.c.h.b16 %v2940
    %v4027 = vunpack.c.l.b16 %v2941
    %v4028 = vunpack.c.h.b16 %v2941
    %v4029 = vunpack.c.l.b16 %v2942
    %v4030 = vunpack.c.l.b16 %v2943
    %v4031 = vunpack.c.h.b16 %v2943
    %v4032 = vunpack.c.l.b16 %v2944
    %v4033 = vunpack.c.h.b16 %v2944
    %v4034 = vunpack.c.l.b16 %v2945
    %v4035 = vunpack.c.h.b16 %v2945
    %v4036 = vunpack.c.l.b16 %v2946
    %v4037 = vunpack.c.l.b16 %v2947
    %v4038 = vunpack.c.h.b16 %v2947
    %v4039 = vunpack.c.l.b16 %v2948
    %v4040 = vunpack.c.h.b16 %v2948
    %v4041 = vunpack.c.l.b16 %v2949
    %v4042 = vunpack.c.h.b16 %v2949
    %v4043 = vunpack.c.l.b16 %v2950
    %v4044 = vunpack.c.l.b16 %v2951
    %v4045 = vunpack.c.h.b16 %v2951
    %v4046 = vunpack.c.l.b16 %v2952
    %v4047 = vunpack.c.h.b16 %v2952
    %v4048 = vunpack.c.l.b16 %v2953
    %v4049 = vunpack.c.h.b16 %v2953
    %v4050 = vunpack.c.l.b16 %v2954
    %v4051 = vunpack.c.l.b16 %v2955
    %v4052 = vunpack.c.h.b16 %v2955
    %v4053 = vunpack.c.l.b16 %v2956
    %v4054 = vunpack.c.h.b16 %v2956
    %v4055 = vunpack.c.l.b16 %v2957
    %v4056 = vunpack.c.h.b16 %v2957
    %v4057 = vunpack.c.l.b16 %v2958
    %v4058 = vunpack.c.l.b16 %v2959
    %v4059 = vunpack.c.h.b16 %v2959
    %v4060 = vunpack.c.l.b16 %v2960
    %v4061 = vunpack.c.h.b16 %v2960
    %v4062 = vunpack.c.l.b16 %v2961
    %v4063 = vunpack.c.h.b16 %v2961
    %v4064 = vunpack.c.l.b16 %v2962
    %v4065 = vunpack.c.l.b16 %v2963
    %v4066 = vunpack.c.h.b16 %v2963
    %v4067 = vunpack.c.l.b16 %v2964
    %v4068 = vunpack.c.h.b16 %v2964
    %v4069 = vunpack.c.l.b16 %v2965
    %v4070 = vunpack.c.h.b16 %v2965
    %v4071 = vunpack.c.l.b16 %v2966
    %v4072 = vunpack.c.l.b16 %v2967
    %v4073 = vunpack.c.h.b16 %v2967
    %v4074 = vunpack.c.l.b16 %v2968
    %v4075 = vunpack.c.h.b16 %v2968
    %v4076 = vunpack.c.l.b16 %v2969
    %v4077 = vunpack.c.h.b16 %v2969
    %v4078 = vunpack.c.l.b16 %v2970
    %v4079 = vunpack.c.l.b16 %v2971
    %v4080 = vunpack.c.h.b16 %v2971
    %v4081 = vunpack.c.l.b16 %v2972
    %v4082 = vunpack.c.h.b16 %v2972
    %v4083 = vunpack.c.l.b16 %v2973
    %v4084 = vunpack.c.h.b16 %v2973
    %v4085 = vunpack.c.l.b16 %v2974
    %v4086 = vunpack.c.l.b16 %v2975
    %v4087 = vunpack.c.h.b16 %v2975
    %v4088 = vunpack.c.l.b16 %v2976
    %v4089 = vunpack.c.h.b16 %v2976
    %v4090 = vunpack.c.l.b16 %v2977
    %v4091 = vunpack.c.h.b16 %v2977
    %v4092 = vunpack.c.l.b16 %v2978
    %v4093 = vunpack.c.l.b16 %v2979
    %v4094 = vunpack.c.h.b16 %v2979
    %v4095 = vunpack.c.l.b16 %v2980
    %v4096 = vunpack.c.h.b16 %v2980
    %v4097 = vunpack.c.l.b16 %v2981
    %v4098 = vunpack.c.h.b16 %v2981
    %v4099 = vunpack.c.l.b16 %v2982
    %v4100 = vunpack.c.l.b16 %v2983
    %v4101 = vunpack.c.h.b16 %v2983
    %v4102 = vunpack.c.l.b16 %v2984
    %v4103 = vunpack.c.h.b16 %v2984
    %v4104 = vunpack.c.l.b16 %v2985
    %v4105 = vunpack.c.h.b16 %v2985
    %v4106 = vunpack.c.l.b16 %v2986
    %v4107 = vunpack.c.l.b16 %v2987
    %v4108 = vunpack.c.h.b16 %v2987
    %v4109 = vunpack.c.l.b16 %v2988
    %v4110 = vunpack.c.h.b16 %v2988
    %v4111 = vunpack.c.l.b16 %v2989
    %v4112 = vunpack.c.h.b16 %v2989
    %v4113 = vunpack.c.l.b16 %v2990
    %v4114 = vunpack.c.l.b16 %v2991
    %v4115 = vunpack.c.h.b16 %v2991
    %v4116 = vunpack.c.l.b16 %v2992
    %v4117 = vunpack.c.h.b16 %v2992
    %v4118 = vunpack.c.l.b16 %v2993
    %v4119 = vunpack.c.h.b16 %v2993
    %v4120 = vunpack.c.l.b16 %v2994
    %v4121 = vunpack.c.l.b16 %v2995
    %v4122 = vunpack.c.h.b16 %v2995
    %v4123 = vunpack.c.l.b16 %v2996
    %v4124 = vunpack.c.h.b16 %v2996
    %v4125 = vunpack.c.l.b16 %v2997
    %v4126 = vunpack.c.h.b16 %v2997
    %v4127 = vunpack.c.l.b16 %v2998
    %v4128 = vunpack.c.l.b16 %v2999
    %v4129 = vunpack.c.h.b16 %v2999
    %v4130 = vunpack.c.l.b16 %v3000
    %v4131 = vunpack.c.h.b16 %v3000
    %v4132 = vunpack.c.l.b16 %v3001
    %v4133 = vunpack.c.h.b16 %v3001
    %v4134 = vunpack.c.l.b16 %v3002
    %v4135 = vunpack.c.l.b16 %v3003
    %v4136 = vunpack.c.h.b16 %v3003
    %v4137 = vunpack.c.l.b16 %v3004
    %v4138 = vunpack.c.h.b16 %v3004
    %v4139 = vunpack.c.l.b16 %v3005
    %v4140 = vunpack.c.h.b16 %v3005
    %v4141 = vunpack.c.l.b16 %v3006
    %v4142 = vunpack.c.l.b16 %v3007
    %v4143 = vunpack.c.h.b16 %v3007
    %v4144 = vunpack.c.l.b16 %v3008
    %v4145 = vunpack.c.h.b16 %v3008
    %v4146 = vunpack.c.l.b16 %v3009
    %v4147 = vunpack.c.h.b16 %v3009
    %v4148 = vunpack.c.l.b16 %v3010
    %v4149 = vunpack.c.l.b16 %v3011
    %v4150 = vunpack.c.h.b16 %v3011
    %v4151 = vunpack.c.l.b16 %v3012
    %v4152 = vunpack.c.h.b16 %v3012
    %v4153 = vunpack.c.l.b16 %v3013
    %v4154 = vunpack.c.h.b16 %v3013
    %v4155 = vunpack.c.l.b16 %v3014
    %v4156 = vunpack.c.l.b16 %v3015
    %v4157 = vunpack.c.h.b16 %v3015
    %v4158 = vunpack.c.l.b16 %v3016
    %v4159 = vunpack.c.h.b16 %v3016
    %v4160 = vunpack.c.l.b16 %v3017
    %v4161 = vunpack.c.h.b16 %v3017
    %v4162 = vunpack.c.l.b16 %v3018
    %v4163 = vunpack.c.l.b16 %v3019
    %v4164 = vunpack.c.h.b16 %v3019
    %v4165 = vunpack.c.l.b16 %v3020
    %v4166 = vunpack.c.h.b16 %v3020
    %v4167 = vunpack.c.l.b16 %v3021
    %v4168 = vunpack.c.h.b16 %v3021
    %v4169 = vunpack.c.l.b16 %v3022
    %v4170 = vunpack.c.l.b16 %v3023
    %v4171 = vunpack.c.h.b16 %v3023
    %v4172 = vunpack.c.l.b16 %v3024
    %v4173 = vunpack.c.h.b16 %v3024
    %v4174 = vunpack.c.l.b16 %v3025
    %v4175 = vunpack.c.h.b16 %v3025
    %v4176 = vunpack.c.l.b16 %v3026
    %v4177 = vunpack.c.l.b16 %v3027
    %v4178 = vunpack.c.h.b16 %v3027
    %v4179 = vunpack.c.l.b16 %v3028
    %v4180 = vunpack.c.h.b16 %v3028
    %v4181 = vunpack.c.l.b16 %v3029
    %v4182 = vunpack.c.h.b16 %v3029
    %v4183 = vunpack.c.l.b16 %v3030
    %v4184 = vunpack.c.l.b16 %v3031
    %v4185 = vunpack.c.h.b16 %v3031
    %v4186 = vunpack.c.l.b16 %v3032
    %v4187 = vunpack.c.h.b16 %v3032
    %v4188 = vunpack.c.l.b16 %v3033
    %v4189 = vunpack.c.h.b16 %v3033
    %v4190 = vunpack.c.l.b16 %v3034
    %v4191 = vunpack.c.l.b16 %v3035
    %v4192 = vunpack.c.h.b16 %v3035
    %v4193 = vunpack.c.l.b16 %v3036
    %v4194 = vunpack.c.h.b16 %v3036
    %v4195 = vunpack.c.l.b16 %v3037
    %v4196 = vunpack.c.h.b16 %v3037
    %v4197 = vunpack.c.l.b16 %v3038
    %v4198 = vunpack.c.l.b16 %v3039
    %v4199 = vunpack.c.h.b16 %v3039
    %v4200 = vunpack.c.l.b16 %v3040
    %v4201 = vunpack.c.h.b16 %v3040
    %v4202 = vunpack.c.l.b16 %v3041
    %v4203 = vunpack.c.h.b16 %v3041
    %v4204 = vunpack.c.l.b16 %v3042
    %v4205 = vunpack.c.l.b16 %v3043
    %v4206 = vunpack.c.h.b16 %v3043
    %v4207 = vunpack.c.l.b16 %v3044
    %v4208 = vunpack.c.h.b16 %v3044
    %v4209 = vunpack.c.l.b16 %v3045
    %v4210 = vunpack.c.h.b16 %v3045
    %v4211 = vunpack.c.l.b16 %v3046
    %v4212 = vunpack.c.l.b16 %v3047
    %v4213 = vunpack.c.h.b16 %v3047
    %v4214 = vunpack.c.l.b16 %v3048
    %v4215 = vunpack.c.h.b16 %v3048
    %v4216 = vunpack.c.l.b16 %v3049
    %v4217 = vunpack.c.h.b16 %v3049
    %v4218 = vunpack.c.l.b16 %v3050
    %v4219 = vunpack.c.l.b16 %v3051
    %v4220 = vunpack.c.h.b16 %v3051
    %v4221 = vunpack.c.l.b16 %v3052
    %v4222 = vunpack.c.h.b16 %v3052
    %v4223 = vunpack.c.l.b16 %v3053
    %v4224 = vunpack.c.h.b16 %v3053
    %v4225 = vunpack.c.l.b16 %v3054
    %v4226 = vunpack.c.l.b16 %v3055
    %v4227 = vunpack.c.h.b16 %v3055
    %v4228 = vunpack.c.l.b16 %v3056
    %v4229 = vunpack.c.h.b16 %v3056
    %v4230 = vunpack.c.l.b16 %v3057
    %v4231 = vunpack.c.h.b16 %v3057
    %v4232 = vunpack.c.l.b16 %v3058
    %v4233 = vunpack.c.l.b16 %v3059
    %v4234 = vunpack.c.h.b16 %v3059
    %v4235 = vunpack.c.l.b16 %v3060
    %v4236 = vunpack.c.h.b16 %v3060
    %v4237 = vunpack.c.l.b16 %v3061
    %v4238 = vunpack.c.h.b16 %v3061
    %v4239 = vunpack.c.l.b16 %v3062
    %v4240 = vunpack.c.l.b16 %v3063
    %v4241 = vunpack.c.h.b16 %v3063
    %v4242 = vunpack.c.l.b16 %v3064
    %v4243 = vunpack.c.h.b16 %v3064
    %v4244 = vunpack.c.l.b16 %v3065
    %v4245 = vunpack.c.h.b16 %v3065
    %v4246 = vunpack.c.l.b16 %v3066
    %v4247 = vunpack.c.l.b16 %v3067
    %v4248 = vunpack.c.h.b16 %v3067
    %v4249 = vunpack.c.l.b16 %v3068
    %v4250 = vunpack.c.h.b16 %v3068
    %v4251 = vunpack.c.l.b16 %v3069
    %v4252 = vunpack.c.h.b16 %v3069
    %v4253 = vunpack.c.l.b16 %v3070
    %v4254 = vunpack.c.l.b16 %v3071
    %v4255 = vunpack.c.h.b16 %v3071
    %v4256 = vunpack.c.l.b16 %v3072
    %v4257 = vunpack.c.h.b16 %v3072
    %v4258 = vunpack.c.l.b16 %v3073
    %v4259 = vunpack.c.h.b16 %v3073
    %v4260 = vunpack.c.l.b16 %v3074
    %v4261 = vunpack.c.l.b16 %v3075
    %v4262 = vunpack.c.h.b16 %v3075
    %v4263 = vunpack.c.l.b16 %v3076
    %v4264 = vunpack.c.h.b16 %v3076
    %v4265 = vunpack.c.l.b16 %v3077
    %v4266 = vunpack.c.h.b16 %v3077
    %v4267 = vunpack.c.l.b16 %v3078
    %v4268 = vunpack.c.l.b16 %v3079
    %v4269 = vunpack.c.h.b16 %v3079
    %v4270 = vunpack.c.l.b16 %v3080
    %v4271 = vunpack.c.h.b16 %v3080
    %v4272 = vunpack.c.l.b16 %v3081
    %v4273 = vunpack.c.h.b16 %v3081
    %v4274 = vunpack.c.l.b16 %v3082
    %v4275 = vunpack.c.l.b16 %v3083
    %v4276 = vunpack.c.h.b16 %v3083
    %v4277 = vunpack.c.l.b16 %v3084
    %v4278 = vunpack.c.h.b16 %v3084
    %v4279 = vunpack.c.l.b16 %v3085
    %v4280 = vunpack.c.h.b16 %v3085
    %v4281 = vunpack.c.l.b16 %v3086
    %v4282 = vunpack.c.l.b16 %v3087
    %v4283 = vunpack.c.h.b16 %v3087
    %v4284 = vunpack.c.l.b16 %v3088
    %v4285 = vunpack.c.h.b16 %v3088
    %v4286 = vunpack.c.l.b16 %v3089
    %v4287 = vunpack.c.h.b16 %v3089
    %v4288 = vunpack.c.l.b16 %v3090
    %v4289 = vunpack.c.l.b16 %v3091
    %v4290 = vunpack.c.h.b16 %v3091
    %v4291 = vunpack.c.l.b16 %v3092
    %v4292 = vunpack.c.h.b16 %v3092
    %v4293 = vunpack.c.l.b16 %v3093
    %v4294 = vunpack.c.h.b16 %v3093
    %v4295 = vunpack.c.l.b16 %v3094
    %v4296 = vunpack.c.l.b16 %v3095
    %v4297 = vunpack.c.h.b16 %v3095
    %v4298 = vunpack.c.l.b16 %v3096
    %v4299 = vunpack.c.h.b16 %v3096
    %v4300 = vunpack.c.l.b16 %v3097
    %v4301 = vunpack.c.h.b16 %v3097
    %v4302 = vunpack.c.l.b16 %v3098
    %v4303 = vunpack.c.l.b16 %v3099
    %v4304 = vunpack.c.h.b16 %v3099
    %v4305 = vunpack.c.l.b16 %v3100
    %v4306 = vunpack.c.h.b16 %v3100
    %v4307 = vunpack.c.l.b16 %v3101
    %v4308 = vunpack.c.h.b16 %v3101
    %v4309 = vunpack.c.l.b16 %v3102
    %v4310 = vunpack.c.l.b16 %v3103
    %v4311 = vunpack.c.h.b16 %v3103
    %v4312 = vunpack.c.l.b16 %v3104
    %v4313 = vunpack.c.h.b16 %v3104
    %v4314 = vunpack.c.l.b16 %v3105
    %v4315 = vunpack.c.h.b16 %v3105
    %v4316 = vunpack.c.l.b16 %v3106
    %v4317 = vunpack.c.l.b16 %v3107
    %v4318 = vunpack.c.h.b16 %v3107
    %v4319 = vunpack.c.l.b16 %v3108
    %v4320 = vunpack.c.h.b16 %v3108
    %v4321 = vunpack.c.l.b16 %v3109
    %v4322 = vunpack.c.h.b16 %v3109
    %v4323 = vunpack.c.l.b16 %v3110
    %v4324 = vunpack.c.l.b16 %v3111
    %v4325 = vunpack.c.h.b16 %v3111
    %v4326 = vunpack.c.l.b16 %v3112
    %v4327 = vunpack.c.h.b16 %v3112
    %v4328 = vunpack.c.l.b16 %v3113
    %v4329 = vunpack.c.h.b16 %v3113
    %v4330 = vunpack.c.l.b16 %v3114
    %v4331 = vunpack.c.l.b16 %v3115
    %v4332 = vunpack.c.h.b16 %v3115
    %v4333 = vunpack.c.l.b16 %v3116
    %v4334 = vunpack.c.h.b16 %v3116
    %v4335 = vunpack.c.l.b16 %v3117
    %v4336 = vunpack.c.h.b16 %v3117
    %v4337 = vunpack.c.l.b16 %v3118
    %v4338 = vunpack.c.l.b16 %v3119
    %v4339 = vunpack.c.h.b16 %v3119
    %v4340 = vunpack.c.l.b16 %v3120
    %v4341 = vunpack.c.h.b16 %v3120
    %v4342 = vunpack.c.l.b16 %v3121
    %v4343 = vunpack.c.h.b16 %v3121
    %v4344 = vunpack.c.l.b16 %v3122
    %v4345 = vunpack.c.l.b16 %v3123
    %v4346 = vunpack.c.h.b16 %v3123
    %v4347 = vunpack.c.l.b16 %v3124
    %v4348 = vunpack.c.h.b16 %v3124
    %v4349 = vunpack.c.l.b16 %v3125
    %v4350 = vunpack.c.h.b16 %v3125
    %v4351 = vunpack.c.l.b16 %v3126
    %v4352 = vunpack.c.l.b16 %v3127
    %v4353 = vunpack.c.h.b16 %v3127
    %v4354 = vunpack.c.l.b16 %v3128
    %v4355 = vunpack.c.h.b16 %v3128
    %v4356 = vunpack.c.l.b16 %v3129
    %v4357 = vunpack.c.h.b16 %v3129
    %v4358 = vunpack.c.l.b16 %v3130
    %v4359 = vunpack.c.l.b16 %v3131
    %v4360 = vunpack.c.h.b16 %v3131
    %v4361 = vunpack.c.l.b16 %v3132
    %v4362 = vunpack.c.h.b16 %v3132
    %v4363 = vunpack.c.l.b16 %v3133
    %v4364 = vunpack.c.h.b16 %v3133
    %v4365 = vunpack.c.l.b16 %v3134
    %v4366 = vunpack.c.l.b16 %v3135
    %v4367 = vunpack.c.h.b16 %v3135
    %v4368 = vunpack.c.l.b16 %v3136
    %v4369 = vunpack.c.h.b16 %v3136
    %v4370 = vunpack.c.l.b16 %v3137
    %v4371 = vunpack.c.h.b16 %v3137
    %v4372 = vunpack.c.l.b16 %v3138
    %v4373 = vunpack.c.l.b16 %v3139
    %v4374 = vunpack.c.h.b16 %v3139
    %v4375 = vunpack.c.l.b16 %v3140
    %v4376 = vunpack.c.h.b16 %v3140
    %v4377 = vunpack.c.l.b16 %v3141
    %v4378 = vunpack.c.h.b16 %v3141
    %v4379 = vunpack.c.l.b16 %v3142
    %v4380 = vunpack.c.l.b16 %v3143
    %v4381 = vunpack.c.h.b16 %v3143
    %v4382 = vunpack.c.l.b16 %v3144
    %v4383 = vunpack.c.h.b16 %v3144
    %v4384 = vunpack.c.l.b16 %v3145
    %v4385 = vunpack.c.h.b16 %v3145
    %v4386 = vunpack.c.l.b16 %v3146
    %v4387 = vunpack.c.l.b16 %v3147
    %v4388 = vunpack.c.h.b16 %v3147
    %v4389 = vunpack.c.l.b16 %v3148
    %v4390 = vunpack.c.h.b16 %v3148
    %v4391 = vunpack.c.l.b16 %v3149
    %v4392 = vunpack.c.h.b16 %v3149
    %v4393 = vunpack.c.l.b16 %v3150
    %v4394 = vunpack.c.l.b16 %v3151
    %v4395 = vunpack.c.h.b16 %v3151
    %v4396 = vunpack.c.l.b16 %v3152
    %v4397 = vunpack.c.h.b16 %v3152
    %v4398 = vunpack.c.l.b16 %v3153
    %v4399 = vunpack.c.h.b16 %v3153
    %v4400 = vunpack.c.l.b16 %v3154
    %v4401 = vunpack.c.l.b16 %v3155
    %v4402 = vunpack.c.h.b16 %v3155
    %v4403 = vunpack.c.l.b16 %v3156
    %v4404 = vunpack.c.h.b16 %v3156
    %v4405 = vunpack.c.l.b16 %v3157
    %v4406 = vunpack.c.h.b16 %v3157
    %v4407 = vunpack.c.l.b16 %v3158
    %v4408 = vunpack.c.l.b16 %v3159
    %v4409 = vunpack.c.h.b16 %v3159
    %v4410 = vunpack.c.l.b16 %v3160
    %v4411 = vunpack.c.h.b16 %v3160
    %v4412 = vunpack.c.l.b16 %v3161
    %v4413 = vunpack.c.h.b16 %v3161
    %v4414 = vunpack.c.l.b16 %v3162
    %v4415 = vunpack.c.l.b16 %v3163
    %v4416 = vunpack.c.h.b16 %v3163
    %v4417 = vunpack.c.l.b16 %v3164
    %v4418 = vunpack.c.h.b16 %v3164
    %v4419 = vunpack.c.l.b16 %v3165
    %v4420 = vunpack.c.h.b16 %v3165
    %v4421 = vunpack.c.l.b16 %v3166
    %v4422 = vunpack.c.l.b16 %v3167
    %v4423 = vunpack.c.h.b16 %v3167
    %v4424 = vunpack.c.l.b16 %v3168
    %v4425 = vunpack.c.h.b16 %v3168
    %v4426 = vunpack.c.l.b16 %v3169
    %v4427 = vunpack.c.h.b16 %v3169
    %v4428 = vunpack.c.l.b16 %v3170
    %v4429 = vunpack.c.l.b16 %v3171
    %v4430 = vunpack.c.h.b16 %v3171
    %v4431 = vunpack.c.l.b16 %v3172
    %v4432 = vunpack.c.h.b16 %v3172
    %v4433 = vunpack.c.l.b16 %v3173
    %v4434 = vunpack.c.h.b16 %v3173
    %v4435 = vunpack.c.l.b16 %v3174
    %v4436 = vunpack.c.l.b16 %v3175
    %v4437 = vunpack.c.h.b16 %v3175
    %v4438 = vunpack.c.l.b16 %v3176
    %v4439 = vunpack.c.h.b16 %v3176
    %v4440 = vunpack.c.l.b16 %v3177
    %v4441 = vunpack.c.h.b16 %v3177
    %v4442 = vunpack.c.l.b16 %v3178
    %v4443 = vunpack.c.l.b16 %v3179
    %v4444 = vunpack.c.h.b16 %v3179
    %v4445 = vunpack.c.l.b16 %v3180
    %v4446 = vunpack.c.h.b16 %v3180
    %v4447 = vunpack.c.l.b16 %v3181
    %v4448 = vunpack.c.h.b16 %v3181
    %v4449 = vunpack.c.l.b16 %v3182
    %v4450 = vunpack.c.l.b16 %v3183
    %v4451 = vunpack.c.h.b16 %v3183
    %v4452 = vunpack.c.l.b16 %v3184
    %v4453 = vunpack.c.h.b16 %v3184
    %v4454 = vunpack.c.l.b16 %v3185
    %v4455 = vunpack.c.h.b16 %v3185
    %v4456 = vunpack.c.l.b16 %v3186
    %v4457 = vunpack.c.l.b16 %v3187
    %v4458 = vunpack.c.h.b16 %v3187
    %v4459 = vunpack.c.l.b16 %v3188
    %v4460 = vunpack.c.h.b16 %v3188
    %v4461 = vunpack.c.l.b16 %v3189
    %v4462 = vunpack.c.h.b16 %v3189
    %v4463 = vunpack.c.l.b16 %v3190
    %v4464 = vunpack.c.l.b16 %v3191
    %v4465 = vunpack.c.h.b16 %v3191
    %v4466 = vunpack.c.l.b16 %v3192
    %v4467 = vunpack.c.h.b16 %v3192
    %v4468 = vunpack.c.l.b16 %v3193
    %v4469 = vunpack.c.h.b16 %v3193
    %v4470 = vunpack.c.l.b16 %v3194
    %v4471 = vunpack.c.l.b16 %v3195
    %v4472 = vunpack.c.h.b16 %v3195
    %v4473 = vunpack.c.l.b16 %v3196
    %v4474 = vunpack.c.h.b16 %v3196
    %v4475 = vunpack.c.l.b16 %v3197
    %v4476 = vunpack.c.h.b16 %v3197
    %v4477 = vunpack.c.l.b16 %v3198
    %v4478 = vunpack.c.l.b16 %v3199
    %v4479 = vunpack.c.h.b16 %v3199
    %v4480 = vunpack.c.l.b16 %v3200
    %v4481 = vunpack.c.h.b16 %v3200
    %v4482 = vunpack.c.l.b16 %v3201
    %v4483 = vunpack.c.h.b16 %v3201
    %v4484 = vunpack.c.l.b16 %v3202
    %v4485 = vunpack.c.l.b16 %v3203
    %v4486 = vunpack.c.h.b16 %v3203
    %v4487 = vunpack.c.l.b16 %v3204
    %v4488 = vunpack.c.h.b16 %v3204
    %v4489 = vunpack.c.l.b16 %v3205
    %v4490 = vunpack.c.h.b16 %v3205
    %v4491 = vunpack.c.l.b16 %v3206
    %v4492 = vunpack.c.l.b16 %v3207
    %v4493 = vunpack.c.h.b16 %v3207
    %v4494 = vunpack.c.l.b16 %v3208
    %v4495 = vunpack.c.h.b16 %v3208
    %v4496 = vunpack.c.l.b16 %v3209
    %v4497 = vunpack.c.h.b16 %v3209
    %v4498 = vunpack.c.l.b16 %v3210
    %v4499 = vunpack.c.l.b16 %v3211
    %v4500 = vunpack.c.h.b16 %v3211
    %v4501 = vunpack.c.l.b16 %v3212
    %v4502 = vunpack.c.h.b16 %v3212
    %v4503 = vunpack.c.l.b16 %v3213
    %v4504 = vunpack.c.h.b16 %v3213
    %v4505 = vunpack.c.l.b16 %v3214
    %v4506 = vunpack.c.l.b16 %v3215
    %v4507 = vunpack.c.h.b16 %v3215
    %v4508 = vunpack.c.l.b16 %v3216
    %v4509 = vunpack.c.h.b16 %v3216
    %v4510 = vunpack.c.l.b16 %v3217
    %v4511 = vunpack.c.h.b16 %v3217
    %v4512 = vunpack.c.l.b16 %v3218
    %v4513 = vunpack.c.l.b16 %v3219
    %v4514 = vunpack.c.h.b16 %v3219
    %v4515 = vunpack.c.l.b16 %v3220
    %v4516 = vunpack.c.h.b16 %v3220
    %v4517 = vunpack.c.l.b16 %v3221
    %v4518 = vunpack.c.h.b16 %v3221
    %v4519 = vunpack.c.l.b16 %v3222
    %v4520 = vunpack.c.l.b16 %v3223
    %v4521 = vunpack.c.h.b16 %v3223
    %v4522 = vunpack.c.l.b16 %v3224
    %v4523 = vunpack.c.h.b16 %v3224
    %v4524 = vunpack.c.l.b16 %v3225
    %v4525 = vunpack.c.h.b16 %v3225
    %v4526 = vunpack.c.l.b16 %v3226
    %v4527 = vunpack.c.l.b16 %v3227
    %v4528 = vunpack.c.h.b16 %v3227
    %v4529 = vunpack.c.l.b16 %v3228
    %v4530 = vunpack.c.h.b16 %v3228
    %v4531 = vunpack.c.l.b16 %v3229
    %v4532 = vunpack.c.h.b16 %v3229
    %v4533 = vunpack.c.l.b16 %v3230
    %v4534 = vunpack.c.l.b16 %v3231
    %v4535 = vunpack.c.h.b16 %v3231
    %v4536 = vunpack.c.l.b16 %v3232
    %v4537 = vunpack.c.h.b16 %v3232
    %v4538 = vunpack.c.l.b16 %v3233
    %v4539 = vunpack.c.h.b16 %v3233
    %v4540 = vunpack.c.l.b16 %v3234
    %v4541 = vunpack.c.l.b16 %v3235
    %v4542 = vunpack.c.h.b16 %v3235
    %v4543 = vunpack.c.l.b16 %v3236
    %v4544 = vunpack.c.h.b16 %v3236
    %v4545 = vunpack.c.l.b16 %v3237
    %v4546 = vunpack.c.h.b16 %v3237
    %v4547 = vunpack.c.l.b16 %v3238
    %v4548 = vunpack.c.l.b16 %v3239
    %v4549 = vunpack.c.h.b16 %v3239
    %v4550 = vunpack.c.l.b16 %v3240
    %v4551 = vunpack.c.h.b16 %v3240
    %v4552 = vunpack.c.l.b16 %v3241
    %v4553 = vunpack.c.h.b16 %v3241
    %v4554 = vunpack.c.l.b16 %v3242
    %v4555 = vunpack.c.l.b16 %v3243
    %v4556 = vunpack.c.h.b16 %v3243
    %v4557 = vunpack.c.l.b16 %v3244
    %v4558 = vunpack.c.h.b16 %v3244
    %v4559 = vunpack.c.l.b16 %v3245
    %v4560 = vunpack.c.h.b16 %v3245
    %v4561 = vunpack.c.l.b16 %v3246
    %v4562 = vunpack.c.l.b16 %v3247
    %v4563 = vunpack.c.h.b16 %v3247
    %v4564 = vunpack.c.l.b16 %v3248
    %v4565 = vunpack.c.h.b16 %v3248
    %v4566 = vunpack.c.l.b16 %v3249
    %v4567 = vunpack.c.h.b16 %v3249
    %v4568 = vunpack.c.l.b16 %v3250
    %v4569 = vunpack.c.l.b16 %v3251
    %v4570 = vunpack.c.h.b16 %v3251
    %v4571 = vunpack.c.l.b16 %v3252
    %v4572 = vunpack.c.h.b16 %v3252
    %v4573 = vunpack.c.l.b16 %v3253
    %v4574 = vunpack.c.h.b16 %v3253
    %v4575 = vunpack.c.l.b16 %v3254
    %v4576 = vunpack.c.l.b16 %v3255
    %v4577 = vunpack.c.h.b16 %v3255
    %v4578 = vunpack.c.l.b16 %v3256
    %v4579 = vunpack.c.h.b16 %v3256
    %v4580 = vunpack.c.l.b16 %v3257
    %v4581 = vunpack.c.h.b16 %v3257
    %v4582 = vunpack.c.l.b16 %v3258
    %v4583 = vunpack.c.l.b16 %v3259
    %v4584 = vunpack.c.h.b16 %v3259
    %v4585 = vunpack.c.l.b16 %v3260
    %v4586 = vunpack.c.h.b16 %v3260
    %v4587 = vunpack.c.l.b16 %v3261
    %v4588 = vunpack.c.h.b16 %v3261
    %v4589 = vunpack.c.l.b16 %v3262
    %v4590 = vunpack.c.l.b16 %v3263
    %v4591 = vunpack.c.h.b16 %v3263
    %v4592 = vunpack.c.l.b16 %v3264
    %v4593 = vunpack.c.h.b16 %v3264
    %v4594 = vunpack.c.l.b16 %v3265
    %v4595 = vunpack.c.h.b16 %v3265
    %v4596 = vunpack.c.l.b16 %v3266
    %v4597 = vunpack.c.l.b16 %v3267
    %v4598 = vunpack.c.h.b16 %v3267
    %v4599 = vunpack.c.l.b16 %v3268
    %v4600 = vunpack.c.h.b16 %v3268
    %v4601 = vunpack.c.l.b16 %v3269
    %v4602 = vunpack.c.h.b16 %v3269
    %v4603 = vunpack.c.l.b16 %v3270
    %v4604 = vunpack.c.l.b16 %v3271
    %v4605 = vunpack.c.h.b16 %v3271
    %v4606 = vunpack.c.l.b16 %v3272
    %v4607 = vunpack.c.h.b16 %v3272
    %v4608 = vunpack.c.l.b16 %v3273
    %v4609 = vunpack.c.h.b16 %v3273
    %v4610 = vunpack.c.l.b16 %v3274
    %v4611 = vunpack.c.l.b16 %v3275
    %v4612 = vunpack.c.h.b16 %v3275
    %v4613 = vunpack.c.l.b16 %v3276
    %v4614 = vunpack.c.h.b16 %v3276
    %v4615 = vunpack.c.l.b16 %v3277
    %v4616 = vunpack.c.h.b16 %v3277
    %v4617 = vunpack.c.l.b16 %v3278
    %v4618 = vunpack.c.l.b16 %v3279
    %v4619 = vunpack.c.h.b16 %v3279
    %v4620 = vunpack.c.l.b16 %v3280
    %v4621 = vunpack.c.h.b16 %v3280
    %v4622 = vunpack.c.l.b16 %v3281
    %v4623 = vunpack.c.h.b16 %v3281
    %v4624 = vunpack.c.l.b16 %v3282
    %v4625 = vunpack.c.l.b16 %v3283
    %v4626 = vunpack.c.h.b16 %v3283
    %v4627 = vunpack.c.l.b16 %v3284
    %v4628 = vunpack.c.h.b16 %v3284
    %v4629 = vunpack.c.l.b16 %v3285
    %v4630 = vunpack.c.h.b16 %v3285
    %v4631 = vunpack.c.l.b16 %v3286
    %v4632 = vunpack.c.l.b16 %v3287
    %v4633 = vunpack.c.h.b16 %v3287
    %v4634 = vunpack.c.l.b16 %v3288
    %v4635 = vunpack.c.h.b16 %v3288
    %v4636 = vunpack.c.l.b16 %v3289
    %v4637 = vunpack.c.h.b16 %v3289
    %v4638 = vunpack.c.l.b16 %v3290
    %v4639 = vunpack.c.l.b16 %v3291
    %v4640 = vunpack.c.h.b16 %v3291
    %v4641 = vunpack.c.l.b16 %v3292
    %v4642 = vunpack.c.h.b16 %v3292
    %v4643 = vunpack.c.l.b16 %v3293
    %v4644 = vunpack.c.h.b16 %v3293
    %v4645 = vunpack.c.l.b16 %v3294
    %v4646 = vunpack.c.l.b16 %v3295
    %v4647 = vunpack.c.h.b16 %v3295
    %v4648 = vunpack.c.l.b16 %v3296
    %v4649 = vunpack.c.h.b16 %v3296
    %v4650 = vunpack.c.l.b16 %v3297
    %v4651 = vunpack.c.h.b16 %v3297
    %v4652 = vunpack.c.l.b16 %v3298
    %v4653 = vunpack.c.l.b16 %v3299
    %v4654 = vunpack.c.h.b16 %v3299
    %v4655 = vunpack.c.l.b16 %v3300
    %v4656 = vunpack.c.h.b16 %v3300
    %v4657 = vunpack.c.l.b16 %v3301
    %v4658 = vunpack.c.h.b16 %v3301
    %v4659 = vunpack.c.l.b16 %v3302
    %v4660 = vunpack.c.l.b16 %v3303
    %v4661 = vunpack.c.h.b16 %v3303
    %v4662 = vunpack.c.l.b16 %v3304
    %v4663 = vunpack.c.h.b16 %v3304
    %v4664 = vunpack.c.l.b16 %v3305
    %v4665 = vunpack.c.h.b16 %v3305
    %v4666 = vunpack.c.l.b16 %v3306
    %v4667 = vunpack.c.l.b16 %v3307
    %v4668 = vunpack.c.h.b16 %v3307
    %v4669 = vunpack.c.l.b16 %v3308
    %v4670 = vunpack.c.h.b16 %v3308
    %v4671 = vunpack.c.l.b16 %v3309
    %v4672 = vunpack.c.h.b16 %v3309
    %v4673 = vunpack.c.l.b16 %v3310
    %v4674 = vunpack.c.l.b16 %v3311
    %v4675 = vunpack.c.h.b16 %v3311
    %v4676 = vunpack.c.l.b16 %v3312
    %v4677 = vunpack.c.h.b16 %v3312
    %v4678 = vunpack.c.l.b16 %v3313
    %v4679 = vunpack.c.h.b16 %v3313
    %v4680 = vunpack.c.l.b16 %v3314
    %v4681 = vunpack.c.l.b16 %v3315
    %v4682 = vunpack.c.h.b16 %v3315
    %v4683 = vunpack.c.l.b16 %v3316
    %v4684 = vunpack.c.h.b16 %v3316
    %v4685 = vunpack.c.l.b16 %v3317
    %v4686 = vunpack.c.h.b16 %v3317
    %v4687 = vunpack.c.l.b16 %v3318
    %v4688 = vunpack.c.l.b16 %v3319
    %v4689 = vunpack.c.h.b16 %v3319
    %v4690 = vunpack.c.l.b16 %v3320
    %v4691 = vunpack.c.h.b16 %v3320
    %v4692 = vunpack.c.l.b16 %v3321
    %v4693 = vunpack.c.h.b16 %v3321
    %v4694 = vunpack.c.l.b16 %v3322
    %v4695 = vunpack.c.l.b16 %v3323
    %v4696 = vunpack.c.h.b16 %v3323
    %v4697 = vunpack.c.l.b16 %v3324
    %v4698 = vunpack.c.h.b16 %v3324
    %v4699 = vunpack.c.l.b16 %v3325
    %v4700 = vunpack.c.h.b16 %v3325
    %v4701 = vunpack.c.l.b16 %v3326
    %v4702 = vunpack.c.l.b16 %v3327
    %v4703 = vunpack.c.h.b16 %v3327
    %v4704 = vunpack.c.l.b16 %v3328
    %v4705 = vunpack.c.h.b16 %v3328
    %v4706 = vunpack.c.l.b16 %v3329
    %v4707 = vunpack.c.h.b16 %v3329
    %v4708 = vunpack.c.l.b16 %v3330
    %v4709 = vunpack.c.l.b16 %v3331
    %v4710 = vunpack.c.h.b16 %v3331
    %v4711 = vunpack.c.l.b16 %v3332
    %v4712 = vunpack.c.h.b16 %v3332
    %v4713 = vunpack.c.l.b16 %v3333
    %v4714 = vunpack.c.h.b16 %v3333
    %v4715 = vunpack.c.l.b16 %v3334
    %v4716 = vunpack.c.l.b16 %v3335
    %v4717 = vunpack.c.h.b16 %v3335
    %v4718 = vunpack.c.l.b16 %v3336
    %v4719 = vunpack.c.h.b16 %v3336
    %v4720 = vunpack.c.l.b16 %v3337
    %v4721 = vunpack.c.h.b16 %v3337
    %v4722 = vunpack.c.l.b16 %v3338
    %v4723 = vunpack.c.l.b16 %v3339
    %v4724 = vunpack.c.h.b16 %v3339
    %v4725 = vunpack.c.l.b16 %v3340
    %v4726 = vunpack.c.h.b16 %v3340
    %v4727 = vunpack.c.l.b16 %v3341
    %v4728 = vunpack.c.h.b16 %v3341
    %v4729 = vunpack.c.l.b16 %v3342
    %v4730 = vunpack.c.l.b16 %v3343
    %v4731 = vunpack.c.h.b16 %v3343
    %v4732 = vunpack.c.l.b16 %v3344
    %v4733 = vunpack.c.h.b16 %v3344
    %v4734 = vunpack.c.l.b16 %v3345
    %v4735 = vunpack.c.h.b16 %v3345
    %v4736 = vunpack.c.l.b16 %v3346
    %v4737 = vunpack.c.l.b16 %v3347
    %v4738 = vunpack.c.h.b16 %v3347
    %v4739 = vunpack.c.l.b16 %v3348
    %v4740 = vunpack.c.h.b16 %v3348
    %v4741 = vunpack.c.l.b16 %v3349
    %v4742 = vunpack.c.h.b16 %v3349
    %v4743 = vunpack.c.l.b16 %v3350
    %v4744 = vunpack.c.l.b16 %v3351
    %v4745 = vunpack.c.h.b16 %v3351
    %v4746 = vunpack.c.l.b16 %v3352
    %v4747 = vunpack.c.h.b16 %v3352
    %v4748 = vunpack.c.l.b16 %v3353
    %v4749 = vunpack.c.h.b16 %v3353
    %v4750 = vunpack.c.l.b16 %v3354
    %v4751 = vunpack.c.l.b16 %v3355
    %v4752 = vunpack.c.h.b16 %v3355
    %v4753 = vunpack.c.l.b16 %v3356
    %v4754 = vunpack.c.h.b16 %v3356
    %v4755 = vunpack.c.l.b16 %v3357
    %v4756 = vunpack.c.h.b16 %v3357
    %v4757 = vunpack.c.l.b16 %v3358
    %v4758 = vunpack.c.l.b16 %v3359
    %v4759 = vunpack.c.h.b16 %v3359
    %v4760 = vunpack.c.l.b16 %v3360
    %v4761 = vunpack.c.h.b16 %v3360
    %v4762 = vunpack.c.l.b16 %v3361
    %v4763 = vunpack.c.h.b16 %v3361
    %v4764 = vunpack.c.l.b16 %v3362
    %v4765 = vunpack.c.l.b16 %v3363
    %v4766 = vunpack.c.h.b16 %v3363
    %v4767 = vunpack.c.l.b16 %v3364
    %v4768 = vunpack.c.h.b16 %v3364
    %v4769 = vunpack.c.l.b16 %v3365
    %v4770 = vunpack.c.h.b16 %v3365
    %v4771 = vunpack.c.l.b16 %v3366
    %v4772 = vunpack.c.l.b16 %v3367
    %v4773 = vunpack.c.h.b16 %v3367
    %v4774 = vunpack.c.l.b16 %v3368
    %v4775 = vunpack.c.h.b16 %v3368
    %v4776 = vunpack.c.l.b16 %v3369
    %v4777 = vunpack.c.h.b16 %v3369
    %v4778 = vunpack.c.l.b16 %v3370
    %v4779 = vpack.c.b16 %v3890, %v3883
    %v4780 = vpack.c.b16 %v3891, %v3884
    %v4781 = vpack.c.b16 %v3892, %v3885
    %v4782 = vpack.c.b16 %v3893, %v3886
    %v4783 = vpack.c.b16 %v3894, %v3887
    %v4784 = vpack.c.b16 %v3895, %v3888
    %v4785 = vpack.c.b16 %v3896, %v3889
    %v4786 = vpack.c.b16 %v3904, %v3897
    %v4787 = vpack.c.b16 %v3905, %v3898
    %v4788 = vpack.c.b16 %v3906, %v3899
    %v4789 = vpack.c.b16 %v3907, %v3900
    %v4790 = vpack.c.b16 %v3908, %v3901
    %v4791 = vpack.c.b16 %v3909, %v3902
    %v4792 = vpack.c.b16 %v3910, %v3903
    %v4793 = vpack.c.b16 %v3918, %v3911
    %v4794 = vpack.c.b16 %v3919, %v3912
    %v4795 = vpack.c.b16 %v3920, %v3913
    %v4796 = vpack.c.b16 %v3921, %v3914
    %v4797 = vpack.c.b16 %v3922, %v3915
    %v4798 = vpack.c.b16 %v3923, %v3916
    %v4799 = vpack.c.b16 %v3924, %v3917
    %v4800 = vpack.c.b16 %v3932, %v3925
    %v4801 = vpack.c.b16 %v3933, %v3926
    %v4802 = vpack.c.b16 %v3934, %v3927
    %v4803 = vpack.c.b16 %v3935, %v3928
    %v4804 = vpack.c.b16 %v3936, %v3929
    %v4805 = vpack.c.b16 %v3937, %v3930
    %v4806 = vpack.c.b16 %v3938, %v3931
    %v4807 = vpack.c.b16 %v3946, %v3939
    %v4808 = vpack.c.b16 %v3947, %v3940
    %v4809 = vpack.c.b16 %v3948, %v3941
    %v4810 = vpack.c.b16 %v3949, %v3942
    %v4811 = vpack.c.b16 %v3950, %v3943
    %v4812 = vpack.c.b16 %v3951, %v3944
    %v4813 = vpack.c.b16 %v3952, %v3945
    %v4814 = vpack.c.b16 %v3960, %v3953
    %v4815 = vpack.c.b16 %v3961, %v3954
    %v4816 = vpack.c.b16 %v3962, %v3955
    %v4817 = vpack.c.b16 %v3963, %v3956
    %v4818 = vpack.c.b16 %v3964, %v3957
    %v4819 = vpack.c.b16 %v3965, %v3958
    %v4820 = vpack.c.b16 %v3966, %v3959
    %v4821 = vpack.c.b16 %v3974, %v3967
    %v4822 = vpack.c.b16 %v3975, %v3968
    %v4823 = vpack.c.b16 %v3976, %v3969
    %v4824 = vpack.c.b16 %v3977, %v3970
    %v4825 = vpack.c.b16 %v3978, %v3971
    %v4826 = vpack.c.b16 %v3979, %v3972
    %v4827 = vpack.c.b16 %v3980, %v3973
    %v4828 = vpack.c.b16 %v3988, %v3981
    %v4829 = vpack.c.b16 %v3989, %v3982
    %v4830 = vpack.c.b16 %v3990, %v3983
    %v4831 = vpack.c.b16 %v3991, %v3984
    %v4832 = vpack.c.b16 %v3992, %v3985
    %v4833 = vpack.c.b16 %v3993, %v3986
    %v4834 = vpack.c.b16 %v3994, %v3987
    %v4835 = vpack.c.b16 %v4002, %v3995
    %v4836 = vpack.c.b16 %v4003, %v3996
    %v4837 = vpack.c.b16 %v4004, %v3997
    %v4838 = vpack.c.b16 %v4005, %v3998
    %v4839 = vpack.c.b16 %v4006, %v3999
    %v4840 = vpack.c.b16 %v4007, %v4000
    %v4841 = vpack.c.b16 %v4008, %v4001
    %v4842 = vpack.c.b16 %v4016, %v4009
    %v4843 = vpack.c.b16 %v4017, %v4010
    %v4844 = vpack.c.b16 %v4018, %v4011
    %v4845 = vpack.c.b16 %v4019, %v4012
    %v4846 = vpack.c.b16 %v4020, %v4013
    %v4847 = vpack.c.b16 %v4021, %v4014
    %v4848 = vpack.c.b16 %v4022, %v4015
    %v4849 = vpack.c.b16 %v4030, %v4023
    %v4850 = vpack.c.b16 %v4031, %v4024
    %v4851 = vpack.c.b16 %v4032, %v4025
    %v4852 = vpack.c.b16 %v4033, %v4026
    %v4853 = vpack.c.b16 %v4034, %v4027
    %v4854 = vpack.c.b16 %v4035, %v4028
    %v4855 = vpack.c.b16 %v4036, %v4029
    %v4856 = vpack.c.b16 %v4044, %v4037
    %v4857 = vpack.c.b16 %v4045, %v4038
    %v4858 = vpack.c.b16 %v4046, %v4039
    %v4859 = vpack.c.b16 %v4047, %v4040
    %v4860 = vpack.c.b16 %v4048, %v4041
    %v4861 = vpack.c.b16 %v4049, %v4042
    %v4862 = vpack.c.b16 %v4050, %v4043
    %v4863 = vpack.c.b16 %v4058, %v4051
    %v4864 = vpack.c.b16 %v4059, %v4052
    %v4865 = vpack.c.b16 %v4060, %v4053
    %v4866 = vpack.c.b16 %v4061, %v4054
    %v4867 = vpack.c.b16 %v4062, %v4055
    %v4868 = vpack.c.b16 %v4063, %v4056
    %v4869 = vpack.c.b16 %v4064, %v4057
    %v4870 = vpack.c.b16 %v4072, %v4065
    %v4871 = vpack.c.b16 %v4073, %v4066
    %v4872 = vpack.c.b16 %v4074, %v4067
    %v4873 = vpack.c.b16 %v4075, %v4068
    %v4874 = vpack.c.b16 %v4076, %v4069
    %v4875 = vpack.c.b16 %v4077, %v4070
    %v4876 = vpack.c.b16 %v4078, %v4071
    %v4877 = vpack.c.b16 %v4086, %v4079
    %v4878 = vpack.c.b16 %v4087, %v4080
    %v4879 = vpack.c.b16 %v4088, %v4081
    %v4880 = vpack.c.b16 %v4089, %v4082
    %v4881 = vpack.c.b16 %v4090, %v4083
    %v4882 = vpack.c.b16 %v4091, %v4084
    %v4883 = vpack.c.b16 %v4092, %v4085
    %v4884 = vpack.c.b16 %v4100, %v4093
    %v4885 = vpack.c.b16 %v4101, %v4094
    %v4886 = vpack.c.b16 %v4102, %v4095
    %v4887 = vpack.c.b16 %v4103, %v4096
    %v4888 = vpack.c.b16 %v4104, %v4097
    %v4889 = vpack.c.b16 %v4105, %v4098
    %v4890 = vpack.c.b16 %v4106, %v4099
    %v4891 = vpack.c.b16 %v4114, %v4107
    %v4892 = vpack.c.b16 %v4115, %v4108
    %v4893 = vpack.c.b16 %v4116, %v4109
    %v4894 = vpack.c.b16 %v4117, %v4110
    %v4895 = vpack.c.b16 %v4118, %v4111
    %v4896 = vpack.c.b16 %v4119, %v4112
    %v4897 = vpack.c.b16 %v4120, %v4113
    %v4898 = vpack.c.b16 %v4128, %v4121
    %v4899 = vpack.c.b16 %v4129, %v4122
    %v4900 = vpack.c.b16 %v4130, %v4123
    %v4901 = vpack.c.b16 %v4131, %v4124
    %v4902 = vpack.c.b16 %v4132, %v4125
    %v4903 = vpack.c.b16 %v4133, %v4126
    %v4904 = vpack.c.b16 %v4134, %v4127
    %v4905 = vpack.c.b16 %v4142, %v4135
    %v4906 = vpack.c.b16 %v4143, %v4136
    %v4907 = vpack.c.b16 %v4144, %v4137
    %v4908 = vpack.c.b16 %v4145, %v4138
    %v4909 = vpack.c.b16 %v4146, %v4139
    %v4910 = vpack.c.b16 %v4147, %v4140
    %v4911 = vpack.c.b16 %v4148, %v4141
    %v4912 = vpack.c.b16 %v4156, %v4149
    %v4913 = vpack.c.b16 %v4157, %v4150
    %v4914 = vpack.c.b16 %v4158, %v4151
    %v4915 = vpack.c.b16 %v4159, %v4152
    %v4916 = vpack.c.b16 %v4160, %v4153
    %v4917 = vpack.c.b16 %v4161, %v4154
    %v4918 = vpack.c.b16 %v4162, %v4155
    %v4919 = vpack.c.b16 %v4170, %v4163
    %v4920 = vpack.c.b16 %v4171, %v4164
    %v4921 = vpack.c.b16 %v4172, %v4165
    %v4922 = vpack.c.b16 %v4173, %v4166
    %v4923 = vpack.c.b16 %v4174, %v4167
    %v4924 = vpack.c.b16 %v4175, %v4168
    %v4925 = vpack.c.b16 %v4176, %v4169
    %v4926 = vpack.c.b16 %v4184, %v4177
    %v4927 = vpack.c.b16 %v4185, %v4178
    %v4928 = vpack.c.b16 %v4186, %v4179
    %v4929 = vpack.c.b16 %v4187, %v4180
    %v4930 = vpack.c.b16 %v4188, %v4181
    %v4931 = vpack.c.b16 %v4189, %v4182
    %v4932 = vpack.c.b16 %v4190, %v4183
    %v4933 = vpack.c.b16 %v4198, %v4191
    %v4934 = vpack.c.b16 %v4199, %v4192
    %v4935 = vpack.c.b16 %v4200, %v4193
    %v4936 = vpack.c.b16 %v4201, %v4194
    %v4937 = vpack.c.b16 %v4202, %v4195
    %v4938 = vpack.c.b16 %v4203, %v4196
    %v4939 = vpack.c.b16 %v4204, %v4197
    %v4940 = vpack.c.b16 %v4212, %v4205
    %v4941 = vpack.c.b16 %v4213, %v4206
    %v4942 = vpack.c.b16 %v4214, %v4207
    %v4943 = vpack.c.b16 %v4215, %v4208
    %v4944 = vpack.c.b16 %v4216, %v4209
    %v4945 = vpack.c.b16 %v4217, %v4210
    %v4946 = vpack.c.b16 %v4218, %v4211
    %v4947 = vpack.c.b16 %v4226, %v4219
    %v4948 = vpack.c.b16 %v4227, %v4220
    %v4949 = vpack.c.b16 %v4228, %v4221
    %v4950 = vpack.c.b16 %v4229, %v4222
    %v4951 = vpack.c.b16 %v4230, %v4223
    %v4952 = vpack.c.b16 %v4231, %v4224
    %v4953 = vpack.c.b16 %v4232, %v4225
    %v4954 = vpack.c.b16 %v4240, %v4233
    %v4955 = vpack.c.b16 %v4241, %v4234
    %v4956 = vpack.c.b16 %v4242, %v4235
    %v4957 = vpack.c.b16 %v4243, %v4236
    %v4958 = vpack.c.b16 %v4244, %v4237
    %v4959 = vpack.c.b16 %v4245, %v4238
    %v4960 = vpack.c.b16 %v4246, %v4239
    %v4961 = vpack.c.b16 %v4254, %v4247
    %v4962 = vpack.c.b16 %v4255, %v4248
    %v4963 = vpack.c.b16 %v4256, %v4249
    %v4964 = vpack.c.b16 %v4257, %v4250
    %v4965 = vpack.c.b16 %v4258, %v4251
    %v4966 = vpack.c.b16 %v4259, %v4252
    %v4967 = vpack.c.b16 %v4260, %v4253
    %v4968 = vpack.c.b16 %v4268, %v4261
    %v4969 = vpack.c.b16 %v4269, %v4262
    %v4970 = vpack.c.b16 %v4270, %v4263
    %v4971 = vpack.c.b16 %v4271, %v4264
    %v4972 = vpack.c.b16 %v4272, %v4265
    %v4973 = vpack.c.b16 %v4273, %v4266
    %v4974 = vpack.c.b16 %v4274, %v4267
    %v4975 = vpack.c.b16 %v4282, %v4275
    %v4976 = vpack.c.b16 %v4283, %v4276
    %v4977 = vpack.c.b16 %v4284, %v4277
    %v4978 = vpack.c.b16 %v4285, %v4278
    %v4979 = vpack.c.b16 %v4286, %v4279
    %v4980 = vpack.c.b16 %v4287, %v4280
    %v4981 = vpack.c.b16 %v4288, %v4281
    %v4982 = vpack.c.b16 %v4296, %v4289
    %v4983 = vpack.c.b16 %v4297, %v4290
    %v4984 = vpack.c.b16 %v4298, %v4291
    %v4985 = vpack.c.b16 %v4299, %v4292
    %v4986 = vpack.c.b16 %v4300, %v4293
    %v4987 = vpack.c.b16 %v4301, %v4294
    %v4988 = vpack.c.b16 %v4302, %v4295
    %v4989 = vpack.c.b16 %v4310, %v4303
    %v4990 = vpack.c.b16 %v4311, %v4304
    %v4991 = vpack.c.b16 %v4312, %v4305
    %v4992 = vpack.c.b16 %v4313, %v4306
    %v4993 = vpack.c.b16 %v4314, %v4307
    %v4994 = vpack.c.b16 %v4315, %v4308
    %v4995 = vpack.c.b16 %v4316, %v4309
    %v4996 = vpack.c.b16 %v4324, %v4317
    %v4997 = vpack.c.b16 %v4325, %v4318
    %v4998 = vpack.c.b16 %v4326, %v4319
    %v4999 = vpack.c.b16 %v4327, %v4320
    %v5000 = vpack.c.b16 %v4328, %v4321
    %v5001 = vpack.c.b16 %v4329, %v4322
    %v5002 = vpack.c.b16 %v4330, %v4323
    %v5003 = vpack.c.b16 %v4338, %v4331
    %v5004 = vpack.c.b16 %v4339, %v4332
    %v5005 = vpack.c.b16 %v4340, %v4333
    %v5006 = vpack.c.b16 %v4341, %v4334
    %v5007 = vpack.c.b16 %v4342, %v4335
    %v5008 = vpack.c.b16 %v4343, %v4336
    %v5009 = vpack.c.b16 %v4344, %v4337
    %v5010 = vpack.c.b16 %v4352, %v4345
    %v5011 = vpack.c.b16 %v4353, %v4346
    %v5012 = vpack.c.b16 %v4354, %v4347
    %v5013 = vpack.c.b16 %v4355, %v4348
    %v5014 = vpack.c.b16 %v4356, %v4349
    %v5015 = vpack.c.b16 %v4357, %v4350
    %v5016 = vpack.c.b16 %v4358, %v4351
    %v5017 = vpack.c.b16 %v4366, %v4359
    %v5018 = vpack.c.b16 %v4367, %v4360
    %v5019 = vpack.c.b16 %v4368, %v4361
    %v5020 = vpack.c.b16 %v4369, %v4362
    %v5021 = vpack.c.b16 %v4370, %v4363
    %v5022 = vpack.c.b16 %v4371, %v4364
    %v5023 = vpack.c.b16 %v4372, %v4365
    %v5024 = vpack.c.b16 %v4380, %v4373
    %v5025 = vpack.c.b16 %v4381, %v4374
    %v5026 = vpack.c.b16 %v4382, %v4375
    %v5027 = vpack.c.b16 %v4383, %v4376
    %v5028 = vpack.c.b16 %v4384, %v4377
    %v5029 = vpack.c.b16 %v4385, %v4378
    %v5030 = vpack.c.b16 %v4386, %v4379
    %v5031 = vpack.c.b16 %v4394, %v4387
    %v5032 = vpack.c.b16 %v4395, %v4388
    %v5033 = vpack.c.b16 %v4396, %v4389
    %v5034 = vpack.c.b16 %v4397, %v4390
    %v5035 = vpack.c.b16 %v4398, %v4391
    %v5036 = vpack.c.b16 %v4399, %v4392
    %v5037 = vpack.c.b16 %v4400, %v4393
    %v5038 = vpack.c.b16 %v4408, %v4401
    %v5039 = vpack.c.b16 %v4409, %v4402
    %v5040 = vpack.c.b16 %v4410, %v4403
    %v5041 = vpack.c.b16 %v4411, %v4404
    %v5042 = vpack.c.b16 %v4412, %v4405
    %v5043 = vpack.c.b16 %v4413, %v4406
    %v5044 = vpack.c.b16 %v4414, %v4407
    %v5045 = vpack.c.b16 %v4422, %v4415
    %v5046 = vpack.c.b16 %v4423, %v4416
    %v5047 = vpack.c.b16 %v4424, %v4417
    %v5048 = vpack.c.b16 %v4425, %v4418
    %v5049 = vpack.c.b16 %v4426, %v4419
    %v5050 = vpack.c.b16 %v4427, %v4420
    %v5051 = vpack.c.b16 %v4428, %v4421
    %v5052 = vpack.c.b16 %v4436, %v4429
    %v5053 = vpack.c.b16 %v4437, %v4430
    %v5054 = vpack.c.b16 %v4438, %v4431
    %v5055 = vpack.c.b16 %v4439, %v4432
    %v5056 = vpack.c.b16 %v4440, %v4433
    %v5057 = vpack.c.b16 %v4441, %v4434
    %v5058 = vpack.c.b16 %v4442, %v4435
    %v5059 = vpack.c.b16 %v4450, %v4443
    %v5060 = vpack.c.b16 %v4451, %v4444
    %v5061 = vpack.c.b16 %v4452, %v4445
    %v5062 = vpack.c.b16 %v4453, %v4446
    %v5063 = vpack.c.b16 %v4454, %v4447
    %v5064 = vpack.c.b16 %v4455, %v4448
    %v5065 = vpack.c.b16 %v4456, %v4449
    %v5066 = vpack.c.b16 %v4464, %v4457
    %v5067 = vpack.c.b16 %v4465, %v4458
    %v5068 = vpack.c.b16 %v4466, %v4459
    %v5069 = vpack.c.b16 %v4467, %v4460
    %v5070 = vpack.c.b16 %v4468, %v4461
    %v5071 = vpack.c.b16 %v4469, %v4462
    %v5072 = vpack.c.b16 %v4470, %v4463
    %v5073 = vpack.c.b16 %v4478, %v4471
    %v5074 = vpack.c.b16 %v4479, %v4472
    %v5075 = vpack.c.b16 %v4480, %v4473
    %v5076 = vpack.c.b16 %v4481, %v4474
    %v5077 = vpack.c.b16 %v4482, %v4475
    %v5078 = vpack.c.b16 %v4483, %v4476
    %v5079 = vpack.c.b16 %v4484, %v4477
    %v5080 = vpack.c.b16 %v4492, %v4485
    %v5081 = vpack.c.b16 %v4493, %v4486
    %v5082 = vpack.c.b16 %v4494, %v4487
    %v5083 = vpack.c.b16 %v4495, %v4488
    %v5084 = vpack.c.b16 %v4496, %v4489
    %v5085 = vpack.c.b16 %v4497, %v4490
    %v5086 = vpack.c.b16 %v4498, %v4491
    %v5087 = vpack.c.b16 %v4506, %v4499
    %v5088 = vpack.c.b16 %v4507, %v4500
    %v5089 = vpack.c.b16 %v4508, %v4501
    %v5090 = vpack.c.b16 %v4509, %v4502
    %v5091 = vpack.c.b16 %v4510, %v4503
    %v5092 = vpack.c.b16 %v4511, %v4504
    %v5093 = vpack.c.b16 %v4512, %v4505
    %v5094 = vpack.c.b16 %v4520, %v4513
    %v5095 = vpack.c.b16 %v4521, %v4514
    %v5096 = vpack.c.b16 %v4522, %v4515
    %v5097 = vpack.c.b16 %v4523, %v4516
    %v5098 = vpack.c.b16 %v4524, %v4517
    %v5099 = vpack.c.b16 %v4525, %v4518
    %v5100 = vpack.c.b16 %v4526, %v4519
    %v5101 = vpack.c.b16 %v4534, %v4527
    %v5102 = vpack.c.b16 %v4535, %v4528
    %v5103 = vpack.c.b16 %v4536, %v4529
    %v5104 = vpack.c.b16 %v4537, %v4530
    %v5105 = vpack.c.b16 %v4538, %v4531
    %v5106 = vpack.c.b16 %v4539, %v4532
    %v5107 = vpack.c.b16 %v4540, %v4533
    %v5108 = vpack.c.b16 %v4548, %v4541
    %v5109 = vpack.c.b16 %v4549, %v4542
    %v5110 = vpack.c.b16 %v4550, %v4543
    %v5111 = vpack.c.b16 %v4551, %v4544
    %v5112 = vpack.c.b16 %v4552, %v4545
    %v5113 = vpack.c.b16 %v4553, %v4546
    %v5114 = vpack.c.b16 %v4554, %v4547
    %v5115 = vpack.c.b16 %v4562, %v4555
    %v5116 = vpack.c.b16 %v4563, %v4556
    %v5117 = vpack.c.b16 %v4564, %v4557
    %v5118 = vpack.c.b16 %v4565, %v4558
    %v5119 = vpack.c.b16 %v4566, %v4559
    %v5120 = vpack.c.b16 %v4567, %v4560
    %v5121 = vpack.c.b16 %v4568, %v4561
    %v5122 = vpack.c.b16 %v4576, %v4569
    %v5123 = vpack.c.b16 %v4577, %v4570
    %v5124 = vpack.c.b16 %v4578, %v4571
    %v5125 = vpack.c.b16 %v4579, %v4572
    %v5126 = vpack.c.b16 %v4580, %v4573
    %v5127 = vpack.c.b16 %v4581, %v4574
    %v5128 = vpack.c.b16 %v4582, %v4575
    %v5129 = vpack.c.b16 %v4590, %v4583
    %v5130 = vpack.c.b16 %v4591, %v4584
    %v5131 = vpack.c.b16 %v4592, %v4585
    %v5132 = vpack.c.b16 %v4593, %v4586
    %v5133 = vpack.c.b16 %v4594, %v4587
    %v5134 = vpack.c.b16 %v4595, %v4588
    %v5135 = vpack.c.b16 %v4596, %v4589
    %v5136 = vpack.c.b16 %v4604, %v4597
    %v5137 = vpack.c.b16 %v4605, %v4598
    %v5138 = vpack.c.b16 %v4606, %v4599
    %v5139 = vpack.c.b16 %v4607, %v4600
    %v5140 = vpack.c.b16 %v4608, %v4601
    %v5141 = vpack.c.b16 %v4609, %v4602
    %v5142 = vpack.c.b16 %v4610, %v4603
    %v5143 = vpack.c.b16 %v4618, %v4611
    %v5144 = vpack.c.b16 %v4619, %v4612
    %v5145 = vpack.c.b16 %v4620, %v4613
    %v5146 = vpack.c.b16 %v4621, %v4614
    %v5147 = vpack.c.b16 %v4622, %v4615
    %v5148 = vpack.c.b16 %v4623, %v4616
    %v5149 = vpack.c.b16 %v4624, %v4617
    %v5150 = vpack.c.b16 %v4632, %v4625
    %v5151 = vpack.c.b16 %v4633, %v4626
    %v5152 = vpack.c.b16 %v4634, %v4627
    %v5153 = vpack.c.b16 %v4635, %v4628
    %v5154 = vpack.c.b16 %v4636, %v4629
    %v5155 = vpack.c.b16 %v4637, %v4630
    %v5156 = vpack.c.b16 %v4638, %v4631
    %v5157 = vpack.c.b16 %v4646, %v4639
    %v5158 = vpack.c.b16 %v4647, %v4640
    %v5159 = vpack.c.b16 %v4648, %v4641
    %v5160 = vpack.c.b16 %v4649, %v4642
    %v5161 = vpack.c.b16 %v4650, %v4643
    %v5162 = vpack.c.b16 %v4651, %v4644
    %v5163 = vpack.c.b16 %v4652, %v4645
    %v5164 = vpack.c.b16 %v4660, %v4653
    %v5165 = vpack.c.b16 %v4661, %v4654
    %v5166 = vpack.c.b16 %v4662, %v4655
    %v5167 = vpack.c.b16 %v4663, %v4656
    %v5168 = vpack.c.b16 %v4664, %v4657
    %v5169 = vpack.c.b16 %v4665, %v4658
    %v5170 = vpack.c.b16 %v4666, %v4659
    %v5171 = vpack.c.b16 %v4674, %v4667
    %v5172 = vpack.c.b16 %v4675, %v4668
    %v5173 = vpack.c.b16 %v4676, %v4669
    %v5174 = vpack.c.b16 %v4677, %v4670
    %v5175 = vpack.c.b16 %v4678, %v4671
    %v5176 = vpack.c.b16 %v4679, %v4672
    %v5177 = vpack.c.b16 %v4680, %v4673
    %v5178 = vpack.c.b16 %v4688, %v4681
    %v5179 = vpack.c.b16 %v4689, %v4682
    %v5180 = vpack.c.b16 %v4690, %v4683
    %v5181 = vpack.c.b16 %v4691, %v4684
    %v5182 = vpack.c.b16 %v4692, %v4685
    %v5183 = vpack.c.b16 %v4693, %v4686
    %v5184 = vpack.c.b16 %v4694, %v4687
    %v5185 = vpack.c.b16 %v4702, %v4695
    %v5186 = vpack.c.b16 %v4703, %v4696
    %v5187 = vpack.c.b16 %v4704, %v4697
    %v5188 = vpack.c.b16 %v4705, %v4698
    %v5189 = vpack.c.b16 %v4706, %v4699
    %v5190 = vpack.c.b16 %v4707, %v4700
    %v5191 = vpack.c.b16 %v4708, %v4701
    %v5192 = vpack.c.b16 %v4716, %v4709
    %v5193 = vpack.c.b16 %v4717, %v4710
    %v5194 = vpack.c.b16 %v4718, %v4711
    %v5195 = vpack.c.b16 %v4719, %v4712
    %v5196 = vpack.c.b16 %v4720, %v4713
    %v5197 = vpack.c.b16 %v4721, %v4714
    %v5198 = vpack.c.b16 %v4722, %v4715
    %v5199 = vpack.c.b16 %v4730, %v4723
    %v5200 = vpack.c.b16 %v4731, %v4724
    %v5201 = vpack.c.b16 %v4732, %v4725
    %v5202 = vpack.c.b16 %v4733, %v4726
    %v5203 = vpack.c.b16 %v4734, %v4727
    %v5204 = vpack.c.b16 %v4735, %v4728
    %v5205 = vpack.c.b16 %v4736, %v4729
    %v5206 = vpack.c.b16 %v4744, %v4737
    %v5207 = vpack.c.b16 %v4745, %v4738
    %v5208 = vpack.c.b16 %v4746, %v4739
    %v5209 = vpack.c.b16 %v4747, %v4740
    %v5210 = vpack.c.b16 %v4748, %v4741
    %v5211 = vpack.c.b16 %v4749, %v4742
    %v5212 = vpack.c.b16 %v4750, %v4743
    %v5213 = vpack.c.b16 %v4758, %v4751
    %v5214 = vpack.c.b16 %v4759, %v4752
    %v5215 = vpack.c.b16 %v4760, %v4753
    %v5216 = vpack.c.b16 %v4761, %v4754
    %v5217 = vpack.c.b16 %v4762, %v4755
    %v5218 = vpack.c.b16 %v4763, %v4756
    %v5219 = vpack.c.b16 %v4764, %v4757
    %v5220 = vpack.c.b16 %v4772, %v4765
    %v5221 = vpack.c.b16 %v4773, %v4766
    %v5222 = vpack.c.b16 %v4774, %v4767
    %v5223 = vpack.c.b16 %v4775, %v4768
    %v5224 = vpack.c.b16 %v4776, %v4769
    %v5225 = vpack.c.b16 %v4777, %v4770
    %v5226 = vpack.c.b16 %v4778, %v4771
    %5675 = vmatprep.subr.bf16.mxu0 %v4829
    %5676 = vmatpush1.bf16.msra.mxu0 %v4828
    %5677 = vmatprep.subr.bf16.mxu0 %v4822
    %5678 = vmatpush1.bf16.msra.mxu0 %v4821
    %5679 = vmatprep.subr.bf16.mxu0 %v4815
    %5680 = vmatpush1.bf16.msra.mxu0 %v4814
    %5681 = vmatprep.subr.bf16.mxu0 %v4808
    %5682 = vmatpush1.bf16.msra.mxu0 %v4807
    %5683 = vmatprep.subr.bf16.mxu0 %v4801
    %5684 = vmatpush1.bf16.msra.mxu0 %v4800
    %5685 = vmatprep.subr.bf16.mxu0 %v4794
    %5686 = vmatpush1.bf16.msra.mxu0 %v4793
    %5687 = vmatprep.subr.bf16.mxu0 %v4787
    %5688 = vmatpush1.bf16.msra.mxu0 %v4786
    %5689 = vmatprep.subr.bf16.mxu0 %v4780
    %5690 = vmatpush1.bf16.msra.mxu0 %v4779
    %5691 = vmatprep.subr.bf16.mxu0 %v4885
    %5692 = vmatpush2.bf16.msra.mxu0 %v4884
    %5693 = vmatprep.subr.bf16.mxu0 %v4878
    %5694 = vmatpush2.bf16.msra.mxu0 %v4877
    %5695 = vmatprep.subr.bf16.mxu0 %v4871
    %5696 = vmatpush2.bf16.msra.mxu0 %v4870
    %5697 = vmatprep.subr.bf16.mxu0 %v4864
    %5698 = vmatpush2.bf16.msra.mxu0 %v4863
    %5699 = vmatprep.subr.bf16.mxu0 %v4857
    %5700 = vmatpush2.bf16.msra.mxu0 %v4856
    %5701 = vmatprep.subr.bf16.mxu0 %v4850
    %5702 = vmatpush2.bf16.msra.mxu0 %v4849
    %5703 = vmatprep.subr.bf16.mxu0 %v4843
    %5704 = vmatpush2.bf16.msra.mxu0 %v4842
    %5705 = vmatprep.subr.bf16.mxu0 %v4836
    %5706 = vmatpush2.bf16.msra.mxu0 %v4835
    %5707 = vmatprep.mubr.bf16.mxu0 %v2852
    %5708 = vmatmul.mubr.bf16.gmra.mxu0 %v2851
    %v5709 = vpop.f32.mrf.mxu0
    %v5710 = vadd.f32 0.0, %v5709
    %v5711 = vpop.f32.mrf.mxu0
    %v5712 = vadd.f32 0.0, %v5711
    %v5713 = vpop.f32.mrf.mxu0
    %v5714 = vpop.f32.mrf.mxu0
    %5715 = vdwg.mxu0
    %5716 = vmatprep.subr.bf16.mxu0 %v4941
    %5717 = vmatpush1.bf16.msra.mxu0 %v4940
    %5718 = vmatprep.subr.bf16.mxu0 %v4934
    %5719 = vmatpush1.bf16.msra.mxu0 %v4933
    %5720 = vmatprep.subr.bf16.mxu0 %v4927
    %5721 = vmatpush1.bf16.msra.mxu0 %v4926
    %5722 = vmatprep.subr.bf16.mxu0 %v4920
    %5723 = vmatpush1.bf16.msra.mxu0 %v4919
    %5724 = vmatprep.subr.bf16.mxu0 %v4913
    %5725 = vmatpush1.bf16.msra.mxu0 %v4912
    %5726 = vmatprep.subr.bf16.mxu0 %v4906
    %5727 = vmatpush1.bf16.msra.mxu0 %v4905
    %5728 = vmatprep.subr.bf16.mxu0 %v4899
    %5729 = vmatpush1.bf16.msra.mxu0 %v4898
    %5730 = vmatprep.subr.bf16.mxu0 %v4892
    %5731 = vmatpush1.bf16.msra.mxu0 %v4891
    %5732 = vmatprep.subr.bf16.mxu0 %v4997
    %5733 = vmatpush2.bf16.msra.mxu0 %v4996
    %5734 = vmatprep.subr.bf16.mxu0 %v4990
    %5735 = vmatpush2.bf16.msra.mxu0 %v4989
    %5736 = vmatprep.subr.bf16.mxu0 %v4983
    %5737 = vmatpush2.bf16.msra.mxu0 %v4982
    %5738 = vmatprep.subr.bf16.mxu0 %v4976
    %5739 = vmatpush2.bf16.msra.mxu0 %v4975
    %5740 = vmatprep.subr.bf16.mxu0 %v4969
    %5741 = vmatpush2.bf16.msra.mxu0 %v4968
    %5742 = vmatprep.subr.bf16.mxu0 %v4962
    %5743 = vmatpush2.bf16.msra.mxu0 %v4961
    %5744 = vmatprep.subr.bf16.mxu0 %v4955
    %5745 = vmatpush2.bf16.msra.mxu0 %v4954
    %5746 = vmatprep.subr.bf16.mxu0 %v4948
    %5747 = vmatpush2.bf16.msra.mxu0 %v4947
    %5748 = vmatprep.mubr.bf16.mxu0 %v2854
    %5749 = vmatmul.mubr.bf16.gmra.mxu0 %v2853
    %v5750 = vpop.f32.mrf.mxu0
    %v5751 = vadd.f32 %v5710, %v5750
    %v5752 = vpop.f32.mrf.mxu0
    %v5753 = vadd.f32 %v5712, %v5752
    %v5754 = vpop.f32.mrf.mxu0
    %v5755 = vpop.f32.mrf.mxu0
    %5756 = vdwg.mxu0
    %5757 = vmatprep.subr.bf16.mxu0 %v5053
    %5758 = vmatpush1.bf16.msra.mxu0 %v5052
    %5759 = vmatprep.subr.bf16.mxu0 %v5046
    %5760 = vmatpush1.bf16.msra.mxu0 %v5045
    %5761 = vmatprep.subr.bf16.mxu0 %v5039
    %5762 = vmatpush1.bf16.msra.mxu0 %v5038
    %5763 = vmatprep.subr.bf16.mxu0 %v5032
    %5764 = vmatpush1.bf16.msra.mxu0 %v5031
    %5765 = vmatprep.subr.bf16.mxu0 %v5025
    %5766 = vmatpush1.bf16.msra.mxu0 %v5024
    %5767 = vmatprep.subr.bf16.mxu0 %v5018
    %5768 = vmatpush1.bf16.msra.mxu0 %v5017
    %5769 = vmatprep.subr.bf16.mxu0 %v5011
    %5770 = vmatpush1.bf16.msra.mxu0 %v5010
    %5771 = vmatprep.subr.bf16.mxu0 %v5004
    %5772 = vmatpush1.bf16.msra.mxu0 %v5003
    %5773 = vmatprep.subr.bf16.mxu0 %v5109
    %5774 = vmatpush2.bf16.msra.mxu0 %v5108
    %5775 = vmatprep.subr.bf16.mxu0 %v5102
    %5776 = vmatpush2.bf16.msra.mxu0 %v5101
    %5777 = vmatprep.subr.bf16.mxu0 %v5095
    %5778 = vmatpush2.bf16.msra.mxu0 %v5094
    %5779 = vmatprep.subr.bf16.mxu0 %v5088
    %5780 = vmatpush2.bf16.msra.mxu0 %v5087
    %5781 = vmatprep.subr.bf16.mxu0 %v5081
    %5782 = vmatpush2.bf16.msra.mxu0 %v5080
    %5783 = vmatprep.subr.bf16.mxu0 %v5074
    %5784 = vmatpush2.bf16.msra.mxu0 %v5073
    %5785 = vmatprep.subr.bf16.mxu0 %v5067
    %5786 = vmatpush2.bf16.msra.mxu0 %v5066
    %5787 = vmatprep.subr.bf16.mxu0 %v5060
    %5788 = vmatpush2.bf16.msra.mxu0 %v5059
    %5789 = vmatprep.mubr.bf16.mxu0 %v2856
    %5790 = vmatmul.mubr.bf16.gmra.mxu0 %v2855
    %v5791 = vpop.f32.mrf.mxu0
    %v5792 = vadd.f32 %v5751, %v5791
    %v5793 = vpop.f32.mrf.mxu0
    %v5794 = vadd.f32 %v5753, %v5793
    %v5795 = vpop.f32.mrf.mxu0
    %v5796 = vpop.f32.mrf.mxu0
    %5797 = vdwg.mxu0
    %5798 = vmatprep.subr.bf16.mxu0 %v5165
    %5799 = vmatpush1.bf16.msra.mxu0 %v5164
    %5800 = vmatprep.subr.bf16.mxu0 %v5158
    %5801 = vmatpush1.bf16.msra.mxu0 %v5157
    %5802 = vmatprep.subr.bf16.mxu0 %v5151
    %5803 = vmatpush1.bf16.msra.mxu0 %v5150
    %5804 = vmatprep.subr.bf16.mxu0 %v5144
    %5805 = vmatpush1.bf16.msra.mxu0 %v5143
    %5806 = vmatprep.subr.bf16.mxu0 %v5137
    %5807 = vmatpush1.bf16.msra.mxu0 %v5136
    %5808 = vmatprep.subr.bf16.mxu0 %v5130
    %5809 = vmatpush1.bf16.msra.mxu0 %v5129
    %5810 = vmatprep.subr.bf16.mxu0 %v5123
    %5811 = vmatpush1.bf16.msra.mxu0 %v5122
    %5812 = vmatprep.subr.bf16.mxu0 %v5116
    %5813 = vmatpush1.bf16.msra.mxu0 %v5115
    %5814 = vmatprep.subr.bf16.mxu0 %v5221
    %5815 = vmatpush2.bf16.msra.mxu0 %v5220
    %5816 = vmatprep.subr.bf16.mxu0 %v5214
    %5817 = vmatpush2.bf16.msra.mxu0 %v5213
    %5818 = vmatprep.subr.bf16.mxu0 %v5207
    %5819 = vmatpush2.bf16.msra.mxu0 %v5206
    %5820 = vmatprep.subr.bf16.mxu0 %v5200
    %5821 = vmatpush2.bf16.msra.mxu0 %v5199
    %5822 = vmatprep.subr.bf16.mxu0 %v5193
    %5823 = vmatpush2.bf16.msra.mxu0 %v5192
    %5824 = vmatprep.subr.bf16.mxu0 %v5186
    %5825 = vmatpush2.bf16.msra.mxu0 %v5185
    %5826 = vmatprep.subr.bf16.mxu0 %v5179
    %5827 = vmatpush2.bf16.msra.mxu0 %v5178
    %5828 = vmatprep.subr.bf16.mxu0 %v5172
    %5829 = vmatpush2.bf16.msra.mxu0 %v5171
    %5830 = vmatprep.mubr.bf16.mxu0 %v2858
    %5831 = vmatmul.mubr.bf16.gmra.mxu0 %v2857
    %v5832 = vpop.f32.mrf.mxu0
    %v5833 = vadd.f32 %v5792, %v5832
    %v5834 = vpop.f32.mrf.mxu0
    %v5835 = vadd.f32 %v5794, %v5834
    %v5836 = vpop.f32.mrf.mxu0
    %v5837 = vpop.f32.mrf.mxu0
    %5838 = vdwg.mxu0
    %5839 = vmatprep.subr.bf16.mxu0 %v4831
    %5840 = vmatpush1.bf16.msra.mxu0 %v4830
    %5841 = vmatprep.subr.bf16.mxu0 %v4824
    %5842 = vmatpush1.bf16.msra.mxu0 %v4823
    %5843 = vmatprep.subr.bf16.mxu0 %v4817
    %5844 = vmatpush1.bf16.msra.mxu0 %v4816
    %5845 = vmatprep.subr.bf16.mxu0 %v4810
    %5846 = vmatpush1.bf16.msra.mxu0 %v4809
    %5847 = vmatprep.subr.bf16.mxu0 %v4803
    %5848 = vmatpush1.bf16.msra.mxu0 %v4802
    %5849 = vmatprep.subr.bf16.mxu0 %v4796
    %5850 = vmatpush1.bf16.msra.mxu0 %v4795
    %5851 = vmatprep.subr.bf16.mxu0 %v4789
    %5852 = vmatpush1.bf16.msra.mxu0 %v4788
    %5853 = vmatprep.subr.bf16.mxu0 %v4782
    %5854 = vmatpush1.bf16.msra.mxu0 %v4781
    %5855 = vmatprep.subr.bf16.mxu0 %v4887
    %5856 = vmatpush2.bf16.msra.mxu0 %v4886
    %5857 = vmatprep.subr.bf16.mxu0 %v4880
    %5858 = vmatpush2.bf16.msra.mxu0 %v4879
    %5859 = vmatprep.subr.bf16.mxu0 %v4873
    %5860 = vmatpush2.bf16.msra.mxu0 %v4872
    %5861 = vmatprep.subr.bf16.mxu0 %v4866
    %5862 = vmatpush2.bf16.msra.mxu0 %v4865
    %5863 = vmatprep.subr.bf16.mxu0 %v4859
    %5864 = vmatpush2.bf16.msra.mxu0 %v4858
    %5865 = vmatprep.subr.bf16.mxu0 %v4852
    %5866 = vmatpush2.bf16.msra.mxu0 %v4851
    %5867 = vmatprep.subr.bf16.mxu0 %v4845
    %5868 = vmatpush2.bf16.msra.mxu0 %v4844
    %5869 = vmatprep.subr.bf16.mxu0 %v4838
    %5870 = vmatpush2.bf16.msra.mxu0 %v4837
    %5871 = vmatprep.mubr.bf16.mxu0 %v2852
    %5872 = vmatmul.mubr.bf16.gmra.mxu0 %v2851
    %v5873 = vpop.f32.mrf.mxu0
    %v5874 = vadd.f32 0.0, %v5873
    %v5875 = vpop.f32.mrf.mxu0
    %v5876 = vadd.f32 0.0, %v5875
    %v5877 = vpop.f32.mrf.mxu0
    %v5878 = vpop.f32.mrf.mxu0
    %5879 = vdwg.mxu0
    %5880 = vmatprep.subr.bf16.mxu0 %v4943
    %5881 = vmatpush1.bf16.msra.mxu0 %v4942
    %5882 = vmatprep.subr.bf16.mxu0 %v4936
    %5883 = vmatpush1.bf16.msra.mxu0 %v4935
    %5884 = vmatprep.subr.bf16.mxu0 %v4929
    %5885 = vmatpush1.bf16.msra.mxu0 %v4928
    %5886 = vmatprep.subr.bf16.mxu0 %v4922
    %5887 = vmatpush1.bf16.msra.mxu0 %v4921
    %5888 = vmatprep.subr.bf16.mxu0 %v4915
    %5889 = vmatpush1.bf16.msra.mxu0 %v4914
    %5890 = vmatprep.subr.bf16.mxu0 %v4908
    %5891 = vmatpush1.bf16.msra.mxu0 %v4907
    %5892 = vmatprep.subr.bf16.mxu0 %v4901
    %5893 = vmatpush1.bf16.msra.mxu0 %v4900
    %5894 = vmatprep.subr.bf16.mxu0 %v4894
    %5895 = vmatpush1.bf16.msra.mxu0 %v4893
    %5896 = vmatprep.subr.bf16.mxu0 %v4999
    %5897 = vmatpush2.bf16.msra.mxu0 %v4998
    %5898 = vmatprep.subr.bf16.mxu0 %v4992
    %5899 = vmatpush2.bf16.msra.mxu0 %v4991
    %5900 = vmatprep.subr.bf16.mxu0 %v4985
    %5901 = vmatpush2.bf16.msra.mxu0 %v4984
    %5902 = vmatprep.subr.bf16.mxu0 %v4978
    %5903 = vmatpush2.bf16.msra.mxu0 %v4977
    %5904 = vmatprep.subr.bf16.mxu0 %v4971
    %5905 = vmatpush2.bf16.msra.mxu0 %v4970
    %5906 = vmatprep.subr.bf16.mxu0 %v4964
    %5907 = vmatpush2.bf16.msra.mxu0 %v4963
    %5908 = vmatprep.subr.bf16.mxu0 %v4957
    %5909 = vmatpush2.bf16.msra.mxu0 %v4956
    %5910 = vmatprep.subr.bf16.mxu0 %v4950
    %5911 = vmatpush2.bf16.msra.mxu0 %v4949
    %5912 = vmatprep.mubr.bf16.mxu0 %v2854
    %5913 = vmatmul.mubr.bf16.gmra.mxu0 %v2853
    %v5914 = vpop.f32.mrf.mxu0
    %v5915 = vadd.f32 %v5874, %v5914
    %v5916 = vpop.f32.mrf.mxu0
    %v5917 = vadd.f32 %v5876, %v5916
    %v5918 = vpop.f32.mrf.mxu0
    %v5919 = vpop.f32.mrf.mxu0
    %5920 = vdwg.mxu0
    %5921 = vmatprep.subr.bf16.mxu0 %v5055
    %5922 = vmatpush1.bf16.msra.mxu0 %v5054
    %5923 = vmatprep.subr.bf16.mxu0 %v5048
    %5924 = vmatpush1.bf16.msra.mxu0 %v5047
    %5925 = vmatprep.subr.bf16.mxu0 %v5041
    %5926 = vmatpush1.bf16.msra.mxu0 %v5040
    %5927 = vmatprep.subr.bf16.mxu0 %v5034
    %5928 = vmatpush1.bf16.msra.mxu0 %v5033
    %5929 = vmatprep.subr.bf16.mxu0 %v5027
    %5930 = vmatpush1.bf16.msra.mxu0 %v5026
    %5931 = vmatprep.subr.bf16.mxu0 %v5020
    %5932 = vmatpush1.bf16.msra.mxu0 %v5019
    %5933 = vmatprep.subr.bf16.mxu0 %v5013
    %5934 = vmatpush1.bf16.msra.mxu0 %v5012
    %5935 = vmatprep.subr.bf16.mxu0 %v5006
    %5936 = vmatpush1.bf16.msra.mxu0 %v5005
    %5937 = vmatprep.subr.bf16.mxu0 %v5111
    %5938 = vmatpush2.bf16.msra.mxu0 %v5110
    %5939 = vmatprep.subr.bf16.mxu0 %v5104
    %5940 = vmatpush2.bf16.msra.mxu0 %v5103
    %5941 = vmatprep.subr.bf16.mxu0 %v5097
    %5942 = vmatpush2.bf16.msra.mxu0 %v5096
    %5943 = vmatprep.subr.bf16.mxu0 %v5090
    %5944 = vmatpush2.bf16.msra.mxu0 %v5089
    %5945 = vmatprep.subr.bf16.mxu0 %v5083
    %5946 = vmatpush2.bf16.msra.mxu0 %v5082
    %5947 = vmatprep.subr.bf16.mxu0 %v5076
    %5948 = vmatpush2.bf16.msra.mxu0 %v5075
    %5949 = vmatprep.subr.bf16.mxu0 %v5069
    %5950 = vmatpush2.bf16.msra.mxu0 %v5068
    %5951 = vmatprep.subr.bf16.mxu0 %v5062
    %5952 = vmatpush2.bf16.msra.mxu0 %v5061
    %5953 = vmatprep.mubr.bf16.mxu0 %v2856
    %5954 = vmatmul.mubr.bf16.gmra.mxu0 %v2855
    %v5955 = vpop.f32.mrf.mxu0
    %v5956 = vadd.f32 %v5915, %v5955
    %v5957 = vpop.f32.mrf.mxu0
    %v5958 = vadd.f32 %v5917, %v5957
    %v5959 = vpop.f32.mrf.mxu0
    %v5960 = vpop.f32.mrf.mxu0
    %5961 = vdwg.mxu0
    %5962 = vmatprep.subr.bf16.mxu0 %v5167
    %5963 = vmatpush1.bf16.msra.mxu0 %v5166
    %5964 = vmatprep.subr.bf16.mxu0 %v5160
    %5965 = vmatpush1.bf16.msra.mxu0 %v5159
    %5966 = vmatprep.subr.bf16.mxu0 %v5153
    %5967 = vmatpush1.bf16.msra.mxu0 %v5152
    %5968 = vmatprep.subr.bf16.mxu0 %v5146
    %5969 = vmatpush1.bf16.msra.mxu0 %v5145
    %5970 = vmatprep.subr.bf16.mxu0 %v5139
    %5971 = vmatpush1.bf16.msra.mxu0 %v5138
    %5972 = vmatprep.subr.bf16.mxu0 %v5132
    %5973 = vmatpush1.bf16.msra.mxu0 %v5131
    %5974 = vmatprep.subr.bf16.mxu0 %v5125
    %5975 = vmatpush1.bf16.msra.mxu0 %v5124
    %5976 = vmatprep.subr.bf16.mxu0 %v5118
    %5977 = vmatpush1.bf16.msra.mxu0 %v5117
    %5978 = vmatprep.subr.bf16.mxu0 %v5223
    %5979 = vmatpush2.bf16.msra.mxu0 %v5222
    %5980 = vmatprep.subr.bf16.mxu0 %v5216
    %5981 = vmatpush2.bf16.msra.mxu0 %v5215
    %5982 = vmatprep.subr.bf16.mxu0 %v5209
    %5983 = vmatpush2.bf16.msra.mxu0 %v5208
    %5984 = vmatprep.subr.bf16.mxu0 %v5202
    %5985 = vmatpush2.bf16.msra.mxu0 %v5201
    %5986 = vmatprep.subr.bf16.mxu0 %v5195
    %5987 = vmatpush2.bf16.msra.mxu0 %v5194
    %5988 = vmatprep.subr.bf16.mxu0 %v5188
    %5989 = vmatpush2.bf16.msra.mxu0 %v5187
    %5990 = vmatprep.subr.bf16.mxu0 %v5181
    %5991 = vmatpush2.bf16.msra.mxu0 %v5180
    %5992 = vmatprep.subr.bf16.mxu0 %v5174
    %5993 = vmatpush2.bf16.msra.mxu0 %v5173
    %5994 = vmatprep.mubr.bf16.mxu0 %v2858
    %5995 = vmatmul.mubr.bf16.gmra.mxu0 %v2857
    %v5996 = vpop.f32.mrf.mxu0
    %v5997 = vadd.f32 %v5956, %v5996
    %v5998 = vpop.f32.mrf.mxu0
    %v5999 = vadd.f32 %v5958, %v5998
    %v6000 = vpop.f32.mrf.mxu0
    %v6001 = vpop.f32.mrf.mxu0
    %6002 = vdwg.mxu0
    %6003 = vmatprep.subr.bf16.mxu0 %v4833
    %6004 = vmatpush1.bf16.msra.mxu0 %v4832
    %6005 = vmatprep.subr.bf16.mxu0 %v4826
    %6006 = vmatpush1.bf16.msra.mxu0 %v4825
    %6007 = vmatprep.subr.bf16.mxu0 %v4819
    %6008 = vmatpush1.bf16.msra.mxu0 %v4818
    %6009 = vmatprep.subr.bf16.mxu0 %v4812
    %6010 = vmatpush1.bf16.msra.mxu0 %v4811
    %6011 = vmatprep.subr.bf16.mxu0 %v4805
    %6012 = vmatpush1.bf16.msra.mxu0 %v4804
    %6013 = vmatprep.subr.bf16.mxu0 %v4798
    %6014 = vmatpush1.bf16.msra.mxu0 %v4797
    %6015 = vmatprep.subr.bf16.mxu0 %v4791
    %6016 = vmatpush1.bf16.msra.mxu0 %v4790
    %6017 = vmatprep.subr.bf16.mxu0 %v4784
    %6018 = vmatpush1.bf16.msra.mxu0 %v4783
    %6019 = vmatprep.subr.bf16.mxu0 %v4889
    %6020 = vmatpush2.bf16.msra.mxu0 %v4888
    %6021 = vmatprep.subr.bf16.mxu0 %v4882
    %6022 = vmatpush2.bf16.msra.mxu0 %v4881
    %6023 = vmatprep.subr.bf16.mxu0 %v4875
    %6024 = vmatpush2.bf16.msra.mxu0 %v4874
    %6025 = vmatprep.subr.bf16.mxu0 %v4868
    %6026 = vmatpush2.bf16.msra.mxu0 %v4867
    %6027 = vmatprep.subr.bf16.mxu0 %v4861
    %6028 = vmatpush2.bf16.msra.mxu0 %v4860
    %6029 = vmatprep.subr.bf16.mxu0 %v4854
    %6030 = vmatpush2.bf16.msra.mxu0 %v4853
    %6031 = vmatprep.subr.bf16.mxu0 %v4847
    %6032 = vmatpush2.bf16.msra.mxu0 %v4846
    %6033 = vmatprep.subr.bf16.mxu0 %v4840
    %6034 = vmatpush2.bf16.msra.mxu0 %v4839
    %6035 = vmatprep.mubr.bf16.mxu0 %v2852
    %6036 = vmatmul.mubr.bf16.gmra.mxu0 %v2851
    %v6037 = vpop.f32.mrf.mxu0
    %v6038 = vadd.f32 0.0, %v6037
    %v6039 = vpop.f32.mrf.mxu0
    %v6040 = vadd.f32 0.0, %v6039
    %v6041 = vpop.f32.mrf.mxu0
    %v6042 = vpop.f32.mrf.mxu0
    %6043 = vdwg.mxu0
    %6044 = vmatprep.subr.bf16.mxu0 %v4945
    %6045 = vmatpush1.bf16.msra.mxu0 %v4944
    %6046 = vmatprep.subr.bf16.mxu0 %v4938
    %6047 = vmatpush1.bf16.msra.mxu0 %v4937
    %6048 = vmatprep.subr.bf16.mxu0 %v4931
    %6049 = vmatpush1.bf16.msra.mxu0 %v4930
    %6050 = vmatprep.subr.bf16.mxu0 %v4924
    %6051 = vmatpush1.bf16.msra.mxu0 %v4923
    %6052 = vmatprep.subr.bf16.mxu0 %v4917
    %6053 = vmatpush1.bf16.msra.mxu0 %v4916
    %6054 = vmatprep.subr.bf16.mxu0 %v4910
    %6055 = vmatpush1.bf16.msra.mxu0 %v4909
    %6056 = vmatprep.subr.bf16.mxu0 %v4903
    %6057 = vmatpush1.bf16.msra.mxu0 %v4902
    %6058 = vmatprep.subr.bf16.mxu0 %v4896
    %6059 = vmatpush1.bf16.msra.mxu0 %v4895
    %6060 = vmatprep.subr.bf16.mxu0 %v5001
    %6061 = vmatpush2.bf16.msra.mxu0 %v5000
    %6062 = vmatprep.subr.bf16.mxu0 %v4994
    %6063 = vmatpush2.bf16.msra.mxu0 %v4993
    %6064 = vmatprep.subr.bf16.mxu0 %v4987
    %6065 = vmatpush2.bf16.msra.mxu0 %v4986
    %6066 = vmatprep.subr.bf16.mxu0 %v4980
    %6067 = vmatpush2.bf16.msra.mxu0 %v4979
    %6068 = vmatprep.subr.bf16.mxu0 %v4973
    %6069 = vmatpush2.bf16.msra.mxu0 %v4972
    %6070 = vmatprep.subr.bf16.mxu0 %v4966
    %6071 = vmatpush2.bf16.msra.mxu0 %v4965
    %6072 = vmatprep.subr.bf16.mxu0 %v4959
    %6073 = vmatpush2.bf16.msra.mxu0 %v4958
    %6074 = vmatprep.subr.bf16.mxu0 %v4952
    %6075 = vmatpush2.bf16.msra.mxu0 %v4951
    %6076 = vmatprep.mubr.bf16.mxu0 %v2854
    %6077 = vmatmul.mubr.bf16.gmra.mxu0 %v2853
    %v6078 = vpop.f32.mrf.mxu0
    %v6079 = vadd.f32 %v6038, %v6078
    %v6080 = vpop.f32.mrf.mxu0
    %v6081 = vadd.f32 %v6040, %v6080
    %v6082 = vpop.f32.mrf.mxu0
    %v6083 = vpop.f32.mrf.mxu0
    %6084 = vdwg.mxu0
    %6085 = vmatprep.subr.bf16.mxu0 %v5057
    %6086 = vmatpush1.bf16.msra.mxu0 %v5056
    %6087 = vmatprep.subr.bf16.mxu0 %v5050
    %6088 = vmatpush1.bf16.msra.mxu0 %v5049
    %6089 = vmatprep.subr.bf16.mxu0 %v5043
    %6090 = vmatpush1.bf16.msra.mxu0 %v5042
    %6091 = vmatprep.subr.bf16.mxu0 %v5036
    %6092 = vmatpush1.bf16.msra.mxu0 %v5035
    %6093 = vmatprep.subr.bf16.mxu0 %v5029
    %6094 = vmatpush1.bf16.msra.mxu0 %v5028
    %6095 = vmatprep.subr.bf16.mxu0 %v5022
    %6096 = vmatpush1.bf16.msra.mxu0 %v5021
    %6097 = vmatprep.subr.bf16.mxu0 %v5015
    %6098 = vmatpush1.bf16.msra.mxu0 %v5014
    %6099 = vmatprep.subr.bf16.mxu0 %v5008
    %6100 = vmatpush1.bf16.msra.mxu0 %v5007
    %6101 = vmatprep.subr.bf16.mxu0 %v5113
    %6102 = vmatpush2.bf16.msra.mxu0 %v5112
    %6103 = vmatprep.subr.bf16.mxu0 %v5106
    %6104 = vmatpush2.bf16.msra.mxu0 %v5105
    %6105 = vmatprep.subr.bf16.mxu0 %v5099
    %6106 = vmatpush2.bf16.msra.mxu0 %v5098
    %6107 = vmatprep.subr.bf16.mxu0 %v5092
    %6108 = vmatpush2.bf16.msra.mxu0 %v5091
    %6109 = vmatprep.subr.bf16.mxu0 %v5085
    %6110 = vmatpush2.bf16.msra.mxu0 %v5084
    %6111 = vmatprep.subr.bf16.mxu0 %v5078
    %6112 = vmatpush2.bf16.msra.mxu0 %v5077
    %6113 = vmatprep.subr.bf16.mxu0 %v5071
    %6114 = vmatpush2.bf16.msra.mxu0 %v5070
    %6115 = vmatprep.subr.bf16.mxu0 %v5064
    %6116 = vmatpush2.bf16.msra.mxu0 %v5063
    %6117 = vmatprep.mubr.bf16.mxu0 %v2856
    %6118 = vmatmul.mubr.bf16.gmra.mxu0 %v2855
    %v6119 = vpop.f32.mrf.mxu0
    %v6120 = vadd.f32 %v6079, %v6119
    %v6121 = vpop.f32.mrf.mxu0
    %v6122 = vadd.f32 %v6081, %v6121
    %v6123 = vpop.f32.mrf.mxu0
    %v6124 = vpop.f32.mrf.mxu0
    %6125 = vdwg.mxu0
    %6126 = vmatprep.subr.bf16.mxu0 %v5169
    %6127 = vmatpush1.bf16.msra.mxu0 %v5168
    %6128 = vmatprep.subr.bf16.mxu0 %v5162
    %6129 = vmatpush1.bf16.msra.mxu0 %v5161
    %6130 = vmatprep.subr.bf16.mxu0 %v5155
    %6131 = vmatpush1.bf16.msra.mxu0 %v5154
    %6132 = vmatprep.subr.bf16.mxu0 %v5148
    %6133 = vmatpush1.bf16.msra.mxu0 %v5147
    %6134 = vmatprep.subr.bf16.mxu0 %v5141
    %6135 = vmatpush1.bf16.msra.mxu0 %v5140
    %6136 = vmatprep.subr.bf16.mxu0 %v5134
    %6137 = vmatpush1.bf16.msra.mxu0 %v5133
    %6138 = vmatprep.subr.bf16.mxu0 %v5127
    %6139 = vmatpush1.bf16.msra.mxu0 %v5126
    %6140 = vmatprep.subr.bf16.mxu0 %v5120
    %6141 = vmatpush1.bf16.msra.mxu0 %v5119
    %6142 = vmatprep.subr.bf16.mxu0 %v5225
    %6143 = vmatpush2.bf16.msra.mxu0 %v5224
    %6144 = vmatprep.subr.bf16.mxu0 %v5218
    %6145 = vmatpush2.bf16.msra.mxu0 %v5217
    %6146 = vmatprep.subr.bf16.mxu0 %v5211
    %6147 = vmatpush2.bf16.msra.mxu0 %v5210
    %6148 = vmatprep.subr.bf16.mxu0 %v5204
    %6149 = vmatpush2.bf16.msra.mxu0 %v5203
    %6150 = vmatprep.subr.bf16.mxu0 %v5197
    %6151 = vmatpush2.bf16.msra.mxu0 %v5196
    %6152 = vmatprep.subr.bf16.mxu0 %v5190
    %6153 = vmatpush2.bf16.msra.mxu0 %v5189
    %6154 = vmatprep.subr.bf16.mxu0 %v5183
    %6155 = vmatpush2.bf16.msra.mxu0 %v5182
    %6156 = vmatprep.subr.bf16.mxu0 %v5176
    %6157 = vmatpush2.bf16.msra.mxu0 %v5175
    %6158 = vmatprep.mubr.bf16.mxu0 %v2858
    %6159 = vmatmul.mubr.bf16.gmra.mxu0 %v2857
    %v6160 = vpop.f32.mrf.mxu0
    %v6161 = vadd.f32 %v6120, %v6160
    %v6162 = vpop.f32.mrf.mxu0
    %v6163 = vadd.f32 %v6122, %v6162
    %v6164 = vpop.f32.mrf.mxu0
    %v6165 = vpop.f32.mrf.mxu0
    %6166 = vdwg.mxu0
    %6167 = vmatprep.subr.bf16.mxu0 0
    %6168 = vmatpush1.bf16.msra.mxu0 %v4834
    %6169 = vmatprep.subr.bf16.mxu0 0
    %6170 = vmatpush1.bf16.msra.mxu0 %v4827
    %6171 = vmatprep.subr.bf16.mxu0 0
    %6172 = vmatpush1.bf16.msra.mxu0 %v4820
    %6173 = vmatprep.subr.bf16.mxu0 0
    %6174 = vmatpush1.bf16.msra.mxu0 %v4813
    %6175 = vmatprep.subr.bf16.mxu0 0
    %6176 = vmatpush1.bf16.msra.mxu0 %v4806
    %6177 = vmatprep.subr.bf16.mxu0 0
    %6178 = vmatpush1.bf16.msra.mxu0 %v4799
    %6179 = vmatprep.subr.bf16.mxu0 0
    %6180 = vmatpush1.bf16.msra.mxu0 %v4792
    %6181 = vmatprep.subr.bf16.mxu0 0
    %6182 = vmatpush1.bf16.msra.mxu0 %v4785
    %6183 = vmatprep.subr.bf16.mxu0 0
    %6184 = vmatpush2.bf16.msra.mxu0 %v4890
    %6185 = vmatprep.subr.bf16.mxu0 0
    %6186 = vmatpush2.bf16.msra.mxu0 %v4883
    %6187 = vmatprep.subr.bf16.mxu0 0
    %6188 = vmatpush2.bf16.msra.mxu0 %v4876
    %6189 = vmatprep.subr.bf16.mxu0 0
    %6190 = vmatpush2.bf16.msra.mxu0 %v4869
    %6191 = vmatprep.subr.bf16.mxu0 0
    %6192 = vmatpush2.bf16.msra.mxu0 %v4862
    %6193 = vmatprep.subr.bf16.mxu0 0
    %6194 = vmatpush2.bf16.msra.mxu0 %v4855
    %6195 = vmatprep.subr.bf16.mxu0 0
    %6196 = vmatpush2.bf16.msra.mxu0 %v4848
    %6197 = vmatprep.subr.bf16.mxu0 0
    %6198 = vmatpush2.bf16.msra.mxu0 %v4841
    %6199 = vmatprep.mubr.bf16.mxu0 %v2852
    %6200 = vmatmul.mubr.bf16.gmra.mxu0 %v2851
    %v6201 = vpop.f32.mrf.mxu0
    %v6202 = vadd.f32 0.0, %v6201
    %v6203 = vpop.f32.mrf.mxu0
    %v6204 = vpop.f32.mrf.mxu0
    %v6205 = vpop.f32.mrf.mxu0
    %6206 = vdwg.mxu0
    %6207 = vmatprep.subr.bf16.mxu0 0
    %6208 = vmatpush1.bf16.msra.mxu0 %v4946
    %6209 = vmatprep.subr.bf16.mxu0 0
    %6210 = vmatpush1.bf16.msra.mxu0 %v4939
    %6211 = vmatprep.subr.bf16.mxu0 0
    %6212 = vmatpush1.bf16.msra.mxu0 %v4932
    %6213 = vmatprep.subr.bf16.mxu0 0
    %6214 = vmatpush1.bf16.msra.mxu0 %v4925
    %6215 = vmatprep.subr.bf16.mxu0 0
    %6216 = vmatpush1.bf16.msra.mxu0 %v4918
    %6217 = vmatprep.subr.bf16.mxu0 0
    %6218 = vmatpush1.bf16.msra.mxu0 %v4911
    %6219 = vmatprep.subr.bf16.mxu0 0
    %6220 = vmatpush1.bf16.msra.mxu0 %v4904
    %6221 = vmatprep.subr.bf16.mxu0 0
    %6222 = vmatpush1.bf16.msra.mxu0 %v4897
    %6223 = vmatprep.subr.bf16.mxu0 0
    %6224 = vmatpush2.bf16.msra.mxu0 %v5002
    %6225 = vmatprep.subr.bf16.mxu0 0
    %6226 = vmatpush2.bf16.msra.mxu0 %v4995
    %6227 = vmatprep.subr.bf16.mxu0 0
    %6228 = vmatpush2.bf16.msra.mxu0 %v4988
    %6229 = vmatprep.subr.bf16.mxu0 0
    %6230 = vmatpush2.bf16.msra.mxu0 %v4981
    %6231 = vmatprep.subr.bf16.mxu0 0
    %6232 = vmatpush2.bf16.msra.mxu0 %v4974
    %6233 = vmatprep.subr.bf16.mxu0 0
    %6234 = vmatpush2.bf16.msra.mxu0 %v4967
    %6235 = vmatprep.subr.bf16.mxu0 0
    %6236 = vmatpush2.bf16.msra.mxu0 %v4960
    %6237 = vmatprep.subr.bf16.mxu0 0
    %6238 = vmatpush2.bf16.msra.mxu0 %v4953
    %6239 = vmatprep.mubr.bf16.mxu0 %v2854
    %6240 = vmatmul.mubr.bf16.gmra.mxu0 %v2853
    %v6241 = vpop.f32.mrf.mxu0
    %v6242 = vadd.f32 %v6202, %v6241
    %v6243 = vpop.f32.mrf.mxu0
    %v6244 = vpop.f32.mrf.mxu0
    %v6245 = vpop.f32.mrf.mxu0
    %6246 = vdwg.mxu0
    %6247 = vmatprep.subr.bf16.mxu0 0
    %6248 = vmatpush1.bf16.msra.mxu0 %v5058
    %6249 = vmatprep.subr.bf16.mxu0 0
    %6250 = vmatpush1.bf16.msra.mxu0 %v5051
    %6251 = vmatprep.subr.bf16.mxu0 0
    %6252 = vmatpush1.bf16.msra.mxu0 %v5044
    %6253 = vmatprep.subr.bf16.mxu0 0
    %6254 = vmatpush1.bf16.msra.mxu0 %v5037
    %6255 = vmatprep.subr.bf16.mxu0 0
    %6256 = vmatpush1.bf16.msra.mxu0 %v5030
    %6257 = vmatprep.subr.bf16.mxu0 0
    %6258 = vmatpush1.bf16.msra.mxu0 %v5023
    %6259 = vmatprep.subr.bf16.mxu0 0
    %6260 = vmatpush1.bf16.msra.mxu0 %v5016
    %6261 = vmatprep.subr.bf16.mxu0 0
    %6262 = vmatpush1.bf16.msra.mxu0 %v5009
    %6263 = vmatprep.subr.bf16.mxu0 0
    %6264 = vmatpush2.bf16.msra.mxu0 %v5114
    %6265 = vmatprep.subr.bf16.mxu0 0
    %6266 = vmatpush2.bf16.msra.mxu0 %v5107
    %6267 = vmatprep.subr.bf16.mxu0 0
    %6268 = vmatpush2.bf16.msra.mxu0 %v5100
    %6269 = vmatprep.subr.bf16.mxu0 0
    %6270 = vmatpush2.bf16.msra.mxu0 %v5093
    %6271 = vmatprep.subr.bf16.mxu0 0
    %6272 = vmatpush2.bf16.msra.mxu0 %v5086
    %6273 = vmatprep.subr.bf16.mxu0 0
    %6274 = vmatpush2.bf16.msra.mxu0 %v5079
    %6275 = vmatprep.subr.bf16.mxu0 0
    %6276 = vmatpush2.bf16.msra.mxu0 %v5072
    %6277 = vmatprep.subr.bf16.mxu0 0
    %6278 = vmatpush2.bf16.msra.mxu0 %v5065
    %6279 = vmatprep.mubr.bf16.mxu0 %v2856
    %6280 = vmatmul.mubr.bf16.gmra.mxu0 %v2855
    %v6281 = vpop.f32.mrf.mxu0
    %v6282 = vadd.f32 %v6242, %v6281
    %v6283 = vpop.f32.mrf.mxu0
    %v6284 = vpop.f32.mrf.mxu0
    %v6285 = vpop.f32.mrf.mxu0
    %6286 = vdwg.mxu0
    %6287 = vmatprep.subr.bf16.mxu0 0
    %6288 = vmatpush1.bf16.msra.mxu0 %v5170
    %6289 = vmatprep.subr.bf16.mxu0 0
    %6290 = vmatpush1.bf16.msra.mxu0 %v5163
    %6291 = vmatprep.subr.bf16.mxu0 0
    %6292 = vmatpush1.bf16.msra.mxu0 %v5156
    %6293 = vmatprep.subr.bf16.mxu0 0
    %6294 = vmatpush1.bf16.msra.mxu0 %v5149
    %6295 = vmatprep.subr.bf16.mxu0 0
    %6296 = vmatpush1.bf16.msra.mxu0 %v5142
    %6297 = vmatprep.subr.bf16.mxu0 0
    %6298 = vmatpush1.bf16.msra.mxu0 %v5135
    %6299 = vmatprep.subr.bf16.mxu0 0
    %6300 = vmatpush1.bf16.msra.mxu0 %v5128
    %6301 = vmatprep.subr.bf16.mxu0 0
    %6302 = vmatpush1.bf16.msra.mxu0 %v5121
    %6303 = vmatprep.subr.bf16.mxu0 0
    %6304 = vmatpush2.bf16.msra.mxu0 %v5226
    %6305 = vmatprep.subr.bf16.mxu0 0
    %6306 = vmatpush2.bf16.msra.mxu0 %v5219
    %6307 = vmatprep.subr.bf16.mxu0 0
    %6308 = vmatpush2.bf16.msra.mxu0 %v5212
    %6309 = vmatprep.subr.bf16.mxu0 0
    %6310 = vmatpush2.bf16.msra.mxu0 %v5205
    %6311 = vmatprep.subr.bf16.mxu0 0
    %6312 = vmatpush2.bf16.msra.mxu0 %v5198
    %6313 = vmatprep.subr.bf16.mxu0 0
    %6314 = vmatpush2.bf16.msra.mxu0 %v5191
    %6315 = vmatprep.subr.bf16.mxu0 0
    %6316 = vmatpush2.bf16.msra.mxu0 %v5184
    %6317 = vmatprep.subr.bf16.mxu0 0
    %6318 = vmatpush2.bf16.msra.mxu0 %v5177
    %6319 = vmatprep.mubr.bf16.mxu0 %v2858
    %6320 = vmatmul.mubr.bf16.gmra.mxu0 %v2857
    %v6321 = vpop.f32.mrf.mxu0
    %v6322 = vadd.f32 %v6282, %v6321
    %v6323 = vpop.f32.mrf.mxu0
    %v6324 = vpop.f32.mrf.mxu0
    %v6325 = vpop.f32.mrf.mxu0
    %6326 = vdwg.mxu0
    %v6327 = vpack.c.bf16 %v5833, %v5833
    %v6328 = vpack.c.bf16 %v5835, %v5835
    %v6329 = vpack.c.bf16 %v5997, %v5997
    %v6330 = vpack.c.bf16 %v5999, %v5999
    %v6331 = vpack.c.bf16 %v6161, %v6161
    %v6332 = vpack.c.bf16 %v6163, %v6163
    %v6333 = vpack.c.bf16 %v6322, %v6322
    %v6334 = vld [vmem:[#allocation16] sm:$0xff]
    %v6336 = vlaneseq
    %v6337 = vshrl.u32 %v6336, 7
    %v6338 = vsub.s32 0, %v6337
    %v6339 = vrot.slane %v6334, %v6338
    %v6340 = vlaneseq
    %v6341 = vshrl.u32 %v6340, 7
    %v6342 = vsub.s32 1, %v6341
    %v6343 = vrot.slane %v6334, %v6342
    %v6344 = vlaneseq
    %v6345 = vshrl.u32 %v6344, 7
    %v6346 = vsub.s32 2, %v6345
    %v6347 = vrot.slane %v6334, %v6346
    %v6348 = vlaneseq
    %v6349 = vshrl.u32 %v6348, 7
    %v6350 = vsub.s32 3, %v6349
    %v6351 = vrot.slane %v6334, %v6350
    %v6352 = vlaneseq
    %v6353 = vshrl.u32 %v6352, 7
    %v6354 = vsub.s32 4, %v6353
    %v6355 = vrot.slane %v6334, %v6354
    %v6356 = vlaneseq
    %v6357 = vshrl.u32 %v6356, 7
    %v6358 = vsub.s32 5, %v6357
    %v6359 = vrot.slane %v6334, %v6358
    %v6360 = vlaneseq
    %v6361 = vshrl.u32 %v6360, 7
    %v6362 = vsub.s32 6, %v6361
    %v6363 = vrot.slane %v6334, %v6362
    %v6371 = vpack.c.bf16 %v6339, %v6339
    %v6372 = vpack.c.bf16 %v6343, %v6343
    %v6373 = vpack.c.bf16 %v6347, %v6347
    %v6374 = vpack.c.bf16 %v6351, %v6351
    %v6375 = vpack.c.bf16 %v6355, %v6355
    %v6376 = vpack.c.bf16 %v6359, %v6359
    %v6377 = vpack.c.bf16 %v6363, %v6363
    %v6379 = vpack.i.b16 %v6371, %v6371
    %v6381 = vlaneseq
    %v6382 = vshrl.u32 %v6381, 7
    %v6383 = vsub.s32 0, %v6382
    %v6384 = vrot.slane %v6379, %v6383
    %v6386 = vpack.i.b16 %v6372, %v6372
    %v6388 = vlaneseq
    %v6389 = vshrl.u32 %v6388, 7
    %v6390 = vsub.s32 0, %v6389
    %v6391 = vrot.slane %v6386, %v6390
    %v6393 = vpack.i.b16 %v6373, %v6373
    %v6395 = vlaneseq
    %v6396 = vshrl.u32 %v6395, 7
    %v6397 = vsub.s32 0, %v6396
    %v6398 = vrot.slane %v6393, %v6397
    %v6400 = vpack.i.b16 %v6374, %v6374
    %v6402 = vlaneseq
    %v6403 = vshrl.u32 %v6402, 7
    %v6404 = vsub.s32 0, %v6403
    %v6405 = vrot.slane %v6400, %v6404
    %v6407 = vpack.i.b16 %v6375, %v6375
    %v6409 = vlaneseq
    %v6410 = vshrl.u32 %v6409, 7
    %v6411 = vsub.s32 0, %v6410
    %v6412 = vrot.slane %v6407, %v6411
    %v6414 = vpack.i.b16 %v6376, %v6376
    %v6416 = vlaneseq
    %v6417 = vshrl.u32 %v6416, 7
    %v6418 = vsub.s32 0, %v6417
    %v6419 = vrot.slane %v6414, %v6418
    %v6421 = vpack.i.b16 %v6377, %v6377
    %v6423 = vlaneseq
    %v6424 = vshrl.u32 %v6423, 7
    %v6425 = vsub.s32 0, %v6424
    %v6426 = vrot.slane %v6421, %v6425
    %v6427 = vadd.bf16 %v6327, %v6384
    %v6428 = vadd.bf16 %v6328, %v6391
    %v6429 = vadd.bf16 %v6329, %v6398
    %v6430 = vadd.bf16 %v6330, %v6405
    %v6431 = vadd.bf16 %v6331, %v6412
    %v6432 = vadd.bf16 %v6332, %v6419
    %v6433 = vadd.bf16 %v6333, %v6426
    %v6434 = vtanh.bf16.pop %v6427
    %v6435 = vtanh.bf16.pop %v6428
    %v6436 = vtanh.bf16.pop %v6429
    %v6437 = vtanh.bf16.pop %v6430
    %v6438 = vtanh.bf16.pop %v6431
    %v6439 = vtanh.bf16.pop %v6432
    %v6440 = vtanh.bf16.pop %v6433
    %v6448 = vunpack.c.l.b16 %v6434
    %v6449 = vunpack.c.l.b16 %v6435
    %v6450 = vunpack.c.l.b16 %v6436
    %v6451 = vunpack.c.l.b16 %v6437
    %v6452 = vunpack.c.l.b16 %v6438
    %v6453 = vunpack.c.l.b16 %v6439
    %v6454 = vunpack.c.l.b16 %v6440
    %v6455 = vpack.c.b16 %v6449, %v6448
    %v6456 = vpack.c.b16 %v6451, %v6450
    %v6457 = vpack.c.b16 %v6453, %v6452
    %v6458 = vpack.c.b16 %v6454, %v6454
    %6463 = vst [vmem:[#allocation17] sm:$0xff] %v6455
    %6464 = vst [vmem:[#allocation17 + $0x8] sm:$0xff] %v6456
    %6465 = vst [vmem:[#allocation17 + $0x10] sm:$0xff] %v6457
    %6466 = vst [vmem:[#allocation17 + $0x18] sm:$0xf] %v6458
    // Predicated region
    $region74: #{tpu_custom_call.1} parent=1 // pred_check
      _
    $region75: #{tpu_custom_call.1} parent=1 // pred_check_branch
      %6468 = sbr.rel (0) target = $region77
    $region76: #{tpu_custom_call.1} parent=1 // pred_region
      %s6470 = ssub.s32 448, 448
      %6471 = vsyncadd [#allocation4], %s6470
      %s6473 = sshll.u32 [#allocation17], 4
      %s6474 = int_to_ptr.vmem [resolvable:$true] %s6473
      %6476 = dma.vmem_to_hbm [thread:$0]  %s6474, 448, %s9, [#allocation4]
    $region77: #{tpu_custom_call.1} parent=1 // pred_fallthru
      _
    // Predicated region
    $region78: #{tpu_custom_call.1} parent=1 // pred_check
      _
    $region79: #{tpu_custom_call.1} parent=1 // pred_check_branch
      %6478 = sbr.rel (0) target = $region81
    $region80: #{tpu_custom_call.1} parent=1 // pred_region
      %6479 = dma.done [#allocation4], 448
    $region81: #{tpu_custom_call.1} parent=1 // pred_fallthru
      _
    %6480 = vsyncpa [#allocation3], 1
    %6481 = vsyncpa [#allocation6], 1
    %6482 = vsyncpa [#allocation9], 1
    %6483 = vsyncpa [#allocation12], 1
    %6484 = vsyncpa [#allocation15], 1
    %6485 = vsyncpa [#allocation4], 1

</llo_original>
